<compile_context>
chip_gen: v5e
topology: v5e:2x2
jax: 0.10.0
libtpu: 0.0.40
codegen_flags: <defaults>
</compile_context>

<pallas_src>
from functools import partial

import jax
import jax.numpy as jnp
from jax import lax
from jax.experimental import pallas as pl
from jax.experimental.pallas import tpu as pltpu


_STASH_BUDGET_BYTES = 8 * 1024 * 1024   # qsm stash budget (safe on v7x 64 MiB)
_DEFAULT_TILE_CAP = 2048                # token-tile cap, multiple of 128


def _round_up(x, m):
  return (x + m - 1) // m * m


def _channel_softmax(q, head_count, hkc):
  """Per-head softmax over the channel (lane) axis of q:(TN, C), f32 in/out."""
  parts = []
  for h in range(head_count):
    qh = q[:, h * hkc:(h + 1) * hkc]
    qh = qh - jnp.max(qh, axis=1, keepdims=True)
    e = jnp.exp(qh)
    parts.append(e * pl.reciprocal(jnp.sum(e, axis=1, keepdims=True)))
  return parts[0] if head_count == 1 else jnp.concatenate(parts, axis=1)


def _efficient_attention_kernel(
    x_ref, wkvq_ref, wr_ref, bkvq_ref, br_ref,
    o_ref,
    m_ref, l_ref, ctx_ref, wprime_ref, *opt_scratch,
    head_count, hkc, hvc, compute_dtype, tn, n_real, stash_q):
  """Grid = (batch, phase, token_tile).  wkvq = [Wk | Wv | Wq] fused.

  phase 0: one (TN,C)@(C,3C) projection -> online (flash-style) key softmax
           over tokens + transposed per-head context accumulation (one full
           CxC MXU update, block-diagonal slices).  If stash_q, the per-head
           query channel-softmax is also computed here and stashed in VMEM.
           On the last tile the context is normalized and the reprojection is
           folded in:  W' = concat_h(ctx_h_norm @ Wr_h)   (C, C).
  phase 1: out_tile = qsm_tile @ W' + br        (single matmul per tile).
  """
  qsm_ref = opt_scratch[0] if stash_q else None
  phase = pl.program_id(1)
  t = pl.program_id(2)
  num_t = pl.num_programs(2)
  cd = compute_dtype
  C = head_count * hkc        # key/query channels (== dim)
  Cv = head_count * hvc       # value channels     (== dim)

  # ---------------- phase 0: K/V (and Q) -> online context ------------------
  @pl.when(phase == 0)
  def _kv_phase():
    x = x_ref[0].astype(cd)                                        # (TN, C)
    ncol = (C + Cv + C) if stash_q else (C + Cv)
    kvq = jnp.dot(x, wkvq_ref[:, :ncol],
                  preferred_element_type=jnp.float32) + bkvq_ref[:, :ncol]
    k = kvq[:, :C]                                                 # (TN, C) f32
    v = kvq[:, C:C + Cv]                                           # (TN, Cv) f32

    @pl.when(t == 0)
    def _init():
      m_ref[...] = jnp.full(m_ref.shape, -jnp.inf, dtype=m_ref.dtype)
      l_ref[...] = jnp.zeros(l_ref.shape, dtype=l_ref.dtype)
      ctx_ref[...] = jnp.zeros(ctx_ref.shape, dtype=ctx_ref.dtype)

    # Online softmax over the token axis, per key channel, fused with the
    # context accumulation ctx[h][v, c] += p[n, c] * v[n, v].
    m_old = m_ref[...]                                             # (1, C)
    m_new = jnp.maximum(m_old, jnp.max(k, axis=0, keepdims=True))
    alpha = jnp.exp(m_old - m_new)                                 # (1, C)
    p = jnp.exp(k - m_new)                                         # (TN, C) f32
    if n_real is not None:
      # Padded tokens must not contribute to l / ctx.
      row = t * tn + lax.broadcasted_iota(jnp.int32, (tn, 1), 0)
      p = jnp.where(row < n_real, p, 0.0)
    l_ref[...] = alpha * l_ref[...] + jnp.sum(p, axis=0, keepdims=True)
    m_ref[...] = m_new

    # One full-width V^T @ P on the MXU (mem-bound kernel: the off-diagonal
    # flops are free filler and this avoids narrow K=hkc contractions).
    upd_t = lax.dot_general(v.astype(cd), p.astype(cd),
                            (((0,), (0,)), ((), ())),
                            preferred_element_type=jnp.float32)    # (Cv, C)
    for h in range(head_count):
      alpha_h = alpha[:, h * hkc:(h + 1) * hkc]                    # (1, hkc)
      ctx_ref[h] = alpha_h * ctx_ref[h] + upd_t[h * hvc:(h + 1) * hvc,
                                                h * hkc:(h + 1) * hkc]

    if stash_q:
      # Query softmax computed here so x is streamed from HBM only once.
      qsm = _channel_softmax(kvq[:, C + Cv:], head_count, hkc)
      qsm_ref[pl.ds(pl.multiple_of(t * tn, tn), tn), :] = qsm.astype(cd)

    # Last tile: normalize ctx and fold the reprojection into W' (per batch).
    @pl.when(t == num_t - 1)
    def _finalize():
      inv_l = pl.reciprocal(l_ref[...])                            # (1, C)
      for h in range(head_count):
        ctx_n = (ctx_ref[h] * inv_l[:, h * hkc:(h + 1) * hkc]).astype(cd)
        wr_h = wr_ref[h * hvc:(h + 1) * hvc, :]                    # (hvc, C)
        wp_h = lax.dot_general(ctx_n, wr_h, (((0,), (0,)), ((), ())),
                               preferred_element_type=jnp.float32)  # (hkc, C)
        wprime_ref[h * hkc:(h + 1) * hkc, :] = wp_h.astype(cd)

  # ---------------- phase 1: queries -> output (one matmul per tile) --------
  @pl.when(phase == 1)
  def _out_phase():
    if stash_q:
      qsm = qsm_ref[pl.ds(pl.multiple_of(t * tn, tn), tn), :]      # (TN, C) cd
    else:
      # Large-N fallback: re-stream x and project queries here.
      q = jnp.dot(x_ref[0].astype(cd), wkvq_ref[:, C + Cv:],
                  preferred_element_type=jnp.float32) + bkvq_ref[:, C + Cv:]
      qsm = _channel_softmax(q, head_count, hkc).astype(cd)
    out = jnp.dot(qsm, wprime_ref[...],
                  preferred_element_type=jnp.float32) + br_ref[...]
    o_ref[0] = out.astype(o_ref.dtype)


def _pick_token_tile(n, c, x_bytes, requested, vmem_budget):
  """Largest 128-multiple tile <= cap whose per-tile footprint fits budget."""
  if requested is not None:
    if requested % 8 != 0:
      raise ValueError(f"block_n={requested} must be a multiple of 8")
    return requested
  tn = min(_DEFAULT_TILE_CAP, _round_up(n, 128))
  # 5 tile-sized x/out buffers (Buffered(3) + double-buffered out) + ~9 f32
  # compiler temporaries per token-channel (kvq, p, exp, qsm, ...).
  while tn > 128 and tn * c * (5 * x_bytes + 9 * 4) > vmem_budget:
    tn -= 128
  return tn


def efficient_attention_forward(x, params, *, head_count=1, block_n=None,
                                compute_dtype=jnp.bfloat16, stash_q=None):
  """x: (B, H, W, D, C) -> (B, H, W, D, C).  Weights in math layout (in, out)."""
  B, H, W, D, C = x.shape
  N = H * W * D
  if C % head_count != 0:
    raise ValueError("dim must be divisible by head_count")
  hkc = C // head_count
  hvc = C // head_count
  cd = compute_dtype
  x_bytes = jnp.dtype(x.dtype).itemsize
  cd_bytes = jnp.dtype(cd).itemsize

  # VMEM budget: query physical capacity (v7x: 64 MiB; v5e/v6e: 128 MiB) and
  # stay well inside it.
  try:
    phys_vmem = int(pltpu.get_tpu_info().vmem_capacity_bytes)
    vmem_cap = min(int(0.70 * phys_vmem), 96 * 1024 * 1024)
  except Exception:
    vmem_cap = 48 * 1024 * 1024

  tn = _pick_token_tile(N, C, x_bytes, block_n, vmem_cap // 2)
  n_pad = _round_up(N, tn)
  num_t = n_pad // tn
  n_real = None if n_pad == N else N            # mask only when padded

  if stash_q is None:
    stash_q = n_pad * C * cd_bytes <= _STASH_BUDGET_BYTES

  x_flat = x.reshape(B, N, C)
  if n_pad != N:
    x_flat = jnp.pad(x_flat, ((0, 0), (0, n_pad - N), (0, 0)))

  # Fused projection weight [Wk | Wv | Wq]: one (TN,C)@(C,3C) matmul fills the
  # 256-wide MXU on v6e/v7x.  Biases fused likewise (kept f32).
  wkvq = jnp.concatenate([params["wk"], params["wv"], params["wq"]],
                         axis=1).astype(cd)                         # (C, 3C)
  bkvq = jnp.concatenate([params["bk"], params["bv"], params["bq"]]
                         ).reshape(1, 3 * C).astype(jnp.float32)
  wr = params["wr"].astype(cd)
  br = params["br"].reshape(1, C).astype(jnp.float32)

  kernel = partial(_efficient_attention_kernel, head_count=head_count,
                   hkc=hkc, hvc=hvc, compute_dtype=cd, tn=tn,
                   n_real=n_real, stash_q=stash_q)

  # x index map: walk tiles in phase 0; in stash mode pin the phase-1 block to
  # the LAST phase-0 tile so no phase-1 x DMA is ever issued (x read once).
  if stash_q:
    x_index = lambda b, s, t: (b, (1 - s) * t + s * (num_t - 1), 0)
  else:
    x_index = lambda b, s, t: (b, t, 0)

  scratch = [
      pltpu.VMEM((1, C), jnp.float32),                   # m: running max
      pltpu.VMEM((1, C), jnp.float32),                   # l: running sum
      pltpu.VMEM((head_count, hvc, hkc), jnp.float32),   # ctx (transposed)
      pltpu.VMEM((C, C), cd),                            # W' = ctx_norm @ Wr
  ]
  if stash_q:
    scratch.append(pltpu.VMEM((n_pad, C), cd))           # qsm stash

  vmem_est = (3 * tn * C * x_bytes                       # x tiles (Buffered(3))
              + 2 * tn * C * x_bytes                     # out tiles (2x buf)
              + 2 * 4 * C * C * cd_bytes                 # wkvq + wr (2x buf)
              + 8 * C * 4                                # biases
              + (2 * C + head_count * hkc * hvc) * 4     # m, l, ctx
              + C * C * cd_bytes                         # W'
              + (n_pad * C * cd_bytes if stash_q else 0)  # qsm stash
              + 9 * tn * C * 4)                          # compiler f32 temps
  vmem_limit = int(min(max(int(1.4 * vmem_est), 16 * 1024 * 1024), vmem_cap))

  cost = pl.CostEstimate(
      flops=int(10 * B * n_pad * C * C),
      transcendentals=int(3 * B * n_pad * C),
      bytes_accessed=int((2 if stash_q else 3) * B * n_pad * C * x_bytes
                         + 4 * C * C * cd_bytes))

  def _build(use_buffered):
    if use_buffered:
      x_spec = pl.BlockSpec((1, tn, C), x_index, pipeline_mode=pl.Buffered(3))
    else:
      x_spec = pl.BlockSpec((1, tn, C), x_index)
    return pl.pallas_call(
        kernel,
        out_shape=jax.ShapeDtypeStruct((B, n_pad, C), x.dtype),
        grid_spec=pltpu.PrefetchScalarGridSpec(
            num_scalar_prefetch=0,
            grid=(B, 2, num_t),
            in_specs=[
                x_spec,
                pl.BlockSpec((C, 3 * C), lambda b, s, t: (0, 0)),   # [Wk|Wv|Wq]
                pl.BlockSpec((C, C), lambda b, s, t: (0, 0)),       # Wr
                pl.BlockSpec((1, 3 * C), lambda b, s, t: (0, 0)),   # [bk|bv|bq]
                pl.BlockSpec((1, C), lambda b, s, t: (0, 0)),       # br
            ],
            # Output block pinned to tile 0 during phase 0 (no kernel write
            # and no block-index change => no garbage write-back), walks the
            # token tiles in phase 1.  Relies on Pallas writing an output
            # block back only when its block index changes.
            out_specs=pl.BlockSpec((1, tn, C), lambda b, s, t: (b, s * t, 0)),
            scratch_shapes=scratch),
        compiler_params=pltpu.CompilerParams(
            dimension_semantics=("parallel", "arbitrary", "arbitrary"),
            vmem_limit_bytes=vmem_limit),
        cost_estimate=cost,
    )

  try:
    out_flat = _build(True)(x_flat, wkvq, wr, bkvq, br)
  except Exception:
    # Graceful fallback if pipeline_mode=pl.Buffered is unavailable/rejected.
    out_flat = _build(False)(x_flat, wkvq, wr, bkvq, br)

  if n_pad != N:
    out_flat = out_flat[:, :N, :]
  return out_flat.reshape(B, H, W, D, C)


def _reference_forward(x, params, head_count):
  """Pure-JAX f32 reference mirroring the PyTorch EfficientAttention.forward."""
  prec = jax.lax.Precision.HIGHEST
  B, H, W, D, C = x.shape
  N = H * W * D
  xf = x.reshape(B, N, C).astype(jnp.float32)
  k = jnp.einsum("bnc,cd->bnd", xf, params["wk"], precision=prec) + params["bk"]
  q = jnp.einsum("bnc,cd->bnd", xf, params["wq"], precision=prec) + params["bq"]
  v = jnp.einsum("bnc,cd->bnd", xf, params["wv"], precision=prec) + params["bv"]
  hkc = C // head_count
  hvc = C // head_count
  heads = []
  for i in range(head_count):
    ks = jax.nn.softmax(k[:, :, i * hkc:(i + 1) * hkc], axis=1)  # over tokens
    qs = jax.nn.softmax(q[:, :, i * hkc:(i + 1) * hkc], axis=2)  # over channels
    vs = v[:, :, i * hvc:(i + 1) * hvc]
    ctx = jnp.einsum("bnc,bnv->bcv", ks, vs, precision=prec)     # (B, hkc, hvc)
    heads.append(jnp.einsum("bnc,bcv->bnv", qs, ctx, precision=prec))
  agg = jnp.concatenate(heads, axis=-1)                          # (B, N, C)
  out = jnp.einsum("bnv,vc->bnc", agg, params["wr"], precision=prec) + params["br"]
  return out.reshape(B, H, W, D, C)


def _make_params(key, dim):
  ks = jax.random.split(key, 8)
  s = dim ** -0.5
  return dict(
      wq=jax.random.normal(ks[0], (dim, dim), jnp.float32) * s,
      wk=jax.random.normal(ks[1], (dim, dim), jnp.float32) * s,
      wv=jax.random.normal(ks[2], (dim, dim), jnp.float32) * s,
      wr=jax.random.normal(ks[3], (dim, dim), jnp.float32) * s,
      bq=jax.random.normal(ks[4], (dim,), jnp.float32) * 0.1,
      bk=jax.random.normal(ks[5], (dim,), jnp.float32) * 0.1,
      bv=jax.random.normal(ks[6], (dim,), jnp.float32) * 0.1,
      br=jax.random.normal(ks[7], (dim,), jnp.float32) * 0.1,
  )


if __name__ == "__main__":
  key = jax.random.PRNGKey(0)
  # (B, (H, W, D), dim, heads, block_n, stash_q)
  cases = [
      (2, (8, 8, 8), 128, 2, None, None),   # single 512-token tile, q-stash
      (2, (8, 8, 8), 128, 2, 128, None),    # multi-tile online softmax, q-stash
      (2, (8, 8, 8), 128, 2, 128, False),   # two-pass streaming fallback
      (2, (7, 6, 5), 128, 1, None, None),   # ragged N=210 -> padded + masked
  ]
  for B, (H, W, D), dim, heads, block_n, stash in cases:
    kx, kp, key = jax.random.split(key, 3)
    x = jax.random.normal(kx, (B, H, W, D, dim), dtype=jnp.float32)
    params = _make_params(kp, dim)
    out = efficient_attention_forward(x, params, head_count=heads,
                                      block_n=block_n,
                                      compute_dtype=jnp.bfloat16,
                                      stash_q=stash)
    out = jax.block_until_ready(out)
    ref = _reference_forward(x, params, heads)
    assert out.shape == (B, H, W, D, dim)
    err = float(jnp.max(jnp.abs(out.astype(jnp.float32) - ref)))
    # bf16 MXU operands (f32 accumulation) -> loosened tolerance vs f32 ref.
    assert jnp.allclose(out.astype(jnp.float32), ref, atol=2e-2, rtol=2e-2), \
        f"mismatch (B={B}, HWD={(H, W, D)}, heads={heads}, block_n={block_n}, " \
        f"stash={stash}): max|err|={err}"
  print("KERNEL_OK")
</pallas_src>

<mosaic_0001>
module attributes {stable_mosaic.version = 11 : i64} {
  func.func @_efficient_attention_kernel(%arg0: i32, %arg1: i32, %arg2: i32, %arg3: memref<1x512x128xf32, #tpu.memory_space<vmem>>, %arg4: memref<128x384xbf16, #tpu.memory_space<vmem>>, %arg5: memref<128x128xbf16, #tpu.memory_space<vmem>>, %arg6: memref<1x384xf32, #tpu.memory_space<vmem>>, %arg7: memref<1x128xf32, #tpu.memory_space<vmem>>, %arg8: memref<1x512x128xf32, #tpu.memory_space<vmem>>, %arg9: memref<1x128xf32, #tpu.memory_space<vmem>>, %arg10: memref<1x128xf32, #tpu.memory_space<vmem>>, %arg11: memref<2x64x64xf32, #tpu.memory_space<vmem>>, %arg12: memref<128x128xbf16, #tpu.memory_space<vmem>>, %arg13: memref<512x128xbf16, #tpu.memory_space<vmem>>) attributes {dimension_semantics = [#tpu.dimension_semantics<parallel>, #tpu.dimension_semantics<arbitrary>, #tpu.dimension_semantics<arbitrary>], iteration_bounds = array<i64: 2, 2, 1>, scalar_prefetch = 0 : i64, scratch_operands = 5 : i64, tpu.core_type = #tpu.core_type<tc>, window_params = [{transform_indices = @transform_0, window_bounds = array<i64: 1, 512, 128>}, {pipeline_mode = #tpu.pipeline_mode<synchronous>, transform_indices = @transform_1, window_bounds = array<i64: 128, 384>}, {pipeline_mode = #tpu.pipeline_mode<synchronous>, transform_indices = @transform_2, window_bounds = array<i64: 128, 128>}, {pipeline_mode = #tpu.pipeline_mode<synchronous>, transform_indices = @transform_3, window_bounds = array<i64: 1, 384>}, {pipeline_mode = #tpu.pipeline_mode<synchronous>, transform_indices = @transform_4, window_bounds = array<i64: 1, 128>}, {transform_indices = @transform_5, window_bounds = array<i64: 1, 512, 128>}]} {
    %c0_i32 = arith.constant 0 : i32
    %0 = arith.cmpi eq, %arg1, %c0_i32 : i32
    %1 = arith.extui %0 : i1 to i32
    %c0_i32_0 = arith.constant 0 : i32
    %2 = arith.cmpi ne, %1, %c0_i32_0 : i32
    scf.if %2 {
      %c0 = arith.constant 0 : index
      %c0_2 = arith.constant 0 : index
      %c0_3 = arith.constant 0 : index
      %6 = vector.load %arg3[%c0, %c0_2, %c0_3] : memref<1x512x128xf32, #tpu.memory_space<vmem>>, vector<1x512x128xf32>
      %7 = vector.shape_cast %6 : vector<1x512x128xf32> to vector<512x128xf32>
      %8 = arith.truncf %7 : vector<512x128xf32> to vector<512x128xbf16>
      %c0_4 = arith.constant 0 : index
      %c0_5 = arith.constant 0 : index
      %9 = vector.load %arg4[%c0_4, %c0_5] : memref<128x384xbf16, #tpu.memory_space<vmem>>, vector<128x384xbf16>
      %cst = arith.constant dense<0.000000e+00> : vector<512x384xf32>
      %10 = tpu.matmul %8, %9, %cst {dimension_numbers = #tpu.dot_dimension_numbers<[1], [0], [0], [1], [0, 0, 1, 1], [], []>} : vector<512x128xbf16>, vector<128x384xbf16>, vector<512x384xf32> -> vector<512x384xf32>
      %c0_6 = arith.constant 0 : index
      %c0_7 = arith.constant 0 : index
      %11 = vector.load %arg6[%c0_6, %c0_7] : memref<1x384xf32, #tpu.memory_space<vmem>>, vector<1x384xf32>
      %12 = vector.broadcast %11 : vector<1x384xf32> to vector<512x384xf32>
      %13 = arith.addf %10, %12 : vector<512x384xf32>
      %14 = vector.extract_strided_slice %13 {offsets = [0, 0], sizes = [512, 128], strides = [1, 1]} : vector<512x384xf32> to vector<512x128xf32>
      %15 = vector.extract_strided_slice %13 {offsets = [0, 128], sizes = [512, 128], strides = [1, 1]} : vector<512x384xf32> to vector<512x128xf32>
      %c0_i32_8 = arith.constant 0 : i32
      %16 = arith.cmpi eq, %arg2, %c0_i32_8 : i32
      %17 = arith.extui %16 : i1 to i32
      %c0_i32_9 = arith.constant 0 : i32
      %18 = arith.cmpi ne, %17, %c0_i32_9 : i32
      scf.if %18 {
        %cst_39 = arith.constant 0xFF800000 : f32
        %90 = vector.broadcast %cst_39 : f32 to vector<1x128xf32>
        %c0_40 = arith.constant 0 : index
        %c0_41 = arith.constant 0 : index
        %91 = vector.load %arg9[%c0_40, %c0_41] : memref<1x128xf32, #tpu.memory_space<vmem>>, vector<1x128xf32>
        tpu.vector_store %arg9[%c0_40, %c0_41], %90 {strides = array<i32>} : memref<1x128xf32, #tpu.memory_space<vmem>>, vector<1x128xf32>,
        %cst_42 = arith.constant 0.000000e+00 : f32
        %92 = vector.broadcast %cst_42 : f32 to vector<1x128xf32>
        %c0_43 = arith.constant 0 : index
        %c0_44 = arith.constant 0 : index
        %93 = vector.load %arg10[%c0_43, %c0_44] : memref<1x128xf32, #tpu.memory_space<vmem>>, vector<1x128xf32>
        tpu.vector_store %arg10[%c0_43, %c0_44], %92 {strides = array<i32>} : memref<1x128xf32, #tpu.memory_space<vmem>>, vector<1x128xf32>,
        %cst_45 = arith.constant 0.000000e+00 : f32
        %94 = vector.broadcast %cst_45 : f32 to vector<2x64x64xf32>
        %c0_46 = arith.constant 0 : index
        %c0_47 = arith.constant 0 : index
        %c0_48 = arith.constant 0 : index
        %95 = vector.load %arg11[%c0_46, %c0_47, %c0_48] : memref<2x64x64xf32, #tpu.memory_space<vmem>>, vector<2x64x64xf32>
        tpu.vector_store %arg11[%c0_46, %c0_47, %c0_48], %94 {strides = array<i32>} : memref<2x64x64xf32, #tpu.memory_space<vmem>>, vector<2x64x64xf32>,
      } else {
      }
      %c0_10 = arith.constant 0 : index
      %c0_11 = arith.constant 0 : index
      %19 = vector.load %arg9[%c0_10, %c0_11] : memref<1x128xf32, #tpu.memory_space<vmem>>, vector<1x128xf32>
      %cst_12 = arith.constant dense<0xFF800000> : vector<128xf32>
      %20 = vector.multi_reduction <maximumf>, %14, %cst_12 [0] : vector<512x128xf32> to vector<128xf32>
      %21 = vector.shape_cast %20 : vector<128xf32> to vector<1x128xf32>
      %22 = arith.maximumf %19, %21 : vector<1x128xf32>
      %23 = arith.subf %19, %22 : vector<1x128xf32>
      %24 = math.exp %23 : vector<1x128xf32>
      %25 = vector.broadcast %22 : vector<1x128xf32> to vector<512x128xf32>
      %26 = arith.subf %14, %25 : vector<512x128xf32>
      %27 = math.exp %26 : vector<512x128xf32>
      %c0_13 = arith.constant 0 : index
      %c0_14 = arith.constant 0 : index
      %28 = vector.load %arg10[%c0_13, %c0_14] : memref<1x128xf32, #tpu.memory_space<vmem>>, vector<1x128xf32>
      %29 = arith.mulf %24, %28 : vector<1x128xf32>
      %cst_15 = arith.constant dense<0.000000e+00> : vector<128xf32>
      %30 = vector.multi_reduction <add>, %27, %cst_15 [0] : vector<512x128xf32> to vector<128xf32>
      %31 = vector.shape_cast %30 : vector<128xf32> to vector<1x128xf32>
      %32 = arith.addf %29, %31 : vector<1x128xf32>
      %c0_16 = arith.constant 0 : index
      %c0_17 = arith.constant 0 : index
      %33 = vector.load %arg10[%c0_16, %c0_17] : memref<1x128xf32, #tpu.memory_space<vmem>>, vector<1x128xf32>
      tpu.vector_store %arg10[%c0_16, %c0_17], %32 {strides = array<i32>} : memref<1x128xf32, #tpu.memory_space<vmem>>, vector<1x128xf32>,
      %c0_18 = arith.constant 0 : index
      %c0_19 = arith.constant 0 : index
      %34 = vector.load %arg9[%c0_18, %c0_19] : memref<1x128xf32, #tpu.memory_space<vmem>>, vector<1x128xf32>
      tpu.vector_store %arg9[%c0_18, %c0_19], %22 {strides = array<i32>} : memref<1x128xf32, #tpu.memory_space<vmem>>, vector<1x128xf32>,
      %35 = arith.truncf %15 : vector<512x128xf32> to vector<512x128xbf16>
      %36 = arith.truncf %27 : vector<512x128xf32> to vector<512x128xbf16>
      %cst_20 = arith.constant dense<0.000000e+00> : vector<128x128xf32>
      %37 = tpu.matmul %35, %36, %cst_20 {dimension_numbers = #tpu.dot_dimension_numbers<[0], [0], [1], [1], [0, 1, 1, 1], [], []>} : vector<512x128xbf16>, vector<512x128xbf16>, vector<128x128xf32> -> vector<128x128xf32>
      %38 = vector.extract_strided_slice %24 {offsets = [0, 0], sizes = [1, 64], strides = [1, 1]} : vector<1x128xf32> to vector<1x64xf32>
      %c0_21 = arith.constant 0 : index
      %c0_22 = arith.constant 0 : index
      %c0_23 = arith.constant 0 : index
      %39 = vector.load %arg11[%c0_21, %c0_22, %c0_23] : memref<2x64x64xf32, #tpu.memory_space<vmem>>, vector<1x64x64xf32>
      %40 = vector.shape_cast %39 : vector<1x64x64xf32> to vector<64x64xf32>
      %41 = vector.broadcast %38 : vector<1x64xf32> to vector<64x64xf32>
      %42 = arith.mulf %41, %40 : vector<64x64xf32>
      %43 = vector.extract_strided_slice %37 {offsets = [0, 0], sizes = [64, 64], strides = [1, 1]} : vector<128x128xf32> to vector<64x64xf32>
      %44 = arith.addf %42, %43 : vector<64x64xf32>
      %c0_24 = arith.constant 0 : index
      %c0_25 = arith.constant 0 : index
      %c0_26 = arith.constant 0 : index
      %45 = vector.load %arg11[%c0_24, %c0_25, %c0_26] : memref<2x64x64xf32, #tpu.memory_space<vmem>>, vector<1x64x64xf32>
      %46 = vector.shape_cast %45 : vector<1x64x64xf32> to vector<64x64xf32>
      %47 = vector.shape_cast %44 : vector<64x64xf32> to vector<1x64x64xf32>
      tpu.vector_store %arg11[%c0_24, %c0_25, %c0_26], %47 {strides = array<i32>} : memref<2x64x64xf32, #tpu.memory_space<vmem>>, vector<1x64x64xf32>,
      %48 = vector.extract_strided_slice %24 {offsets = [0, 64], sizes = [1, 64], strides = [1, 1]} : vector<1x128xf32> to vector<1x64xf32>
      %c1 = arith.constant 1 : index
      %c0_27 = arith.constant 0 : index
      %c0_28 = arith.constant 0 : index
      %49 = vector.load %arg11[%c1, %c0_27, %c0_28] : memref<2x64x64xf32, #tpu.memory_space<vmem>>, vector<1x64x64xf32>
      %50 = vector.shape_cast %49 : vector<1x64x64xf32> to vector<64x64xf32>
      %51 = vector.broadcast %48 : vector<1x64xf32> to vector<64x64xf32>
      %52 = arith.mulf %51, %50 : vector<64x64xf32>
      %53 = vector.extract_strided_slice %37 {offsets = [64, 64], sizes = [64, 64], strides = [1, 1]} : vector<128x128xf32> to vector<64x64xf32>
      %54 = arith.addf %52, %53 : vector<64x64xf32>
      %c1_29 = arith.constant 1 : index
      %c0_30 = arith.constant 0 : index
      %c0_31 = arith.constant 0 : index
      %55 = vector.load %arg11[%c1_29, %c0_30, %c0_31] : memref<2x64x64xf32, #tpu.memory_space<vmem>>, vector<1x64x64xf32>
      %56 = vector.shape_cast %55 : vector<1x64x64xf32> to vector<64x64xf32>
      %57 = vector.shape_cast %54 : vector<64x64xf32> to vector<1x64x64xf32>
      tpu.vector_store %arg11[%c1_29, %c0_30, %c0_31], %57 {strides = array<i32>} : memref<2x64x64xf32, #tpu.memory_space<vmem>>, vector<1x64x64xf32>,
      %58 = vector.extract_strided_slice %13 {offsets = [0, 256], sizes = [512, 128], strides = [1, 1]} : vector<512x384xf32> to vector<512x128xf32>
      %59 = vector.extract_strided_slice %58 {offsets = [0, 0], sizes = [512, 64], strides = [1, 1]} : vector<512x128xf32> to vector<512x64xf32>
      %cst_32 = arith.constant dense<0xFF800000> : vector<512xf32>
      %60 = vector.multi_reduction <maximumf>, %59, %cst_32 [1] : vector<512x64xf32> to vector<512xf32>
      %61 = vector.shape_cast %60 : vector<512xf32> to vector<512x1xf32>
      %62 = vector.broadcast %61 : vector<512x1xf32> to vector<512x64xf32>
      %63 = arith.subf %59, %62 : vector<512x64xf32>
      %64 = math.exp %63 : vector<512x64xf32>
      %cst_33 = arith.constant dense<0.000000e+00> : vector<512xf32>
      %65 = vector.multi_reduction <add>, %64, %cst_33 [1] : vector<512x64xf32> to vector<512xf32>
      %66 = vector.shape_cast %65 : vector<512xf32> to vector<512x1xf32>
      %67 = tpu.reciprocal %66 : vector<512x1xf32> -> vector<512x1xf32>
      %68 = vector.broadcast %67 : vector<512x1xf32> to vector<512x64xf32>
      %69 = arith.mulf %64, %68 : vector<512x64xf32>
      %70 = vector.extract_strided_slice %58 {offsets = [0, 64], sizes = [512, 64], strides = [1, 1]} : vector<512x128xf32> to vector<512x64xf32>
      %cst_34 = arith.constant dense<0xFF800000> : vector<512xf32>
      %71 = vector.multi_reduction <maximumf>, %70, %cst_34 [1] : vector<512x64xf32> to vector<512xf32>
      %72 = vector.shape_cast %71 : vector<512xf32> to vector<512x1xf32>
      %73 = vector.broadcast %72 : vector<512x1xf32> to vector<512x64xf32>
      %74 = arith.subf %70, %73 : vector<512x64xf32>
      %75 = math.exp %74 : vector<512x64xf32>
      %cst_35 = arith.constant dense<0.000000e+00> : vector<512xf32>
      %76 = vector.multi_reduction <add>, %75, %cst_35 [1] : vector<512x64xf32> to vector<512xf32>
      %77 = vector.shape_cast %76 : vector<512xf32> to vector<512x1xf32>
      %78 = tpu.reciprocal %77 : vector<512x1xf32> -> vector<512x1xf32>
      %79 = vector.broadcast %78 : vector<512x1xf32> to vector<512x64xf32>
      %80 = arith.mulf %75, %79 : vector<512x64xf32>
      %81 = tpu.concatenate %69, %80 in 1 : vector<512x64xf32>, vector<512x64xf32> -> vector<512x128xf32>
      %82 = arith.truncf %81 : vector<512x128xf32> to vector<512x128xbf16>
      %c512_i32 = arith.constant 512 : i32
      %83 = arith.muli %arg2, %c512_i32 : i32
      %84 = tpu.assume_multiple %83, 512 : i32
      %85 = arith.index_cast %84 : i32 to index
      %c0_36 = arith.constant 0 : index
      %86 = vector.load %arg13[%85, %c0_36] : memref<512x128xbf16, #tpu.memory_space<vmem>>, vector<512x128xbf16>
      tpu.vector_store %arg13[%85, %c0_36], %82 {strides = array<i32>} : memref<512x128xbf16, #tpu.memory_space<vmem>>, vector<512x128xbf16>,
      %c0_i32_37 = arith.constant 0 : i32
      %87 = arith.cmpi eq, %arg2, %c0_i32_37 : i32
      %88 = arith.extui %87 : i1 to i32
      %c0_i32_38 = arith.constant 0 : i32
      %89 = arith.cmpi ne, %88, %c0_i32_38 : i32
      scf.if %89 {
        %c0_39 = arith.constant 0 : index
        %c0_40 = arith.constant 0 : index
        %90 = vector.load %arg10[%c0_39, %c0_40] : memref<1x128xf32, #tpu.memory_space<vmem>>, vector<1x128xf32>
        %91 = tpu.reciprocal %90 : vector<1x128xf32> -> vector<1x128xf32>
        %c0_41 = arith.constant 0 : index
        %c0_42 = arith.constant 0 : index
        %c0_43 = arith.constant 0 : index
        %92 = vector.load %arg11[%c0_41, %c0_42, %c0_43] : memref<2x64x64xf32, #tpu.memory_space<vmem>>, vector<1x64x64xf32>
        %93 = vector.shape_cast %92 : vector<1x64x64xf32> to vector<64x64xf32>
        %94 = vector.extract_strided_slice %91 {offsets = [0, 0], sizes = [1, 64], strides = [1, 1]} : vector<1x128xf32> to vector<1x64xf32>
        %95 = vector.broadcast %94 : vector<1x64xf32> to vector<64x64xf32>
        %96 = arith.mulf %93, %95 : vector<64x64xf32>
        %97 = arith.truncf %96 : vector<64x64xf32> to vector<64x64xbf16>
        %c0_44 = arith.constant 0 : index
        %c0_45 = arith.constant 0 : index
        %98 = vector.load %arg5[%c0_44, %c0_45] : memref<128x128xbf16, #tpu.memory_space<vmem>>, vector<64x128xbf16>
        %cst_46 = arith.constant dense<0.000000e+00> : vector<64x128xf32>
        %99 = tpu.matmul %97, %98, %cst_46 {dimension_numbers = #tpu.dot_dimension_numbers<[0], [0], [1], [1], [0, 1, 1, 1], [], []>} : vector<64x64xbf16>, vector<64x128xbf16>, vector<64x128xf32> -> vector<64x128xf32>
        %100 = arith.truncf %99 : vector<64x128xf32> to vector<64x128xbf16>
        %c0_47 = arith.constant 0 : index
        %c0_48 = arith.constant 0 : index
        %101 = vector.load %arg12[%c0_47, %c0_48] : memref<128x128xbf16, #tpu.memory_space<vmem>>, vector<64x128xbf16>
        tpu.vector_store %arg12[%c0_47, %c0_48], %100 {strides = array<i32>} : memref<128x128xbf16, #tpu.memory_space<vmem>>, vector<64x128xbf16>,
        %c1_49 = arith.constant 1 : index
        %c0_50 = arith.constant 0 : index
        %c0_51 = arith.constant 0 : index
        %102 = vector.load %arg11[%c1_49, %c0_50, %c0_51] : memref<2x64x64xf32, #tpu.memory_space<vmem>>, vector<1x64x64xf32>
        %103 = vector.shape_cast %102 : vector<1x64x64xf32> to vector<64x64xf32>
        %104 = vector.extract_strided_slice %91 {offsets = [0, 64], sizes = [1, 64], strides = [1, 1]} : vector<1x128xf32> to vector<1x64xf32>
        %105 = vector.broadcast %104 : vector<1x64xf32> to vector<64x64xf32>
        %106 = arith.mulf %103, %105 : vector<64x64xf32>
        %107 = arith.truncf %106 : vector<64x64xf32> to vector<64x64xbf16>
        %c64 = arith.constant 64 : index
        %c0_52 = arith.constant 0 : index
        %108 = vector.load %arg5[%c64, %c0_52] : memref<128x128xbf16, #tpu.memory_space<vmem>>, vector<64x128xbf16>
        %cst_53 = arith.constant dense<0.000000e+00> : vector<64x128xf32>
        %109 = tpu.matmul %107, %108, %cst_53 {dimension_numbers = #tpu.dot_dimension_numbers<[0], [0], [1], [1], [0, 1, 1, 1], [], []>} : vector<64x64xbf16>, vector<64x128xbf16>, vector<64x128xf32> -> vector<64x128xf32>
        %110 = arith.truncf %109 : vector<64x128xf32> to vector<64x128xbf16>
        %c64_54 = arith.constant 64 : index
        %c0_55 = arith.constant 0 : index
        %111 = vector.load %arg12[%c64_54, %c0_55] : memref<128x128xbf16, #tpu.memory_space<vmem>>, vector<64x128xbf16>
        tpu.vector_store %arg12[%c64_54, %c0_55], %110 {strides = array<i32>} : memref<128x128xbf16, #tpu.memory_space<vmem>>, vector<64x128xbf16>,
      } else {
      }
    } else {
    }
    %c1_i32 = arith.constant 1 : i32
    %3 = arith.cmpi eq, %arg1, %c1_i32 : i32
    %4 = arith.extui %3 : i1 to i32
    %c0_i32_1 = arith.constant 0 : i32
    %5 = arith.cmpi ne, %4, %c0_i32_1 : i32
    scf.if %5 {
      %c512_i32 = arith.constant 512 : i32
      %6 = arith.muli %arg2, %c512_i32 : i32
      %7 = tpu.assume_multiple %6, 512 : i32
      %8 = arith.index_cast %7 : i32 to index
      %c0 = arith.constant 0 : index
      %9 = vector.load %arg13[%8, %c0] : memref<512x128xbf16, #tpu.memory_space<vmem>>, vector<512x128xbf16>
      %c0_2 = arith.constant 0 : index
      %c0_3 = arith.constant 0 : index
      %10 = vector.load %arg12[%c0_2, %c0_3] : memref<128x128xbf16, #tpu.memory_space<vmem>>, vector<128x128xbf16>
      %cst = arith.constant dense<0.000000e+00> : vector<512x128xf32>
      %11 = tpu.matmul %9, %10, %cst {dimension_numbers = #tpu.dot_dimension_numbers<[1], [0], [0], [1], [0, 0, 1, 1], [], []>} : vector<512x128xbf16>, vector<128x128xbf16>, vector<512x128xf32> -> vector<512x128xf32>
      %c0_4 = arith.constant 0 : index
      %c0_5 = arith.constant 0 : index
      %12 = vector.load %arg7[%c0_4, %c0_5] : memref<1x128xf32, #tpu.memory_space<vmem>>, vector<1x128xf32>
      %13 = vector.broadcast %12 : vector<1x128xf32> to vector<512x128xf32>
      %14 = arith.addf %11, %13 : vector<512x128xf32>
      %c0_6 = arith.constant 0 : index
      %c0_7 = arith.constant 0 : index
      %c0_8 = arith.constant 0 : index
      %15 = vector.load %arg8[%c0_6, %c0_7, %c0_8] : memref<1x512x128xf32, #tpu.memory_space<vmem>>, vector<1x512x128xf32>
      %16 = vector.shape_cast %15 : vector<1x512x128xf32> to vector<512x128xf32>
      %17 = vector.shape_cast %14 : vector<512x128xf32> to vector<1x512x128xf32>
      tpu.vector_store %arg8[%c0_6, %c0_7, %c0_8], %17 {strides = array<i32>} : memref<1x512x128xf32, #tpu.memory_space<vmem>>, vector<1x512x128xf32>,
    } else {
    }
    return
  }
  func.func @transform_0(%arg0: i32, %arg1: i32, %arg2: i32) -> (i32, i32, i32) {
    %c1_i32 = arith.constant 1 : i32
    %0 = arith.subi %c1_i32, %arg1 : i32
    %1 = arith.muli %0, %arg2 : i32
    %c0_i32 = arith.constant 0 : i32
    %2 = arith.muli %arg1, %c0_i32 : i32
    %3 = arith.addi %1, %2 : i32
    %c0_i32_0 = arith.constant 0 : i32
    %c0_i32_1 = arith.constant 0 : i32
    return %arg0, %3, %c0_i32_0 : i32, i32, i32
  }
  func.func @transform_1(%arg0: i32, %arg1: i32, %arg2: i32) -> (i32, i32) {
    %c0_i32 = arith.constant 0 : i32
    %c0_i32_0 = arith.constant 0 : i32
    %c0_i32_1 = arith.constant 0 : i32
    return %c0_i32, %c0_i32_0 : i32, i32
  }
  func.func @transform_2(%arg0: i32, %arg1: i32, %arg2: i32) -> (i32, i32) {
    %c0_i32 = arith.constant 0 : i32
    %c0_i32_0 = arith.constant 0 : i32
    %c0_i32_1 = arith.constant 0 : i32
    return %c0_i32, %c0_i32_0 : i32, i32
  }
  func.func @transform_3(%arg0: i32, %arg1: i32, %arg2: i32) -> (i32, i32) {
    %c0_i32 = arith.constant 0 : i32
    %c0_i32_0 = arith.constant 0 : i32
    %c0_i32_1 = arith.constant 0 : i32
    return %c0_i32, %c0_i32_0 : i32, i32
  }
  func.func @transform_4(%arg0: i32, %arg1: i32, %arg2: i32) -> (i32, i32) {
    %c0_i32 = arith.constant 0 : i32
    %c0_i32_0 = arith.constant 0 : i32
    %c0_i32_1 = arith.constant 0 : i32
    return %c0_i32, %c0_i32_0 : i32, i32
  }
  func.func @transform_5(%arg0: i32, %arg1: i32, %arg2: i32) -> (i32, i32, i32) {
    %0 = arith.muli %arg1, %arg2 : i32
    %c0_i32 = arith.constant 0 : i32
    %c0_i32_0 = arith.constant 0 : i32
    return %arg0, %0, %c0_i32 : i32, i32, i32
  }
}

</mosaic_0001>

<llo_original>
// kernel: tpu_custom_call.1
$region0: #{tpu_custom_call.1}
  #allocation0 [shape = 'u32[]', space=smem, size = 0x4, offset = 0x4, fixed_abs, tag = 'smem constant byte address 0x4 - core index']
  #allocation1 [shape = 'u32[72,128]{1,0:T(1,128)}', space=vmem, size = 0x9000, scoped, tag = 'internal scratch']
  #allocation2 [shape = 'f32[1,128]{1,0:T(1,128)}', space=vmem, size = 0x200, scoped, tag = 'scratch operand']
  #allocation3 [shape = 'f32[1,128]{1,0:T(1,128)}', space=vmem, size = 0x200, scoped, tag = 'scratch operand']
  #allocation4 [shape = 'f32[2,64,64]{2,1,0:T(8,128)}', space=vmem, size = 0x10000, scoped, tag = 'scratch operand']
  #allocation5 [shape = 'bf16[128,128]{1,0:T(8,128)(2,1)}', space=vmem, size = 0x8000, scoped, tag = 'scratch operand']
  #allocation6 [shape = 'bf16[512,128]{1,0:T(8,128)(2,1)}', space=vmem, size = 0x20000, scoped, tag = 'scratch operand']
  %s0 = inlined_call_operand.hbm [shape: f32[2,512,128], index: 0, kind: input, shape index: {}]
  %s1 = inlined_call_operand.hbm [shape: bf16[128,384], index: 1, kind: input, shape index: {}]
  %s2 = inlined_call_operand.hbm [shape: bf16[128,128], index: 2, kind: input, shape index: {}]
  %s3 = inlined_call_operand.hbm [shape: f32[1,384], index: 3, kind: input, shape index: {}]
  %s4 = inlined_call_operand.vmem [shape: f32[1,128], index: 4, kind: input, shape index: {}]
  %s5 = inlined_call_operand.hbm [shape: f32[2,512,128], index: 5, kind: output, shape index: {}]
  %s6 = sld [smem:[#allocation0]]
  $region85: #{tpu_custom_call.1} parent=0
    _
  %s8 = ssub.s32 1, %s6
  %s9 = scalar_select 0, %s8, %s6
  $region1: #{tpu_custom_call.1} parent=0
    #allocation7 [shape = 'u8[524288]{0}', space=vmem, size = 0x80000, scoped, tag = 'input window, operand 0']
    #allocation8 [shape = 's32[2]{0}', space=sflag, size = 0x8, scoped, tag = 'scoped memory for tpu_custom_call.1']
    #allocation9 [shape = 's32[2]{0}', space=sflag, size = 0x8, scoped, tag = 'scoped memory for tpu_custom_call.1']
    #allocation10 [shape = 'u8[98304]{0}', space=vmem, size = 0x18000, scoped, tag = 'input window, operand 1, single buffered']
    #allocation11 [shape = 's32[1]{0}', space=sflag, size = 0x4, scoped, tag = 'scoped memory for tpu_custom_call.1']
    #allocation12 [shape = 'u8[32768]{0}', space=vmem, size = 0x8000, scoped, tag = 'input window, operand 2, single buffered']
    #allocation13 [shape = 'u8[1536]{0}', space=vmem, size = 0x800, scoped, tag = 'input window, operand 3, single buffered']
    #allocation14 [shape = 's32[1]{0}', space=sflag, size = 0x4, scoped, tag = 'scoped memory for tpu_custom_call.1']
    #allocation15 [shape = 'u8[524288]{0}', space=vmem, size = 0x80000, scoped, tag = 'output window, operand 0']
    %10 = vsyncpa [#allocation8], 0
    %s11 = scalar_lea.sflag [#allocation8], 1
    %12 = vsyncpa %s11, 0
    %13 = vsyncpa [#allocation11], 0
    %14 = vsyncpa [#allocation14], 0
    %15 = vsyncpa [#allocation9], 0
    %s16 = scalar_lea.sflag [#allocation9], 1
    %17 = vsyncpa %s16, 0
    loop: start=0, step=1, limit=6
    $region2: #{tpu_custom_call.1} parent=1 // loop_pre_header
      _
    $region3: #{tpu_custom_call.1} parent=1 // loop_header
      %s19 = sphi 0, %s23
      %p20 = scmp.ge.s32.totalorder %s19, 6
      %s26 = sphi 0, %s45
      %s27 = sphi 0, %s41
      %s28 = sphi 0, %s37
      %s29 = sphi 0, %s26
      %s30 = sphi 0, %s27
      %s31 = sphi 0, %s28
      %s32 = sphi 0, %s29
      %s33 = sphi 0, %s30
      %s34 = sphi 0, %s31
      %s54 = sphi 0, %s56
      %s57 = sphi 0, %s54
      %s58 = sphi 0, %s57
      %s74 = sphi 0, %s58
      %s78 = sphi 0, %s78
      %s80 = sphi 0, %s78
      %s81 = sphi 0, %s80
      %s95 = sphi 0, %s81
      %s99 = sphi 0, %s99
      %s101 = sphi 0, %s99
      %s102 = sphi 0, %s101
      %s116 = sphi 0, %s102
      %s120 = sphi 0, %s120
      %s122 = sphi 0, %s120
      %s123 = sphi 0, %s122
      %s137 = sphi 0, %s123
      %s141 = sphi 0, %s141
      %s143 = sphi 0, %s141
      %s144 = sphi 0, %s143
      %s158 = sphi 0, %s144
      %s168 = sphi 0, %s170
      %s171 = sphi 0, %s168
      %s172 = sphi 0, %s171
      %s188 = sphi 0, %s172
    $region4: #{tpu_custom_call.1} parent=1 // loop_header_branch
      %22 = sbr.rel (%p20) target = $region8
    $region5: #{tpu_custom_call.1} parent=1 // loop_body
      %s24 = ssub.s32 %s19, 1
      %s25 = ssub.s32 %s19, 2
      %s35 = sadd.s32 1, %s28
      %p36 = scmp.ge.s32.totalorder %s35, 1
      %s37 = scalar_select %p36, 0, %s35
      %s38 = sadd.s32 1, %s27
      %s39 = scalar_select %p36, %s38, %s27
      %p40 = scmp.ge.s32.totalorder %s39, 2
      %s41 = scalar_select %p40, 0, %s39
      %s42 = sadd.s32 1, %s26
      %s43 = scalar_select %p40, %s42, %s26
      %p44 = scmp.ge.s32.totalorder %s43, 2
      %s45 = scalar_select %p44, 0, %s43
      %s46 = ssub.s32 1, %s27
      %s47 = smul.u32 %s46, %s28
      %s48 = ssub.s32 1, %s41
      %s49 = smul.u32 %s48, %s37
      %s50 = ssub.s32 %s26, %s45
      %s51 = ssub.s32 %s47, %s49
      %s52 = sor.u32 %s50, %s51
      %p53 = scmp.eq.s32.totalorder %s52, 0
      %s55 = sadd.s32 %s54, 1
      %s56 = scalar_select %p53, %s54, %s55
      %p59 = pneg %p53
      %p60 = scmp.eq.s32.totalorder %s19, 3
      %p61 = por %p59, %p60
      %p62 = scmp.ne.s32.totalorder %s54, %s57
      %p63 = scmp.eq.s32.totalorder %s19, 0
      %p64 = por %p62, %p63
      %p65 = scmp.ne.s32.totalorder %s54, %s57
      %p66 = scmp.eq.s32.totalorder %s24, 3
      %p67 = por %p65, %p66
      %p68 = scmp.ne.s32.totalorder %s57, %s58
      %p69 = scmp.eq.s32.totalorder %s24, 0
      %p70 = por %p68, %p69
      %p71 = scmp.ne.s32.totalorder %s57, %s58
      %p72 = scmp.eq.s32.totalorder %s25, 3
      %p73 = por %p71, %p72
      %p75 = scmp.ne.s32.totalorder %s58, %s74
      %p76 = scmp.eq.s32.totalorder %s25, 0
      %p77 = por %p75, %p76
      %s79 = sadd.s32 %s78, 1
      %p82 = scmp.eq.s32.totalorder %s19, 3
      %p83 = scmp.ne.s32.totalorder %s78, %s80
      %p84 = scmp.eq.s32.totalorder %s19, 0
      %p85 = por %p83, %p84
      %p86 = scmp.ne.s32.totalorder %s78, %s80
      %p87 = scmp.eq.s32.totalorder %s24, 3
      %p88 = por %p86, %p87
      %p89 = scmp.ne.s32.totalorder %s80, %s81
      %p90 = scmp.eq.s32.totalorder %s24, 0
      %p91 = por %p89, %p90
      %p92 = scmp.ne.s32.totalorder %s80, %s81
      %p93 = scmp.eq.s32.totalorder %s25, 3
      %p94 = por %p92, %p93
      %p96 = scmp.ne.s32.totalorder %s81, %s95
      %p97 = scmp.eq.s32.totalorder %s25, 0
      %p98 = por %p96, %p97
      %s100 = sadd.s32 %s99, 1
      %p103 = scmp.eq.s32.totalorder %s19, 3
      %p104 = scmp.ne.s32.totalorder %s99, %s101
      %p105 = scmp.eq.s32.totalorder %s19, 0
      %p106 = por %p104, %p105
      %p107 = scmp.ne.s32.totalorder %s99, %s101
      %p108 = scmp.eq.s32.totalorder %s24, 3
      %p109 = por %p107, %p108
      %p110 = scmp.ne.s32.totalorder %s101, %s102
      %p111 = scmp.eq.s32.totalorder %s24, 0
      %p112 = por %p110, %p111
      %p113 = scmp.ne.s32.totalorder %s101, %s102
      %p114 = scmp.eq.s32.totalorder %s25, 3
      %p115 = por %p113, %p114
      %p117 = scmp.ne.s32.totalorder %s102, %s116
      %p118 = scmp.eq.s32.totalorder %s25, 0
      %p119 = por %p117, %p118
      %s121 = sadd.s32 %s120, 1
      %p124 = scmp.eq.s32.totalorder %s19, 3
      %p125 = scmp.ne.s32.totalorder %s120, %s122
      %p126 = scmp.eq.s32.totalorder %s19, 0
      %p127 = por %p125, %p126
      %p128 = scmp.ne.s32.totalorder %s120, %s122
      %p129 = scmp.eq.s32.totalorder %s24, 3
      %p130 = por %p128, %p129
      %p131 = scmp.ne.s32.totalorder %s122, %s123
      %p132 = scmp.eq.s32.totalorder %s24, 0
      %p133 = por %p131, %p132
      %p134 = scmp.ne.s32.totalorder %s122, %s123
      %p135 = scmp.eq.s32.totalorder %s25, 3
      %p136 = por %p134, %p135
      %p138 = scmp.ne.s32.totalorder %s123, %s137
      %p139 = scmp.eq.s32.totalorder %s25, 0
      %p140 = por %p138, %p139
      %s142 = sadd.s32 %s141, 1
      %p145 = scmp.eq.s32.totalorder %s19, 3
      %p146 = scmp.ne.s32.totalorder %s141, %s143
      %p147 = scmp.eq.s32.totalorder %s19, 0
      %p148 = por %p146, %p147
      %p149 = scmp.ne.s32.totalorder %s141, %s143
      %p150 = scmp.eq.s32.totalorder %s24, 3
      %p151 = por %p149, %p150
      %p152 = scmp.ne.s32.totalorder %s143, %s144
      %p153 = scmp.eq.s32.totalorder %s24, 0
      %p154 = por %p152, %p153
      %p155 = scmp.ne.s32.totalorder %s143, %s144
      %p156 = scmp.eq.s32.totalorder %s25, 3
      %p157 = por %p155, %p156
      %p159 = scmp.ne.s32.totalorder %s144, %s158
      %p160 = scmp.eq.s32.totalorder %s25, 0
      %p161 = por %p159, %p160
      %s162 = smul.u32 %s27, %s28
      %s163 = smul.u32 %s41, %s37
      %s164 = ssub.s32 %s26, %s45
      %s165 = ssub.s32 %s162, %s163
      %s166 = sor.u32 %s164, %s165
      %p167 = scmp.eq.s32.totalorder %s166, 0
      %s169 = sadd.s32 %s168, 1
      %s170 = scalar_select %p167, %s168, %s169
      %p173 = pneg %p167
      %p174 = scmp.eq.s32.totalorder %s19, 3
      %p175 = por %p173, %p174
      %p176 = scmp.ne.s32.totalorder %s168, %s171
      %p177 = scmp.eq.s32.totalorder %s19, 0
      %p178 = por %p176, %p177
      %p179 = scmp.ne.s32.totalorder %s168, %s171
      %p180 = scmp.eq.s32.totalorder %s24, 3
      %p181 = por %p179, %p180
      %p182 = scmp.ne.s32.totalorder %s171, %s172
      %p183 = scmp.eq.s32.totalorder %s24, 0
      %p184 = por %p182, %p183
      %p185 = scmp.ne.s32.totalorder %s171, %s172
      %p186 = scmp.eq.s32.totalorder %s25, 3
      %p187 = por %p185, %p186
      %p189 = scmp.ne.s32.totalorder %s172, %s188
      %p190 = scmp.eq.s32.totalorder %s25, 0
      %p191 = por %p189, %p190
      %p192 = scmp.le.s32.totalorder 1, %s19
      %p193 = scmp.lt.s32.totalorder %s19, 5
      %p194 = pnand %p192, %p193
      %p195 = pneg %p194
      // Predicated region
      $region9: #{tpu_custom_call.1} parent=5 // pred_check
        _
      $region10: #{tpu_custom_call.1} parent=5 // pred_check_branch
        %197 = sbr.rel (%p194) target = $region12
      $region11: #{tpu_custom_call.1} parent=5 // pred_region
        %s198 = ssub.s32 %s19, 1
        // Predicated region
        $region13: #{tpu_custom_call.1} parent=11 // pred_check
          %p199 = pneg %p91
        $region14: #{tpu_custom_call.1} parent=11 // pred_check_branch
          %201 = sbr.rel (%p199) target = $region16
        $region15: #{tpu_custom_call.1} parent=11 // pred_region
          %203 = vsyncadd [#allocation11], 0
          %s204 = sshll.u32 %s1, 4
          %s205 = int_to_ptr.hbm [resolvable:$true] %s204
          %s206 = sshll.u32 [#allocation10], 4
          %s207 = int_to_ptr.vmem [resolvable:$true] %s206
          %212 = dma.hbm_to_vmem [thread:$0]  %s205, 3072, %s207, [#allocation11], 192, 192, 12
        $region16: #{tpu_custom_call.1} parent=11 // pred_fallthru
          _
        // Predicated region
        $region17: #{tpu_custom_call.1} parent=11 // pred_check
          %p213 = pneg %p112
        $region18: #{tpu_custom_call.1} parent=11 // pred_check_branch
          %215 = sbr.rel (%p213) target = $region20
        $region19: #{tpu_custom_call.1} parent=11 // pred_region
          %217 = vsyncadd [#allocation11], 0
          %s218 = sshll.u32 %s2, 4
          %s219 = int_to_ptr.hbm [resolvable:$true] %s218
          %s220 = sshll.u32 [#allocation12], 4
          %s221 = int_to_ptr.vmem [resolvable:$true] %s220
          %226 = dma.hbm_to_vmem [thread:$0]  %s219, 1024, %s221, [#allocation11], 64, 64, 4
        $region20: #{tpu_custom_call.1} parent=11 // pred_fallthru
          _
        // Predicated region
        $region21: #{tpu_custom_call.1} parent=11 // pred_check
          %p227 = pneg %p133
        $region22: #{tpu_custom_call.1} parent=11 // pred_check_branch
          %229 = sbr.rel (%p227) target = $region24
        $region23: #{tpu_custom_call.1} parent=11 // pred_region
          %231 = vsyncadd [#allocation14], 0
          %s233 = sshll.u32 %s3, 4
          %s234 = int_to_ptr.hbm [resolvable:$true] %s233
          %s235 = sshll.u32 [#allocation13], 4
          %s236 = int_to_ptr.vmem [resolvable:$true] %s235
          %238 = dma.hbm_to_vmem [thread:$0]  %s234, 48, %s236, [#allocation14]
        $region24: #{tpu_custom_call.1} parent=11 // pred_fallthru
          _
        // Predicated region
        $region25: #{tpu_custom_call.1} parent=11 // pred_check
          %p239 = pneg %p154
        $region26: #{tpu_custom_call.1} parent=11 // pred_check_branch
          %241 = sbr.rel (%p239) target = $region28
        $region27: #{tpu_custom_call.1} parent=11 // pred_region
          _
        $region28: #{tpu_custom_call.1} parent=11 // pred_fallthru
          _
      $region12: #{tpu_custom_call.1} parent=5 // pred_fallthru
        _
      %p242 = scmp.lt.s32.totalorder %s19, 4
      // Predicated region
      $region29: #{tpu_custom_call.1} parent=5 // pred_check
        %p243 = pneg %p242
      $region30: #{tpu_custom_call.1} parent=5 // pred_check_branch
        %245 = sbr.rel (%p243) target = $region32
      $region31: #{tpu_custom_call.1} parent=5 // pred_region
        // Predicated region
        $region33: #{tpu_custom_call.1} parent=31 // pred_check
          %p246 = pneg %p64
        $region34: #{tpu_custom_call.1} parent=31 // pred_check_branch
          %248 = sbr.rel (%p246) target = $region36
        $region35: #{tpu_custom_call.1} parent=31 // pred_region
          %s249 = sand.u32 %s54, 1
          %s250 = scalar_lea.sflag [#allocation8], %s249
          %s251 = sand.u32 %s54, 1
          %s252 = smul.addr %s251, 512
          %s253 = scalar_lea.vmem [#allocation7], %s252
          %s254 = ssub.s32 1, %s27
          %s255 = smul.u32 %s254, %s28
          %s256 = smul.u32 64, %s255
          %258 = vsyncadd %s250, 0
          %s259 = smul.addr %s26, 64
          %s260 = sadd.s32 %s256, %s259
          %s261 = smul.addr %s260, 8
          %s262 = scalar_lea.hbm %s0, %s261
          %s263 = sshll.u32 %s262, 4
          %s264 = int_to_ptr.hbm [resolvable:$true] %s263
          %s265 = sshll.u32 %s253, 4
          %s266 = int_to_ptr.vmem [resolvable:$true] %s265
          %271 = dma.hbm_to_vmem [thread:$0]  %s264, 8192, %s266, %s250, 128, 128, 8
        $region36: #{tpu_custom_call.1} parent=31 // pred_fallthru
          _
      $region32: #{tpu_custom_call.1} parent=5 // pred_fallthru
        _
      %p272 = scmp.le.s32.totalorder 1, %s19
      %p273 = scmp.lt.s32.totalorder %s19, 5
      %p274 = pnand %p272, %p273
      %p275 = pneg %p274
      // Predicated region
      $region37: #{tpu_custom_call.1} parent=5 // pred_check
        _
      $region38: #{tpu_custom_call.1} parent=5 // pred_check_branch
        %277 = sbr.rel (%p274) target = $region40
      $region39: #{tpu_custom_call.1} parent=5 // pred_region
        %s278 = ssub.s32 %s19, 1
        %s279 = sand.u32 %s57, 1
        %s280 = scalar_lea.sflag [#allocation8], %s279
        %s281 = sand.u32 %s57, 1
        %s282 = smul.addr %s281, 512
        %s283 = scalar_lea.vmem [#allocation7], %s282
        // Predicated region
        $region41: #{tpu_custom_call.1} parent=39 // pred_check
          %p284 = pneg %p70
        $region42: #{tpu_custom_call.1} parent=39 // pred_check_branch
          %286 = sbr.rel (%p284) target = $region44
        $region43: #{tpu_custom_call.1} parent=39 // pred_region
          %288 = dma.done %s280, 8192
        $region44: #{tpu_custom_call.1} parent=39 // pred_fallthru
          _
        // Predicated region
        $region45: #{tpu_custom_call.1} parent=39 // pred_check
          %p289 = pneg %p91
        $region46: #{tpu_custom_call.1} parent=39 // pred_check_branch
          %291 = sbr.rel (%p289) target = $region48
        $region47: #{tpu_custom_call.1} parent=39 // pred_region
          %293 = dma.done [#allocation11], 3072
        $region48: #{tpu_custom_call.1} parent=39 // pred_fallthru
          _
        // Predicated region
        $region49: #{tpu_custom_call.1} parent=39 // pred_check
          %p294 = pneg %p112
        $region50: #{tpu_custom_call.1} parent=39 // pred_check_branch
          %296 = sbr.rel (%p294) target = $region52
        $region51: #{tpu_custom_call.1} parent=39 // pred_region
          %298 = dma.done [#allocation11], 1024
        $region52: #{tpu_custom_call.1} parent=39 // pred_fallthru
          _
        // Predicated region
        $region53: #{tpu_custom_call.1} parent=39 // pred_check
          %p299 = pneg %p133
        $region54: #{tpu_custom_call.1} parent=39 // pred_check_branch
          %301 = sbr.rel (%p299) target = $region56
        $region55: #{tpu_custom_call.1} parent=39 // pred_region
          %303 = dma.done [#allocation14], 48
        $region56: #{tpu_custom_call.1} parent=39 // pred_fallthru
          _
        %s304 = sand.u32 %s57, 1
        %s305 = scalar_lea.sflag [#allocation8], %s304
        %s306 = sand.u32 %s57, 1
        %s307 = smul.addr %s306, 512
        %s308 = scalar_lea.vmem [#allocation7], %s307
        %p309 = pneg %p70
        %p310 = pneg %p67
        %p311 = pneg %p91
        %p312 = pneg %p88
        %p313 = pneg %p112
        %p314 = pneg %p109
        %p315 = pneg %p133
        %p316 = pneg %p130
        %p317 = pneg %p154
        %p318 = pneg %p151
        %p319 = pneg %p184
        %p320 = pneg %p181
        %s321 = sand.u32 %s171, 1
        %s322 = scalar_lea.sflag [#allocation9], %s321
        %s323 = sand.u32 %s171, 1
        %s324 = smul.addr %s323, 512
        %s325 = scalar_lea.vmem [#allocation15], %s324
        %s326 = ssub.s32 1, %s30
        %s327 = smul.u32 %s326, %s31
        %s328 = smul.u32 64, %s327
        %s329 = smul.u32 %s30, %s31
        %s330 = smul.u32 64, %s329
        %p332 = scmp.eq.s32.totalorder %s30, 0
        // Predicated region
        $region57: #{tpu_custom_call.1} parent=39 // pred_check
          %p333 = pneg %p332
        $region58: #{tpu_custom_call.1} parent=39 // pred_check_branch
          %335 = sbr.rel (%p333) target = $region60
        $region59: #{tpu_custom_call.1} parent=39 // pred_region
          %v336 = vld [vmem:[%s283] sm:$0xff]
          %v337 = vld [vmem:[%s283 + $0x8] sm:$0xff]
          %v338 = vld [vmem:[%s283 + $0x10] sm:$0xff]
          %v339 = vld [vmem:[%s283 + $0x18] sm:$0xff]
          %v340 = vld [vmem:[%s283 + $0x20] sm:$0xff]
          %v341 = vld [vmem:[%s283 + $0x28] sm:$0xff]
          %v342 = vld [vmem:[%s283 + $0x30] sm:$0xff]
          %v343 = vld [vmem:[%s283 + $0x38] sm:$0xff]
          %v344 = vld [vmem:[%s283 + $0x40] sm:$0xff]
          %v345 = vld [vmem:[%s283 + $0x48] sm:$0xff]
          %v346 = vld [vmem:[%s283 + $0x50] sm:$0xff]
          %v347 = vld [vmem:[%s283 + $0x58] sm:$0xff]
          %v348 = vld [vmem:[%s283 + $0x60] sm:$0xff]
          %v349 = vld [vmem:[%s283 + $0x68] sm:$0xff]
          %v350 = vld [vmem:[%s283 + $0x70] sm:$0xff]
          %v351 = vld [vmem:[%s283 + $0x78] sm:$0xff]
          %v352 = vld [vmem:[%s283 + $0x80] sm:$0xff]
          %v353 = vld [vmem:[%s283 + $0x88] sm:$0xff]
          %v354 = vld [vmem:[%s283 + $0x90] sm:$0xff]
          %v355 = vld [vmem:[%s283 + $0x98] sm:$0xff]
          %v356 = vld [vmem:[%s283 + $0xa0] sm:$0xff]
          %v357 = vld [vmem:[%s283 + $0xa8] sm:$0xff]
          %v358 = vld [vmem:[%s283 + $0xb0] sm:$0xff]
          %v359 = vld [vmem:[%s283 + $0xb8] sm:$0xff]
          %v360 = vld [vmem:[%s283 + $0xc0] sm:$0xff]
          %v361 = vld [vmem:[%s283 + $0xc8] sm:$0xff]
          %v362 = vld [vmem:[%s283 + $0xd0] sm:$0xff]
          %v363 = vld [vmem:[%s283 + $0xd8] sm:$0xff]
          %v364 = vld [vmem:[%s283 + $0xe0] sm:$0xff]
          %v365 = vld [vmem:[%s283 + $0xe8] sm:$0xff]
          %v366 = vld [vmem:[%s283 + $0xf0] sm:$0xff]
          %v367 = vld [vmem:[%s283 + $0xf8] sm:$0xff]
          %v368 = vld [vmem:[%s283 + $0x100] sm:$0xff]
          %v369 = vld [vmem:[%s283 + $0x108] sm:$0xff]
          %v370 = vld [vmem:[%s283 + $0x110] sm:$0xff]
          %v371 = vld [vmem:[%s283 + $0x118] sm:$0xff]
          %v372 = vld [vmem:[%s283 + $0x120] sm:$0xff]
          %v373 = vld [vmem:[%s283 + $0x128] sm:$0xff]
          %v374 = vld [vmem:[%s283 + $0x130] sm:$0xff]
          %v375 = vld [vmem:[%s283 + $0x138] sm:$0xff]
          %v376 = vld [vmem:[%s283 + $0x140] sm:$0xff]
          %v377 = vld [vmem:[%s283 + $0x148] sm:$0xff]
          %v378 = vld [vmem:[%s283 + $0x150] sm:$0xff]
          %v379 = vld [vmem:[%s283 + $0x158] sm:$0xff]
          %v380 = vld [vmem:[%s283 + $0x160] sm:$0xff]
          %v381 = vld [vmem:[%s283 + $0x168] sm:$0xff]
          %v382 = vld [vmem:[%s283 + $0x170] sm:$0xff]
          %v383 = vld [vmem:[%s283 + $0x178] sm:$0xff]
          %v384 = vld [vmem:[%s283 + $0x180] sm:$0xff]
          %v385 = vld [vmem:[%s283 + $0x188] sm:$0xff]
          %v386 = vld [vmem:[%s283 + $0x190] sm:$0xff]
          %v387 = vld [vmem:[%s283 + $0x198] sm:$0xff]
          %v388 = vld [vmem:[%s283 + $0x1a0] sm:$0xff]
          %v389 = vld [vmem:[%s283 + $0x1a8] sm:$0xff]
          %v390 = vld [vmem:[%s283 + $0x1b0] sm:$0xff]
          %v391 = vld [vmem:[%s283 + $0x1b8] sm:$0xff]
          %v392 = vld [vmem:[%s283 + $0x1c0] sm:$0xff]
          %v393 = vld [vmem:[%s283 + $0x1c8] sm:$0xff]
          %v394 = vld [vmem:[%s283 + $0x1d0] sm:$0xff]
          %v395 = vld [vmem:[%s283 + $0x1d8] sm:$0xff]
          %v396 = vld [vmem:[%s283 + $0x1e0] sm:$0xff]
          %v397 = vld [vmem:[%s283 + $0x1e8] sm:$0xff]
          %v398 = vld [vmem:[%s283 + $0x1f0] sm:$0xff]
          %v399 = vld [vmem:[%s283 + $0x1f8] sm:$0xff]
          %v400 = vpack.c.bf16 %v337, %v336
          %v401 = vpack.c.bf16 %v339, %v338
          %v402 = vpack.c.bf16 %v341, %v340
          %v403 = vpack.c.bf16 %v343, %v342
          %v404 = vpack.c.bf16 %v345, %v344
          %v405 = vpack.c.bf16 %v347, %v346
          %v406 = vpack.c.bf16 %v349, %v348
          %v407 = vpack.c.bf16 %v351, %v350
          %v408 = vpack.c.bf16 %v353, %v352
          %v409 = vpack.c.bf16 %v355, %v354
          %v410 = vpack.c.bf16 %v357, %v356
          %v411 = vpack.c.bf16 %v359, %v358
          %v412 = vpack.c.bf16 %v361, %v360
          %v413 = vpack.c.bf16 %v363, %v362
          %v414 = vpack.c.bf16 %v365, %v364
          %v415 = vpack.c.bf16 %v367, %v366
          %v416 = vpack.c.bf16 %v369, %v368
          %v417 = vpack.c.bf16 %v371, %v370
          %v418 = vpack.c.bf16 %v373, %v372
          %v419 = vpack.c.bf16 %v375, %v374
          %v420 = vpack.c.bf16 %v377, %v376
          %v421 = vpack.c.bf16 %v379, %v378
          %v422 = vpack.c.bf16 %v381, %v380
          %v423 = vpack.c.bf16 %v383, %v382
          %v424 = vpack.c.bf16 %v385, %v384
          %v425 = vpack.c.bf16 %v387, %v386
          %v426 = vpack.c.bf16 %v389, %v388
          %v427 = vpack.c.bf16 %v391, %v390
          %v428 = vpack.c.bf16 %v393, %v392
          %v429 = vpack.c.bf16 %v395, %v394
          %v430 = vpack.c.bf16 %v397, %v396
          %v431 = vpack.c.bf16 %v399, %v398
          %v432 = vld [vmem:[#allocation10] sm:$0xff]
          %v433 = vld [vmem:[#allocation10 + $0x8] sm:$0xf]
          %v434 = vld [vmem:[#allocation10 + $0xc] sm:$0xff]
          %v435 = vld [vmem:[#allocation10 + $0x14] sm:$0xf]
          %v436 = vld [vmem:[#allocation10 + $0x18] sm:$0xff]
          %v437 = vld [vmem:[#allocation10 + $0x20] sm:$0xf]
          %v438 = vld [vmem:[#allocation10 + $0x24] sm:$0xff]
          %v439 = vld [vmem:[#allocation10 + $0x2c] sm:$0xf]
          %v440 = vld [vmem:[#allocation10 + $0x30] sm:$0xff]
          %v441 = vld [vmem:[#allocation10 + $0x38] sm:$0xf]
          %v442 = vld [vmem:[#allocation10 + $0x3c] sm:$0xff]
          %v443 = vld [vmem:[#allocation10 + $0x44] sm:$0xf]
          %v444 = vld [vmem:[#allocation10 + $0x48] sm:$0xff]
          %v445 = vld [vmem:[#allocation10 + $0x50] sm:$0xf]
          %v446 = vld [vmem:[#allocation10 + $0x54] sm:$0xff]
          %v447 = vld [vmem:[#allocation10 + $0x5c] sm:$0xf]
          %v448 = vld [vmem:[#allocation10 + $0x60] sm:$0xff]
          %v449 = vld [vmem:[#allocation10 + $0x68] sm:$0xf]
          %v450 = vld [vmem:[#allocation10 + $0x6c] sm:$0xff]
          %v451 = vld [vmem:[#allocation10 + $0x74] sm:$0xf]
          %v452 = vld [vmem:[#allocation10 + $0x78] sm:$0xff]
          %v453 = vld [vmem:[#allocation10 + $0x80] sm:$0xf]
          %v454 = vld [vmem:[#allocation10 + $0x84] sm:$0xff]
          %v455 = vld [vmem:[#allocation10 + $0x8c] sm:$0xf]
          %v456 = vld [vmem:[#allocation10 + $0x90] sm:$0xff]
          %v457 = vld [vmem:[#allocation10 + $0x98] sm:$0xf]
          %v458 = vld [vmem:[#allocation10 + $0x9c] sm:$0xff]
          %v459 = vld [vmem:[#allocation10 + $0xa4] sm:$0xf]
          %v460 = vld [vmem:[#allocation10 + $0xa8] sm:$0xff]
          %v461 = vld [vmem:[#allocation10 + $0xb0] sm:$0xf]
          %v462 = vld [vmem:[#allocation10 + $0xb4] sm:$0xff]
          %v463 = vld [vmem:[#allocation10 + $0xbc] sm:$0xf]
          %v464 = vld [vmem:[#allocation13] sm:$0x7]
          %v466 = vperm.slane %v464, 0
          %v467 = vperm.slane %v464, 1
          %v468 = vperm.slane %v464, 2
          %v504 = vunpack.c.l.b16 %v432
          %v505 = vunpack.c.h.b16 %v432
          %v506 = vunpack.c.l.b16 %v433
          %v507 = vunpack.c.l.b16 %v434
          %v508 = vunpack.c.h.b16 %v434
          %v509 = vunpack.c.l.b16 %v435
          %v510 = vunpack.c.l.b16 %v436
          %v511 = vunpack.c.h.b16 %v436
          %v512 = vunpack.c.l.b16 %v437
          %v513 = vunpack.c.l.b16 %v438
          %v514 = vunpack.c.h.b16 %v438
          %v515 = vunpack.c.l.b16 %v439
          %v516 = vunpack.c.l.b16 %v440
          %v517 = vunpack.c.h.b16 %v440
          %v518 = vunpack.c.l.b16 %v441
          %v519 = vunpack.c.l.b16 %v442
          %v520 = vunpack.c.h.b16 %v442
          %v521 = vunpack.c.l.b16 %v443
          %v522 = vunpack.c.l.b16 %v444
          %v523 = vunpack.c.h.b16 %v444
          %v524 = vunpack.c.l.b16 %v445
          %v525 = vunpack.c.l.b16 %v446
          %v526 = vunpack.c.h.b16 %v446
          %v527 = vunpack.c.l.b16 %v447
          %v528 = vunpack.c.l.b16 %v448
          %v529 = vunpack.c.h.b16 %v448
          %v530 = vunpack.c.l.b16 %v449
          %v531 = vunpack.c.l.b16 %v450
          %v532 = vunpack.c.h.b16 %v450
          %v533 = vunpack.c.l.b16 %v451
          %v534 = vunpack.c.l.b16 %v452
          %v535 = vunpack.c.h.b16 %v452
          %v536 = vunpack.c.l.b16 %v453
          %v537 = vunpack.c.l.b16 %v454
          %v538 = vunpack.c.h.b16 %v454
          %v539 = vunpack.c.l.b16 %v455
          %v540 = vunpack.c.l.b16 %v456
          %v541 = vunpack.c.h.b16 %v456
          %v542 = vunpack.c.l.b16 %v457
          %v543 = vunpack.c.l.b16 %v458
          %v544 = vunpack.c.h.b16 %v458
          %v545 = vunpack.c.l.b16 %v459
          %v546 = vunpack.c.l.b16 %v460
          %v547 = vunpack.c.h.b16 %v460
          %v548 = vunpack.c.l.b16 %v461
          %v549 = vunpack.c.l.b16 %v462
          %v550 = vunpack.c.h.b16 %v462
          %v551 = vunpack.c.l.b16 %v463
          %v552 = vpack.c.b16 %v507, %v504
          %v553 = vpack.c.b16 %v508, %v505
          %v554 = vpack.c.b16 %v509, %v506
          %v555 = vpack.c.b16 %v513, %v510
          %v556 = vpack.c.b16 %v514, %v511
          %v557 = vpack.c.b16 %v515, %v512
          %v558 = vpack.c.b16 %v519, %v516
          %v559 = vpack.c.b16 %v520, %v517
          %v560 = vpack.c.b16 %v521, %v518
          %v561 = vpack.c.b16 %v525, %v522
          %v562 = vpack.c.b16 %v526, %v523
          %v563 = vpack.c.b16 %v527, %v524
          %v564 = vpack.c.b16 %v531, %v528
          %v565 = vpack.c.b16 %v532, %v529
          %v566 = vpack.c.b16 %v533, %v530
          %v567 = vpack.c.b16 %v537, %v534
          %v568 = vpack.c.b16 %v538, %v535
          %v569 = vpack.c.b16 %v539, %v536
          %v570 = vpack.c.b16 %v543, %v540
          %v571 = vpack.c.b16 %v544, %v541
          %v572 = vpack.c.b16 %v545, %v542
          %v573 = vpack.c.b16 %v549, %v546
          %v574 = vpack.c.b16 %v550, %v547
          %v575 = vpack.c.b16 %v551, %v548
          %600 = vmatpush.bf16.msra.mxu0 %v573
          %601 = vmatpush.bf16.msra.mxu0 %v570
          %602 = vmatpush.bf16.msra.mxu0 %v567
          %603 = vmatpush.bf16.msra.mxu0 %v564
          %604 = vmatpush.bf16.msra.mxu0 %v561
          %605 = vmatpush.bf16.msra.mxu0 %v558
          %606 = vmatpush.bf16.msra.mxu0 %v555
          %607 = vmatpush.bf16.msra.mxu0 %v552
          %608 = vmatmul.bf16.gmra.mxu0 %v400
          %v609 = vpop.f32.mrf.mxu0
          %v610 = vadd.f32 %v466, %v609
          %v611 = vpop.f32.mrf.mxu0
          %v612 = vadd.f32 %v466, %v611
          %613 = vmatmul.bf16.gmra.mxu0 %v401
          %v614 = vpop.f32.mrf.mxu0
          %v615 = vadd.f32 %v466, %v614
          %v616 = vpop.f32.mrf.mxu0
          %v617 = vadd.f32 %v466, %v616
          %618 = vmatmul.bf16.gmra.mxu0 %v402
          %v619 = vpop.f32.mrf.mxu0
          %v620 = vadd.f32 %v466, %v619
          %v621 = vpop.f32.mrf.mxu0
          %v622 = vadd.f32 %v466, %v621
          %623 = vmatmul.bf16.gmra.mxu0 %v403
          %v624 = vpop.f32.mrf.mxu0
          %v625 = vadd.f32 %v466, %v624
          %v626 = vpop.f32.mrf.mxu0
          %v627 = vadd.f32 %v466, %v626
          %628 = vmatmul.bf16.gmra.mxu0 %v404
          %v629 = vpop.f32.mrf.mxu0
          %v630 = vadd.f32 %v466, %v629
          %v631 = vpop.f32.mrf.mxu0
          %v632 = vadd.f32 %v466, %v631
          %633 = vmatmul.bf16.gmra.mxu0 %v405
          %v634 = vpop.f32.mrf.mxu0
          %v635 = vadd.f32 %v466, %v634
          %v636 = vpop.f32.mrf.mxu0
          %v637 = vadd.f32 %v466, %v636
          %638 = vmatmul.bf16.gmra.mxu0 %v406
          %v639 = vpop.f32.mrf.mxu0
          %v640 = vadd.f32 %v466, %v639
          %v641 = vpop.f32.mrf.mxu0
          %v642 = vadd.f32 %v466, %v641
          %643 = vmatmul.bf16.gmra.mxu0 %v407
          %v644 = vpop.f32.mrf.mxu0
          %v645 = vadd.f32 %v466, %v644
          %v646 = vpop.f32.mrf.mxu0
          %v647 = vadd.f32 %v466, %v646
          %648 = vmatmul.bf16.gmra.mxu0 %v408
          %v649 = vpop.f32.mrf.mxu0
          %v650 = vadd.f32 %v466, %v649
          %v651 = vpop.f32.mrf.mxu0
          %v652 = vadd.f32 %v466, %v651
          %653 = vmatmul.bf16.gmra.mxu0 %v409
          %v654 = vpop.f32.mrf.mxu0
          %v655 = vadd.f32 %v466, %v654
          %v656 = vpop.f32.mrf.mxu0
          %v657 = vadd.f32 %v466, %v656
          %658 = vmatmul.bf16.gmra.mxu0 %v410
          %v659 = vpop.f32.mrf.mxu0
          %v660 = vadd.f32 %v466, %v659
          %v661 = vpop.f32.mrf.mxu0
          %v662 = vadd.f32 %v466, %v661
          %663 = vmatmul.bf16.gmra.mxu0 %v411
          %v664 = vpop.f32.mrf.mxu0
          %v665 = vadd.f32 %v466, %v664
          %v666 = vpop.f32.mrf.mxu0
          %v667 = vadd.f32 %v466, %v666
          %668 = vmatmul.bf16.gmra.mxu0 %v412
          %v669 = vpop.f32.mrf.mxu0
          %v670 = vadd.f32 %v466, %v669
          %v671 = vpop.f32.mrf.mxu0
          %v672 = vadd.f32 %v466, %v671
          %673 = vmatmul.bf16.gmra.mxu0 %v413
          %v674 = vpop.f32.mrf.mxu0
          %v675 = vadd.f32 %v466, %v674
          %v676 = vpop.f32.mrf.mxu0
          %v677 = vadd.f32 %v466, %v676
          %678 = vmatmul.bf16.gmra.mxu0 %v414
          %v679 = vpop.f32.mrf.mxu0
          %v680 = vadd.f32 %v466, %v679
          %v681 = vpop.f32.mrf.mxu0
          %v682 = vadd.f32 %v466, %v681
          %683 = vmatmul.bf16.gmra.mxu0 %v415
          %v684 = vpop.f32.mrf.mxu0
          %v685 = vadd.f32 %v466, %v684
          %v686 = vpop.f32.mrf.mxu0
          %v687 = vadd.f32 %v466, %v686
          %688 = vmatmul.bf16.gmra.mxu0 %v416
          %v689 = vpop.f32.mrf.mxu0
          %v690 = vadd.f32 %v466, %v689
          %v691 = vpop.f32.mrf.mxu0
          %v692 = vadd.f32 %v466, %v691
          %693 = vmatmul.bf16.gmra.mxu0 %v417
          %v694 = vpop.f32.mrf.mxu0
          %v695 = vadd.f32 %v466, %v694
          %v696 = vpop.f32.mrf.mxu0
          %v697 = vadd.f32 %v466, %v696
          %698 = vmatmul.bf16.gmra.mxu0 %v418
          %v699 = vpop.f32.mrf.mxu0
          %v700 = vadd.f32 %v466, %v699
          %v701 = vpop.f32.mrf.mxu0
          %v702 = vadd.f32 %v466, %v701
          %703 = vmatmul.bf16.gmra.mxu0 %v419
          %v704 = vpop.f32.mrf.mxu0
          %v705 = vadd.f32 %v466, %v704
          %v706 = vpop.f32.mrf.mxu0
          %v707 = vadd.f32 %v466, %v706
          %708 = vmatmul.bf16.gmra.mxu0 %v420
          %v709 = vpop.f32.mrf.mxu0
          %v710 = vadd.f32 %v466, %v709
          %v711 = vpop.f32.mrf.mxu0
          %v712 = vadd.f32 %v466, %v711
          %713 = vmatmul.bf16.gmra.mxu0 %v421
          %v714 = vpop.f32.mrf.mxu0
          %v715 = vadd.f32 %v466, %v714
          %v716 = vpop.f32.mrf.mxu0
          %v717 = vadd.f32 %v466, %v716
          %718 = vmatmul.bf16.gmra.mxu0 %v422
          %v719 = vpop.f32.mrf.mxu0
          %v720 = vadd.f32 %v466, %v719
          %v721 = vpop.f32.mrf.mxu0
          %v722 = vadd.f32 %v466, %v721
          %723 = vmatmul.bf16.gmra.mxu0 %v423
          %v724 = vpop.f32.mrf.mxu0
          %v725 = vadd.f32 %v466, %v724
          %v726 = vpop.f32.mrf.mxu0
          %v727 = vadd.f32 %v466, %v726
          %728 = vmatmul.bf16.gmra.mxu0 %v424
          %v729 = vpop.f32.mrf.mxu0
          %v730 = vadd.f32 %v466, %v729
          %v731 = vpop.f32.mrf.mxu0
          %v732 = vadd.f32 %v466, %v731
          %733 = vmatmul.bf16.gmra.mxu0 %v425
          %v734 = vpop.f32.mrf.mxu0
          %v735 = vadd.f32 %v466, %v734
          %v736 = vpop.f32.mrf.mxu0
          %v737 = vadd.f32 %v466, %v736
          %738 = vmatmul.bf16.gmra.mxu0 %v426
          %v739 = vpop.f32.mrf.mxu0
          %v740 = vadd.f32 %v466, %v739
          %v741 = vpop.f32.mrf.mxu0
          %v742 = vadd.f32 %v466, %v741
          %743 = vmatmul.bf16.gmra.mxu0 %v427
          %v744 = vpop.f32.mrf.mxu0
          %v745 = vadd.f32 %v466, %v744
          %v746 = vpop.f32.mrf.mxu0
          %v747 = vadd.f32 %v466, %v746
          %748 = vmatmul.bf16.gmra.mxu0 %v428
          %v749 = vpop.f32.mrf.mxu0
          %v750 = vadd.f32 %v466, %v749
          %v751 = vpop.f32.mrf.mxu0
          %v752 = vadd.f32 %v466, %v751
          %753 = vmatmul.bf16.gmra.mxu0 %v429
          %v754 = vpop.f32.mrf.mxu0
          %v755 = vadd.f32 %v466, %v754
          %v756 = vpop.f32.mrf.mxu0
          %v757 = vadd.f32 %v466, %v756
          %758 = vmatmul.bf16.gmra.mxu0 %v430
          %v759 = vpop.f32.mrf.mxu0
          %v760 = vadd.f32 %v466, %v759
          %v761 = vpop.f32.mrf.mxu0
          %v762 = vadd.f32 %v466, %v761
          %763 = vmatmul.bf16.gmra.mxu0 %v431
          %v764 = vpop.f32.mrf.mxu0
          %v765 = vadd.f32 %v466, %v764
          %v766 = vpop.f32.mrf.mxu0
          %v767 = vadd.f32 %v466, %v766
          %768 = vdwg.mxu0
          %769 = vmatpush.bf16.msra.mxu0 %v574
          %770 = vmatpush.bf16.msra.mxu0 %v571
          %771 = vmatpush.bf16.msra.mxu0 %v568
          %772 = vmatpush.bf16.msra.mxu0 %v565
          %773 = vmatpush.bf16.msra.mxu0 %v562
          %774 = vmatpush.bf16.msra.mxu0 %v559
          %775 = vmatpush.bf16.msra.mxu0 %v556
          %776 = vmatpush.bf16.msra.mxu0 %v553
          %777 = vmatmul.bf16.gmra.mxu0 %v400
          %v778 = vpop.f32.mrf.mxu0
          %v779 = vadd.f32 %v467, %v778
          %v780 = vpop.f32.mrf.mxu0
          %v781 = vadd.f32 %v467, %v780
          %782 = vmatmul.bf16.gmra.mxu0 %v401
          %v783 = vpop.f32.mrf.mxu0
          %v784 = vadd.f32 %v467, %v783
          %v785 = vpop.f32.mrf.mxu0
          %v786 = vadd.f32 %v467, %v785
          %787 = vmatmul.bf16.gmra.mxu0 %v402
          %v788 = vpop.f32.mrf.mxu0
          %v789 = vadd.f32 %v467, %v788
          %v790 = vpop.f32.mrf.mxu0
          %v791 = vadd.f32 %v467, %v790
          %792 = vmatmul.bf16.gmra.mxu0 %v403
          %v793 = vpop.f32.mrf.mxu0
          %v794 = vadd.f32 %v467, %v793
          %v795 = vpop.f32.mrf.mxu0
          %v796 = vadd.f32 %v467, %v795
          %797 = vmatmul.bf16.gmra.mxu0 %v404
          %v798 = vpop.f32.mrf.mxu0
          %v799 = vadd.f32 %v467, %v798
          %v800 = vpop.f32.mrf.mxu0
          %v801 = vadd.f32 %v467, %v800
          %802 = vmatmul.bf16.gmra.mxu0 %v405
          %v803 = vpop.f32.mrf.mxu0
          %v804 = vadd.f32 %v467, %v803
          %v805 = vpop.f32.mrf.mxu0
          %v806 = vadd.f32 %v467, %v805
          %807 = vmatmul.bf16.gmra.mxu0 %v406
          %v808 = vpop.f32.mrf.mxu0
          %v809 = vadd.f32 %v467, %v808
          %v810 = vpop.f32.mrf.mxu0
          %v811 = vadd.f32 %v467, %v810
          %812 = vmatmul.bf16.gmra.mxu0 %v407
          %v813 = vpop.f32.mrf.mxu0
          %v814 = vadd.f32 %v467, %v813
          %v815 = vpop.f32.mrf.mxu0
          %v816 = vadd.f32 %v467, %v815
          %817 = vmatmul.bf16.gmra.mxu0 %v408
          %v818 = vpop.f32.mrf.mxu0
          %v819 = vadd.f32 %v467, %v818
          %v820 = vpop.f32.mrf.mxu0
          %v821 = vadd.f32 %v467, %v820
          %822 = vmatmul.bf16.gmra.mxu0 %v409
          %v823 = vpop.f32.mrf.mxu0
          %v824 = vadd.f32 %v467, %v823
          %v825 = vpop.f32.mrf.mxu0
          %v826 = vadd.f32 %v467, %v825
          %827 = vmatmul.bf16.gmra.mxu0 %v410
          %v828 = vpop.f32.mrf.mxu0
          %v829 = vadd.f32 %v467, %v828
          %v830 = vpop.f32.mrf.mxu0
          %v831 = vadd.f32 %v467, %v830
          %832 = vmatmul.bf16.gmra.mxu0 %v411
          %v833 = vpop.f32.mrf.mxu0
          %v834 = vadd.f32 %v467, %v833
          %v835 = vpop.f32.mrf.mxu0
          %v836 = vadd.f32 %v467, %v835
          %837 = vmatmul.bf16.gmra.mxu0 %v412
          %v838 = vpop.f32.mrf.mxu0
          %v839 = vadd.f32 %v467, %v838
          %v840 = vpop.f32.mrf.mxu0
          %v841 = vadd.f32 %v467, %v840
          %842 = vmatmul.bf16.gmra.mxu0 %v413
          %v843 = vpop.f32.mrf.mxu0
          %v844 = vadd.f32 %v467, %v843
          %v845 = vpop.f32.mrf.mxu0
          %v846 = vadd.f32 %v467, %v845
          %847 = vmatmul.bf16.gmra.mxu0 %v414
          %v848 = vpop.f32.mrf.mxu0
          %v849 = vadd.f32 %v467, %v848
          %v850 = vpop.f32.mrf.mxu0
          %v851 = vadd.f32 %v467, %v850
          %852 = vmatmul.bf16.gmra.mxu0 %v415
          %v853 = vpop.f32.mrf.mxu0
          %v854 = vadd.f32 %v467, %v853
          %v855 = vpop.f32.mrf.mxu0
          %v856 = vadd.f32 %v467, %v855
          %857 = vmatmul.bf16.gmra.mxu0 %v416
          %v858 = vpop.f32.mrf.mxu0
          %v859 = vadd.f32 %v467, %v858
          %v860 = vpop.f32.mrf.mxu0
          %v861 = vadd.f32 %v467, %v860
          %862 = vmatmul.bf16.gmra.mxu0 %v417
          %v863 = vpop.f32.mrf.mxu0
          %v864 = vadd.f32 %v467, %v863
          %v865 = vpop.f32.mrf.mxu0
          %v866 = vadd.f32 %v467, %v865
          %867 = vmatmul.bf16.gmra.mxu0 %v418
          %v868 = vpop.f32.mrf.mxu0
          %v869 = vadd.f32 %v467, %v868
          %v870 = vpop.f32.mrf.mxu0
          %v871 = vadd.f32 %v467, %v870
          %872 = vmatmul.bf16.gmra.mxu0 %v419
          %v873 = vpop.f32.mrf.mxu0
          %v874 = vadd.f32 %v467, %v873
          %v875 = vpop.f32.mrf.mxu0
          %v876 = vadd.f32 %v467, %v875
          %877 = vmatmul.bf16.gmra.mxu0 %v420
          %v878 = vpop.f32.mrf.mxu0
          %v879 = vadd.f32 %v467, %v878
          %v880 = vpop.f32.mrf.mxu0
          %v881 = vadd.f32 %v467, %v880
          %882 = vmatmul.bf16.gmra.mxu0 %v421
          %v883 = vpop.f32.mrf.mxu0
          %v884 = vadd.f32 %v467, %v883
          %v885 = vpop.f32.mrf.mxu0
          %v886 = vadd.f32 %v467, %v885
          %887 = vmatmul.bf16.gmra.mxu0 %v422
          %v888 = vpop.f32.mrf.mxu0
          %v889 = vadd.f32 %v467, %v888
          %v890 = vpop.f32.mrf.mxu0
          %v891 = vadd.f32 %v467, %v890
          %892 = vmatmul.bf16.gmra.mxu0 %v423
          %v893 = vpop.f32.mrf.mxu0
          %v894 = vadd.f32 %v467, %v893
          %v895 = vpop.f32.mrf.mxu0
          %v896 = vadd.f32 %v467, %v895
          %897 = vmatmul.bf16.gmra.mxu0 %v424
          %v898 = vpop.f32.mrf.mxu0
          %v899 = vadd.f32 %v467, %v898
          %v900 = vpop.f32.mrf.mxu0
          %v901 = vadd.f32 %v467, %v900
          %902 = vmatmul.bf16.gmra.mxu0 %v425
          %v903 = vpop.f32.mrf.mxu0
          %v904 = vadd.f32 %v467, %v903
          %v905 = vpop.f32.mrf.mxu0
          %v906 = vadd.f32 %v467, %v905
          %907 = vmatmul.bf16.gmra.mxu0 %v426
          %v908 = vpop.f32.mrf.mxu0
          %v909 = vadd.f32 %v467, %v908
          %v910 = vpop.f32.mrf.mxu0
          %v911 = vadd.f32 %v467, %v910
          %912 = vmatmul.bf16.gmra.mxu0 %v427
          %v913 = vpop.f32.mrf.mxu0
          %v914 = vadd.f32 %v467, %v913
          %v915 = vpop.f32.mrf.mxu0
          %v916 = vadd.f32 %v467, %v915
          %917 = vmatmul.bf16.gmra.mxu0 %v428
          %v918 = vpop.f32.mrf.mxu0
          %v919 = vadd.f32 %v467, %v918
          %v920 = vpop.f32.mrf.mxu0
          %v921 = vadd.f32 %v467, %v920
          %922 = vmatmul.bf16.gmra.mxu0 %v429
          %v923 = vpop.f32.mrf.mxu0
          %v924 = vadd.f32 %v467, %v923
          %v925 = vpop.f32.mrf.mxu0
          %v926 = vadd.f32 %v467, %v925
          %927 = vmatmul.bf16.gmra.mxu0 %v430
          %v928 = vpop.f32.mrf.mxu0
          %v929 = vadd.f32 %v467, %v928
          %v930 = vpop.f32.mrf.mxu0
          %v931 = vadd.f32 %v467, %v930
          %932 = vmatmul.bf16.gmra.mxu0 %v431
          %v933 = vpop.f32.mrf.mxu0
          %v934 = vadd.f32 %v467, %v933
          %v935 = vpop.f32.mrf.mxu0
          %v936 = vadd.f32 %v467, %v935
          %937 = vdwg.mxu0
          %938 = vmatpush.bf16.msra.mxu0 %v575
          %939 = vmatpush.bf16.msra.mxu0 %v572
          %940 = vmatpush.bf16.msra.mxu0 %v569
          %941 = vmatpush.bf16.msra.mxu0 %v566
          %942 = vmatpush.bf16.msra.mxu0 %v563
          %943 = vmatpush.bf16.msra.mxu0 %v560
          %944 = vmatpush.bf16.msra.mxu0 %v557
          %945 = vmatpush.bf16.msra.mxu0 %v554
          %946 = vmatmul.bf16.gmra.mxu0 %v400
          %v947 = vpop.f32.mrf.mxu0
          %v948 = vadd.f32 %v468, %v947
          %v949 = vpop.f32.mrf.mxu0
          %v950 = vadd.f32 %v468, %v949
          %951 = vmatmul.bf16.gmra.mxu0 %v401
          %v952 = vpop.f32.mrf.mxu0
          %v953 = vadd.f32 %v468, %v952
          %v954 = vpop.f32.mrf.mxu0
          %v955 = vadd.f32 %v468, %v954
          %956 = vmatmul.bf16.gmra.mxu0 %v402
          %v957 = vpop.f32.mrf.mxu0
          %v958 = vadd.f32 %v468, %v957
          %v959 = vpop.f32.mrf.mxu0
          %v960 = vadd.f32 %v468, %v959
          %961 = vmatmul.bf16.gmra.mxu0 %v403
          %v962 = vpop.f32.mrf.mxu0
          %v963 = vadd.f32 %v468, %v962
          %v964 = vpop.f32.mrf.mxu0
          %v965 = vadd.f32 %v468, %v964
          %966 = vmatmul.bf16.gmra.mxu0 %v404
          %v967 = vpop.f32.mrf.mxu0
          %v968 = vadd.f32 %v468, %v967
          %v969 = vpop.f32.mrf.mxu0
          %v970 = vadd.f32 %v468, %v969
          %971 = vmatmul.bf16.gmra.mxu0 %v405
          %v972 = vpop.f32.mrf.mxu0
          %v973 = vadd.f32 %v468, %v972
          %v974 = vpop.f32.mrf.mxu0
          %v975 = vadd.f32 %v468, %v974
          %976 = vmatmul.bf16.gmra.mxu0 %v406
          %v977 = vpop.f32.mrf.mxu0
          %v978 = vadd.f32 %v468, %v977
          %v979 = vpop.f32.mrf.mxu0
          %v980 = vadd.f32 %v468, %v979
          %981 = vmatmul.bf16.gmra.mxu0 %v407
          %v982 = vpop.f32.mrf.mxu0
          %v983 = vadd.f32 %v468, %v982
          %v984 = vpop.f32.mrf.mxu0
          %v985 = vadd.f32 %v468, %v984
          %986 = vmatmul.bf16.gmra.mxu0 %v408
          %v987 = vpop.f32.mrf.mxu0
          %v988 = vadd.f32 %v468, %v987
          %v989 = vpop.f32.mrf.mxu0
          %v990 = vadd.f32 %v468, %v989
          %991 = vmatmul.bf16.gmra.mxu0 %v409
          %v992 = vpop.f32.mrf.mxu0
          %v993 = vadd.f32 %v468, %v992
          %v994 = vpop.f32.mrf.mxu0
          %v995 = vadd.f32 %v468, %v994
          %996 = vmatmul.bf16.gmra.mxu0 %v410
          %v997 = vpop.f32.mrf.mxu0
          %v998 = vadd.f32 %v468, %v997
          %v999 = vpop.f32.mrf.mxu0
          %v1000 = vadd.f32 %v468, %v999
          %1001 = vmatmul.bf16.gmra.mxu0 %v411
          %v1002 = vpop.f32.mrf.mxu0
          %v1003 = vadd.f32 %v468, %v1002
          %v1004 = vpop.f32.mrf.mxu0
          %v1005 = vadd.f32 %v468, %v1004
          %1006 = vmatmul.bf16.gmra.mxu0 %v412
          %v1007 = vpop.f32.mrf.mxu0
          %v1008 = vadd.f32 %v468, %v1007
          %v1009 = vpop.f32.mrf.mxu0
          %v1010 = vadd.f32 %v468, %v1009
          %1011 = vmatmul.bf16.gmra.mxu0 %v413
          %v1012 = vpop.f32.mrf.mxu0
          %v1013 = vadd.f32 %v468, %v1012
          %v1014 = vpop.f32.mrf.mxu0
          %v1015 = vadd.f32 %v468, %v1014
          %1016 = vmatmul.bf16.gmra.mxu0 %v414
          %v1017 = vpop.f32.mrf.mxu0
          %v1018 = vadd.f32 %v468, %v1017
          %v1019 = vpop.f32.mrf.mxu0
          %v1020 = vadd.f32 %v468, %v1019
          %1021 = vmatmul.bf16.gmra.mxu0 %v415
          %v1022 = vpop.f32.mrf.mxu0
          %v1023 = vadd.f32 %v468, %v1022
          %v1024 = vpop.f32.mrf.mxu0
          %v1025 = vadd.f32 %v468, %v1024
          %1026 = vmatmul.bf16.gmra.mxu0 %v416
          %v1027 = vpop.f32.mrf.mxu0
          %v1028 = vadd.f32 %v468, %v1027
          %v1029 = vpop.f32.mrf.mxu0
          %v1030 = vadd.f32 %v468, %v1029
          %1031 = vmatmul.bf16.gmra.mxu0 %v417
          %v1032 = vpop.f32.mrf.mxu0
          %v1033 = vadd.f32 %v468, %v1032
          %v1034 = vpop.f32.mrf.mxu0
          %v1035 = vadd.f32 %v468, %v1034
          %1036 = vmatmul.bf16.gmra.mxu0 %v418
          %v1037 = vpop.f32.mrf.mxu0
          %v1038 = vadd.f32 %v468, %v1037
          %v1039 = vpop.f32.mrf.mxu0
          %v1040 = vadd.f32 %v468, %v1039
          %1041 = vmatmul.bf16.gmra.mxu0 %v419
          %v1042 = vpop.f32.mrf.mxu0
          %v1043 = vadd.f32 %v468, %v1042
          %v1044 = vpop.f32.mrf.mxu0
          %v1045 = vadd.f32 %v468, %v1044
          %1046 = vmatmul.bf16.gmra.mxu0 %v420
          %v1047 = vpop.f32.mrf.mxu0
          %v1048 = vadd.f32 %v468, %v1047
          %v1049 = vpop.f32.mrf.mxu0
          %v1050 = vadd.f32 %v468, %v1049
          %1051 = vmatmul.bf16.gmra.mxu0 %v421
          %v1052 = vpop.f32.mrf.mxu0
          %v1053 = vadd.f32 %v468, %v1052
          %v1054 = vpop.f32.mrf.mxu0
          %v1055 = vadd.f32 %v468, %v1054
          %1056 = vmatmul.bf16.gmra.mxu0 %v422
          %v1057 = vpop.f32.mrf.mxu0
          %v1058 = vadd.f32 %v468, %v1057
          %v1059 = vpop.f32.mrf.mxu0
          %v1060 = vadd.f32 %v468, %v1059
          %1061 = vmatmul.bf16.gmra.mxu0 %v423
          %v1062 = vpop.f32.mrf.mxu0
          %v1063 = vadd.f32 %v468, %v1062
          %v1064 = vpop.f32.mrf.mxu0
          %v1065 = vadd.f32 %v468, %v1064
          %1066 = vmatmul.bf16.gmra.mxu0 %v424
          %v1067 = vpop.f32.mrf.mxu0
          %v1068 = vadd.f32 %v468, %v1067
          %v1069 = vpop.f32.mrf.mxu0
          %v1070 = vadd.f32 %v468, %v1069
          %1071 = vmatmul.bf16.gmra.mxu0 %v425
          %v1072 = vpop.f32.mrf.mxu0
          %v1073 = vadd.f32 %v468, %v1072
          %v1074 = vpop.f32.mrf.mxu0
          %v1075 = vadd.f32 %v468, %v1074
          %1076 = vmatmul.bf16.gmra.mxu0 %v426
          %v1077 = vpop.f32.mrf.mxu0
          %v1078 = vadd.f32 %v468, %v1077
          %v1079 = vpop.f32.mrf.mxu0
          %v1080 = vadd.f32 %v468, %v1079
          %1081 = vmatmul.bf16.gmra.mxu0 %v427
          %v1082 = vpop.f32.mrf.mxu0
          %v1083 = vadd.f32 %v468, %v1082
          %v1084 = vpop.f32.mrf.mxu0
          %v1085 = vadd.f32 %v468, %v1084
          %1086 = vmatmul.bf16.gmra.mxu0 %v428
          %v1087 = vpop.f32.mrf.mxu0
          %v1088 = vadd.f32 %v468, %v1087
          %v1089 = vpop.f32.mrf.mxu0
          %v1090 = vadd.f32 %v468, %v1089
          %1091 = vmatmul.bf16.gmra.mxu0 %v429
          %v1092 = vpop.f32.mrf.mxu0
          %v1093 = vadd.f32 %v468, %v1092
          %v1094 = vpop.f32.mrf.mxu0
          %v1095 = vadd.f32 %v468, %v1094
          %1096 = vmatmul.bf16.gmra.mxu0 %v430
          %v1097 = vpop.f32.mrf.mxu0
          %v1098 = vadd.f32 %v468, %v1097
          %v1099 = vpop.f32.mrf.mxu0
          %v1100 = vadd.f32 %v468, %v1099
          %1101 = vmatmul.bf16.gmra.mxu0 %v431
          %v1102 = vpop.f32.mrf.mxu0
          %v1103 = vadd.f32 %v468, %v1102
          %v1104 = vpop.f32.mrf.mxu0
          %v1105 = vadd.f32 %v468, %v1104
          %1106 = vdwg.mxu0
          %p1107 = scmp.eq.s32.totalorder %s31, 0
          // Predicated region
          $region61: #{tpu_custom_call.1} parent=59 // pred_check
            %p1108 = pneg %p1107
          $region62: #{tpu_custom_call.1} parent=59 // pred_check_branch
            %1110 = sbr.rel (%p1108) target = $region64
          $region63: #{tpu_custom_call.1} parent=59 // pred_region
            %1111 = vst [vmem:[#allocation2] sm:$0x1] -inf
            %1112 = vst [vmem:[#allocation3] sm:$0x1] 0.0
            %vm1113 = vcmask 523264
            %1114 = vst.msk [vmem:[#allocation4] sm:$0xff] %vm1113, 0.0
            %1115 = vst.msk [vmem:[#allocation4 + $0x8] sm:$0xff] %vm1113, 0.0
            %1116 = vst.msk [vmem:[#allocation4 + $0x10] sm:$0xff] %vm1113, 0.0
            %1117 = vst.msk [vmem:[#allocation4 + $0x18] sm:$0xff] %vm1113, 0.0
            %1118 = vst.msk [vmem:[#allocation4 + $0x20] sm:$0xff] %vm1113, 0.0
            %1119 = vst.msk [vmem:[#allocation4 + $0x28] sm:$0xff] %vm1113, 0.0
            %1120 = vst.msk [vmem:[#allocation4 + $0x30] sm:$0xff] %vm1113, 0.0
            %1121 = vst.msk [vmem:[#allocation4 + $0x38] sm:$0xff] %vm1113, 0.0
            %1122 = vst.msk [vmem:[#allocation4 + $0x40] sm:$0xff] %vm1113, 0.0
            %1123 = vst.msk [vmem:[#allocation4 + $0x48] sm:$0xff] %vm1113, 0.0
            %1124 = vst.msk [vmem:[#allocation4 + $0x50] sm:$0xff] %vm1113, 0.0
            %1125 = vst.msk [vmem:[#allocation4 + $0x58] sm:$0xff] %vm1113, 0.0
            %1126 = vst.msk [vmem:[#allocation4 + $0x60] sm:$0xff] %vm1113, 0.0
            %1127 = vst.msk [vmem:[#allocation4 + $0x68] sm:$0xff] %vm1113, 0.0
            %1128 = vst.msk [vmem:[#allocation4 + $0x70] sm:$0xff] %vm1113, 0.0
            %1129 = vst.msk [vmem:[#allocation4 + $0x78] sm:$0xff] %vm1113, 0.0
          $region64: #{tpu_custom_call.1} parent=59 // pred_fallthru
            _
          %v1130 = vld [vmem:[#allocation2] sm:$0x1]
          %v1131 = vmax.f32 %v610, %v620
          %v1132 = vmax.f32 %v612, %v622
          %v1133 = vmax.f32 %v615, %v625
          %v1134 = vmax.f32 %v617, %v627
          %v1135 = vmax.f32 %v1131, %v630
          %v1136 = vmax.f32 %v1132, %v632
          %v1137 = vmax.f32 %v1133, %v635
          %v1138 = vmax.f32 %v1134, %v637
          %v1139 = vmax.f32 %v1135, %v640
          %v1140 = vmax.f32 %v1136, %v642
          %v1141 = vmax.f32 %v1137, %v645
          %v1142 = vmax.f32 %v1138, %v647
          %v1143 = vmax.f32 %v1139, %v650
          %v1144 = vmax.f32 %v1140, %v652
          %v1145 = vmax.f32 %v1141, %v655
          %v1146 = vmax.f32 %v1142, %v657
          %v1147 = vmax.f32 %v1143, %v660
          %v1148 = vmax.f32 %v1144, %v662
          %v1149 = vmax.f32 %v1145, %v665
          %v1150 = vmax.f32 %v1146, %v667
          %v1151 = vmax.f32 %v1147, %v670
          %v1152 = vmax.f32 %v1148, %v672
          %v1153 = vmax.f32 %v1149, %v675
          %v1154 = vmax.f32 %v1150, %v677
          %v1155 = vmax.f32 %v1151, %v680
          %v1156 = vmax.f32 %v1152, %v682
          %v1157 = vmax.f32 %v1153, %v685
          %v1158 = vmax.f32 %v1154, %v687
          %v1159 = vmax.f32 %v1155, %v690
          %v1160 = vmax.f32 %v1156, %v692
          %v1161 = vmax.f32 %v1157, %v695
          %v1162 = vmax.f32 %v1158, %v697
          %v1163 = vmax.f32 %v1159, %v700
          %v1164 = vmax.f32 %v1160, %v702
          %v1165 = vmax.f32 %v1161, %v705
          %v1166 = vmax.f32 %v1162, %v707
          %v1167 = vmax.f32 %v1163, %v710
          %v1168 = vmax.f32 %v1164, %v712
          %v1169 = vmax.f32 %v1165, %v715
          %v1170 = vmax.f32 %v1166, %v717
          %v1171 = vmax.f32 %v1167, %v720
          %v1172 = vmax.f32 %v1168, %v722
          %v1173 = vmax.f32 %v1169, %v725
          %v1174 = vmax.f32 %v1170, %v727
          %v1175 = vmax.f32 %v1171, %v730
          %v1176 = vmax.f32 %v1172, %v732
          %v1177 = vmax.f32 %v1173, %v735
          %v1178 = vmax.f32 %v1174, %v737
          %v1179 = vmax.f32 %v1175, %v740
          %v1180 = vmax.f32 %v1176, %v742
          %v1181 = vmax.f32 %v1177, %v745
          %v1182 = vmax.f32 %v1178, %v747
          %v1183 = vmax.f32 %v1179, %v750
          %v1184 = vmax.f32 %v1180, %v752
          %v1185 = vmax.f32 %v1181, %v755
          %v1186 = vmax.f32 %v1182, %v757
          %v1187 = vmax.f32 %v1183, %v760
          %v1188 = vmax.f32 %v1184, %v762
          %v1189 = vmax.f32 %v1185, %v765
          %v1190 = vmax.f32 %v1186, %v767
          %v1191 = vmax.f32 %v1187, %v1188
          %v1192 = vmax.f32 %v1189, %v1190
          %v1193 = vmax.f32 %v1191, %v1192
          %v1194 = vrot.slane %v1193, 4
          %v1195 = vmax.f32 %v1193, %v1194
          %v1196 = vrot.slane %v1195, 2
          %v1197 = vmax.f32 %v1195, %v1196
          %v1198 = vrot.slane %v1197, 1
          %v1199 = vmax.f32 %v1197, %v1198
          %v1200 = vmax.f32 %v1130, %v1199
          %v1201 = vsub.f32 %v1130, %v1200
          %v1202 = vmul.f32 %v1201, 1.442695
          %v1203 = vpow.pop %v1202
          %v1205 = vperm.slane %v1200, 0
          %v1207 = vsub.f32 %v610, %v1205
          %v1208 = vsub.f32 %v612, %v1205
          %v1209 = vsub.f32 %v615, %v1205
          %v1210 = vsub.f32 %v617, %v1205
          %v1211 = vsub.f32 %v620, %v1205
          %v1212 = vsub.f32 %v622, %v1205
          %v1213 = vsub.f32 %v625, %v1205
          %v1214 = vsub.f32 %v627, %v1205
          %v1215 = vsub.f32 %v630, %v1205
          %v1216 = vsub.f32 %v632, %v1205
          %v1217 = vsub.f32 %v635, %v1205
          %v1218 = vsub.f32 %v637, %v1205
          %v1219 = vsub.f32 %v640, %v1205
          %v1220 = vsub.f32 %v642, %v1205
          %v1221 = vsub.f32 %v645, %v1205
          %v1222 = vsub.f32 %v647, %v1205
          %v1223 = vsub.f32 %v650, %v1205
          %v1224 = vsub.f32 %v652, %v1205
          %v1225 = vsub.f32 %v655, %v1205
          %v1226 = vsub.f32 %v657, %v1205
          %v1227 = vsub.f32 %v660, %v1205
          %v1228 = vsub.f32 %v662, %v1205
          %v1229 = vsub.f32 %v665, %v1205
          %v1230 = vsub.f32 %v667, %v1205
          %v1231 = vsub.f32 %v670, %v1205
          %v1232 = vsub.f32 %v672, %v1205
          %v1233 = vsub.f32 %v675, %v1205
          %v1234 = vsub.f32 %v677, %v1205
          %v1235 = vsub.f32 %v680, %v1205
          %v1236 = vsub.f32 %v682, %v1205
          %v1237 = vsub.f32 %v685, %v1205
          %v1238 = vsub.f32 %v687, %v1205
          %v1239 = vsub.f32 %v690, %v1205
          %v1240 = vsub.f32 %v692, %v1205
          %v1241 = vsub.f32 %v695, %v1205
          %v1242 = vsub.f32 %v697, %v1205
          %v1243 = vsub.f32 %v700, %v1205
          %v1244 = vsub.f32 %v702, %v1205
          %v1245 = vsub.f32 %v705, %v1205
          %v1246 = vsub.f32 %v707, %v1205
          %v1247 = vsub.f32 %v710, %v1205
          %v1248 = vsub.f32 %v712, %v1205
          %v1249 = vsub.f32 %v715, %v1205
          %v1250 = vsub.f32 %v717, %v1205
          %v1251 = vsub.f32 %v720, %v1205
          %v1252 = vsub.f32 %v722, %v1205
          %v1253 = vsub.f32 %v725, %v1205
          %v1254 = vsub.f32 %v727, %v1205
          %v1255 = vsub.f32 %v730, %v1205
          %v1256 = vsub.f32 %v732, %v1205
          %v1257 = vsub.f32 %v735, %v1205
          %v1258 = vsub.f32 %v737, %v1205
          %v1259 = vsub.f32 %v740, %v1205
          %v1260 = vsub.f32 %v742, %v1205
          %v1261 = vsub.f32 %v745, %v1205
          %v1262 = vsub.f32 %v747, %v1205
          %v1263 = vsub.f32 %v750, %v1205
          %v1264 = vsub.f32 %v752, %v1205
          %v1265 = vsub.f32 %v755, %v1205
          %v1266 = vsub.f32 %v757, %v1205
          %v1267 = vsub.f32 %v760, %v1205
          %v1268 = vsub.f32 %v762, %v1205
          %v1269 = vsub.f32 %v765, %v1205
          %v1270 = vsub.f32 %v767, %v1205
          %v1271 = vmul.f32 %v1207, 1.442695
          %v1272 = vpow.pop %v1271
          %v1273 = vmul.f32 %v1208, 1.442695
          %v1274 = vpow.pop %v1273
          %v1275 = vmul.f32 %v1209, 1.442695
          %v1276 = vpow.pop %v1275
          %v1277 = vmul.f32 %v1210, 1.442695
          %v1278 = vpow.pop %v1277
          %v1279 = vmul.f32 %v1211, 1.442695
          %v1280 = vpow.pop %v1279
          %v1281 = vmul.f32 %v1212, 1.442695
          %v1282 = vpow.pop %v1281
          %v1283 = vmul.f32 %v1213, 1.442695
          %v1284 = vpow.pop %v1283
          %v1285 = vmul.f32 %v1214, 1.442695
          %v1286 = vpow.pop %v1285
          %v1287 = vmul.f32 %v1215, 1.442695
          %v1288 = vpow.pop %v1287
          %v1289 = vmul.f32 %v1216, 1.442695
          %v1290 = vpow.pop %v1289
          %v1291 = vmul.f32 %v1217, 1.442695
          %v1292 = vpow.pop %v1291
          %v1293 = vmul.f32 %v1218, 1.442695
          %v1294 = vpow.pop %v1293
          %v1295 = vmul.f32 %v1219, 1.442695
          %v1296 = vpow.pop %v1295
          %v1297 = vmul.f32 %v1220, 1.442695
          %v1298 = vpow.pop %v1297
          %v1299 = vmul.f32 %v1221, 1.442695
          %v1300 = vpow.pop %v1299
          %v1301 = vmul.f32 %v1222, 1.442695
          %v1302 = vpow.pop %v1301
          %v1303 = vmul.f32 %v1223, 1.442695
          %v1304 = vpow.pop %v1303
          %v1305 = vmul.f32 %v1224, 1.442695
          %v1306 = vpow.pop %v1305
          %v1307 = vmul.f32 %v1225, 1.442695
          %v1308 = vpow.pop %v1307
          %v1309 = vmul.f32 %v1226, 1.442695
          %v1310 = vpow.pop %v1309
          %v1311 = vmul.f32 %v1227, 1.442695
          %v1312 = vpow.pop %v1311
          %v1313 = vmul.f32 %v1228, 1.442695
          %v1314 = vpow.pop %v1313
          %v1315 = vmul.f32 %v1229, 1.442695
          %v1316 = vpow.pop %v1315
          %v1317 = vmul.f32 %v1230, 1.442695
          %v1318 = vpow.pop %v1317
          %v1319 = vmul.f32 %v1231, 1.442695
          %v1320 = vpow.pop %v1319
          %v1321 = vmul.f32 %v1232, 1.442695
          %v1322 = vpow.pop %v1321
          %v1323 = vmul.f32 %v1233, 1.442695
          %v1324 = vpow.pop %v1323
          %v1325 = vmul.f32 %v1234, 1.442695
          %v1326 = vpow.pop %v1325
          %v1327 = vmul.f32 %v1235, 1.442695
          %v1328 = vpow.pop %v1327
          %v1329 = vmul.f32 %v1236, 1.442695
          %v1330 = vpow.pop %v1329
          %v1331 = vmul.f32 %v1237, 1.442695
          %v1332 = vpow.pop %v1331
          %v1333 = vmul.f32 %v1238, 1.442695
          %v1334 = vpow.pop %v1333
          %v1335 = vmul.f32 %v1239, 1.442695
          %v1336 = vpow.pop %v1335
          %v1337 = vmul.f32 %v1240, 1.442695
          %v1338 = vpow.pop %v1337
          %v1339 = vmul.f32 %v1241, 1.442695
          %v1340 = vpow.pop %v1339
          %v1341 = vmul.f32 %v1242, 1.442695
          %v1342 = vpow.pop %v1341
          %v1343 = vmul.f32 %v1243, 1.442695
          %v1344 = vpow.pop %v1343
          %v1345 = vmul.f32 %v1244, 1.442695
          %v1346 = vpow.pop %v1345
          %v1347 = vmul.f32 %v1245, 1.442695
          %v1348 = vpow.pop %v1347
          %v1349 = vmul.f32 %v1246, 1.442695
          %v1350 = vpow.pop %v1349
          %v1351 = vmul.f32 %v1247, 1.442695
          %v1352 = vpow.pop %v1351
          %v1353 = vmul.f32 %v1248, 1.442695
          %v1354 = vpow.pop %v1353
          %v1355 = vmul.f32 %v1249, 1.442695
          %v1356 = vpow.pop %v1355
          %v1357 = vmul.f32 %v1250, 1.442695
          %v1358 = vpow.pop %v1357
          %v1359 = vmul.f32 %v1251, 1.442695
          %v1360 = vpow.pop %v1359
          %v1361 = vmul.f32 %v1252, 1.442695
          %v1362 = vpow.pop %v1361
          %v1363 = vmul.f32 %v1253, 1.442695
          %v1364 = vpow.pop %v1363
          %v1365 = vmul.f32 %v1254, 1.442695
          %v1366 = vpow.pop %v1365
          %v1367 = vmul.f32 %v1255, 1.442695
          %v1368 = vpow.pop %v1367
          %v1369 = vmul.f32 %v1256, 1.442695
          %v1370 = vpow.pop %v1369
          %v1371 = vmul.f32 %v1257, 1.442695
          %v1372 = vpow.pop %v1371
          %v1373 = vmul.f32 %v1258, 1.442695
          %v1374 = vpow.pop %v1373
          %v1375 = vmul.f32 %v1259, 1.442695
          %v1376 = vpow.pop %v1375
          %v1377 = vmul.f32 %v1260, 1.442695
          %v1378 = vpow.pop %v1377
          %v1379 = vmul.f32 %v1261, 1.442695
          %v1380 = vpow.pop %v1379
          %v1381 = vmul.f32 %v1262, 1.442695
          %v1382 = vpow.pop %v1381
          %v1383 = vmul.f32 %v1263, 1.442695
          %v1384 = vpow.pop %v1383
          %v1385 = vmul.f32 %v1264, 1.442695
          %v1386 = vpow.pop %v1385
          %v1387 = vmul.f32 %v1265, 1.442695
          %v1388 = vpow.pop %v1387
          %v1389 = vmul.f32 %v1266, 1.442695
          %v1390 = vpow.pop %v1389
          %v1391 = vmul.f32 %v1267, 1.442695
          %v1392 = vpow.pop %v1391
          %v1393 = vmul.f32 %v1268, 1.442695
          %v1394 = vpow.pop %v1393
          %v1395 = vmul.f32 %v1269, 1.442695
          %v1396 = vpow.pop %v1395
          %v1397 = vmul.f32 %v1270, 1.442695
          %v1398 = vpow.pop %v1397
          %v1399 = vld [vmem:[#allocation3] sm:$0x1]
          %v1400 = vmul.f32 %v1203, %v1399
          %v1401 = vadd.f32 %v1272, %v1274
          %v1402 = vadd.f32 %v1401, %v1276
          %v1403 = vadd.f32 %v1402, %v1278
          %v1404 = vadd.f32 %v1403, %v1280
          %v1405 = vadd.f32 %v1404, %v1282
          %v1406 = vadd.f32 %v1405, %v1284
          %v1407 = vadd.f32 %v1406, %v1286
          %v1408 = vadd.f32 %v1407, %v1288
          %v1409 = vadd.f32 %v1408, %v1290
          %v1410 = vadd.f32 %v1409, %v1292
          %v1411 = vadd.f32 %v1410, %v1294
          %v1412 = vadd.f32 %v1411, %v1296
          %v1413 = vadd.f32 %v1412, %v1298
          %v1414 = vadd.f32 %v1413, %v1300
          %v1415 = vadd.f32 %v1414, %v1302
          %v1416 = vadd.f32 %v1415, %v1304
          %v1417 = vadd.f32 %v1416, %v1306
          %v1418 = vadd.f32 %v1417, %v1308
          %v1419 = vadd.f32 %v1418, %v1310
          %v1420 = vadd.f32 %v1419, %v1312
          %v1421 = vadd.f32 %v1420, %v1314
          %v1422 = vadd.f32 %v1421, %v1316
          %v1423 = vadd.f32 %v1422, %v1318
          %v1424 = vadd.f32 %v1423, %v1320
          %v1425 = vadd.f32 %v1424, %v1322
          %v1426 = vadd.f32 %v1425, %v1324
          %v1427 = vadd.f32 %v1426, %v1326
          %v1428 = vadd.f32 %v1427, %v1328
          %v1429 = vadd.f32 %v1428, %v1330
          %v1430 = vadd.f32 %v1429, %v1332
          %v1431 = vadd.f32 %v1430, %v1334
          %v1432 = vadd.f32 %v1431, %v1336
          %v1433 = vadd.f32 %v1432, %v1338
          %v1434 = vadd.f32 %v1433, %v1340
          %v1435 = vadd.f32 %v1434, %v1342
          %v1436 = vadd.f32 %v1435, %v1344
          %v1437 = vadd.f32 %v1436, %v1346
          %v1438 = vadd.f32 %v1437, %v1348
          %v1439 = vadd.f32 %v1438, %v1350
          %v1440 = vadd.f32 %v1439, %v1352
          %v1441 = vadd.f32 %v1440, %v1354
          %v1442 = vadd.f32 %v1441, %v1356
          %v1443 = vadd.f32 %v1442, %v1358
          %v1444 = vadd.f32 %v1443, %v1360
          %v1445 = vadd.f32 %v1444, %v1362
          %v1446 = vadd.f32 %v1445, %v1364
          %v1447 = vadd.f32 %v1446, %v1366
          %v1448 = vadd.f32 %v1447, %v1368
          %v1449 = vadd.f32 %v1448, %v1370
          %v1450 = vadd.f32 %v1449, %v1372
          %v1451 = vadd.f32 %v1450, %v1374
          %v1452 = vadd.f32 %v1451, %v1376
          %v1453 = vadd.f32 %v1452, %v1378
          %v1454 = vadd.f32 %v1453, %v1380
          %v1455 = vadd.f32 %v1454, %v1382
          %v1456 = vadd.f32 %v1455, %v1384
          %v1457 = vadd.f32 %v1456, %v1386
          %v1458 = vadd.f32 %v1457, %v1388
          %v1459 = vadd.f32 %v1458, %v1390
          %v1460 = vadd.f32 %v1459, %v1392
          %v1461 = vadd.f32 %v1460, %v1394
          %v1462 = vadd.f32 %v1461, %v1396
          %v1463 = vadd.f32 %v1462, %v1398
          %v1464 = vrot.slane %v1463, 4
          %v1465 = vadd.f32 %v1463, %v1464
          %v1466 = vrot.slane %v1465, 2
          %v1467 = vadd.f32 %v1465, %v1466
          %v1468 = vrot.slane %v1467, 1
          %v1469 = vadd.f32 %v1467, %v1468
          %v1470 = vadd.f32 %v1400, %v1469
          %1471 = vst [vmem:[#allocation3] sm:$0x1] %v1470
          %1472 = vst [vmem:[#allocation2] sm:$0x1] %v1200
          %v1473 = vpack.c.bf16 %v781, %v779
          %v1474 = vpack.c.bf16 %v786, %v784
          %v1475 = vpack.c.bf16 %v791, %v789
          %v1476 = vpack.c.bf16 %v796, %v794
          %v1477 = vpack.c.bf16 %v801, %v799
          %v1478 = vpack.c.bf16 %v806, %v804
          %v1479 = vpack.c.bf16 %v811, %v809
          %v1480 = vpack.c.bf16 %v816, %v814
          %v1481 = vpack.c.bf16 %v821, %v819
          %v1482 = vpack.c.bf16 %v826, %v824
          %v1483 = vpack.c.bf16 %v831, %v829
          %v1484 = vpack.c.bf16 %v836, %v834
          %v1485 = vpack.c.bf16 %v841, %v839
          %v1486 = vpack.c.bf16 %v846, %v844
          %v1487 = vpack.c.bf16 %v851, %v849
          %v1488 = vpack.c.bf16 %v856, %v854
          %v1489 = vpack.c.bf16 %v861, %v859
          %v1490 = vpack.c.bf16 %v866, %v864
          %v1491 = vpack.c.bf16 %v871, %v869
          %v1492 = vpack.c.bf16 %v876, %v874
          %v1493 = vpack.c.bf16 %v881, %v879
          %v1494 = vpack.c.bf16 %v886, %v884
          %v1495 = vpack.c.bf16 %v891, %v889
          %v1496 = vpack.c.bf16 %v896, %v894
          %v1497 = vpack.c.bf16 %v901, %v899
          %v1498 = vpack.c.bf16 %v906, %v904
          %v1499 = vpack.c.bf16 %v911, %v909
          %v1500 = vpack.c.bf16 %v916, %v914
          %v1501 = vpack.c.bf16 %v921, %v919
          %v1502 = vpack.c.bf16 %v926, %v924
          %v1503 = vpack.c.bf16 %v931, %v929
          %v1504 = vpack.c.bf16 %v936, %v934
          %v1505 = vpack.c.bf16 %v1274, %v1272
          %v1506 = vpack.c.bf16 %v1278, %v1276
          %v1507 = vpack.c.bf16 %v1282, %v1280
          %v1508 = vpack.c.bf16 %v1286, %v1284
          %v1509 = vpack.c.bf16 %v1290, %v1288
          %v1510 = vpack.c.bf16 %v1294, %v1292
          %v1511 = vpack.c.bf16 %v1298, %v1296
          %v1512 = vpack.c.bf16 %v1302, %v1300
          %v1513 = vpack.c.bf16 %v1306, %v1304
          %v1514 = vpack.c.bf16 %v1310, %v1308
          %v1515 = vpack.c.bf16 %v1314, %v1312
          %v1516 = vpack.c.bf16 %v1318, %v1316
          %v1517 = vpack.c.bf16 %v1322, %v1320
          %v1518 = vpack.c.bf16 %v1326, %v1324
          %v1519 = vpack.c.bf16 %v1330, %v1328
          %v1520 = vpack.c.bf16 %v1334, %v1332
          %v1521 = vpack.c.bf16 %v1338, %v1336
          %v1522 = vpack.c.bf16 %v1342, %v1340
          %v1523 = vpack.c.bf16 %v1346, %v1344
          %v1524 = vpack.c.bf16 %v1350, %v1348
          %v1525 = vpack.c.bf16 %v1354, %v1352
          %v1526 = vpack.c.bf16 %v1358, %v1356
          %v1527 = vpack.c.bf16 %v1362, %v1360
          %v1528 = vpack.c.bf16 %v1366, %v1364
          %v1529 = vpack.c.bf16 %v1370, %v1368
          %v1530 = vpack.c.bf16 %v1374, %v1372
          %v1531 = vpack.c.bf16 %v1378, %v1376
          %v1532 = vpack.c.bf16 %v1382, %v1380
          %v1533 = vpack.c.bf16 %v1386, %v1384
          %v1534 = vpack.c.bf16 %v1390, %v1388
          %v1535 = vpack.c.bf16 %v1394, %v1392
          %v1536 = vpack.c.bf16 %v1398, %v1396
          %1537 = vxpose.xlu0.c.b16.start [1/8] %v1473, 128
          %1538 = vxpose.xlu0.c.b16.cont [2/8] %v1474, 128
          %1539 = vxpose.xlu0.c.b16.cont [3/8] %v1475, 128
          %1540 = vxpose.xlu0.c.b16.cont [4/8] %v1476, 128
          %1541 = vxpose.xlu0.c.b16.cont [5/8] %v1477, 128
          %1542 = vxpose.xlu0.c.b16.cont [6/8] %v1478, 128
          %1543 = vxpose.xlu0.c.b16.cont [7/8] %v1479, 128
          %1544 = vxpose.xlu0.c.b16.end [8/8] %v1480, 128
          %v1545 = vpop.trf.xlu0
          %v1546 = vpop.trf.xlu0
          %v1547 = vpop.trf.xlu0
          %v1548 = vpop.trf.xlu0
          %v1549 = vpop.trf.xlu0
          %v1550 = vpop.trf.xlu0
          %v1551 = vpop.trf.xlu0
          %v1552 = vpop.trf.xlu0
          %1553 = vxpose.xlu0.c.b16.start [1/8] %v1481, 128
          %1554 = vxpose.xlu0.c.b16.cont [2/8] %v1482, 128
          %1555 = vxpose.xlu0.c.b16.cont [3/8] %v1483, 128
          %1556 = vxpose.xlu0.c.b16.cont [4/8] %v1484, 128
          %1557 = vxpose.xlu0.c.b16.cont [5/8] %v1485, 128
          %1558 = vxpose.xlu0.c.b16.cont [6/8] %v1486, 128
          %1559 = vxpose.xlu0.c.b16.cont [7/8] %v1487, 128
          %1560 = vxpose.xlu0.c.b16.end [8/8] %v1488, 128
          %v1561 = vpop.trf.xlu0
          %v1562 = vpop.trf.xlu0
          %v1563 = vpop.trf.xlu0
          %v1564 = vpop.trf.xlu0
          %v1565 = vpop.trf.xlu0
          %v1566 = vpop.trf.xlu0
          %v1567 = vpop.trf.xlu0
          %v1568 = vpop.trf.xlu0
          %1569 = vxpose.xlu0.c.b16.start [1/8] %v1489, 128
          %1570 = vxpose.xlu0.c.b16.cont [2/8] %v1490, 128
          %1571 = vxpose.xlu0.c.b16.cont [3/8] %v1491, 128
          %1572 = vxpose.xlu0.c.b16.cont [4/8] %v1492, 128
          %1573 = vxpose.xlu0.c.b16.cont [5/8] %v1493, 128
          %1574 = vxpose.xlu0.c.b16.cont [6/8] %v1494, 128
          %1575 = vxpose.xlu0.c.b16.cont [7/8] %v1495, 128
          %1576 = vxpose.xlu0.c.b16.end [8/8] %v1496, 128
          %v1577 = vpop.trf.xlu0
          %v1578 = vpop.trf.xlu0
          %v1579 = vpop.trf.xlu0
          %v1580 = vpop.trf.xlu0
          %v1581 = vpop.trf.xlu0
          %v1582 = vpop.trf.xlu0
          %v1583 = vpop.trf.xlu0
          %v1584 = vpop.trf.xlu0
          %1585 = vxpose.xlu0.c.b16.start [1/8] %v1497, 128
          %1586 = vxpose.xlu0.c.b16.cont [2/8] %v1498, 128
          %1587 = vxpose.xlu0.c.b16.cont [3/8] %v1499, 128
          %1588 = vxpose.xlu0.c.b16.cont [4/8] %v1500, 128
          %1589 = vxpose.xlu0.c.b16.cont [5/8] %v1501, 128
          %1590 = vxpose.xlu0.c.b16.cont [6/8] %v1502, 128
          %1591 = vxpose.xlu0.c.b16.cont [7/8] %v1503, 128
          %1592 = vxpose.xlu0.c.b16.end [8/8] %v1504, 128
          %v1593 = vpop.trf.xlu0
          %v1594 = vpop.trf.xlu0
          %v1595 = vpop.trf.xlu0
          %v1596 = vpop.trf.xlu0
          %v1597 = vpop.trf.xlu0
          %v1598 = vpop.trf.xlu0
          %v1599 = vpop.trf.xlu0
          %v1600 = vpop.trf.xlu0
          %1601 = vmatpush.bf16.msra.mxu0 %v1512
          %1602 = vmatpush.bf16.msra.mxu0 %v1511
          %1603 = vmatpush.bf16.msra.mxu0 %v1510
          %1604 = vmatpush.bf16.msra.mxu0 %v1509
          %1605 = vmatpush.bf16.msra.mxu0 %v1508
          %1606 = vmatpush.bf16.msra.mxu0 %v1507
          %1607 = vmatpush.bf16.msra.mxu0 %v1506
          %1608 = vmatpush.bf16.msra.mxu0 %v1505
          %1609 = vmatmul.bf16.gmra.mxu0 %v1545
          %v1610 = vpop.f32.mrf.mxu0
          %v1611 = vadd.f32 0.0, %v1610
          %v1612 = vpop.f32.mrf.mxu0
          %v1613 = vadd.f32 0.0, %v1612
          %1614 = vmatmul.bf16.gmra.mxu0 %v1546
          %v1615 = vpop.f32.mrf.mxu0
          %v1616 = vadd.f32 0.0, %v1615
          %v1617 = vpop.f32.mrf.mxu0
          %v1618 = vadd.f32 0.0, %v1617
          %1619 = vmatmul.bf16.gmra.mxu0 %v1547
          %v1620 = vpop.f32.mrf.mxu0
          %v1621 = vadd.f32 0.0, %v1620
          %v1622 = vpop.f32.mrf.mxu0
          %v1623 = vadd.f32 0.0, %v1622
          %1624 = vmatmul.bf16.gmra.mxu0 %v1548
          %v1625 = vpop.f32.mrf.mxu0
          %v1626 = vadd.f32 0.0, %v1625
          %v1627 = vpop.f32.mrf.mxu0
          %v1628 = vadd.f32 0.0, %v1627
          %1629 = vmatmul.bf16.gmra.mxu0 %v1549
          %v1630 = vpop.f32.mrf.mxu0
          %v1631 = vadd.f32 0.0, %v1630
          %v1632 = vpop.f32.mrf.mxu0
          %v1633 = vadd.f32 0.0, %v1632
          %1634 = vmatmul.bf16.gmra.mxu0 %v1550
          %v1635 = vpop.f32.mrf.mxu0
          %v1636 = vadd.f32 0.0, %v1635
          %v1637 = vpop.f32.mrf.mxu0
          %v1638 = vadd.f32 0.0, %v1637
          %1639 = vmatmul.bf16.gmra.mxu0 %v1551
          %v1640 = vpop.f32.mrf.mxu0
          %v1641 = vadd.f32 0.0, %v1640
          %v1642 = vpop.f32.mrf.mxu0
          %v1643 = vadd.f32 0.0, %v1642
          %1644 = vmatmul.bf16.gmra.mxu0 %v1552
          %v1645 = vpop.f32.mrf.mxu0
          %v1646 = vadd.f32 0.0, %v1645
          %v1647 = vpop.f32.mrf.mxu0
          %v1648 = vadd.f32 0.0, %v1647
          %1649 = vdwg.mxu0
          %1650 = vmatpush.bf16.msra.mxu0 %v1520
          %1651 = vmatpush.bf16.msra.mxu0 %v1519
          %1652 = vmatpush.bf16.msra.mxu0 %v1518
          %1653 = vmatpush.bf16.msra.mxu0 %v1517
          %1654 = vmatpush.bf16.msra.mxu0 %v1516
          %1655 = vmatpush.bf16.msra.mxu0 %v1515
          %1656 = vmatpush.bf16.msra.mxu0 %v1514
          %1657 = vmatpush.bf16.msra.mxu0 %v1513
          %1658 = vmatmul.bf16.gmra.mxu0 %v1561
          %v1659 = vpop.f32.mrf.mxu0
          %v1660 = vadd.f32 %v1611, %v1659
          %v1661 = vpop.f32.mrf.mxu0
          %v1662 = vadd.f32 %v1613, %v1661
          %1663 = vmatmul.bf16.gmra.mxu0 %v1562
          %v1664 = vpop.f32.mrf.mxu0
          %v1665 = vadd.f32 %v1616, %v1664
          %v1666 = vpop.f32.mrf.mxu0
          %v1667 = vadd.f32 %v1618, %v1666
          %1668 = vmatmul.bf16.gmra.mxu0 %v1563
          %v1669 = vpop.f32.mrf.mxu0
          %v1670 = vadd.f32 %v1621, %v1669
          %v1671 = vpop.f32.mrf.mxu0
          %v1672 = vadd.f32 %v1623, %v1671
          %1673 = vmatmul.bf16.gmra.mxu0 %v1564
          %v1674 = vpop.f32.mrf.mxu0
          %v1675 = vadd.f32 %v1626, %v1674
          %v1676 = vpop.f32.mrf.mxu0
          %v1677 = vadd.f32 %v1628, %v1676
          %1678 = vmatmul.bf16.gmra.mxu0 %v1565
          %v1679 = vpop.f32.mrf.mxu0
          %v1680 = vadd.f32 %v1631, %v1679
          %v1681 = vpop.f32.mrf.mxu0
          %v1682 = vadd.f32 %v1633, %v1681
          %1683 = vmatmul.bf16.gmra.mxu0 %v1566
          %v1684 = vpop.f32.mrf.mxu0
          %v1685 = vadd.f32 %v1636, %v1684
          %v1686 = vpop.f32.mrf.mxu0
          %v1687 = vadd.f32 %v1638, %v1686
          %1688 = vmatmul.bf16.gmra.mxu0 %v1567
          %v1689 = vpop.f32.mrf.mxu0
          %v1690 = vadd.f32 %v1641, %v1689
          %v1691 = vpop.f32.mrf.mxu0
          %v1692 = vadd.f32 %v1643, %v1691
          %1693 = vmatmul.bf16.gmra.mxu0 %v1568
          %v1694 = vpop.f32.mrf.mxu0
          %v1695 = vadd.f32 %v1646, %v1694
          %v1696 = vpop.f32.mrf.mxu0
          %v1697 = vadd.f32 %v1648, %v1696
          %1698 = vdwg.mxu0
          %1699 = vmatpush.bf16.msra.mxu0 %v1528
          %1700 = vmatpush.bf16.msra.mxu0 %v1527
          %1701 = vmatpush.bf16.msra.mxu0 %v1526
          %1702 = vmatpush.bf16.msra.mxu0 %v1525
          %1703 = vmatpush.bf16.msra.mxu0 %v1524
          %1704 = vmatpush.bf16.msra.mxu0 %v1523
          %1705 = vmatpush.bf16.msra.mxu0 %v1522
          %1706 = vmatpush.bf16.msra.mxu0 %v1521
          %1707 = vmatmul.bf16.gmra.mxu0 %v1577
          %v1708 = vpop.f32.mrf.mxu0
          %v1709 = vadd.f32 %v1660, %v1708
          %v1710 = vpop.f32.mrf.mxu0
          %v1711 = vadd.f32 %v1662, %v1710
          %1712 = vmatmul.bf16.gmra.mxu0 %v1578
          %v1713 = vpop.f32.mrf.mxu0
          %v1714 = vadd.f32 %v1665, %v1713
          %v1715 = vpop.f32.mrf.mxu0
          %v1716 = vadd.f32 %v1667, %v1715
          %1717 = vmatmul.bf16.gmra.mxu0 %v1579
          %v1718 = vpop.f32.mrf.mxu0
          %v1719 = vadd.f32 %v1670, %v1718
          %v1720 = vpop.f32.mrf.mxu0
          %v1721 = vadd.f32 %v1672, %v1720
          %1722 = vmatmul.bf16.gmra.mxu0 %v1580
          %v1723 = vpop.f32.mrf.mxu0
          %v1724 = vadd.f32 %v1675, %v1723
          %v1725 = vpop.f32.mrf.mxu0
          %v1726 = vadd.f32 %v1677, %v1725
          %1727 = vmatmul.bf16.gmra.mxu0 %v1581
          %v1728 = vpop.f32.mrf.mxu0
          %v1729 = vadd.f32 %v1680, %v1728
          %v1730 = vpop.f32.mrf.mxu0
          %v1731 = vadd.f32 %v1682, %v1730
          %1732 = vmatmul.bf16.gmra.mxu0 %v1582
          %v1733 = vpop.f32.mrf.mxu0
          %v1734 = vadd.f32 %v1685, %v1733
          %v1735 = vpop.f32.mrf.mxu0
          %v1736 = vadd.f32 %v1687, %v1735
          %1737 = vmatmul.bf16.gmra.mxu0 %v1583
          %v1738 = vpop.f32.mrf.mxu0
          %v1739 = vadd.f32 %v1690, %v1738
          %v1740 = vpop.f32.mrf.mxu0
          %v1741 = vadd.f32 %v1692, %v1740
          %1742 = vmatmul.bf16.gmra.mxu0 %v1584
          %v1743 = vpop.f32.mrf.mxu0
          %v1744 = vadd.f32 %v1695, %v1743
          %v1745 = vpop.f32.mrf.mxu0
          %v1746 = vadd.f32 %v1697, %v1745
          %1747 = vdwg.mxu0
          %1748 = vmatpush.bf16.msra.mxu0 %v1536
          %1749 = vmatpush.bf16.msra.mxu0 %v1535
          %1750 = vmatpush.bf16.msra.mxu0 %v1534
          %1751 = vmatpush.bf16.msra.mxu0 %v1533
          %1752 = vmatpush.bf16.msra.mxu0 %v1532
          %1753 = vmatpush.bf16.msra.mxu0 %v1531
          %1754 = vmatpush.bf16.msra.mxu0 %v1530
          %1755 = vmatpush.bf16.msra.mxu0 %v1529
          %1756 = vmatmul.bf16.gmra.mxu0 %v1593
          %v1757 = vpop.f32.mrf.mxu0
          %v1758 = vadd.f32 %v1709, %v1757
          %v1759 = vpop.f32.mrf.mxu0
          %v1760 = vadd.f32 %v1711, %v1759
          %1761 = vmatmul.bf16.gmra.mxu0 %v1594
          %v1762 = vpop.f32.mrf.mxu0
          %v1763 = vadd.f32 %v1714, %v1762
          %v1764 = vpop.f32.mrf.mxu0
          %v1765 = vadd.f32 %v1716, %v1764
          %1766 = vmatmul.bf16.gmra.mxu0 %v1595
          %v1767 = vpop.f32.mrf.mxu0
          %v1768 = vadd.f32 %v1719, %v1767
          %v1769 = vpop.f32.mrf.mxu0
          %v1770 = vadd.f32 %v1721, %v1769
          %1771 = vmatmul.bf16.gmra.mxu0 %v1596
          %v1772 = vpop.f32.mrf.mxu0
          %v1773 = vadd.f32 %v1724, %v1772
          %v1774 = vpop.f32.mrf.mxu0
          %v1775 = vadd.f32 %v1726, %v1774
          %1776 = vmatmul.bf16.gmra.mxu0 %v1597
          %v1777 = vpop.f32.mrf.mxu0
          %v1778 = vadd.f32 %v1729, %v1777
          %v1779 = vpop.f32.mrf.mxu0
          %v1780 = vadd.f32 %v1731, %v1779
          %1781 = vmatmul.bf16.gmra.mxu0 %v1598
          %v1782 = vpop.f32.mrf.mxu0
          %v1783 = vadd.f32 %v1734, %v1782
          %v1784 = vpop.f32.mrf.mxu0
          %v1785 = vadd.f32 %v1736, %v1784
          %1786 = vmatmul.bf16.gmra.mxu0 %v1599
          %v1787 = vpop.f32.mrf.mxu0
          %v1788 = vadd.f32 %v1739, %v1787
          %v1789 = vpop.f32.mrf.mxu0
          %v1790 = vadd.f32 %v1741, %v1789
          %1791 = vmatmul.bf16.gmra.mxu0 %v1600
          %v1792 = vpop.f32.mrf.mxu0
          %v1793 = vadd.f32 %v1744, %v1792
          %v1794 = vpop.f32.mrf.mxu0
          %v1795 = vadd.f32 %v1746, %v1794
          %1796 = vdwg.mxu0
          %v1797 = vld [vmem:[#allocation4] sm:$0xff]
          %v1798 = vld [vmem:[#allocation4 + $0x8] sm:$0xff]
          %v1799 = vld [vmem:[#allocation4 + $0x10] sm:$0xff]
          %v1800 = vld [vmem:[#allocation4 + $0x18] sm:$0xff]
          %v1801 = vld [vmem:[#allocation4 + $0x20] sm:$0xff]
          %v1802 = vld [vmem:[#allocation4 + $0x28] sm:$0xff]
          %v1803 = vld [vmem:[#allocation4 + $0x30] sm:$0xff]
          %v1804 = vld [vmem:[#allocation4 + $0x38] sm:$0xff]
          %v1806 = vperm.slane %v1203, 0
          %v1808 = vmul.f32 %v1806, %v1797
          %v1809 = vmul.f32 %v1806, %v1798
          %v1810 = vmul.f32 %v1806, %v1799
          %v1811 = vmul.f32 %v1806, %v1800
          %v1812 = vmul.f32 %v1806, %v1801
          %v1813 = vmul.f32 %v1806, %v1802
          %v1814 = vmul.f32 %v1806, %v1803
          %v1815 = vmul.f32 %v1806, %v1804
          %v1816 = vadd.f32 %v1808, %v1758
          %v1817 = vadd.f32 %v1809, %v1760
          %v1818 = vadd.f32 %v1810, %v1763
          %v1819 = vadd.f32 %v1811, %v1765
          %v1820 = vadd.f32 %v1812, %v1768
          %v1821 = vadd.f32 %v1813, %v1770
          %v1822 = vadd.f32 %v1814, %v1773
          %v1823 = vadd.f32 %v1815, %v1775
          %vm1824 = vcmask 523264
          %1825 = vst.msk [vmem:[#allocation4] sm:$0xff] %vm1824, %v1816
          %1826 = vst.msk [vmem:[#allocation4 + $0x8] sm:$0xff] %vm1824, %v1817
          %1827 = vst.msk [vmem:[#allocation4 + $0x10] sm:$0xff] %vm1824, %v1818
          %1828 = vst.msk [vmem:[#allocation4 + $0x18] sm:$0xff] %vm1824, %v1819
          %1829 = vst.msk [vmem:[#allocation4 + $0x20] sm:$0xff] %vm1824, %v1820
          %1830 = vst.msk [vmem:[#allocation4 + $0x28] sm:$0xff] %vm1824, %v1821
          %1831 = vst.msk [vmem:[#allocation4 + $0x30] sm:$0xff] %vm1824, %v1822
          %1832 = vst.msk [vmem:[#allocation4 + $0x38] sm:$0xff] %vm1824, %v1823
          %s1833 = scalar_lea.vmem [#allocation4], 64
          %v1834 = vld [vmem:[%s1833] sm:$0xff]
          %v1835 = vld [vmem:[%s1833 + $0x8] sm:$0xff]
          %v1836 = vld [vmem:[%s1833 + $0x10] sm:$0xff]
          %v1837 = vld [vmem:[%s1833 + $0x18] sm:$0xff]
          %v1838 = vld [vmem:[%s1833 + $0x20] sm:$0xff]
          %v1839 = vld [vmem:[%s1833 + $0x28] sm:$0xff]
          %v1840 = vld [vmem:[%s1833 + $0x30] sm:$0xff]
          %v1841 = vld [vmem:[%s1833 + $0x38] sm:$0xff]
          %1850 = vrot.lane.b32.xlu0 %v1834, 64
          %v1851 = vpop.permute.xlu0 %1850
          %1852 = vrot.lane.b32.xlu0 %v1835, 64
          %v1853 = vpop.permute.xlu0 %1852
          %1854 = vrot.lane.b32.xlu0 %v1836, 64
          %v1855 = vpop.permute.xlu0 %1854
          %1856 = vrot.lane.b32.xlu0 %v1837, 64
          %v1857 = vpop.permute.xlu0 %1856
          %1858 = vrot.lane.b32.xlu0 %v1838, 64
          %v1859 = vpop.permute.xlu0 %1858
          %1860 = vrot.lane.b32.xlu0 %v1839, 64
          %v1861 = vpop.permute.xlu0 %1860
          %1862 = vrot.lane.b32.xlu0 %v1840, 64
          %v1863 = vpop.permute.xlu0 %1862
          %1864 = vrot.lane.b32.xlu0 %v1841, 64
          %v1865 = vpop.permute.xlu0 %1864
          %v1874 = vmul.f32 %v1806, %v1851
          %v1875 = vmul.f32 %v1806, %v1853
          %v1876 = vmul.f32 %v1806, %v1855
          %v1877 = vmul.f32 %v1806, %v1857
          %v1878 = vmul.f32 %v1806, %v1859
          %v1879 = vmul.f32 %v1806, %v1861
          %v1880 = vmul.f32 %v1806, %v1863
          %v1881 = vmul.f32 %v1806, %v1865
          %v1882 = vadd.f32 %v1874, %v1778
          %v1883 = vadd.f32 %v1875, %v1780
          %v1884 = vadd.f32 %v1876, %v1783
          %v1885 = vadd.f32 %v1877, %v1785
          %v1886 = vadd.f32 %v1878, %v1788
          %v1887 = vadd.f32 %v1879, %v1790
          %v1888 = vadd.f32 %v1880, %v1793
          %v1889 = vadd.f32 %v1881, %v1795
          %1898 = vrot.lane.b32.xlu0 %v1882, 64
          %v1899 = vpop.permute.xlu0 %1898
          %1900 = vrot.lane.b32.xlu0 %v1883, 64
          %v1901 = vpop.permute.xlu0 %1900
          %1902 = vrot.lane.b32.xlu0 %v1884, 64
          %v1903 = vpop.permute.xlu0 %1902
          %1904 = vrot.lane.b32.xlu0 %v1885, 64
          %v1905 = vpop.permute.xlu0 %1904
          %1906 = vrot.lane.b32.xlu0 %v1886, 64
          %v1907 = vpop.permute.xlu0 %1906
          %1908 = vrot.lane.b32.xlu0 %v1887, 64
          %v1909 = vpop.permute.xlu0 %1908
          %1910 = vrot.lane.b32.xlu0 %v1888, 64
          %v1911 = vpop.permute.xlu0 %1910
          %1912 = vrot.lane.b32.xlu0 %v1889, 64
          %v1913 = vpop.permute.xlu0 %1912
          %1922 = vst.msk [vmem:[%s1833] sm:$0xff] %vm1824, %v1899
          %1923 = vst.msk [vmem:[%s1833 + $0x8] sm:$0xff] %vm1824, %v1901
          %1924 = vst.msk [vmem:[%s1833 + $0x10] sm:$0xff] %vm1824, %v1903
          %1925 = vst.msk [vmem:[%s1833 + $0x18] sm:$0xff] %vm1824, %v1905
          %1926 = vst.msk [vmem:[%s1833 + $0x20] sm:$0xff] %vm1824, %v1907
          %1927 = vst.msk [vmem:[%s1833 + $0x28] sm:$0xff] %vm1824, %v1909
          %1928 = vst.msk [vmem:[%s1833 + $0x30] sm:$0xff] %vm1824, %v1911
          %1929 = vst.msk [vmem:[%s1833 + $0x38] sm:$0xff] %vm1824, %v1913
          %v1930 = vsel %vm1824, %v948, -inf
          %1931 = vmax.xlane.f32.xlu0 %v1930
          %v1932 = vpop.xlane.xlu0 %1931
          %v1933 = vsel %vm1824, %v950, -inf
          %1934 = vmax.xlane.f32.xlu0 %v1933
          %v1935 = vpop.xlane.xlu0 %1934
          %v1936 = vsel %vm1824, %v953, -inf
          %1937 = vmax.xlane.f32.xlu0 %v1936
          %v1938 = vpop.xlane.xlu0 %1937
          %v1939 = vsel %vm1824, %v955, -inf
          %1940 = vmax.xlane.f32.xlu0 %v1939
          %v1941 = vpop.xlane.xlu0 %1940
          %v1942 = vsel %vm1824, %v958, -inf
          %1943 = vmax.xlane.f32.xlu0 %v1942
          %v1944 = vpop.xlane.xlu0 %1943
          %v1945 = vsel %vm1824, %v960, -inf
          %1946 = vmax.xlane.f32.xlu0 %v1945
          %v1947 = vpop.xlane.xlu0 %1946
          %v1948 = vsel %vm1824, %v963, -inf
          %1949 = vmax.xlane.f32.xlu0 %v1948
          %v1950 = vpop.xlane.xlu0 %1949
          %v1951 = vsel %vm1824, %v965, -inf
          %1952 = vmax.xlane.f32.xlu0 %v1951
          %v1953 = vpop.xlane.xlu0 %1952
          %v1954 = vsel %vm1824, %v968, -inf
          %1955 = vmax.xlane.f32.xlu0 %v1954
          %v1956 = vpop.xlane.xlu0 %1955
          %v1957 = vsel %vm1824, %v970, -inf
          %1958 = vmax.xlane.f32.xlu0 %v1957
          %v1959 = vpop.xlane.xlu0 %1958
          %v1960 = vsel %vm1824, %v973, -inf
          %1961 = vmax.xlane.f32.xlu0 %v1960
          %v1962 = vpop.xlane.xlu0 %1961
          %v1963 = vsel %vm1824, %v975, -inf
          %1964 = vmax.xlane.f32.xlu0 %v1963
          %v1965 = vpop.xlane.xlu0 %1964
          %v1966 = vsel %vm1824, %v978, -inf
          %1967 = vmax.xlane.f32.xlu0 %v1966
          %v1968 = vpop.xlane.xlu0 %1967
          %v1969 = vsel %vm1824, %v980, -inf
          %1970 = vmax.xlane.f32.xlu0 %v1969
          %v1971 = vpop.xlane.xlu0 %1970
          %v1972 = vsel %vm1824, %v983, -inf
          %1973 = vmax.xlane.f32.xlu0 %v1972
          %v1974 = vpop.xlane.xlu0 %1973
          %v1975 = vsel %vm1824, %v985, -inf
          %1976 = vmax.xlane.f32.xlu0 %v1975
          %v1977 = vpop.xlane.xlu0 %1976
          %v1978 = vsel %vm1824, %v988, -inf
          %1979 = vmax.xlane.f32.xlu0 %v1978
          %v1980 = vpop.xlane.xlu0 %1979
          %v1981 = vsel %vm1824, %v990, -inf
          %1982 = vmax.xlane.f32.xlu0 %v1981
          %v1983 = vpop.xlane.xlu0 %1982
          %v1984 = vsel %vm1824, %v993, -inf
          %1985 = vmax.xlane.f32.xlu0 %v1984
          %v1986 = vpop.xlane.xlu0 %1985
          %v1987 = vsel %vm1824, %v995, -inf
          %1988 = vmax.xlane.f32.xlu0 %v1987
          %v1989 = vpop.xlane.xlu0 %1988
          %v1990 = vsel %vm1824, %v998, -inf
          %1991 = vmax.xlane.f32.xlu0 %v1990
          %v1992 = vpop.xlane.xlu0 %1991
          %v1993 = vsel %vm1824, %v1000, -inf
          %1994 = vmax.xlane.f32.xlu0 %v1993
          %v1995 = vpop.xlane.xlu0 %1994
          %v1996 = vsel %vm1824, %v1003, -inf
          %1997 = vmax.xlane.f32.xlu0 %v1996
          %v1998 = vpop.xlane.xlu0 %1997
          %v1999 = vsel %vm1824, %v1005, -inf
          %2000 = vmax.xlane.f32.xlu0 %v1999
          %v2001 = vpop.xlane.xlu0 %2000
          %v2002 = vsel %vm1824, %v1008, -inf
          %2003 = vmax.xlane.f32.xlu0 %v2002
          %v2004 = vpop.xlane.xlu0 %2003
          %v2005 = vsel %vm1824, %v1010, -inf
          %2006 = vmax.xlane.f32.xlu0 %v2005
          %v2007 = vpop.xlane.xlu0 %2006
          %v2008 = vsel %vm1824, %v1013, -inf
          %2009 = vmax.xlane.f32.xlu0 %v2008
          %v2010 = vpop.xlane.xlu0 %2009
          %v2011 = vsel %vm1824, %v1015, -inf
          %2012 = vmax.xlane.f32.xlu0 %v2011
          %v2013 = vpop.xlane.xlu0 %2012
          %v2014 = vsel %vm1824, %v1018, -inf
          %2015 = vmax.xlane.f32.xlu0 %v2014
          %v2016 = vpop.xlane.xlu0 %2015
          %v2017 = vsel %vm1824, %v1020, -inf
          %2018 = vmax.xlane.f32.xlu0 %v2017
          %v2019 = vpop.xlane.xlu0 %2018
          %v2020 = vsel %vm1824, %v1023, -inf
          %2021 = vmax.xlane.f32.xlu0 %v2020
          %v2022 = vpop.xlane.xlu0 %2021
          %v2023 = vsel %vm1824, %v1025, -inf
          %2024 = vmax.xlane.f32.xlu0 %v2023
          %v2025 = vpop.xlane.xlu0 %2024
          %v2026 = vsel %vm1824, %v1028, -inf
          %2027 = vmax.xlane.f32.xlu0 %v2026
          %v2028 = vpop.xlane.xlu0 %2027
          %v2029 = vsel %vm1824, %v1030, -inf
          %2030 = vmax.xlane.f32.xlu0 %v2029
          %v2031 = vpop.xlane.xlu0 %2030
          %v2032 = vsel %vm1824, %v1033, -inf
          %2033 = vmax.xlane.f32.xlu0 %v2032
          %v2034 = vpop.xlane.xlu0 %2033
          %v2035 = vsel %vm1824, %v1035, -inf
          %2036 = vmax.xlane.f32.xlu0 %v2035
          %v2037 = vpop.xlane.xlu0 %2036
          %v2038 = vsel %vm1824, %v1038, -inf
          %2039 = vmax.xlane.f32.xlu0 %v2038
          %v2040 = vpop.xlane.xlu0 %2039
          %v2041 = vsel %vm1824, %v1040, -inf
          %2042 = vmax.xlane.f32.xlu0 %v2041
          %v2043 = vpop.xlane.xlu0 %2042
          %v2044 = vsel %vm1824, %v1043, -inf
          %2045 = vmax.xlane.f32.xlu0 %v2044
          %v2046 = vpop.xlane.xlu0 %2045
          %v2047 = vsel %vm1824, %v1045, -inf
          %2048 = vmax.xlane.f32.xlu0 %v2047
          %v2049 = vpop.xlane.xlu0 %2048
          %v2050 = vsel %vm1824, %v1048, -inf
          %2051 = vmax.xlane.f32.xlu0 %v2050
          %v2052 = vpop.xlane.xlu0 %2051
          %v2053 = vsel %vm1824, %v1050, -inf
          %2054 = vmax.xlane.f32.xlu0 %v2053
          %v2055 = vpop.xlane.xlu0 %2054
          %v2056 = vsel %vm1824, %v1053, -inf
          %2057 = vmax.xlane.f32.xlu0 %v2056
          %v2058 = vpop.xlane.xlu0 %2057
          %v2059 = vsel %vm1824, %v1055, -inf
          %2060 = vmax.xlane.f32.xlu0 %v2059
          %v2061 = vpop.xlane.xlu0 %2060
          %v2062 = vsel %vm1824, %v1058, -inf
          %2063 = vmax.xlane.f32.xlu0 %v2062
          %v2064 = vpop.xlane.xlu0 %2063
          %v2065 = vsel %vm1824, %v1060, -inf
          %2066 = vmax.xlane.f32.xlu0 %v2065
          %v2067 = vpop.xlane.xlu0 %2066
          %v2068 = vsel %vm1824, %v1063, -inf
          %2069 = vmax.xlane.f32.xlu0 %v2068
          %v2070 = vpop.xlane.xlu0 %2069
          %v2071 = vsel %vm1824, %v1065, -inf
          %2072 = vmax.xlane.f32.xlu0 %v2071
          %v2073 = vpop.xlane.xlu0 %2072
          %v2074 = vsel %vm1824, %v1068, -inf
          %2075 = vmax.xlane.f32.xlu0 %v2074
          %v2076 = vpop.xlane.xlu0 %2075
          %v2077 = vsel %vm1824, %v1070, -inf
          %2078 = vmax.xlane.f32.xlu0 %v2077
          %v2079 = vpop.xlane.xlu0 %2078
          %v2080 = vsel %vm1824, %v1073, -inf
          %2081 = vmax.xlane.f32.xlu0 %v2080
          %v2082 = vpop.xlane.xlu0 %2081
          %v2083 = vsel %vm1824, %v1075, -inf
          %2084 = vmax.xlane.f32.xlu0 %v2083
          %v2085 = vpop.xlane.xlu0 %2084
          %v2086 = vsel %vm1824, %v1078, -inf
          %2087 = vmax.xlane.f32.xlu0 %v2086
          %v2088 = vpop.xlane.xlu0 %2087
          %v2089 = vsel %vm1824, %v1080, -inf
          %2090 = vmax.xlane.f32.xlu0 %v2089
          %v2091 = vpop.xlane.xlu0 %2090
          %v2092 = vsel %vm1824, %v1083, -inf
          %2093 = vmax.xlane.f32.xlu0 %v2092
          %v2094 = vpop.xlane.xlu0 %2093
          %v2095 = vsel %vm1824, %v1085, -inf
          %2096 = vmax.xlane.f32.xlu0 %v2095
          %v2097 = vpop.xlane.xlu0 %2096
          %v2098 = vsel %vm1824, %v1088, -inf
          %2099 = vmax.xlane.f32.xlu0 %v2098
          %v2100 = vpop.xlane.xlu0 %2099
          %v2101 = vsel %vm1824, %v1090, -inf
          %2102 = vmax.xlane.f32.xlu0 %v2101
          %v2103 = vpop.xlane.xlu0 %2102
          %v2104 = vsel %vm1824, %v1093, -inf
          %2105 = vmax.xlane.f32.xlu0 %v2104
          %v2106 = vpop.xlane.xlu0 %2105
          %v2107 = vsel %vm1824, %v1095, -inf
          %2108 = vmax.xlane.f32.xlu0 %v2107
          %v2109 = vpop.xlane.xlu0 %2108
          %v2110 = vsel %vm1824, %v1098, -inf
          %2111 = vmax.xlane.f32.xlu0 %v2110
          %v2112 = vpop.xlane.xlu0 %2111
          %v2113 = vsel %vm1824, %v1100, -inf
          %2114 = vmax.xlane.f32.xlu0 %v2113
          %v2115 = vpop.xlane.xlu0 %2114
          %v2116 = vsel %vm1824, %v1103, -inf
          %2117 = vmax.xlane.f32.xlu0 %v2116
          %v2118 = vpop.xlane.xlu0 %2117
          %v2119 = vsel %vm1824, %v1105, -inf
          %2120 = vmax.xlane.f32.xlu0 %v2119
          %v2121 = vpop.xlane.xlu0 %2120
          %v2122 = vsub.f32 %v948, %v1932
          %v2123 = vsub.f32 %v950, %v1935
          %v2124 = vsub.f32 %v953, %v1938
          %v2125 = vsub.f32 %v955, %v1941
          %v2126 = vsub.f32 %v958, %v1944
          %v2127 = vsub.f32 %v960, %v1947
          %v2128 = vsub.f32 %v963, %v1950
          %v2129 = vsub.f32 %v965, %v1953
          %v2130 = vsub.f32 %v968, %v1956
          %v2131 = vsub.f32 %v970, %v1959
          %v2132 = vsub.f32 %v973, %v1962
          %v2133 = vsub.f32 %v975, %v1965
          %v2134 = vsub.f32 %v978, %v1968
          %v2135 = vsub.f32 %v980, %v1971
          %v2136 = vsub.f32 %v983, %v1974
          %v2137 = vsub.f32 %v985, %v1977
          %v2138 = vsub.f32 %v988, %v1980
          %v2139 = vsub.f32 %v990, %v1983
          %v2140 = vsub.f32 %v993, %v1986
          %v2141 = vsub.f32 %v995, %v1989
          %v2142 = vsub.f32 %v998, %v1992
          %v2143 = vsub.f32 %v1000, %v1995
          %v2144 = vsub.f32 %v1003, %v1998
          %v2145 = vsub.f32 %v1005, %v2001
          %v2146 = vsub.f32 %v1008, %v2004
          %v2147 = vsub.f32 %v1010, %v2007
          %v2148 = vsub.f32 %v1013, %v2010
          %v2149 = vsub.f32 %v1015, %v2013
          %v2150 = vsub.f32 %v1018, %v2016
          %v2151 = vsub.f32 %v1020, %v2019
          %v2152 = vsub.f32 %v1023, %v2022
          %v2153 = vsub.f32 %v1025, %v2025
          %v2154 = vsub.f32 %v1028, %v2028
          %v2155 = vsub.f32 %v1030, %v2031
          %v2156 = vsub.f32 %v1033, %v2034
          %v2157 = vsub.f32 %v1035, %v2037
          %v2158 = vsub.f32 %v1038, %v2040
          %v2159 = vsub.f32 %v1040, %v2043
          %v2160 = vsub.f32 %v1043, %v2046
          %v2161 = vsub.f32 %v1045, %v2049
          %v2162 = vsub.f32 %v1048, %v2052
          %v2163 = vsub.f32 %v1050, %v2055
          %v2164 = vsub.f32 %v1053, %v2058
          %v2165 = vsub.f32 %v1055, %v2061
          %v2166 = vsub.f32 %v1058, %v2064
          %v2167 = vsub.f32 %v1060, %v2067
          %v2168 = vsub.f32 %v1063, %v2070
          %v2169 = vsub.f32 %v1065, %v2073
          %v2170 = vsub.f32 %v1068, %v2076
          %v2171 = vsub.f32 %v1070, %v2079
          %v2172 = vsub.f32 %v1073, %v2082
          %v2173 = vsub.f32 %v1075, %v2085
          %v2174 = vsub.f32 %v1078, %v2088
          %v2175 = vsub.f32 %v1080, %v2091
          %v2176 = vsub.f32 %v1083, %v2094
          %v2177 = vsub.f32 %v1085, %v2097
          %v2178 = vsub.f32 %v1088, %v2100
          %v2179 = vsub.f32 %v1090, %v2103
          %v2180 = vsub.f32 %v1093, %v2106
          %v2181 = vsub.f32 %v1095, %v2109
          %v2182 = vsub.f32 %v1098, %v2112
          %v2183 = vsub.f32 %v1100, %v2115
          %v2184 = vsub.f32 %v1103, %v2118
          %v2185 = vsub.f32 %v1105, %v2121
          %v2186 = vmul.f32 %v2122, 1.442695
          %v2187 = vpow.pop %v2186
          %v2188 = vmul.f32 %v2123, 1.442695
          %v2189 = vpow.pop %v2188
          %v2190 = vmul.f32 %v2124, 1.442695
          %v2191 = vpow.pop %v2190
          %v2192 = vmul.f32 %v2125, 1.442695
          %v2193 = vpow.pop %v2192
          %v2194 = vmul.f32 %v2126, 1.442695
          %v2195 = vpow.pop %v2194
          %v2196 = vmul.f32 %v2127, 1.442695
          %v2197 = vpow.pop %v2196
          %v2198 = vmul.f32 %v2128, 1.442695
          %v2199 = vpow.pop %v2198
          %v2200 = vmul.f32 %v2129, 1.442695
          %v2201 = vpow.pop %v2200
          %v2202 = vmul.f32 %v2130, 1.442695
          %v2203 = vpow.pop %v2202
          %v2204 = vmul.f32 %v2131, 1.442695
          %v2205 = vpow.pop %v2204
          %v2206 = vmul.f32 %v2132, 1.442695
          %v2207 = vpow.pop %v2206
          %v2208 = vmul.f32 %v2133, 1.442695
          %v2209 = vpow.pop %v2208
          %v2210 = vmul.f32 %v2134, 1.442695
          %v2211 = vpow.pop %v2210
          %v2212 = vmul.f32 %v2135, 1.442695
          %v2213 = vpow.pop %v2212
          %v2214 = vmul.f32 %v2136, 1.442695
          %v2215 = vpow.pop %v2214
          %v2216 = vmul.f32 %v2137, 1.442695
          %v2217 = vpow.pop %v2216
          %v2218 = vmul.f32 %v2138, 1.442695
          %v2219 = vpow.pop %v2218
          %v2220 = vmul.f32 %v2139, 1.442695
          %v2221 = vpow.pop %v2220
          %v2222 = vmul.f32 %v2140, 1.442695
          %v2223 = vpow.pop %v2222
          %v2224 = vmul.f32 %v2141, 1.442695
          %v2225 = vpow.pop %v2224
          %v2226 = vmul.f32 %v2142, 1.442695
          %v2227 = vpow.pop %v2226
          %v2228 = vmul.f32 %v2143, 1.442695
          %v2229 = vpow.pop %v2228
          %v2230 = vmul.f32 %v2144, 1.442695
          %v2231 = vpow.pop %v2230
          %v2232 = vmul.f32 %v2145, 1.442695
          %v2233 = vpow.pop %v2232
          %v2234 = vmul.f32 %v2146, 1.442695
          %v2235 = vpow.pop %v2234
          %v2236 = vmul.f32 %v2147, 1.442695
          %v2237 = vpow.pop %v2236
          %v2238 = vmul.f32 %v2148, 1.442695
          %v2239 = vpow.pop %v2238
          %v2240 = vmul.f32 %v2149, 1.442695
          %v2241 = vpow.pop %v2240
          %v2242 = vmul.f32 %v2150, 1.442695
          %v2243 = vpow.pop %v2242
          %v2244 = vmul.f32 %v2151, 1.442695
          %v2245 = vpow.pop %v2244
          %v2246 = vmul.f32 %v2152, 1.442695
          %v2247 = vpow.pop %v2246
          %v2248 = vmul.f32 %v2153, 1.442695
          %v2249 = vpow.pop %v2248
          %v2250 = vmul.f32 %v2154, 1.442695
          %v2251 = vpow.pop %v2250
          %v2252 = vmul.f32 %v2155, 1.442695
          %v2253 = vpow.pop %v2252
          %v2254 = vmul.f32 %v2156, 1.442695
          %v2255 = vpow.pop %v2254
          %v2256 = vmul.f32 %v2157, 1.442695
          %v2257 = vpow.pop %v2256
          %v2258 = vmul.f32 %v2158, 1.442695
          %v2259 = vpow.pop %v2258
          %v2260 = vmul.f32 %v2159, 1.442695
          %v2261 = vpow.pop %v2260
          %v2262 = vmul.f32 %v2160, 1.442695
          %v2263 = vpow.pop %v2262
          %v2264 = vmul.f32 %v2161, 1.442695
          %v2265 = vpow.pop %v2264
          %v2266 = vmul.f32 %v2162, 1.442695
          %v2267 = vpow.pop %v2266
          %v2268 = vmul.f32 %v2163, 1.442695
          %v2269 = vpow.pop %v2268
          %v2270 = vmul.f32 %v2164, 1.442695
          %v2271 = vpow.pop %v2270
          %v2272 = vmul.f32 %v2165, 1.442695
          %v2273 = vpow.pop %v2272
          %v2274 = vmul.f32 %v2166, 1.442695
          %v2275 = vpow.pop %v2274
          %v2276 = vmul.f32 %v2167, 1.442695
          %v2277 = vpow.pop %v2276
          %v2278 = vmul.f32 %v2168, 1.442695
          %v2279 = vpow.pop %v2278
          %v2280 = vmul.f32 %v2169, 1.442695
          %v2281 = vpow.pop %v2280
          %v2282 = vmul.f32 %v2170, 1.442695
          %v2283 = vpow.pop %v2282
          %v2284 = vmul.f32 %v2171, 1.442695
          %v2285 = vpow.pop %v2284
          %v2286 = vmul.f32 %v2172, 1.442695
          %v2287 = vpow.pop %v2286
          %v2288 = vmul.f32 %v2173, 1.442695
          %v2289 = vpow.pop %v2288
          %v2290 = vmul.f32 %v2174, 1.442695
          %v2291 = vpow.pop %v2290
          %v2292 = vmul.f32 %v2175, 1.442695
          %v2293 = vpow.pop %v2292
          %v2294 = vmul.f32 %v2176, 1.442695
          %v2295 = vpow.pop %v2294
          %v2296 = vmul.f32 %v2177, 1.442695
          %v2297 = vpow.pop %v2296
          %v2298 = vmul.f32 %v2178, 1.442695
          %v2299 = vpow.pop %v2298
          %v2300 = vmul.f32 %v2179, 1.442695
          %v2301 = vpow.pop %v2300
          %v2302 = vmul.f32 %v2180, 1.442695
          %v2303 = vpow.pop %v2302
          %v2304 = vmul.f32 %v2181, 1.442695
          %v2305 = vpow.pop %v2304
          %v2306 = vmul.f32 %v2182, 1.442695
          %v2307 = vpow.pop %v2306
          %v2308 = vmul.f32 %v2183, 1.442695
          %v2309 = vpow.pop %v2308
          %v2310 = vmul.f32 %v2184, 1.442695
          %v2311 = vpow.pop %v2310
          %v2312 = vmul.f32 %v2185, 1.442695
          %v2313 = vpow.pop %v2312
          %v2314 = vsel %vm1824, %v2187, 0.0
          %2315 = vadd.xlane.f32.xlu0 %v2314
          %v2316 = vpop.xlane.xlu0 %2315
          %v2317 = vsel %vm1824, %v2189, 0.0
          %2318 = vadd.xlane.f32.xlu0 %v2317
          %v2319 = vpop.xlane.xlu0 %2318
          %v2320 = vsel %vm1824, %v2191, 0.0
          %2321 = vadd.xlane.f32.xlu0 %v2320
          %v2322 = vpop.xlane.xlu0 %2321
          %v2323 = vsel %vm1824, %v2193, 0.0
          %2324 = vadd.xlane.f32.xlu0 %v2323
          %v2325 = vpop.xlane.xlu0 %2324
          %v2326 = vsel %vm1824, %v2195, 0.0
          %2327 = vadd.xlane.f32.xlu0 %v2326
          %v2328 = vpop.xlane.xlu0 %2327
          %v2329 = vsel %vm1824, %v2197, 0.0
          %2330 = vadd.xlane.f32.xlu0 %v2329
          %v2331 = vpop.xlane.xlu0 %2330
          %v2332 = vsel %vm1824, %v2199, 0.0
          %2333 = vadd.xlane.f32.xlu0 %v2332
          %v2334 = vpop.xlane.xlu0 %2333
          %v2335 = vsel %vm1824, %v2201, 0.0
          %2336 = vadd.xlane.f32.xlu0 %v2335
          %v2337 = vpop.xlane.xlu0 %2336
          %v2338 = vsel %vm1824, %v2203, 0.0
          %2339 = vadd.xlane.f32.xlu0 %v2338
          %v2340 = vpop.xlane.xlu0 %2339
          %v2341 = vsel %vm1824, %v2205, 0.0
          %2342 = vadd.xlane.f32.xlu0 %v2341
          %v2343 = vpop.xlane.xlu0 %2342
          %v2344 = vsel %vm1824, %v2207, 0.0
          %2345 = vadd.xlane.f32.xlu0 %v2344
          %v2346 = vpop.xlane.xlu0 %2345
          %v2347 = vsel %vm1824, %v2209, 0.0
          %2348 = vadd.xlane.f32.xlu0 %v2347
          %v2349 = vpop.xlane.xlu0 %2348
          %v2350 = vsel %vm1824, %v2211, 0.0
          %2351 = vadd.xlane.f32.xlu0 %v2350
          %v2352 = vpop.xlane.xlu0 %2351
          %v2353 = vsel %vm1824, %v2213, 0.0
          %2354 = vadd.xlane.f32.xlu0 %v2353
          %v2355 = vpop.xlane.xlu0 %2354
          %v2356 = vsel %vm1824, %v2215, 0.0
          %2357 = vadd.xlane.f32.xlu0 %v2356
          %v2358 = vpop.xlane.xlu0 %2357
          %v2359 = vsel %vm1824, %v2217, 0.0
          %2360 = vadd.xlane.f32.xlu0 %v2359
          %v2361 = vpop.xlane.xlu0 %2360
          %v2362 = vsel %vm1824, %v2219, 0.0
          %2363 = vadd.xlane.f32.xlu0 %v2362
          %v2364 = vpop.xlane.xlu0 %2363
          %v2365 = vsel %vm1824, %v2221, 0.0
          %2366 = vadd.xlane.f32.xlu0 %v2365
          %v2367 = vpop.xlane.xlu0 %2366
          %v2368 = vsel %vm1824, %v2223, 0.0
          %2369 = vadd.xlane.f32.xlu0 %v2368
          %v2370 = vpop.xlane.xlu0 %2369
          %v2371 = vsel %vm1824, %v2225, 0.0
          %2372 = vadd.xlane.f32.xlu0 %v2371
          %v2373 = vpop.xlane.xlu0 %2372
          %v2374 = vsel %vm1824, %v2227, 0.0
          %2375 = vadd.xlane.f32.xlu0 %v2374
          %v2376 = vpop.xlane.xlu0 %2375
          %v2377 = vsel %vm1824, %v2229, 0.0
          %2378 = vadd.xlane.f32.xlu0 %v2377
          %v2379 = vpop.xlane.xlu0 %2378
          %v2380 = vsel %vm1824, %v2231, 0.0
          %2381 = vadd.xlane.f32.xlu0 %v2380
          %v2382 = vpop.xlane.xlu0 %2381
          %v2383 = vsel %vm1824, %v2233, 0.0
          %2384 = vadd.xlane.f32.xlu0 %v2383
          %v2385 = vpop.xlane.xlu0 %2384
          %v2386 = vsel %vm1824, %v2235, 0.0
          %2387 = vadd.xlane.f32.xlu0 %v2386
          %v2388 = vpop.xlane.xlu0 %2387
          %v2389 = vsel %vm1824, %v2237, 0.0
          %2390 = vadd.xlane.f32.xlu0 %v2389
          %v2391 = vpop.xlane.xlu0 %2390
          %v2392 = vsel %vm1824, %v2239, 0.0
          %2393 = vadd.xlane.f32.xlu0 %v2392
          %v2394 = vpop.xlane.xlu0 %2393
          %v2395 = vsel %vm1824, %v2241, 0.0
          %2396 = vadd.xlane.f32.xlu0 %v2395
          %v2397 = vpop.xlane.xlu0 %2396
          %v2398 = vsel %vm1824, %v2243, 0.0
          %2399 = vadd.xlane.f32.xlu0 %v2398
          %v2400 = vpop.xlane.xlu0 %2399
          %v2401 = vsel %vm1824, %v2245, 0.0
          %2402 = vadd.xlane.f32.xlu0 %v2401
          %v2403 = vpop.xlane.xlu0 %2402
          %v2404 = vsel %vm1824, %v2247, 0.0
          %2405 = vadd.xlane.f32.xlu0 %v2404
          %v2406 = vpop.xlane.xlu0 %2405
          %v2407 = vsel %vm1824, %v2249, 0.0
          %2408 = vadd.xlane.f32.xlu0 %v2407
          %v2409 = vpop.xlane.xlu0 %2408
          %v2410 = vsel %vm1824, %v2251, 0.0
          %2411 = vadd.xlane.f32.xlu0 %v2410
          %v2412 = vpop.xlane.xlu0 %2411
          %v2413 = vsel %vm1824, %v2253, 0.0
          %2414 = vadd.xlane.f32.xlu0 %v2413
          %v2415 = vpop.xlane.xlu0 %2414
          %v2416 = vsel %vm1824, %v2255, 0.0
          %2417 = vadd.xlane.f32.xlu0 %v2416
          %v2418 = vpop.xlane.xlu0 %2417
          %v2419 = vsel %vm1824, %v2257, 0.0
          %2420 = vadd.xlane.f32.xlu0 %v2419
          %v2421 = vpop.xlane.xlu0 %2420
          %v2422 = vsel %vm1824, %v2259, 0.0
          %2423 = vadd.xlane.f32.xlu0 %v2422
          %v2424 = vpop.xlane.xlu0 %2423
          %v2425 = vsel %vm1824, %v2261, 0.0
          %2426 = vadd.xlane.f32.xlu0 %v2425
          %v2427 = vpop.xlane.xlu0 %2426
          %v2428 = vsel %vm1824, %v2263, 0.0
          %2429 = vadd.xlane.f32.xlu0 %v2428
          %v2430 = vpop.xlane.xlu0 %2429
          %v2431 = vsel %vm1824, %v2265, 0.0
          %2432 = vadd.xlane.f32.xlu0 %v2431
          %v2433 = vpop.xlane.xlu0 %2432
          %v2434 = vsel %vm1824, %v2267, 0.0
          %2435 = vadd.xlane.f32.xlu0 %v2434
          %v2436 = vpop.xlane.xlu0 %2435
          %v2437 = vsel %vm1824, %v2269, 0.0
          %2438 = vadd.xlane.f32.xlu0 %v2437
          %v2439 = vpop.xlane.xlu0 %2438
          %v2440 = vsel %vm1824, %v2271, 0.0
          %2441 = vadd.xlane.f32.xlu0 %v2440
          %v2442 = vpop.xlane.xlu0 %2441
          %v2443 = vsel %vm1824, %v2273, 0.0
          %2444 = vadd.xlane.f32.xlu0 %v2443
          %v2445 = vpop.xlane.xlu0 %2444
          %v2446 = vsel %vm1824, %v2275, 0.0
          %2447 = vadd.xlane.f32.xlu0 %v2446
          %v2448 = vpop.xlane.xlu0 %2447
          %v2449 = vsel %vm1824, %v2277, 0.0
          %2450 = vadd.xlane.f32.xlu0 %v2449
          %v2451 = vpop.xlane.xlu0 %2450
          %v2452 = vsel %vm1824, %v2279, 0.0
          %2453 = vadd.xlane.f32.xlu0 %v2452
          %v2454 = vpop.xlane.xlu0 %2453
          %v2455 = vsel %vm1824, %v2281, 0.0
          %2456 = vadd.xlane.f32.xlu0 %v2455
          %v2457 = vpop.xlane.xlu0 %2456
          %v2458 = vsel %vm1824, %v2283, 0.0
          %2459 = vadd.xlane.f32.xlu0 %v2458
          %v2460 = vpop.xlane.xlu0 %2459
          %v2461 = vsel %vm1824, %v2285, 0.0
          %2462 = vadd.xlane.f32.xlu0 %v2461
          %v2463 = vpop.xlane.xlu0 %2462
          %v2464 = vsel %vm1824, %v2287, 0.0
          %2465 = vadd.xlane.f32.xlu0 %v2464
          %v2466 = vpop.xlane.xlu0 %2465
          %v2467 = vsel %vm1824, %v2289, 0.0
          %2468 = vadd.xlane.f32.xlu0 %v2467
          %v2469 = vpop.xlane.xlu0 %2468
          %v2470 = vsel %vm1824, %v2291, 0.0
          %2471 = vadd.xlane.f32.xlu0 %v2470
          %v2472 = vpop.xlane.xlu0 %2471
          %v2473 = vsel %vm1824, %v2293, 0.0
          %2474 = vadd.xlane.f32.xlu0 %v2473
          %v2475 = vpop.xlane.xlu0 %2474
          %v2476 = vsel %vm1824, %v2295, 0.0
          %2477 = vadd.xlane.f32.xlu0 %v2476
          %v2478 = vpop.xlane.xlu0 %2477
          %v2479 = vsel %vm1824, %v2297, 0.0
          %2480 = vadd.xlane.f32.xlu0 %v2479
          %v2481 = vpop.xlane.xlu0 %2480
          %v2482 = vsel %vm1824, %v2299, 0.0
          %2483 = vadd.xlane.f32.xlu0 %v2482
          %v2484 = vpop.xlane.xlu0 %2483
          %v2485 = vsel %vm1824, %v2301, 0.0
          %2486 = vadd.xlane.f32.xlu0 %v2485
          %v2487 = vpop.xlane.xlu0 %2486
          %v2488 = vsel %vm1824, %v2303, 0.0
          %2489 = vadd.xlane.f32.xlu0 %v2488
          %v2490 = vpop.xlane.xlu0 %2489
          %v2491 = vsel %vm1824, %v2305, 0.0
          %2492 = vadd.xlane.f32.xlu0 %v2491
          %v2493 = vpop.xlane.xlu0 %2492
          %v2494 = vsel %vm1824, %v2307, 0.0
          %2495 = vadd.xlane.f32.xlu0 %v2494
          %v2496 = vpop.xlane.xlu0 %2495
          %v2497 = vsel %vm1824, %v2309, 0.0
          %2498 = vadd.xlane.f32.xlu0 %v2497
          %v2499 = vpop.xlane.xlu0 %2498
          %v2500 = vsel %vm1824, %v2311, 0.0
          %2501 = vadd.xlane.f32.xlu0 %v2500
          %v2502 = vpop.xlane.xlu0 %2501
          %v2503 = vsel %vm1824, %v2313, 0.0
          %2504 = vadd.xlane.f32.xlu0 %v2503
          %v2505 = vpop.xlane.xlu0 %2504
          %v2506 = vrcp.pop %v2316
          %v2507 = vmul.f32 %v2316, %v2506
          %v2508 = vsub.f32 1.0, %v2507
          %v2509 = vmul.f32 %v2506, %v2508
          %v2510 = vadd.f32 %v2506, %v2509
          %vm2511 = vweird.f32 %v2316
          %vm2512 = vweird.f32 %v2506
          %vm2513 = vmor %vm2511, %vm2512
          %v2514 = vsel %vm2513, %v2506, %v2510
          %v2515 = vand.u32 2147483647, %v2316
          %vm2516 = vcmp.eq.f32.partialorder %v2515, 8.507059e+37
          %v2517 = vand.u32 %v2316, 2147483648
          %v2518 = vor.u32 1.1754944e-38, %v2517
          %v2519 = vsel %vm2516, %v2518, %v2514
          %v2520 = vrcp.pop %v2319
          %v2521 = vmul.f32 %v2319, %v2520
          %v2522 = vsub.f32 1.0, %v2521
          %v2523 = vmul.f32 %v2520, %v2522
          %v2524 = vadd.f32 %v2520, %v2523
          %vm2525 = vweird.f32 %v2319
          %vm2526 = vweird.f32 %v2520
          %vm2527 = vmor %vm2525, %vm2526
          %v2528 = vsel %vm2527, %v2520, %v2524
          %v2529 = vand.u32 2147483647, %v2319
          %vm2530 = vcmp.eq.f32.partialorder %v2529, 8.507059e+37
          %v2531 = vand.u32 %v2319, 2147483648
          %v2532 = vor.u32 1.1754944e-38, %v2531
          %v2533 = vsel %vm2530, %v2532, %v2528
          %v2534 = vrcp.pop %v2322
          %v2535 = vmul.f32 %v2322, %v2534
          %v2536 = vsub.f32 1.0, %v2535
          %v2537 = vmul.f32 %v2534, %v2536
          %v2538 = vadd.f32 %v2534, %v2537
          %vm2539 = vweird.f32 %v2322
          %vm2540 = vweird.f32 %v2534
          %vm2541 = vmor %vm2539, %vm2540
          %v2542 = vsel %vm2541, %v2534, %v2538
          %v2543 = vand.u32 2147483647, %v2322
          %vm2544 = vcmp.eq.f32.partialorder %v2543, 8.507059e+37
          %v2545 = vand.u32 %v2322, 2147483648
          %v2546 = vor.u32 1.1754944e-38, %v2545
          %v2547 = vsel %vm2544, %v2546, %v2542
          %v2548 = vrcp.pop %v2325
          %v2549 = vmul.f32 %v2325, %v2548
          %v2550 = vsub.f32 1.0, %v2549
          %v2551 = vmul.f32 %v2548, %v2550
          %v2552 = vadd.f32 %v2548, %v2551
          %vm2553 = vweird.f32 %v2325
          %vm2554 = vweird.f32 %v2548
          %vm2555 = vmor %vm2553, %vm2554
          %v2556 = vsel %vm2555, %v2548, %v2552
          %v2557 = vand.u32 2147483647, %v2325
          %vm2558 = vcmp.eq.f32.partialorder %v2557, 8.507059e+37
          %v2559 = vand.u32 %v2325, 2147483648
          %v2560 = vor.u32 1.1754944e-38, %v2559
          %v2561 = vsel %vm2558, %v2560, %v2556
          %v2562 = vrcp.pop %v2328
          %v2563 = vmul.f32 %v2328, %v2562
          %v2564 = vsub.f32 1.0, %v2563
          %v2565 = vmul.f32 %v2562, %v2564
          %v2566 = vadd.f32 %v2562, %v2565
          %vm2567 = vweird.f32 %v2328
          %vm2568 = vweird.f32 %v2562
          %vm2569 = vmor %vm2567, %vm2568
          %v2570 = vsel %vm2569, %v2562, %v2566
          %v2571 = vand.u32 2147483647, %v2328
          %vm2572 = vcmp.eq.f32.partialorder %v2571, 8.507059e+37
          %v2573 = vand.u32 %v2328, 2147483648
          %v2574 = vor.u32 1.1754944e-38, %v2573
          %v2575 = vsel %vm2572, %v2574, %v2570
          %v2576 = vrcp.pop %v2331
          %v2577 = vmul.f32 %v2331, %v2576
          %v2578 = vsub.f32 1.0, %v2577
          %v2579 = vmul.f32 %v2576, %v2578
          %v2580 = vadd.f32 %v2576, %v2579
          %vm2581 = vweird.f32 %v2331
          %vm2582 = vweird.f32 %v2576
          %vm2583 = vmor %vm2581, %vm2582
          %v2584 = vsel %vm2583, %v2576, %v2580
          %v2585 = vand.u32 2147483647, %v2331
          %vm2586 = vcmp.eq.f32.partialorder %v2585, 8.507059e+37
          %v2587 = vand.u32 %v2331, 2147483648
          %v2588 = vor.u32 1.1754944e-38, %v2587
          %v2589 = vsel %vm2586, %v2588, %v2584
          %v2590 = vrcp.pop %v2334
          %v2591 = vmul.f32 %v2334, %v2590
          %v2592 = vsub.f32 1.0, %v2591
          %v2593 = vmul.f32 %v2590, %v2592
          %v2594 = vadd.f32 %v2590, %v2593
          %vm2595 = vweird.f32 %v2334
          %vm2596 = vweird.f32 %v2590
          %vm2597 = vmor %vm2595, %vm2596
          %v2598 = vsel %vm2597, %v2590, %v2594
          %v2599 = vand.u32 2147483647, %v2334
          %vm2600 = vcmp.eq.f32.partialorder %v2599, 8.507059e+37
          %v2601 = vand.u32 %v2334, 2147483648
          %v2602 = vor.u32 1.1754944e-38, %v2601
          %v2603 = vsel %vm2600, %v2602, %v2598
          %v2604 = vrcp.pop %v2337
          %v2605 = vmul.f32 %v2337, %v2604
          %v2606 = vsub.f32 1.0, %v2605
          %v2607 = vmul.f32 %v2604, %v2606
          %v2608 = vadd.f32 %v2604, %v2607
          %vm2609 = vweird.f32 %v2337
          %vm2610 = vweird.f32 %v2604
          %vm2611 = vmor %vm2609, %vm2610
          %v2612 = vsel %vm2611, %v2604, %v2608
          %v2613 = vand.u32 2147483647, %v2337
          %vm2614 = vcmp.eq.f32.partialorder %v2613, 8.507059e+37
          %v2615 = vand.u32 %v2337, 2147483648
          %v2616 = vor.u32 1.1754944e-38, %v2615
          %v2617 = vsel %vm2614, %v2616, %v2612
          %v2618 = vrcp.pop %v2340
          %v2619 = vmul.f32 %v2340, %v2618
          %v2620 = vsub.f32 1.0, %v2619
          %v2621 = vmul.f32 %v2618, %v2620
          %v2622 = vadd.f32 %v2618, %v2621
          %vm2623 = vweird.f32 %v2340
          %vm2624 = vweird.f32 %v2618
          %vm2625 = vmor %vm2623, %vm2624
          %v2626 = vsel %vm2625, %v2618, %v2622
          %v2627 = vand.u32 2147483647, %v2340
          %vm2628 = vcmp.eq.f32.partialorder %v2627, 8.507059e+37
          %v2629 = vand.u32 %v2340, 2147483648
          %v2630 = vor.u32 1.1754944e-38, %v2629
          %v2631 = vsel %vm2628, %v2630, %v2626
          %v2632 = vrcp.pop %v2343
          %v2633 = vmul.f32 %v2343, %v2632
          %v2634 = vsub.f32 1.0, %v2633
          %v2635 = vmul.f32 %v2632, %v2634
          %v2636 = vadd.f32 %v2632, %v2635
          %vm2637 = vweird.f32 %v2343
          %vm2638 = vweird.f32 %v2632
          %vm2639 = vmor %vm2637, %vm2638
          %v2640 = vsel %vm2639, %v2632, %v2636
          %v2641 = vand.u32 2147483647, %v2343
          %vm2642 = vcmp.eq.f32.partialorder %v2641, 8.507059e+37
          %v2643 = vand.u32 %v2343, 2147483648
          %v2644 = vor.u32 1.1754944e-38, %v2643
          %v2645 = vsel %vm2642, %v2644, %v2640
          %v2646 = vrcp.pop %v2346
          %v2647 = vmul.f32 %v2346, %v2646
          %v2648 = vsub.f32 1.0, %v2647
          %v2649 = vmul.f32 %v2646, %v2648
          %v2650 = vadd.f32 %v2646, %v2649
          %vm2651 = vweird.f32 %v2346
          %vm2652 = vweird.f32 %v2646
          %vm2653 = vmor %vm2651, %vm2652
          %v2654 = vsel %vm2653, %v2646, %v2650
          %v2655 = vand.u32 2147483647, %v2346
          %vm2656 = vcmp.eq.f32.partialorder %v2655, 8.507059e+37
          %v2657 = vand.u32 %v2346, 2147483648
          %v2658 = vor.u32 1.1754944e-38, %v2657
          %v2659 = vsel %vm2656, %v2658, %v2654
          %v2660 = vrcp.pop %v2349
          %v2661 = vmul.f32 %v2349, %v2660
          %v2662 = vsub.f32 1.0, %v2661
          %v2663 = vmul.f32 %v2660, %v2662
          %v2664 = vadd.f32 %v2660, %v2663
          %vm2665 = vweird.f32 %v2349
          %vm2666 = vweird.f32 %v2660
          %vm2667 = vmor %vm2665, %vm2666
          %v2668 = vsel %vm2667, %v2660, %v2664
          %v2669 = vand.u32 2147483647, %v2349
          %vm2670 = vcmp.eq.f32.partialorder %v2669, 8.507059e+37
          %v2671 = vand.u32 %v2349, 2147483648
          %v2672 = vor.u32 1.1754944e-38, %v2671
          %v2673 = vsel %vm2670, %v2672, %v2668
          %v2674 = vrcp.pop %v2352
          %v2675 = vmul.f32 %v2352, %v2674
          %v2676 = vsub.f32 1.0, %v2675
          %v2677 = vmul.f32 %v2674, %v2676
          %v2678 = vadd.f32 %v2674, %v2677
          %vm2679 = vweird.f32 %v2352
          %vm2680 = vweird.f32 %v2674
          %vm2681 = vmor %vm2679, %vm2680
          %v2682 = vsel %vm2681, %v2674, %v2678
          %v2683 = vand.u32 2147483647, %v2352
          %vm2684 = vcmp.eq.f32.partialorder %v2683, 8.507059e+37
          %v2685 = vand.u32 %v2352, 2147483648
          %v2686 = vor.u32 1.1754944e-38, %v2685
          %v2687 = vsel %vm2684, %v2686, %v2682
          %v2688 = vrcp.pop %v2355
          %v2689 = vmul.f32 %v2355, %v2688
          %v2690 = vsub.f32 1.0, %v2689
          %v2691 = vmul.f32 %v2688, %v2690
          %v2692 = vadd.f32 %v2688, %v2691
          %vm2693 = vweird.f32 %v2355
          %vm2694 = vweird.f32 %v2688
          %vm2695 = vmor %vm2693, %vm2694
          %v2696 = vsel %vm2695, %v2688, %v2692
          %v2697 = vand.u32 2147483647, %v2355
          %vm2698 = vcmp.eq.f32.partialorder %v2697, 8.507059e+37
          %v2699 = vand.u32 %v2355, 2147483648
          %v2700 = vor.u32 1.1754944e-38, %v2699
          %v2701 = vsel %vm2698, %v2700, %v2696
          %v2702 = vrcp.pop %v2358
          %v2703 = vmul.f32 %v2358, %v2702
          %v2704 = vsub.f32 1.0, %v2703
          %v2705 = vmul.f32 %v2702, %v2704
          %v2706 = vadd.f32 %v2702, %v2705
          %vm2707 = vweird.f32 %v2358
          %vm2708 = vweird.f32 %v2702
          %vm2709 = vmor %vm2707, %vm2708
          %v2710 = vsel %vm2709, %v2702, %v2706
          %v2711 = vand.u32 2147483647, %v2358
          %vm2712 = vcmp.eq.f32.partialorder %v2711, 8.507059e+37
          %v2713 = vand.u32 %v2358, 2147483648
          %v2714 = vor.u32 1.1754944e-38, %v2713
          %v2715 = vsel %vm2712, %v2714, %v2710
          %v2716 = vrcp.pop %v2361
          %v2717 = vmul.f32 %v2361, %v2716
          %v2718 = vsub.f32 1.0, %v2717
          %v2719 = vmul.f32 %v2716, %v2718
          %v2720 = vadd.f32 %v2716, %v2719
          %vm2721 = vweird.f32 %v2361
          %vm2722 = vweird.f32 %v2716
          %vm2723 = vmor %vm2721, %vm2722
          %v2724 = vsel %vm2723, %v2716, %v2720
          %v2725 = vand.u32 2147483647, %v2361
          %vm2726 = vcmp.eq.f32.partialorder %v2725, 8.507059e+37
          %v2727 = vand.u32 %v2361, 2147483648
          %v2728 = vor.u32 1.1754944e-38, %v2727
          %v2729 = vsel %vm2726, %v2728, %v2724
          %v2730 = vrcp.pop %v2364
          %v2731 = vmul.f32 %v2364, %v2730
          %v2732 = vsub.f32 1.0, %v2731
          %v2733 = vmul.f32 %v2730, %v2732
          %v2734 = vadd.f32 %v2730, %v2733
          %vm2735 = vweird.f32 %v2364
          %vm2736 = vweird.f32 %v2730
          %vm2737 = vmor %vm2735, %vm2736
          %v2738 = vsel %vm2737, %v2730, %v2734
          %v2739 = vand.u32 2147483647, %v2364
          %vm2740 = vcmp.eq.f32.partialorder %v2739, 8.507059e+37
          %v2741 = vand.u32 %v2364, 2147483648
          %v2742 = vor.u32 1.1754944e-38, %v2741
          %v2743 = vsel %vm2740, %v2742, %v2738
          %v2744 = vrcp.pop %v2367
          %v2745 = vmul.f32 %v2367, %v2744
          %v2746 = vsub.f32 1.0, %v2745
          %v2747 = vmul.f32 %v2744, %v2746
          %v2748 = vadd.f32 %v2744, %v2747
          %vm2749 = vweird.f32 %v2367
          %vm2750 = vweird.f32 %v2744
          %vm2751 = vmor %vm2749, %vm2750
          %v2752 = vsel %vm2751, %v2744, %v2748
          %v2753 = vand.u32 2147483647, %v2367
          %vm2754 = vcmp.eq.f32.partialorder %v2753, 8.507059e+37
          %v2755 = vand.u32 %v2367, 2147483648
          %v2756 = vor.u32 1.1754944e-38, %v2755
          %v2757 = vsel %vm2754, %v2756, %v2752
          %v2758 = vrcp.pop %v2370
          %v2759 = vmul.f32 %v2370, %v2758
          %v2760 = vsub.f32 1.0, %v2759
          %v2761 = vmul.f32 %v2758, %v2760
          %v2762 = vadd.f32 %v2758, %v2761
          %vm2763 = vweird.f32 %v2370
          %vm2764 = vweird.f32 %v2758
          %vm2765 = vmor %vm2763, %vm2764
          %v2766 = vsel %vm2765, %v2758, %v2762
          %v2767 = vand.u32 2147483647, %v2370
          %vm2768 = vcmp.eq.f32.partialorder %v2767, 8.507059e+37
          %v2769 = vand.u32 %v2370, 2147483648
          %v2770 = vor.u32 1.1754944e-38, %v2769
          %v2771 = vsel %vm2768, %v2770, %v2766
          %v2772 = vrcp.pop %v2373
          %v2773 = vmul.f32 %v2373, %v2772
          %v2774 = vsub.f32 1.0, %v2773
          %v2775 = vmul.f32 %v2772, %v2774
          %v2776 = vadd.f32 %v2772, %v2775
          %vm2777 = vweird.f32 %v2373
          %vm2778 = vweird.f32 %v2772
          %vm2779 = vmor %vm2777, %vm2778
          %v2780 = vsel %vm2779, %v2772, %v2776
          %v2781 = vand.u32 2147483647, %v2373
          %vm2782 = vcmp.eq.f32.partialorder %v2781, 8.507059e+37
          %v2783 = vand.u32 %v2373, 2147483648
          %v2784 = vor.u32 1.1754944e-38, %v2783
          %v2785 = vsel %vm2782, %v2784, %v2780
          %v2786 = vrcp.pop %v2376
          %v2787 = vmul.f32 %v2376, %v2786
          %v2788 = vsub.f32 1.0, %v2787
          %v2789 = vmul.f32 %v2786, %v2788
          %v2790 = vadd.f32 %v2786, %v2789
          %vm2791 = vweird.f32 %v2376
          %vm2792 = vweird.f32 %v2786
          %vm2793 = vmor %vm2791, %vm2792
          %v2794 = vsel %vm2793, %v2786, %v2790
          %v2795 = vand.u32 2147483647, %v2376
          %vm2796 = vcmp.eq.f32.partialorder %v2795, 8.507059e+37
          %v2797 = vand.u32 %v2376, 2147483648
          %v2798 = vor.u32 1.1754944e-38, %v2797
          %v2799 = vsel %vm2796, %v2798, %v2794
          %v2800 = vrcp.pop %v2379
          %v2801 = vmul.f32 %v2379, %v2800
          %v2802 = vsub.f32 1.0, %v2801
          %v2803 = vmul.f32 %v2800, %v2802
          %v2804 = vadd.f32 %v2800, %v2803
          %vm2805 = vweird.f32 %v2379
          %vm2806 = vweird.f32 %v2800
          %vm2807 = vmor %vm2805, %vm2806
          %v2808 = vsel %vm2807, %v2800, %v2804
          %v2809 = vand.u32 2147483647, %v2379
          %vm2810 = vcmp.eq.f32.partialorder %v2809, 8.507059e+37
          %v2811 = vand.u32 %v2379, 2147483648
          %v2812 = vor.u32 1.1754944e-38, %v2811
          %v2813 = vsel %vm2810, %v2812, %v2808
          %v2814 = vrcp.pop %v2382
          %v2815 = vmul.f32 %v2382, %v2814
          %v2816 = vsub.f32 1.0, %v2815
          %v2817 = vmul.f32 %v2814, %v2816
          %v2818 = vadd.f32 %v2814, %v2817
          %vm2819 = vweird.f32 %v2382
          %vm2820 = vweird.f32 %v2814
          %vm2821 = vmor %vm2819, %vm2820
          %v2822 = vsel %vm2821, %v2814, %v2818
          %v2823 = vand.u32 2147483647, %v2382
          %vm2824 = vcmp.eq.f32.partialorder %v2823, 8.507059e+37
          %v2825 = vand.u32 %v2382, 2147483648
          %v2826 = vor.u32 1.1754944e-38, %v2825
          %v2827 = vsel %vm2824, %v2826, %v2822
          %v2828 = vrcp.pop %v2385
          %v2829 = vmul.f32 %v2385, %v2828
          %v2830 = vsub.f32 1.0, %v2829
          %v2831 = vmul.f32 %v2828, %v2830
          %v2832 = vadd.f32 %v2828, %v2831
          %vm2833 = vweird.f32 %v2385
          %vm2834 = vweird.f32 %v2828
          %vm2835 = vmor %vm2833, %vm2834
          %v2836 = vsel %vm2835, %v2828, %v2832
          %v2837 = vand.u32 2147483647, %v2385
          %vm2838 = vcmp.eq.f32.partialorder %v2837, 8.507059e+37
          %v2839 = vand.u32 %v2385, 2147483648
          %v2840 = vor.u32 1.1754944e-38, %v2839
          %v2841 = vsel %vm2838, %v2840, %v2836
          %v2842 = vrcp.pop %v2388
          %v2843 = vmul.f32 %v2388, %v2842
          %v2844 = vsub.f32 1.0, %v2843
          %v2845 = vmul.f32 %v2842, %v2844
          %v2846 = vadd.f32 %v2842, %v2845
          %vm2847 = vweird.f32 %v2388
          %vm2848 = vweird.f32 %v2842
          %vm2849 = vmor %vm2847, %vm2848
          %v2850 = vsel %vm2849, %v2842, %v2846
          %v2851 = vand.u32 2147483647, %v2388
          %vm2852 = vcmp.eq.f32.partialorder %v2851, 8.507059e+37
          %v2853 = vand.u32 %v2388, 2147483648
          %v2854 = vor.u32 1.1754944e-38, %v2853
          %v2855 = vsel %vm2852, %v2854, %v2850
          %v2856 = vrcp.pop %v2391
          %v2857 = vmul.f32 %v2391, %v2856
          %v2858 = vsub.f32 1.0, %v2857
          %v2859 = vmul.f32 %v2856, %v2858
          %v2860 = vadd.f32 %v2856, %v2859
          %vm2861 = vweird.f32 %v2391
          %vm2862 = vweird.f32 %v2856
          %vm2863 = vmor %vm2861, %vm2862
          %v2864 = vsel %vm2863, %v2856, %v2860
          %v2865 = vand.u32 2147483647, %v2391
          %vm2866 = vcmp.eq.f32.partialorder %v2865, 8.507059e+37
          %v2867 = vand.u32 %v2391, 2147483648
          %v2868 = vor.u32 1.1754944e-38, %v2867
          %v2869 = vsel %vm2866, %v2868, %v2864
          %v2870 = vrcp.pop %v2394
          %v2871 = vmul.f32 %v2394, %v2870
          %v2872 = vsub.f32 1.0, %v2871
          %v2873 = vmul.f32 %v2870, %v2872
          %v2874 = vadd.f32 %v2870, %v2873
          %vm2875 = vweird.f32 %v2394
          %vm2876 = vweird.f32 %v2870
          %vm2877 = vmor %vm2875, %vm2876
          %v2878 = vsel %vm2877, %v2870, %v2874
          %v2879 = vand.u32 2147483647, %v2394
          %vm2880 = vcmp.eq.f32.partialorder %v2879, 8.507059e+37
          %v2881 = vand.u32 %v2394, 2147483648
          %v2882 = vor.u32 1.1754944e-38, %v2881
          %v2883 = vsel %vm2880, %v2882, %v2878
          %v2884 = vrcp.pop %v2397
          %v2885 = vmul.f32 %v2397, %v2884
          %v2886 = vsub.f32 1.0, %v2885
          %v2887 = vmul.f32 %v2884, %v2886
          %v2888 = vadd.f32 %v2884, %v2887
          %vm2889 = vweird.f32 %v2397
          %vm2890 = vweird.f32 %v2884
          %vm2891 = vmor %vm2889, %vm2890
          %v2892 = vsel %vm2891, %v2884, %v2888
          %v2893 = vand.u32 2147483647, %v2397
          %vm2894 = vcmp.eq.f32.partialorder %v2893, 8.507059e+37
          %v2895 = vand.u32 %v2397, 2147483648
          %v2896 = vor.u32 1.1754944e-38, %v2895
          %v2897 = vsel %vm2894, %v2896, %v2892
          %v2898 = vrcp.pop %v2400
          %v2899 = vmul.f32 %v2400, %v2898
          %v2900 = vsub.f32 1.0, %v2899
          %v2901 = vmul.f32 %v2898, %v2900
          %v2902 = vadd.f32 %v2898, %v2901
          %vm2903 = vweird.f32 %v2400
          %vm2904 = vweird.f32 %v2898
          %vm2905 = vmor %vm2903, %vm2904
          %v2906 = vsel %vm2905, %v2898, %v2902
          %v2907 = vand.u32 2147483647, %v2400
          %vm2908 = vcmp.eq.f32.partialorder %v2907, 8.507059e+37
          %v2909 = vand.u32 %v2400, 2147483648
          %v2910 = vor.u32 1.1754944e-38, %v2909
          %v2911 = vsel %vm2908, %v2910, %v2906
          %v2912 = vrcp.pop %v2403
          %v2913 = vmul.f32 %v2403, %v2912
          %v2914 = vsub.f32 1.0, %v2913
          %v2915 = vmul.f32 %v2912, %v2914
          %v2916 = vadd.f32 %v2912, %v2915
          %vm2917 = vweird.f32 %v2403
          %vm2918 = vweird.f32 %v2912
          %vm2919 = vmor %vm2917, %vm2918
          %v2920 = vsel %vm2919, %v2912, %v2916
          %v2921 = vand.u32 2147483647, %v2403
          %vm2922 = vcmp.eq.f32.partialorder %v2921, 8.507059e+37
          %v2923 = vand.u32 %v2403, 2147483648
          %v2924 = vor.u32 1.1754944e-38, %v2923
          %v2925 = vsel %vm2922, %v2924, %v2920
          %v2926 = vrcp.pop %v2406
          %v2927 = vmul.f32 %v2406, %v2926
          %v2928 = vsub.f32 1.0, %v2927
          %v2929 = vmul.f32 %v2926, %v2928
          %v2930 = vadd.f32 %v2926, %v2929
          %vm2931 = vweird.f32 %v2406
          %vm2932 = vweird.f32 %v2926
          %vm2933 = vmor %vm2931, %vm2932
          %v2934 = vsel %vm2933, %v2926, %v2930
          %v2935 = vand.u32 2147483647, %v2406
          %vm2936 = vcmp.eq.f32.partialorder %v2935, 8.507059e+37
          %v2937 = vand.u32 %v2406, 2147483648
          %v2938 = vor.u32 1.1754944e-38, %v2937
          %v2939 = vsel %vm2936, %v2938, %v2934
          %v2940 = vrcp.pop %v2409
          %v2941 = vmul.f32 %v2409, %v2940
          %v2942 = vsub.f32 1.0, %v2941
          %v2943 = vmul.f32 %v2940, %v2942
          %v2944 = vadd.f32 %v2940, %v2943
          %vm2945 = vweird.f32 %v2409
          %vm2946 = vweird.f32 %v2940
          %vm2947 = vmor %vm2945, %vm2946
          %v2948 = vsel %vm2947, %v2940, %v2944
          %v2949 = vand.u32 2147483647, %v2409
          %vm2950 = vcmp.eq.f32.partialorder %v2949, 8.507059e+37
          %v2951 = vand.u32 %v2409, 2147483648
          %v2952 = vor.u32 1.1754944e-38, %v2951
          %v2953 = vsel %vm2950, %v2952, %v2948
          %v2954 = vrcp.pop %v2412
          %v2955 = vmul.f32 %v2412, %v2954
          %v2956 = vsub.f32 1.0, %v2955
          %v2957 = vmul.f32 %v2954, %v2956
          %v2958 = vadd.f32 %v2954, %v2957
          %vm2959 = vweird.f32 %v2412
          %vm2960 = vweird.f32 %v2954
          %vm2961 = vmor %vm2959, %vm2960
          %v2962 = vsel %vm2961, %v2954, %v2958
          %v2963 = vand.u32 2147483647, %v2412
          %vm2964 = vcmp.eq.f32.partialorder %v2963, 8.507059e+37
          %v2965 = vand.u32 %v2412, 2147483648
          %v2966 = vor.u32 1.1754944e-38, %v2965
          %v2967 = vsel %vm2964, %v2966, %v2962
          %v2968 = vrcp.pop %v2415
          %v2969 = vmul.f32 %v2415, %v2968
          %v2970 = vsub.f32 1.0, %v2969
          %v2971 = vmul.f32 %v2968, %v2970
          %v2972 = vadd.f32 %v2968, %v2971
          %vm2973 = vweird.f32 %v2415
          %vm2974 = vweird.f32 %v2968
          %vm2975 = vmor %vm2973, %vm2974
          %v2976 = vsel %vm2975, %v2968, %v2972
          %v2977 = vand.u32 2147483647, %v2415
          %vm2978 = vcmp.eq.f32.partialorder %v2977, 8.507059e+37
          %v2979 = vand.u32 %v2415, 2147483648
          %v2980 = vor.u32 1.1754944e-38, %v2979
          %v2981 = vsel %vm2978, %v2980, %v2976
          %v2982 = vrcp.pop %v2418
          %v2983 = vmul.f32 %v2418, %v2982
          %v2984 = vsub.f32 1.0, %v2983
          %v2985 = vmul.f32 %v2982, %v2984
          %v2986 = vadd.f32 %v2982, %v2985
          %vm2987 = vweird.f32 %v2418
          %vm2988 = vweird.f32 %v2982
          %vm2989 = vmor %vm2987, %vm2988
          %v2990 = vsel %vm2989, %v2982, %v2986
          %v2991 = vand.u32 2147483647, %v2418
          %vm2992 = vcmp.eq.f32.partialorder %v2991, 8.507059e+37
          %v2993 = vand.u32 %v2418, 2147483648
          %v2994 = vor.u32 1.1754944e-38, %v2993
          %v2995 = vsel %vm2992, %v2994, %v2990
          %v2996 = vrcp.pop %v2421
          %v2997 = vmul.f32 %v2421, %v2996
          %v2998 = vsub.f32 1.0, %v2997
          %v2999 = vmul.f32 %v2996, %v2998
          %v3000 = vadd.f32 %v2996, %v2999
          %vm3001 = vweird.f32 %v2421
          %vm3002 = vweird.f32 %v2996
          %vm3003 = vmor %vm3001, %vm3002
          %v3004 = vsel %vm3003, %v2996, %v3000
          %v3005 = vand.u32 2147483647, %v2421
          %vm3006 = vcmp.eq.f32.partialorder %v3005, 8.507059e+37
          %v3007 = vand.u32 %v2421, 2147483648
          %v3008 = vor.u32 1.1754944e-38, %v3007
          %v3009 = vsel %vm3006, %v3008, %v3004
          %v3010 = vrcp.pop %v2424
          %v3011 = vmul.f32 %v2424, %v3010
          %v3012 = vsub.f32 1.0, %v3011
          %v3013 = vmul.f32 %v3010, %v3012
          %v3014 = vadd.f32 %v3010, %v3013
          %vm3015 = vweird.f32 %v2424
          %vm3016 = vweird.f32 %v3010
          %vm3017 = vmor %vm3015, %vm3016
          %v3018 = vsel %vm3017, %v3010, %v3014
          %v3019 = vand.u32 2147483647, %v2424
          %vm3020 = vcmp.eq.f32.partialorder %v3019, 8.507059e+37
          %v3021 = vand.u32 %v2424, 2147483648
          %v3022 = vor.u32 1.1754944e-38, %v3021
          %v3023 = vsel %vm3020, %v3022, %v3018
          %v3024 = vrcp.pop %v2427
          %v3025 = vmul.f32 %v2427, %v3024
          %v3026 = vsub.f32 1.0, %v3025
          %v3027 = vmul.f32 %v3024, %v3026
          %v3028 = vadd.f32 %v3024, %v3027
          %vm3029 = vweird.f32 %v2427
          %vm3030 = vweird.f32 %v3024
          %vm3031 = vmor %vm3029, %vm3030
          %v3032 = vsel %vm3031, %v3024, %v3028
          %v3033 = vand.u32 2147483647, %v2427
          %vm3034 = vcmp.eq.f32.partialorder %v3033, 8.507059e+37
          %v3035 = vand.u32 %v2427, 2147483648
          %v3036 = vor.u32 1.1754944e-38, %v3035
          %v3037 = vsel %vm3034, %v3036, %v3032
          %v3038 = vrcp.pop %v2430
          %v3039 = vmul.f32 %v2430, %v3038
          %v3040 = vsub.f32 1.0, %v3039
          %v3041 = vmul.f32 %v3038, %v3040
          %v3042 = vadd.f32 %v3038, %v3041
          %vm3043 = vweird.f32 %v2430
          %vm3044 = vweird.f32 %v3038
          %vm3045 = vmor %vm3043, %vm3044
          %v3046 = vsel %vm3045, %v3038, %v3042
          %v3047 = vand.u32 2147483647, %v2430
          %vm3048 = vcmp.eq.f32.partialorder %v3047, 8.507059e+37
          %v3049 = vand.u32 %v2430, 2147483648
          %v3050 = vor.u32 1.1754944e-38, %v3049
          %v3051 = vsel %vm3048, %v3050, %v3046
          %v3052 = vrcp.pop %v2433
          %v3053 = vmul.f32 %v2433, %v3052
          %v3054 = vsub.f32 1.0, %v3053
          %v3055 = vmul.f32 %v3052, %v3054
          %v3056 = vadd.f32 %v3052, %v3055
          %vm3057 = vweird.f32 %v2433
          %vm3058 = vweird.f32 %v3052
          %vm3059 = vmor %vm3057, %vm3058
          %v3060 = vsel %vm3059, %v3052, %v3056
          %v3061 = vand.u32 2147483647, %v2433
          %vm3062 = vcmp.eq.f32.partialorder %v3061, 8.507059e+37
          %v3063 = vand.u32 %v2433, 2147483648
          %v3064 = vor.u32 1.1754944e-38, %v3063
          %v3065 = vsel %vm3062, %v3064, %v3060
          %v3066 = vrcp.pop %v2436
          %v3067 = vmul.f32 %v2436, %v3066
          %v3068 = vsub.f32 1.0, %v3067
          %v3069 = vmul.f32 %v3066, %v3068
          %v3070 = vadd.f32 %v3066, %v3069
          %vm3071 = vweird.f32 %v2436
          %vm3072 = vweird.f32 %v3066
          %vm3073 = vmor %vm3071, %vm3072
          %v3074 = vsel %vm3073, %v3066, %v3070
          %v3075 = vand.u32 2147483647, %v2436
          %vm3076 = vcmp.eq.f32.partialorder %v3075, 8.507059e+37
          %v3077 = vand.u32 %v2436, 2147483648
          %v3078 = vor.u32 1.1754944e-38, %v3077
          %v3079 = vsel %vm3076, %v3078, %v3074
          %v3080 = vrcp.pop %v2439
          %v3081 = vmul.f32 %v2439, %v3080
          %v3082 = vsub.f32 1.0, %v3081
          %v3083 = vmul.f32 %v3080, %v3082
          %v3084 = vadd.f32 %v3080, %v3083
          %vm3085 = vweird.f32 %v2439
          %vm3086 = vweird.f32 %v3080
          %vm3087 = vmor %vm3085, %vm3086
          %v3088 = vsel %vm3087, %v3080, %v3084
          %v3089 = vand.u32 2147483647, %v2439
          %vm3090 = vcmp.eq.f32.partialorder %v3089, 8.507059e+37
          %v3091 = vand.u32 %v2439, 2147483648
          %v3092 = vor.u32 1.1754944e-38, %v3091
          %v3093 = vsel %vm3090, %v3092, %v3088
          %v3094 = vrcp.pop %v2442
          %v3095 = vmul.f32 %v2442, %v3094
          %v3096 = vsub.f32 1.0, %v3095
          %v3097 = vmul.f32 %v3094, %v3096
          %v3098 = vadd.f32 %v3094, %v3097
          %vm3099 = vweird.f32 %v2442
          %vm3100 = vweird.f32 %v3094
          %vm3101 = vmor %vm3099, %vm3100
          %v3102 = vsel %vm3101, %v3094, %v3098
          %v3103 = vand.u32 2147483647, %v2442
          %vm3104 = vcmp.eq.f32.partialorder %v3103, 8.507059e+37
          %v3105 = vand.u32 %v2442, 2147483648
          %v3106 = vor.u32 1.1754944e-38, %v3105
          %v3107 = vsel %vm3104, %v3106, %v3102
          %v3108 = vrcp.pop %v2445
          %v3109 = vmul.f32 %v2445, %v3108
          %v3110 = vsub.f32 1.0, %v3109
          %v3111 = vmul.f32 %v3108, %v3110
          %v3112 = vadd.f32 %v3108, %v3111
          %vm3113 = vweird.f32 %v2445
          %vm3114 = vweird.f32 %v3108
          %vm3115 = vmor %vm3113, %vm3114
          %v3116 = vsel %vm3115, %v3108, %v3112
          %v3117 = vand.u32 2147483647, %v2445
          %vm3118 = vcmp.eq.f32.partialorder %v3117, 8.507059e+37
          %v3119 = vand.u32 %v2445, 2147483648
          %v3120 = vor.u32 1.1754944e-38, %v3119
          %v3121 = vsel %vm3118, %v3120, %v3116
          %v3122 = vrcp.pop %v2448
          %v3123 = vmul.f32 %v2448, %v3122
          %v3124 = vsub.f32 1.0, %v3123
          %v3125 = vmul.f32 %v3122, %v3124
          %v3126 = vadd.f32 %v3122, %v3125
          %vm3127 = vweird.f32 %v2448
          %vm3128 = vweird.f32 %v3122
          %vm3129 = vmor %vm3127, %vm3128
          %v3130 = vsel %vm3129, %v3122, %v3126
          %v3131 = vand.u32 2147483647, %v2448
          %vm3132 = vcmp.eq.f32.partialorder %v3131, 8.507059e+37
          %v3133 = vand.u32 %v2448, 2147483648
          %v3134 = vor.u32 1.1754944e-38, %v3133
          %v3135 = vsel %vm3132, %v3134, %v3130
          %v3136 = vrcp.pop %v2451
          %v3137 = vmul.f32 %v2451, %v3136
          %v3138 = vsub.f32 1.0, %v3137
          %v3139 = vmul.f32 %v3136, %v3138
          %v3140 = vadd.f32 %v3136, %v3139
          %vm3141 = vweird.f32 %v2451
          %vm3142 = vweird.f32 %v3136
          %vm3143 = vmor %vm3141, %vm3142
          %v3144 = vsel %vm3143, %v3136, %v3140
          %v3145 = vand.u32 2147483647, %v2451
          %vm3146 = vcmp.eq.f32.partialorder %v3145, 8.507059e+37
          %v3147 = vand.u32 %v2451, 2147483648
          %v3148 = vor.u32 1.1754944e-38, %v3147
          %v3149 = vsel %vm3146, %v3148, %v3144
          %v3150 = vrcp.pop %v2454
          %v3151 = vmul.f32 %v2454, %v3150
          %v3152 = vsub.f32 1.0, %v3151
          %v3153 = vmul.f32 %v3150, %v3152
          %v3154 = vadd.f32 %v3150, %v3153
          %vm3155 = vweird.f32 %v2454
          %vm3156 = vweird.f32 %v3150
          %vm3157 = vmor %vm3155, %vm3156
          %v3158 = vsel %vm3157, %v3150, %v3154
          %v3159 = vand.u32 2147483647, %v2454
          %vm3160 = vcmp.eq.f32.partialorder %v3159, 8.507059e+37
          %v3161 = vand.u32 %v2454, 2147483648
          %v3162 = vor.u32 1.1754944e-38, %v3161
          %v3163 = vsel %vm3160, %v3162, %v3158
          %v3164 = vrcp.pop %v2457
          %v3165 = vmul.f32 %v2457, %v3164
          %v3166 = vsub.f32 1.0, %v3165
          %v3167 = vmul.f32 %v3164, %v3166
          %v3168 = vadd.f32 %v3164, %v3167
          %vm3169 = vweird.f32 %v2457
          %vm3170 = vweird.f32 %v3164
          %vm3171 = vmor %vm3169, %vm3170
          %v3172 = vsel %vm3171, %v3164, %v3168
          %v3173 = vand.u32 2147483647, %v2457
          %vm3174 = vcmp.eq.f32.partialorder %v3173, 8.507059e+37
          %v3175 = vand.u32 %v2457, 2147483648
          %v3176 = vor.u32 1.1754944e-38, %v3175
          %v3177 = vsel %vm3174, %v3176, %v3172
          %v3178 = vrcp.pop %v2460
          %v3179 = vmul.f32 %v2460, %v3178
          %v3180 = vsub.f32 1.0, %v3179
          %v3181 = vmul.f32 %v3178, %v3180
          %v3182 = vadd.f32 %v3178, %v3181
          %vm3183 = vweird.f32 %v2460
          %vm3184 = vweird.f32 %v3178
          %vm3185 = vmor %vm3183, %vm3184
          %v3186 = vsel %vm3185, %v3178, %v3182
          %v3187 = vand.u32 2147483647, %v2460
          %vm3188 = vcmp.eq.f32.partialorder %v3187, 8.507059e+37
          %v3189 = vand.u32 %v2460, 2147483648
          %v3190 = vor.u32 1.1754944e-38, %v3189
          %v3191 = vsel %vm3188, %v3190, %v3186
          %v3192 = vrcp.pop %v2463
          %v3193 = vmul.f32 %v2463, %v3192
          %v3194 = vsub.f32 1.0, %v3193
          %v3195 = vmul.f32 %v3192, %v3194
          %v3196 = vadd.f32 %v3192, %v3195
          %vm3197 = vweird.f32 %v2463
          %vm3198 = vweird.f32 %v3192
          %vm3199 = vmor %vm3197, %vm3198
          %v3200 = vsel %vm3199, %v3192, %v3196
          %v3201 = vand.u32 2147483647, %v2463
          %vm3202 = vcmp.eq.f32.partialorder %v3201, 8.507059e+37
          %v3203 = vand.u32 %v2463, 2147483648
          %v3204 = vor.u32 1.1754944e-38, %v3203
          %v3205 = vsel %vm3202, %v3204, %v3200
          %v3206 = vrcp.pop %v2466
          %v3207 = vmul.f32 %v2466, %v3206
          %v3208 = vsub.f32 1.0, %v3207
          %v3209 = vmul.f32 %v3206, %v3208
          %v3210 = vadd.f32 %v3206, %v3209
          %vm3211 = vweird.f32 %v2466
          %vm3212 = vweird.f32 %v3206
          %vm3213 = vmor %vm3211, %vm3212
          %v3214 = vsel %vm3213, %v3206, %v3210
          %v3215 = vand.u32 2147483647, %v2466
          %vm3216 = vcmp.eq.f32.partialorder %v3215, 8.507059e+37
          %v3217 = vand.u32 %v2466, 2147483648
          %v3218 = vor.u32 1.1754944e-38, %v3217
          %v3219 = vsel %vm3216, %v3218, %v3214
          %v3220 = vrcp.pop %v2469
          %v3221 = vmul.f32 %v2469, %v3220
          %v3222 = vsub.f32 1.0, %v3221
          %v3223 = vmul.f32 %v3220, %v3222
          %v3224 = vadd.f32 %v3220, %v3223
          %vm3225 = vweird.f32 %v2469
          %vm3226 = vweird.f32 %v3220
          %vm3227 = vmor %vm3225, %vm3226
          %v3228 = vsel %vm3227, %v3220, %v3224
          %v3229 = vand.u32 2147483647, %v2469
          %vm3230 = vcmp.eq.f32.partialorder %v3229, 8.507059e+37
          %v3231 = vand.u32 %v2469, 2147483648
          %v3232 = vor.u32 1.1754944e-38, %v3231
          %v3233 = vsel %vm3230, %v3232, %v3228
          %v3234 = vrcp.pop %v2472
          %v3235 = vmul.f32 %v2472, %v3234
          %v3236 = vsub.f32 1.0, %v3235
          %v3237 = vmul.f32 %v3234, %v3236
          %v3238 = vadd.f32 %v3234, %v3237
          %vm3239 = vweird.f32 %v2472
          %vm3240 = vweird.f32 %v3234
          %vm3241 = vmor %vm3239, %vm3240
          %v3242 = vsel %vm3241, %v3234, %v3238
          %v3243 = vand.u32 2147483647, %v2472
          %vm3244 = vcmp.eq.f32.partialorder %v3243, 8.507059e+37
          %v3245 = vand.u32 %v2472, 2147483648
          %v3246 = vor.u32 1.1754944e-38, %v3245
          %v3247 = vsel %vm3244, %v3246, %v3242
          %v3248 = vrcp.pop %v2475
          %v3249 = vmul.f32 %v2475, %v3248
          %v3250 = vsub.f32 1.0, %v3249
          %v3251 = vmul.f32 %v3248, %v3250
          %v3252 = vadd.f32 %v3248, %v3251
          %vm3253 = vweird.f32 %v2475
          %vm3254 = vweird.f32 %v3248
          %vm3255 = vmor %vm3253, %vm3254
          %v3256 = vsel %vm3255, %v3248, %v3252
          %v3257 = vand.u32 2147483647, %v2475
          %vm3258 = vcmp.eq.f32.partialorder %v3257, 8.507059e+37
          %v3259 = vand.u32 %v2475, 2147483648
          %v3260 = vor.u32 1.1754944e-38, %v3259
          %v3261 = vsel %vm3258, %v3260, %v3256
          %v3262 = vrcp.pop %v2478
          %v3263 = vmul.f32 %v2478, %v3262
          %v3264 = vsub.f32 1.0, %v3263
          %v3265 = vmul.f32 %v3262, %v3264
          %v3266 = vadd.f32 %v3262, %v3265
          %vm3267 = vweird.f32 %v2478
          %vm3268 = vweird.f32 %v3262
          %vm3269 = vmor %vm3267, %vm3268
          %v3270 = vsel %vm3269, %v3262, %v3266
          %v3271 = vand.u32 2147483647, %v2478
          %vm3272 = vcmp.eq.f32.partialorder %v3271, 8.507059e+37
          %v3273 = vand.u32 %v2478, 2147483648
          %v3274 = vor.u32 1.1754944e-38, %v3273
          %v3275 = vsel %vm3272, %v3274, %v3270
          %v3276 = vrcp.pop %v2481
          %v3277 = vmul.f32 %v2481, %v3276
          %v3278 = vsub.f32 1.0, %v3277
          %v3279 = vmul.f32 %v3276, %v3278
          %v3280 = vadd.f32 %v3276, %v3279
          %vm3281 = vweird.f32 %v2481
          %vm3282 = vweird.f32 %v3276
          %vm3283 = vmor %vm3281, %vm3282
          %v3284 = vsel %vm3283, %v3276, %v3280
          %v3285 = vand.u32 2147483647, %v2481
          %vm3286 = vcmp.eq.f32.partialorder %v3285, 8.507059e+37
          %v3287 = vand.u32 %v2481, 2147483648
          %v3288 = vor.u32 1.1754944e-38, %v3287
          %v3289 = vsel %vm3286, %v3288, %v3284
          %v3290 = vrcp.pop %v2484
          %v3291 = vmul.f32 %v2484, %v3290
          %v3292 = vsub.f32 1.0, %v3291
          %v3293 = vmul.f32 %v3290, %v3292
          %v3294 = vadd.f32 %v3290, %v3293
          %vm3295 = vweird.f32 %v2484
          %vm3296 = vweird.f32 %v3290
          %vm3297 = vmor %vm3295, %vm3296
          %v3298 = vsel %vm3297, %v3290, %v3294
          %v3299 = vand.u32 2147483647, %v2484
          %vm3300 = vcmp.eq.f32.partialorder %v3299, 8.507059e+37
          %v3301 = vand.u32 %v2484, 2147483648
          %v3302 = vor.u32 1.1754944e-38, %v3301
          %v3303 = vsel %vm3300, %v3302, %v3298
          %v3304 = vrcp.pop %v2487
          %v3305 = vmul.f32 %v2487, %v3304
          %v3306 = vsub.f32 1.0, %v3305
          %v3307 = vmul.f32 %v3304, %v3306
          %v3308 = vadd.f32 %v3304, %v3307
          %vm3309 = vweird.f32 %v2487
          %vm3310 = vweird.f32 %v3304
          %vm3311 = vmor %vm3309, %vm3310
          %v3312 = vsel %vm3311, %v3304, %v3308
          %v3313 = vand.u32 2147483647, %v2487
          %vm3314 = vcmp.eq.f32.partialorder %v3313, 8.507059e+37
          %v3315 = vand.u32 %v2487, 2147483648
          %v3316 = vor.u32 1.1754944e-38, %v3315
          %v3317 = vsel %vm3314, %v3316, %v3312
          %v3318 = vrcp.pop %v2490
          %v3319 = vmul.f32 %v2490, %v3318
          %v3320 = vsub.f32 1.0, %v3319
          %v3321 = vmul.f32 %v3318, %v3320
          %v3322 = vadd.f32 %v3318, %v3321
          %vm3323 = vweird.f32 %v2490
          %vm3324 = vweird.f32 %v3318
          %vm3325 = vmor %vm3323, %vm3324
          %v3326 = vsel %vm3325, %v3318, %v3322
          %v3327 = vand.u32 2147483647, %v2490
          %vm3328 = vcmp.eq.f32.partialorder %v3327, 8.507059e+37
          %v3329 = vand.u32 %v2490, 2147483648
          %v3330 = vor.u32 1.1754944e-38, %v3329
          %v3331 = vsel %vm3328, %v3330, %v3326
          %v3332 = vrcp.pop %v2493
          %v3333 = vmul.f32 %v2493, %v3332
          %v3334 = vsub.f32 1.0, %v3333
          %v3335 = vmul.f32 %v3332, %v3334
          %v3336 = vadd.f32 %v3332, %v3335
          %vm3337 = vweird.f32 %v2493
          %vm3338 = vweird.f32 %v3332
          %vm3339 = vmor %vm3337, %vm3338
          %v3340 = vsel %vm3339, %v3332, %v3336
          %v3341 = vand.u32 2147483647, %v2493
          %vm3342 = vcmp.eq.f32.partialorder %v3341, 8.507059e+37
          %v3343 = vand.u32 %v2493, 2147483648
          %v3344 = vor.u32 1.1754944e-38, %v3343
          %v3345 = vsel %vm3342, %v3344, %v3340
          %v3346 = vrcp.pop %v2496
          %v3347 = vmul.f32 %v2496, %v3346
          %v3348 = vsub.f32 1.0, %v3347
          %v3349 = vmul.f32 %v3346, %v3348
          %v3350 = vadd.f32 %v3346, %v3349
          %vm3351 = vweird.f32 %v2496
          %vm3352 = vweird.f32 %v3346
          %vm3353 = vmor %vm3351, %vm3352
          %v3354 = vsel %vm3353, %v3346, %v3350
          %v3355 = vand.u32 2147483647, %v2496
          %vm3356 = vcmp.eq.f32.partialorder %v3355, 8.507059e+37
          %v3357 = vand.u32 %v2496, 2147483648
          %v3358 = vor.u32 1.1754944e-38, %v3357
          %v3359 = vsel %vm3356, %v3358, %v3354
          %v3360 = vrcp.pop %v2499
          %v3361 = vmul.f32 %v2499, %v3360
          %v3362 = vsub.f32 1.0, %v3361
          %v3363 = vmul.f32 %v3360, %v3362
          %v3364 = vadd.f32 %v3360, %v3363
          %vm3365 = vweird.f32 %v2499
          %vm3366 = vweird.f32 %v3360
          %vm3367 = vmor %vm3365, %vm3366
          %v3368 = vsel %vm3367, %v3360, %v3364
          %v3369 = vand.u32 2147483647, %v2499
          %vm3370 = vcmp.eq.f32.partialorder %v3369, 8.507059e+37
          %v3371 = vand.u32 %v2499, 2147483648
          %v3372 = vor.u32 1.1754944e-38, %v3371
          %v3373 = vsel %vm3370, %v3372, %v3368
          %v3374 = vrcp.pop %v2502
          %v3375 = vmul.f32 %v2502, %v3374
          %v3376 = vsub.f32 1.0, %v3375
          %v3377 = vmul.f32 %v3374, %v3376
          %v3378 = vadd.f32 %v3374, %v3377
          %vm3379 = vweird.f32 %v2502
          %vm3380 = vweird.f32 %v3374
          %vm3381 = vmor %vm3379, %vm3380
          %v3382 = vsel %vm3381, %v3374, %v3378
          %v3383 = vand.u32 2147483647, %v2502
          %vm3384 = vcmp.eq.f32.partialorder %v3383, 8.507059e+37
          %v3385 = vand.u32 %v2502, 2147483648
          %v3386 = vor.u32 1.1754944e-38, %v3385
          %v3387 = vsel %vm3384, %v3386, %v3382
          %v3388 = vrcp.pop %v2505
          %v3389 = vmul.f32 %v2505, %v3388
          %v3390 = vsub.f32 1.0, %v3389
          %v3391 = vmul.f32 %v3388, %v3390
          %v3392 = vadd.f32 %v3388, %v3391
          %vm3393 = vweird.f32 %v2505
          %vm3394 = vweird.f32 %v3388
          %vm3395 = vmor %vm3393, %vm3394
          %v3396 = vsel %vm3395, %v3388, %v3392
          %v3397 = vand.u32 2147483647, %v2505
          %vm3398 = vcmp.eq.f32.partialorder %v3397, 8.507059e+37
          %v3399 = vand.u32 %v2505, 2147483648
          %v3400 = vor.u32 1.1754944e-38, %v3399
          %v3401 = vsel %vm3398, %v3400, %v3396
          %v3402 = vmul.f32 %v2187, %v2519
          %v3403 = vmul.f32 %v2189, %v2533
          %v3404 = vmul.f32 %v2191, %v2547
          %v3405 = vmul.f32 %v2193, %v2561
          %v3406 = vmul.f32 %v2195, %v2575
          %v3407 = vmul.f32 %v2197, %v2589
          %v3408 = vmul.f32 %v2199, %v2603
          %v3409 = vmul.f32 %v2201, %v2617
          %v3410 = vmul.f32 %v2203, %v2631
          %v3411 = vmul.f32 %v2205, %v2645
          %v3412 = vmul.f32 %v2207, %v2659
          %v3413 = vmul.f32 %v2209, %v2673
          %v3414 = vmul.f32 %v2211, %v2687
          %v3415 = vmul.f32 %v2213, %v2701
          %v3416 = vmul.f32 %v2215, %v2715
          %v3417 = vmul.f32 %v2217, %v2729
          %v3418 = vmul.f32 %v2219, %v2743
          %v3419 = vmul.f32 %v2221, %v2757
          %v3420 = vmul.f32 %v2223, %v2771
          %v3421 = vmul.f32 %v2225, %v2785
          %v3422 = vmul.f32 %v2227, %v2799
          %v3423 = vmul.f32 %v2229, %v2813
          %v3424 = vmul.f32 %v2231, %v2827
          %v3425 = vmul.f32 %v2233, %v2841
          %v3426 = vmul.f32 %v2235, %v2855
          %v3427 = vmul.f32 %v2237, %v2869
          %v3428 = vmul.f32 %v2239, %v2883
          %v3429 = vmul.f32 %v2241, %v2897
          %v3430 = vmul.f32 %v2243, %v2911
          %v3431 = vmul.f32 %v2245, %v2925
          %v3432 = vmul.f32 %v2247, %v2939
          %v3433 = vmul.f32 %v2249, %v2953
          %v3434 = vmul.f32 %v2251, %v2967
          %v3435 = vmul.f32 %v2253, %v2981
          %v3436 = vmul.f32 %v2255, %v2995
          %v3437 = vmul.f32 %v2257, %v3009
          %v3438 = vmul.f32 %v2259, %v3023
          %v3439 = vmul.f32 %v2261, %v3037
          %v3440 = vmul.f32 %v2263, %v3051
          %v3441 = vmul.f32 %v2265, %v3065
          %v3442 = vmul.f32 %v2267, %v3079
          %v3443 = vmul.f32 %v2269, %v3093
          %v3444 = vmul.f32 %v2271, %v3107
          %v3445 = vmul.f32 %v2273, %v3121
          %v3446 = vmul.f32 %v2275, %v3135
          %v3447 = vmul.f32 %v2277, %v3149
          %v3448 = vmul.f32 %v2279, %v3163
          %v3449 = vmul.f32 %v2281, %v3177
          %v3450 = vmul.f32 %v2283, %v3191
          %v3451 = vmul.f32 %v2285, %v3205
          %v3452 = vmul.f32 %v2287, %v3219
          %v3453 = vmul.f32 %v2289, %v3233
          %v3454 = vmul.f32 %v2291, %v3247
          %v3455 = vmul.f32 %v2293, %v3261
          %v3456 = vmul.f32 %v2295, %v3275
          %v3457 = vmul.f32 %v2297, %v3289
          %v3458 = vmul.f32 %v2299, %v3303
          %v3459 = vmul.f32 %v2301, %v3317
          %v3460 = vmul.f32 %v2303, %v3331
          %v3461 = vmul.f32 %v2305, %v3345
          %v3462 = vmul.f32 %v2307, %v3359
          %v3463 = vmul.f32 %v2309, %v3373
          %v3464 = vmul.f32 %v2311, %v3387
          %v3465 = vmul.f32 %v2313, %v3401
          %vm3466 = vcmask 1048064
          %v3467 = vsel %vm3466, %v948, -inf
          %3468 = vmax.xlane.f32.xlu0 %v3467
          %v3469 = vpop.xlane.xlu0 %3468
          %v3470 = vsel %vm3466, %v950, -inf
          %3471 = vmax.xlane.f32.xlu0 %v3470
          %v3472 = vpop.xlane.xlu0 %3471
          %v3473 = vsel %vm3466, %v953, -inf
          %3474 = vmax.xlane.f32.xlu0 %v3473
          %v3475 = vpop.xlane.xlu0 %3474
          %v3476 = vsel %vm3466, %v955, -inf
          %3477 = vmax.xlane.f32.xlu0 %v3476
          %v3478 = vpop.xlane.xlu0 %3477
          %v3479 = vsel %vm3466, %v958, -inf
          %3480 = vmax.xlane.f32.xlu0 %v3479
          %v3481 = vpop.xlane.xlu0 %3480
          %v3482 = vsel %vm3466, %v960, -inf
          %3483 = vmax.xlane.f32.xlu0 %v3482
          %v3484 = vpop.xlane.xlu0 %3483
          %v3485 = vsel %vm3466, %v963, -inf
          %3486 = vmax.xlane.f32.xlu0 %v3485
          %v3487 = vpop.xlane.xlu0 %3486
          %v3488 = vsel %vm3466, %v965, -inf
          %3489 = vmax.xlane.f32.xlu0 %v3488
          %v3490 = vpop.xlane.xlu0 %3489
          %v3491 = vsel %vm3466, %v968, -inf
          %3492 = vmax.xlane.f32.xlu0 %v3491
          %v3493 = vpop.xlane.xlu0 %3492
          %v3494 = vsel %vm3466, %v970, -inf
          %3495 = vmax.xlane.f32.xlu0 %v3494
          %v3496 = vpop.xlane.xlu0 %3495
          %v3497 = vsel %vm3466, %v973, -inf
          %3498 = vmax.xlane.f32.xlu0 %v3497
          %v3499 = vpop.xlane.xlu0 %3498
          %v3500 = vsel %vm3466, %v975, -inf
          %3501 = vmax.xlane.f32.xlu0 %v3500
          %v3502 = vpop.xlane.xlu0 %3501
          %v3503 = vsel %vm3466, %v978, -inf
          %3504 = vmax.xlane.f32.xlu0 %v3503
          %v3505 = vpop.xlane.xlu0 %3504
          %v3506 = vsel %vm3466, %v980, -inf
          %3507 = vmax.xlane.f32.xlu0 %v3506
          %v3508 = vpop.xlane.xlu0 %3507
          %v3509 = vsel %vm3466, %v983, -inf
          %3510 = vmax.xlane.f32.xlu0 %v3509
          %v3511 = vpop.xlane.xlu0 %3510
          %v3512 = vsel %vm3466, %v985, -inf
          %3513 = vmax.xlane.f32.xlu0 %v3512
          %v3514 = vpop.xlane.xlu0 %3513
          %v3515 = vsel %vm3466, %v988, -inf
          %3516 = vmax.xlane.f32.xlu0 %v3515
          %v3517 = vpop.xlane.xlu0 %3516
          %v3518 = vsel %vm3466, %v990, -inf
          %3519 = vmax.xlane.f32.xlu0 %v3518
          %v3520 = vpop.xlane.xlu0 %3519
          %v3521 = vsel %vm3466, %v993, -inf
          %3522 = vmax.xlane.f32.xlu0 %v3521
          %v3523 = vpop.xlane.xlu0 %3522
          %v3524 = vsel %vm3466, %v995, -inf
          %3525 = vmax.xlane.f32.xlu0 %v3524
          %v3526 = vpop.xlane.xlu0 %3525
          %v3527 = vsel %vm3466, %v998, -inf
          %3528 = vmax.xlane.f32.xlu0 %v3527
          %v3529 = vpop.xlane.xlu0 %3528
          %v3530 = vsel %vm3466, %v1000, -inf
          %3531 = vmax.xlane.f32.xlu0 %v3530
          %v3532 = vpop.xlane.xlu0 %3531
          %v3533 = vsel %vm3466, %v1003, -inf
          %3534 = vmax.xlane.f32.xlu0 %v3533
          %v3535 = vpop.xlane.xlu0 %3534
          %v3536 = vsel %vm3466, %v1005, -inf
          %3537 = vmax.xlane.f32.xlu0 %v3536
          %v3538 = vpop.xlane.xlu0 %3537
          %v3539 = vsel %vm3466, %v1008, -inf
          %3540 = vmax.xlane.f32.xlu0 %v3539
          %v3541 = vpop.xlane.xlu0 %3540
          %v3542 = vsel %vm3466, %v1010, -inf
          %3543 = vmax.xlane.f32.xlu0 %v3542
          %v3544 = vpop.xlane.xlu0 %3543
          %v3545 = vsel %vm3466, %v1013, -inf
          %3546 = vmax.xlane.f32.xlu0 %v3545
          %v3547 = vpop.xlane.xlu0 %3546
          %v3548 = vsel %vm3466, %v1015, -inf
          %3549 = vmax.xlane.f32.xlu0 %v3548
          %v3550 = vpop.xlane.xlu0 %3549
          %v3551 = vsel %vm3466, %v1018, -inf
          %3552 = vmax.xlane.f32.xlu0 %v3551
          %v3553 = vpop.xlane.xlu0 %3552
          %v3554 = vsel %vm3466, %v1020, -inf
          %3555 = vmax.xlane.f32.xlu0 %v3554
          %v3556 = vpop.xlane.xlu0 %3555
          %v3557 = vsel %vm3466, %v1023, -inf
          %3558 = vmax.xlane.f32.xlu0 %v3557
          %v3559 = vpop.xlane.xlu0 %3558
          %v3560 = vsel %vm3466, %v1025, -inf
          %3561 = vmax.xlane.f32.xlu0 %v3560
          %v3562 = vpop.xlane.xlu0 %3561
          %v3563 = vsel %vm3466, %v1028, -inf
          %3564 = vmax.xlane.f32.xlu0 %v3563
          %v3565 = vpop.xlane.xlu0 %3564
          %v3566 = vsel %vm3466, %v1030, -inf
          %3567 = vmax.xlane.f32.xlu0 %v3566
          %v3568 = vpop.xlane.xlu0 %3567
          %v3569 = vsel %vm3466, %v1033, -inf
          %3570 = vmax.xlane.f32.xlu0 %v3569
          %v3571 = vpop.xlane.xlu0 %3570
          %v3572 = vsel %vm3466, %v1035, -inf
          %3573 = vmax.xlane.f32.xlu0 %v3572
          %v3574 = vpop.xlane.xlu0 %3573
          %v3575 = vsel %vm3466, %v1038, -inf
          %3576 = vmax.xlane.f32.xlu0 %v3575
          %v3577 = vpop.xlane.xlu0 %3576
          %v3578 = vsel %vm3466, %v1040, -inf
          %3579 = vmax.xlane.f32.xlu0 %v3578
          %v3580 = vpop.xlane.xlu0 %3579
          %v3581 = vsel %vm3466, %v1043, -inf
          %3582 = vmax.xlane.f32.xlu0 %v3581
          %v3583 = vpop.xlane.xlu0 %3582
          %v3584 = vsel %vm3466, %v1045, -inf
          %3585 = vmax.xlane.f32.xlu0 %v3584
          %v3586 = vpop.xlane.xlu0 %3585
          %v3587 = vsel %vm3466, %v1048, -inf
          %3588 = vmax.xlane.f32.xlu0 %v3587
          %v3589 = vpop.xlane.xlu0 %3588
          %v3590 = vsel %vm3466, %v1050, -inf
          %3591 = vmax.xlane.f32.xlu0 %v3590
          %v3592 = vpop.xlane.xlu0 %3591
          %v3593 = vsel %vm3466, %v1053, -inf
          %3594 = vmax.xlane.f32.xlu0 %v3593
          %v3595 = vpop.xlane.xlu0 %3594
          %v3596 = vsel %vm3466, %v1055, -inf
          %3597 = vmax.xlane.f32.xlu0 %v3596
          %v3598 = vpop.xlane.xlu0 %3597
          %v3599 = vsel %vm3466, %v1058, -inf
          %3600 = vmax.xlane.f32.xlu0 %v3599
          %v3601 = vpop.xlane.xlu0 %3600
          %v3602 = vsel %vm3466, %v1060, -inf
          %3603 = vmax.xlane.f32.xlu0 %v3602
          %v3604 = vpop.xlane.xlu0 %3603
          %v3605 = vsel %vm3466, %v1063, -inf
          %3606 = vmax.xlane.f32.xlu0 %v3605
          %v3607 = vpop.xlane.xlu0 %3606
          %v3608 = vsel %vm3466, %v1065, -inf
          %3609 = vmax.xlane.f32.xlu0 %v3608
          %v3610 = vpop.xlane.xlu0 %3609
          %v3611 = vsel %vm3466, %v1068, -inf
          %3612 = vmax.xlane.f32.xlu0 %v3611
          %v3613 = vpop.xlane.xlu0 %3612
          %v3614 = vsel %vm3466, %v1070, -inf
          %3615 = vmax.xlane.f32.xlu0 %v3614
          %v3616 = vpop.xlane.xlu0 %3615
          %v3617 = vsel %vm3466, %v1073, -inf
          %3618 = vmax.xlane.f32.xlu0 %v3617
          %v3619 = vpop.xlane.xlu0 %3618
          %v3620 = vsel %vm3466, %v1075, -inf
          %3621 = vmax.xlane.f32.xlu0 %v3620
          %v3622 = vpop.xlane.xlu0 %3621
          %v3623 = vsel %vm3466, %v1078, -inf
          %3624 = vmax.xlane.f32.xlu0 %v3623
          %v3625 = vpop.xlane.xlu0 %3624
          %v3626 = vsel %vm3466, %v1080, -inf
          %3627 = vmax.xlane.f32.xlu0 %v3626
          %v3628 = vpop.xlane.xlu0 %3627
          %v3629 = vsel %vm3466, %v1083, -inf
          %3630 = vmax.xlane.f32.xlu0 %v3629
          %v3631 = vpop.xlane.xlu0 %3630
          %v3632 = vsel %vm3466, %v1085, -inf
          %3633 = vmax.xlane.f32.xlu0 %v3632
          %v3634 = vpop.xlane.xlu0 %3633
          %v3635 = vsel %vm3466, %v1088, -inf
          %3636 = vmax.xlane.f32.xlu0 %v3635
          %v3637 = vpop.xlane.xlu0 %3636
          %v3638 = vsel %vm3466, %v1090, -inf
          %3639 = vmax.xlane.f32.xlu0 %v3638
          %v3640 = vpop.xlane.xlu0 %3639
          %v3641 = vsel %vm3466, %v1093, -inf
          %3642 = vmax.xlane.f32.xlu0 %v3641
          %v3643 = vpop.xlane.xlu0 %3642
          %v3644 = vsel %vm3466, %v1095, -inf
          %3645 = vmax.xlane.f32.xlu0 %v3644
          %v3646 = vpop.xlane.xlu0 %3645
          %v3647 = vsel %vm3466, %v1098, -inf
          %3648 = vmax.xlane.f32.xlu0 %v3647
          %v3649 = vpop.xlane.xlu0 %3648
          %v3650 = vsel %vm3466, %v1100, -inf
          %3651 = vmax.xlane.f32.xlu0 %v3650
          %v3652 = vpop.xlane.xlu0 %3651
          %v3653 = vsel %vm3466, %v1103, -inf
          %3654 = vmax.xlane.f32.xlu0 %v3653
          %v3655 = vpop.xlane.xlu0 %3654
          %v3656 = vsel %vm3466, %v1105, -inf
          %3657 = vmax.xlane.f32.xlu0 %v3656
          %v3658 = vpop.xlane.xlu0 %3657
          %v3659 = vsub.f32 %v948, %v3469
          %v3660 = vsub.f32 %v950, %v3472
          %v3661 = vsub.f32 %v953, %v3475
          %v3662 = vsub.f32 %v955, %v3478
          %v3663 = vsub.f32 %v958, %v3481
          %v3664 = vsub.f32 %v960, %v3484
          %v3665 = vsub.f32 %v963, %v3487
          %v3666 = vsub.f32 %v965, %v3490
          %v3667 = vsub.f32 %v968, %v3493
          %v3668 = vsub.f32 %v970, %v3496
          %v3669 = vsub.f32 %v973, %v3499
          %v3670 = vsub.f32 %v975, %v3502
          %v3671 = vsub.f32 %v978, %v3505
          %v3672 = vsub.f32 %v980, %v3508
          %v3673 = vsub.f32 %v983, %v3511
          %v3674 = vsub.f32 %v985, %v3514
          %v3675 = vsub.f32 %v988, %v3517
          %v3676 = vsub.f32 %v990, %v3520
          %v3677 = vsub.f32 %v993, %v3523
          %v3678 = vsub.f32 %v995, %v3526
          %v3679 = vsub.f32 %v998, %v3529
          %v3680 = vsub.f32 %v1000, %v3532
          %v3681 = vsub.f32 %v1003, %v3535
          %v3682 = vsub.f32 %v1005, %v3538
          %v3683 = vsub.f32 %v1008, %v3541
          %v3684 = vsub.f32 %v1010, %v3544
          %v3685 = vsub.f32 %v1013, %v3547
          %v3686 = vsub.f32 %v1015, %v3550
          %v3687 = vsub.f32 %v1018, %v3553
          %v3688 = vsub.f32 %v1020, %v3556
          %v3689 = vsub.f32 %v1023, %v3559
          %v3690 = vsub.f32 %v1025, %v3562
          %v3691 = vsub.f32 %v1028, %v3565
          %v3692 = vsub.f32 %v1030, %v3568
          %v3693 = vsub.f32 %v1033, %v3571
          %v3694 = vsub.f32 %v1035, %v3574
          %v3695 = vsub.f32 %v1038, %v3577
          %v3696 = vsub.f32 %v1040, %v3580
          %v3697 = vsub.f32 %v1043, %v3583
          %v3698 = vsub.f32 %v1045, %v3586
          %v3699 = vsub.f32 %v1048, %v3589
          %v3700 = vsub.f32 %v1050, %v3592
          %v3701 = vsub.f32 %v1053, %v3595
          %v3702 = vsub.f32 %v1055, %v3598
          %v3703 = vsub.f32 %v1058, %v3601
          %v3704 = vsub.f32 %v1060, %v3604
          %v3705 = vsub.f32 %v1063, %v3607
          %v3706 = vsub.f32 %v1065, %v3610
          %v3707 = vsub.f32 %v1068, %v3613
          %v3708 = vsub.f32 %v1070, %v3616
          %v3709 = vsub.f32 %v1073, %v3619
          %v3710 = vsub.f32 %v1075, %v3622
          %v3711 = vsub.f32 %v1078, %v3625
          %v3712 = vsub.f32 %v1080, %v3628
          %v3713 = vsub.f32 %v1083, %v3631
          %v3714 = vsub.f32 %v1085, %v3634
          %v3715 = vsub.f32 %v1088, %v3637
          %v3716 = vsub.f32 %v1090, %v3640
          %v3717 = vsub.f32 %v1093, %v3643
          %v3718 = vsub.f32 %v1095, %v3646
          %v3719 = vsub.f32 %v1098, %v3649
          %v3720 = vsub.f32 %v1100, %v3652
          %v3721 = vsub.f32 %v1103, %v3655
          %v3722 = vsub.f32 %v1105, %v3658
          %v3723 = vmul.f32 %v3659, 1.442695
          %v3724 = vpow.pop %v3723
          %v3725 = vmul.f32 %v3660, 1.442695
          %v3726 = vpow.pop %v3725
          %v3727 = vmul.f32 %v3661, 1.442695
          %v3728 = vpow.pop %v3727
          %v3729 = vmul.f32 %v3662, 1.442695
          %v3730 = vpow.pop %v3729
          %v3731 = vmul.f32 %v3663, 1.442695
          %v3732 = vpow.pop %v3731
          %v3733 = vmul.f32 %v3664, 1.442695
          %v3734 = vpow.pop %v3733
          %v3735 = vmul.f32 %v3665, 1.442695
          %v3736 = vpow.pop %v3735
          %v3737 = vmul.f32 %v3666, 1.442695
          %v3738 = vpow.pop %v3737
          %v3739 = vmul.f32 %v3667, 1.442695
          %v3740 = vpow.pop %v3739
          %v3741 = vmul.f32 %v3668, 1.442695
          %v3742 = vpow.pop %v3741
          %v3743 = vmul.f32 %v3669, 1.442695
          %v3744 = vpow.pop %v3743
          %v3745 = vmul.f32 %v3670, 1.442695
          %v3746 = vpow.pop %v3745
          %v3747 = vmul.f32 %v3671, 1.442695
          %v3748 = vpow.pop %v3747
          %v3749 = vmul.f32 %v3672, 1.442695
          %v3750 = vpow.pop %v3749
          %v3751 = vmul.f32 %v3673, 1.442695
          %v3752 = vpow.pop %v3751
          %v3753 = vmul.f32 %v3674, 1.442695
          %v3754 = vpow.pop %v3753
          %v3755 = vmul.f32 %v3675, 1.442695
          %v3756 = vpow.pop %v3755
          %v3757 = vmul.f32 %v3676, 1.442695
          %v3758 = vpow.pop %v3757
          %v3759 = vmul.f32 %v3677, 1.442695
          %v3760 = vpow.pop %v3759
          %v3761 = vmul.f32 %v3678, 1.442695
          %v3762 = vpow.pop %v3761
          %v3763 = vmul.f32 %v3679, 1.442695
          %v3764 = vpow.pop %v3763
          %v3765 = vmul.f32 %v3680, 1.442695
          %v3766 = vpow.pop %v3765
          %v3767 = vmul.f32 %v3681, 1.442695
          %v3768 = vpow.pop %v3767
          %v3769 = vmul.f32 %v3682, 1.442695
          %v3770 = vpow.pop %v3769
          %v3771 = vmul.f32 %v3683, 1.442695
          %v3772 = vpow.pop %v3771
          %v3773 = vmul.f32 %v3684, 1.442695
          %v3774 = vpow.pop %v3773
          %v3775 = vmul.f32 %v3685, 1.442695
          %v3776 = vpow.pop %v3775
          %v3777 = vmul.f32 %v3686, 1.442695
          %v3778 = vpow.pop %v3777
          %v3779 = vmul.f32 %v3687, 1.442695
          %v3780 = vpow.pop %v3779
          %v3781 = vmul.f32 %v3688, 1.442695
          %v3782 = vpow.pop %v3781
          %v3783 = vmul.f32 %v3689, 1.442695
          %v3784 = vpow.pop %v3783
          %v3785 = vmul.f32 %v3690, 1.442695
          %v3786 = vpow.pop %v3785
          %v3787 = vmul.f32 %v3691, 1.442695
          %v3788 = vpow.pop %v3787
          %v3789 = vmul.f32 %v3692, 1.442695
          %v3790 = vpow.pop %v3789
          %v3791 = vmul.f32 %v3693, 1.442695
          %v3792 = vpow.pop %v3791
          %v3793 = vmul.f32 %v3694, 1.442695
          %v3794 = vpow.pop %v3793
          %v3795 = vmul.f32 %v3695, 1.442695
          %v3796 = vpow.pop %v3795
          %v3797 = vmul.f32 %v3696, 1.442695
          %v3798 = vpow.pop %v3797
          %v3799 = vmul.f32 %v3697, 1.442695
          %v3800 = vpow.pop %v3799
          %v3801 = vmul.f32 %v3698, 1.442695
          %v3802 = vpow.pop %v3801
          %v3803 = vmul.f32 %v3699, 1.442695
          %v3804 = vpow.pop %v3803
          %v3805 = vmul.f32 %v3700, 1.442695
          %v3806 = vpow.pop %v3805
          %v3807 = vmul.f32 %v3701, 1.442695
          %v3808 = vpow.pop %v3807
          %v3809 = vmul.f32 %v3702, 1.442695
          %v3810 = vpow.pop %v3809
          %v3811 = vmul.f32 %v3703, 1.442695
          %v3812 = vpow.pop %v3811
          %v3813 = vmul.f32 %v3704, 1.442695
          %v3814 = vpow.pop %v3813
          %v3815 = vmul.f32 %v3705, 1.442695
          %v3816 = vpow.pop %v3815
          %v3817 = vmul.f32 %v3706, 1.442695
          %v3818 = vpow.pop %v3817
          %v3819 = vmul.f32 %v3707, 1.442695
          %v3820 = vpow.pop %v3819
          %v3821 = vmul.f32 %v3708, 1.442695
          %v3822 = vpow.pop %v3821
          %v3823 = vmul.f32 %v3709, 1.442695
          %v3824 = vpow.pop %v3823
          %v3825 = vmul.f32 %v3710, 1.442695
          %v3826 = vpow.pop %v3825
          %v3827 = vmul.f32 %v3711, 1.442695
          %v3828 = vpow.pop %v3827
          %v3829 = vmul.f32 %v3712, 1.442695
          %v3830 = vpow.pop %v3829
          %v3831 = vmul.f32 %v3713, 1.442695
          %v3832 = vpow.pop %v3831
          %v3833 = vmul.f32 %v3714, 1.442695
          %v3834 = vpow.pop %v3833
          %v3835 = vmul.f32 %v3715, 1.442695
          %v3836 = vpow.pop %v3835
          %v3837 = vmul.f32 %v3716, 1.442695
          %v3838 = vpow.pop %v3837
          %v3839 = vmul.f32 %v3717, 1.442695
          %v3840 = vpow.pop %v3839
          %v3841 = vmul.f32 %v3718, 1.442695
          %v3842 = vpow.pop %v3841
          %v3843 = vmul.f32 %v3719, 1.442695
          %v3844 = vpow.pop %v3843
          %v3845 = vmul.f32 %v3720, 1.442695
          %v3846 = vpow.pop %v3845
          %v3847 = vmul.f32 %v3721, 1.442695
          %v3848 = vpow.pop %v3847
          %v3849 = vmul.f32 %v3722, 1.442695
          %v3850 = vpow.pop %v3849
          %3915 = vrot.lane.b32.xlu0 %v3724, 64
          %v3916 = vpop.permute.xlu0 %3915
          %3917 = vrot.lane.b32.xlu0 %v3726, 64
          %v3918 = vpop.permute.xlu0 %3917
          %3919 = vrot.lane.b32.xlu0 %v3728, 64
          %v3920 = vpop.permute.xlu0 %3919
          %3921 = vrot.lane.b32.xlu0 %v3730, 64
          %v3922 = vpop.permute.xlu0 %3921
          %3923 = vrot.lane.b32.xlu0 %v3732, 64
          %v3924 = vpop.permute.xlu0 %3923
          %3925 = vrot.lane.b32.xlu0 %v3734, 64
          %v3926 = vpop.permute.xlu0 %3925
          %3927 = vrot.lane.b32.xlu0 %v3736, 64
          %v3928 = vpop.permute.xlu0 %3927
          %3929 = vrot.lane.b32.xlu0 %v3738, 64
          %v3930 = vpop.permute.xlu0 %3929
          %3931 = vrot.lane.b32.xlu0 %v3740, 64
          %v3932 = vpop.permute.xlu0 %3931
          %3933 = vrot.lane.b32.xlu0 %v3742, 64
          %v3934 = vpop.permute.xlu0 %3933
          %3935 = vrot.lane.b32.xlu0 %v3744, 64
          %v3936 = vpop.permute.xlu0 %3935
          %3937 = vrot.lane.b32.xlu0 %v3746, 64
          %v3938 = vpop.permute.xlu0 %3937
          %3939 = vrot.lane.b32.xlu0 %v3748, 64
          %v3940 = vpop.permute.xlu0 %3939
          %3941 = vrot.lane.b32.xlu0 %v3750, 64
          %v3942 = vpop.permute.xlu0 %3941
          %3943 = vrot.lane.b32.xlu0 %v3752, 64
          %v3944 = vpop.permute.xlu0 %3943
          %3945 = vrot.lane.b32.xlu0 %v3754, 64
          %v3946 = vpop.permute.xlu0 %3945
          %3947 = vrot.lane.b32.xlu0 %v3756, 64
          %v3948 = vpop.permute.xlu0 %3947
          %3949 = vrot.lane.b32.xlu0 %v3758, 64
          %v3950 = vpop.permute.xlu0 %3949
          %3951 = vrot.lane.b32.xlu0 %v3760, 64
          %v3952 = vpop.permute.xlu0 %3951
          %3953 = vrot.lane.b32.xlu0 %v3762, 64
          %v3954 = vpop.permute.xlu0 %3953
          %3955 = vrot.lane.b32.xlu0 %v3764, 64
          %v3956 = vpop.permute.xlu0 %3955
          %3957 = vrot.lane.b32.xlu0 %v3766, 64
          %v3958 = vpop.permute.xlu0 %3957
          %3959 = vrot.lane.b32.xlu0 %v3768, 64
          %v3960 = vpop.permute.xlu0 %3959
          %3961 = vrot.lane.b32.xlu0 %v3770, 64
          %v3962 = vpop.permute.xlu0 %3961
          %3963 = vrot.lane.b32.xlu0 %v3772, 64
          %v3964 = vpop.permute.xlu0 %3963
          %3965 = vrot.lane.b32.xlu0 %v3774, 64
          %v3966 = vpop.permute.xlu0 %3965
          %3967 = vrot.lane.b32.xlu0 %v3776, 64
          %v3968 = vpop.permute.xlu0 %3967
          %3969 = vrot.lane.b32.xlu0 %v3778, 64
          %v3970 = vpop.permute.xlu0 %3969
          %3971 = vrot.lane.b32.xlu0 %v3780, 64
          %v3972 = vpop.permute.xlu0 %3971
          %3973 = vrot.lane.b32.xlu0 %v3782, 64
          %v3974 = vpop.permute.xlu0 %3973
          %3975 = vrot.lane.b32.xlu0 %v3784, 64
          %v3976 = vpop.permute.xlu0 %3975
          %3977 = vrot.lane.b32.xlu0 %v3786, 64
          %v3978 = vpop.permute.xlu0 %3977
          %3979 = vrot.lane.b32.xlu0 %v3788, 64
          %v3980 = vpop.permute.xlu0 %3979
          %3981 = vrot.lane.b32.xlu0 %v3790, 64
          %v3982 = vpop.permute.xlu0 %3981
          %3983 = vrot.lane.b32.xlu0 %v3792, 64
          %v3984 = vpop.permute.xlu0 %3983
          %3985 = vrot.lane.b32.xlu0 %v3794, 64
          %v3986 = vpop.permute.xlu0 %3985
          %3987 = vrot.lane.b32.xlu0 %v3796, 64
          %v3988 = vpop.permute.xlu0 %3987
          %3989 = vrot.lane.b32.xlu0 %v3798, 64
          %v3990 = vpop.permute.xlu0 %3989
          %3991 = vrot.lane.b32.xlu0 %v3800, 64
          %v3992 = vpop.permute.xlu0 %3991
          %3993 = vrot.lane.b32.xlu0 %v3802, 64
          %v3994 = vpop.permute.xlu0 %3993
          %3995 = vrot.lane.b32.xlu0 %v3804, 64
          %v3996 = vpop.permute.xlu0 %3995
          %3997 = vrot.lane.b32.xlu0 %v3806, 64
          %v3998 = vpop.permute.xlu0 %3997
          %3999 = vrot.lane.b32.xlu0 %v3808, 64
          %v4000 = vpop.permute.xlu0 %3999
          %4001 = vrot.lane.b32.xlu0 %v3810, 64
          %v4002 = vpop.permute.xlu0 %4001
          %4003 = vrot.lane.b32.xlu0 %v3812, 64
          %v4004 = vpop.permute.xlu0 %4003
          %4005 = vrot.lane.b32.xlu0 %v3814, 64
          %v4006 = vpop.permute.xlu0 %4005
          %4007 = vrot.lane.b32.xlu0 %v3816, 64
          %v4008 = vpop.permute.xlu0 %4007
          %4009 = vrot.lane.b32.xlu0 %v3818, 64
          %v4010 = vpop.permute.xlu0 %4009
          %4011 = vrot.lane.b32.xlu0 %v3820, 64
          %v4012 = vpop.permute.xlu0 %4011
          %4013 = vrot.lane.b32.xlu0 %v3822, 64
          %v4014 = vpop.permute.xlu0 %4013
          %4015 = vrot.lane.b32.xlu0 %v3824, 64
          %v4016 = vpop.permute.xlu0 %4015
          %4017 = vrot.lane.b32.xlu0 %v3826, 64
          %v4018 = vpop.permute.xlu0 %4017
          %4019 = vrot.lane.b32.xlu0 %v3828, 64
          %v4020 = vpop.permute.xlu0 %4019
          %4021 = vrot.lane.b32.xlu0 %v3830, 64
          %v4022 = vpop.permute.xlu0 %4021
          %4023 = vrot.lane.b32.xlu0 %v3832, 64
          %v4024 = vpop.permute.xlu0 %4023
          %4025 = vrot.lane.b32.xlu0 %v3834, 64
          %v4026 = vpop.permute.xlu0 %4025
          %4027 = vrot.lane.b32.xlu0 %v3836, 64
          %v4028 = vpop.permute.xlu0 %4027
          %4029 = vrot.lane.b32.xlu0 %v3838, 64
          %v4030 = vpop.permute.xlu0 %4029
          %4031 = vrot.lane.b32.xlu0 %v3840, 64
          %v4032 = vpop.permute.xlu0 %4031
          %4033 = vrot.lane.b32.xlu0 %v3842, 64
          %v4034 = vpop.permute.xlu0 %4033
          %4035 = vrot.lane.b32.xlu0 %v3844, 64
          %v4036 = vpop.permute.xlu0 %4035
          %4037 = vrot.lane.b32.xlu0 %v3846, 64
          %v4038 = vpop.permute.xlu0 %4037
          %4039 = vrot.lane.b32.xlu0 %v3848, 64
          %v4040 = vpop.permute.xlu0 %4039
          %4041 = vrot.lane.b32.xlu0 %v3850, 64
          %v4042 = vpop.permute.xlu0 %4041
          %v4107 = vsel %vm1824, %v3916, 0.0
          %4108 = vadd.xlane.f32.xlu0 %v4107
          %v4109 = vpop.xlane.xlu0 %4108
          %v4110 = vsel %vm1824, %v3918, 0.0
          %4111 = vadd.xlane.f32.xlu0 %v4110
          %v4112 = vpop.xlane.xlu0 %4111
          %v4113 = vsel %vm1824, %v3920, 0.0
          %4114 = vadd.xlane.f32.xlu0 %v4113
          %v4115 = vpop.xlane.xlu0 %4114
          %v4116 = vsel %vm1824, %v3922, 0.0
          %4117 = vadd.xlane.f32.xlu0 %v4116
          %v4118 = vpop.xlane.xlu0 %4117
          %v4119 = vsel %vm1824, %v3924, 0.0
          %4120 = vadd.xlane.f32.xlu0 %v4119
          %v4121 = vpop.xlane.xlu0 %4120
          %v4122 = vsel %vm1824, %v3926, 0.0
          %4123 = vadd.xlane.f32.xlu0 %v4122
          %v4124 = vpop.xlane.xlu0 %4123
          %v4125 = vsel %vm1824, %v3928, 0.0
          %4126 = vadd.xlane.f32.xlu0 %v4125
          %v4127 = vpop.xlane.xlu0 %4126
          %v4128 = vsel %vm1824, %v3930, 0.0
          %4129 = vadd.xlane.f32.xlu0 %v4128
          %v4130 = vpop.xlane.xlu0 %4129
          %v4131 = vsel %vm1824, %v3932, 0.0
          %4132 = vadd.xlane.f32.xlu0 %v4131
          %v4133 = vpop.xlane.xlu0 %4132
          %v4134 = vsel %vm1824, %v3934, 0.0
          %4135 = vadd.xlane.f32.xlu0 %v4134
          %v4136 = vpop.xlane.xlu0 %4135
          %v4137 = vsel %vm1824, %v3936, 0.0
          %4138 = vadd.xlane.f32.xlu0 %v4137
          %v4139 = vpop.xlane.xlu0 %4138
          %v4140 = vsel %vm1824, %v3938, 0.0
          %4141 = vadd.xlane.f32.xlu0 %v4140
          %v4142 = vpop.xlane.xlu0 %4141
          %v4143 = vsel %vm1824, %v3940, 0.0
          %4144 = vadd.xlane.f32.xlu0 %v4143
          %v4145 = vpop.xlane.xlu0 %4144
          %v4146 = vsel %vm1824, %v3942, 0.0
          %4147 = vadd.xlane.f32.xlu0 %v4146
          %v4148 = vpop.xlane.xlu0 %4147
          %v4149 = vsel %vm1824, %v3944, 0.0
          %4150 = vadd.xlane.f32.xlu0 %v4149
          %v4151 = vpop.xlane.xlu0 %4150
          %v4152 = vsel %vm1824, %v3946, 0.0
          %4153 = vadd.xlane.f32.xlu0 %v4152
          %v4154 = vpop.xlane.xlu0 %4153
          %v4155 = vsel %vm1824, %v3948, 0.0
          %4156 = vadd.xlane.f32.xlu0 %v4155
          %v4157 = vpop.xlane.xlu0 %4156
          %v4158 = vsel %vm1824, %v3950, 0.0
          %4159 = vadd.xlane.f32.xlu0 %v4158
          %v4160 = vpop.xlane.xlu0 %4159
          %v4161 = vsel %vm1824, %v3952, 0.0
          %4162 = vadd.xlane.f32.xlu0 %v4161
          %v4163 = vpop.xlane.xlu0 %4162
          %v4164 = vsel %vm1824, %v3954, 0.0
          %4165 = vadd.xlane.f32.xlu0 %v4164
          %v4166 = vpop.xlane.xlu0 %4165
          %v4167 = vsel %vm1824, %v3956, 0.0
          %4168 = vadd.xlane.f32.xlu0 %v4167
          %v4169 = vpop.xlane.xlu0 %4168
          %v4170 = vsel %vm1824, %v3958, 0.0
          %4171 = vadd.xlane.f32.xlu0 %v4170
          %v4172 = vpop.xlane.xlu0 %4171
          %v4173 = vsel %vm1824, %v3960, 0.0
          %4174 = vadd.xlane.f32.xlu0 %v4173
          %v4175 = vpop.xlane.xlu0 %4174
          %v4176 = vsel %vm1824, %v3962, 0.0
          %4177 = vadd.xlane.f32.xlu0 %v4176
          %v4178 = vpop.xlane.xlu0 %4177
          %v4179 = vsel %vm1824, %v3964, 0.0
          %4180 = vadd.xlane.f32.xlu0 %v4179
          %v4181 = vpop.xlane.xlu0 %4180
          %v4182 = vsel %vm1824, %v3966, 0.0
          %4183 = vadd.xlane.f32.xlu0 %v4182
          %v4184 = vpop.xlane.xlu0 %4183
          %v4185 = vsel %vm1824, %v3968, 0.0
          %4186 = vadd.xlane.f32.xlu0 %v4185
          %v4187 = vpop.xlane.xlu0 %4186
          %v4188 = vsel %vm1824, %v3970, 0.0
          %4189 = vadd.xlane.f32.xlu0 %v4188
          %v4190 = vpop.xlane.xlu0 %4189
          %v4191 = vsel %vm1824, %v3972, 0.0
          %4192 = vadd.xlane.f32.xlu0 %v4191
          %v4193 = vpop.xlane.xlu0 %4192
          %v4194 = vsel %vm1824, %v3974, 0.0
          %4195 = vadd.xlane.f32.xlu0 %v4194
          %v4196 = vpop.xlane.xlu0 %4195
          %v4197 = vsel %vm1824, %v3976, 0.0
          %4198 = vadd.xlane.f32.xlu0 %v4197
          %v4199 = vpop.xlane.xlu0 %4198
          %v4200 = vsel %vm1824, %v3978, 0.0
          %4201 = vadd.xlane.f32.xlu0 %v4200
          %v4202 = vpop.xlane.xlu0 %4201
          %v4203 = vsel %vm1824, %v3980, 0.0
          %4204 = vadd.xlane.f32.xlu0 %v4203
          %v4205 = vpop.xlane.xlu0 %4204
          %v4206 = vsel %vm1824, %v3982, 0.0
          %4207 = vadd.xlane.f32.xlu0 %v4206
          %v4208 = vpop.xlane.xlu0 %4207
          %v4209 = vsel %vm1824, %v3984, 0.0
          %4210 = vadd.xlane.f32.xlu0 %v4209
          %v4211 = vpop.xlane.xlu0 %4210
          %v4212 = vsel %vm1824, %v3986, 0.0
          %4213 = vadd.xlane.f32.xlu0 %v4212
          %v4214 = vpop.xlane.xlu0 %4213
          %v4215 = vsel %vm1824, %v3988, 0.0
          %4216 = vadd.xlane.f32.xlu0 %v4215
          %v4217 = vpop.xlane.xlu0 %4216
          %v4218 = vsel %vm1824, %v3990, 0.0
          %4219 = vadd.xlane.f32.xlu0 %v4218
          %v4220 = vpop.xlane.xlu0 %4219
          %v4221 = vsel %vm1824, %v3992, 0.0
          %4222 = vadd.xlane.f32.xlu0 %v4221
          %v4223 = vpop.xlane.xlu0 %4222
          %v4224 = vsel %vm1824, %v3994, 0.0
          %4225 = vadd.xlane.f32.xlu0 %v4224
          %v4226 = vpop.xlane.xlu0 %4225
          %v4227 = vsel %vm1824, %v3996, 0.0
          %4228 = vadd.xlane.f32.xlu0 %v4227
          %v4229 = vpop.xlane.xlu0 %4228
          %v4230 = vsel %vm1824, %v3998, 0.0
          %4231 = vadd.xlane.f32.xlu0 %v4230
          %v4232 = vpop.xlane.xlu0 %4231
          %v4233 = vsel %vm1824, %v4000, 0.0
          %4234 = vadd.xlane.f32.xlu0 %v4233
          %v4235 = vpop.xlane.xlu0 %4234
          %v4236 = vsel %vm1824, %v4002, 0.0
          %4237 = vadd.xlane.f32.xlu0 %v4236
          %v4238 = vpop.xlane.xlu0 %4237
          %v4239 = vsel %vm1824, %v4004, 0.0
          %4240 = vadd.xlane.f32.xlu0 %v4239
          %v4241 = vpop.xlane.xlu0 %4240
          %v4242 = vsel %vm1824, %v4006, 0.0
          %4243 = vadd.xlane.f32.xlu0 %v4242
          %v4244 = vpop.xlane.xlu0 %4243
          %v4245 = vsel %vm1824, %v4008, 0.0
          %4246 = vadd.xlane.f32.xlu0 %v4245
          %v4247 = vpop.xlane.xlu0 %4246
          %v4248 = vsel %vm1824, %v4010, 0.0
          %4249 = vadd.xlane.f32.xlu0 %v4248
          %v4250 = vpop.xlane.xlu0 %4249
          %v4251 = vsel %vm1824, %v4012, 0.0
          %4252 = vadd.xlane.f32.xlu0 %v4251
          %v4253 = vpop.xlane.xlu0 %4252
          %v4254 = vsel %vm1824, %v4014, 0.0
          %4255 = vadd.xlane.f32.xlu0 %v4254
          %v4256 = vpop.xlane.xlu0 %4255
          %v4257 = vsel %vm1824, %v4016, 0.0
          %4258 = vadd.xlane.f32.xlu0 %v4257
          %v4259 = vpop.xlane.xlu0 %4258
          %v4260 = vsel %vm1824, %v4018, 0.0
          %4261 = vadd.xlane.f32.xlu0 %v4260
          %v4262 = vpop.xlane.xlu0 %4261
          %v4263 = vsel %vm1824, %v4020, 0.0
          %4264 = vadd.xlane.f32.xlu0 %v4263
          %v4265 = vpop.xlane.xlu0 %4264
          %v4266 = vsel %vm1824, %v4022, 0.0
          %4267 = vadd.xlane.f32.xlu0 %v4266
          %v4268 = vpop.xlane.xlu0 %4267
          %v4269 = vsel %vm1824, %v4024, 0.0
          %4270 = vadd.xlane.f32.xlu0 %v4269
          %v4271 = vpop.xlane.xlu0 %4270
          %v4272 = vsel %vm1824, %v4026, 0.0
          %4273 = vadd.xlane.f32.xlu0 %v4272
          %v4274 = vpop.xlane.xlu0 %4273
          %v4275 = vsel %vm1824, %v4028, 0.0
          %4276 = vadd.xlane.f32.xlu0 %v4275
          %v4277 = vpop.xlane.xlu0 %4276
          %v4278 = vsel %vm1824, %v4030, 0.0
          %4279 = vadd.xlane.f32.xlu0 %v4278
          %v4280 = vpop.xlane.xlu0 %4279
          %v4281 = vsel %vm1824, %v4032, 0.0
          %4282 = vadd.xlane.f32.xlu0 %v4281
          %v4283 = vpop.xlane.xlu0 %4282
          %v4284 = vsel %vm1824, %v4034, 0.0
          %4285 = vadd.xlane.f32.xlu0 %v4284
          %v4286 = vpop.xlane.xlu0 %4285
          %v4287 = vsel %vm1824, %v4036, 0.0
          %4288 = vadd.xlane.f32.xlu0 %v4287
          %v4289 = vpop.xlane.xlu0 %4288
          %v4290 = vsel %vm1824, %v4038, 0.0
          %4291 = vadd.xlane.f32.xlu0 %v4290
          %v4292 = vpop.xlane.xlu0 %4291
          %v4293 = vsel %vm1824, %v4040, 0.0
          %4294 = vadd.xlane.f32.xlu0 %v4293
          %v4295 = vpop.xlane.xlu0 %4294
          %v4296 = vsel %vm1824, %v4042, 0.0
          %4297 = vadd.xlane.f32.xlu0 %v4296
          %v4298 = vpop.xlane.xlu0 %4297
          %v4299 = vrcp.pop %v4109
          %v4300 = vmul.f32 %v4109, %v4299
          %v4301 = vsub.f32 1.0, %v4300
          %v4302 = vmul.f32 %v4299, %v4301
          %v4303 = vadd.f32 %v4299, %v4302
          %vm4304 = vweird.f32 %v4109
          %vm4305 = vweird.f32 %v4299
          %vm4306 = vmor %vm4304, %vm4305
          %v4307 = vsel %vm4306, %v4299, %v4303
          %v4308 = vand.u32 2147483647, %v4109
          %vm4309 = vcmp.eq.f32.partialorder %v4308, 8.507059e+37
          %v4310 = vand.u32 %v4109, 2147483648
          %v4311 = vor.u32 1.1754944e-38, %v4310
          %v4312 = vsel %vm4309, %v4311, %v4307
          %v4313 = vrcp.pop %v4112
          %v4314 = vmul.f32 %v4112, %v4313
          %v4315 = vsub.f32 1.0, %v4314
          %v4316 = vmul.f32 %v4313, %v4315
          %v4317 = vadd.f32 %v4313, %v4316
          %vm4318 = vweird.f32 %v4112
          %vm4319 = vweird.f32 %v4313
          %vm4320 = vmor %vm4318, %vm4319
          %v4321 = vsel %vm4320, %v4313, %v4317
          %v4322 = vand.u32 2147483647, %v4112
          %vm4323 = vcmp.eq.f32.partialorder %v4322, 8.507059e+37
          %v4324 = vand.u32 %v4112, 2147483648
          %v4325 = vor.u32 1.1754944e-38, %v4324
          %v4326 = vsel %vm4323, %v4325, %v4321
          %v4327 = vrcp.pop %v4115
          %v4328 = vmul.f32 %v4115, %v4327
          %v4329 = vsub.f32 1.0, %v4328
          %v4330 = vmul.f32 %v4327, %v4329
          %v4331 = vadd.f32 %v4327, %v4330
          %vm4332 = vweird.f32 %v4115
          %vm4333 = vweird.f32 %v4327
          %vm4334 = vmor %vm4332, %vm4333
          %v4335 = vsel %vm4334, %v4327, %v4331
          %v4336 = vand.u32 2147483647, %v4115
          %vm4337 = vcmp.eq.f32.partialorder %v4336, 8.507059e+37
          %v4338 = vand.u32 %v4115, 2147483648
          %v4339 = vor.u32 1.1754944e-38, %v4338
          %v4340 = vsel %vm4337, %v4339, %v4335
          %v4341 = vrcp.pop %v4118
          %v4342 = vmul.f32 %v4118, %v4341
          %v4343 = vsub.f32 1.0, %v4342
          %v4344 = vmul.f32 %v4341, %v4343
          %v4345 = vadd.f32 %v4341, %v4344
          %vm4346 = vweird.f32 %v4118
          %vm4347 = vweird.f32 %v4341
          %vm4348 = vmor %vm4346, %vm4347
          %v4349 = vsel %vm4348, %v4341, %v4345
          %v4350 = vand.u32 2147483647, %v4118
          %vm4351 = vcmp.eq.f32.partialorder %v4350, 8.507059e+37
          %v4352 = vand.u32 %v4118, 2147483648
          %v4353 = vor.u32 1.1754944e-38, %v4352
          %v4354 = vsel %vm4351, %v4353, %v4349
          %v4355 = vrcp.pop %v4121
          %v4356 = vmul.f32 %v4121, %v4355
          %v4357 = vsub.f32 1.0, %v4356
          %v4358 = vmul.f32 %v4355, %v4357
          %v4359 = vadd.f32 %v4355, %v4358
          %vm4360 = vweird.f32 %v4121
          %vm4361 = vweird.f32 %v4355
          %vm4362 = vmor %vm4360, %vm4361
          %v4363 = vsel %vm4362, %v4355, %v4359
          %v4364 = vand.u32 2147483647, %v4121
          %vm4365 = vcmp.eq.f32.partialorder %v4364, 8.507059e+37
          %v4366 = vand.u32 %v4121, 2147483648
          %v4367 = vor.u32 1.1754944e-38, %v4366
          %v4368 = vsel %vm4365, %v4367, %v4363
          %v4369 = vrcp.pop %v4124
          %v4370 = vmul.f32 %v4124, %v4369
          %v4371 = vsub.f32 1.0, %v4370
          %v4372 = vmul.f32 %v4369, %v4371
          %v4373 = vadd.f32 %v4369, %v4372
          %vm4374 = vweird.f32 %v4124
          %vm4375 = vweird.f32 %v4369
          %vm4376 = vmor %vm4374, %vm4375
          %v4377 = vsel %vm4376, %v4369, %v4373
          %v4378 = vand.u32 2147483647, %v4124
          %vm4379 = vcmp.eq.f32.partialorder %v4378, 8.507059e+37
          %v4380 = vand.u32 %v4124, 2147483648
          %v4381 = vor.u32 1.1754944e-38, %v4380
          %v4382 = vsel %vm4379, %v4381, %v4377
          %v4383 = vrcp.pop %v4127
          %v4384 = vmul.f32 %v4127, %v4383
          %v4385 = vsub.f32 1.0, %v4384
          %v4386 = vmul.f32 %v4383, %v4385
          %v4387 = vadd.f32 %v4383, %v4386
          %vm4388 = vweird.f32 %v4127
          %vm4389 = vweird.f32 %v4383
          %vm4390 = vmor %vm4388, %vm4389
          %v4391 = vsel %vm4390, %v4383, %v4387
          %v4392 = vand.u32 2147483647, %v4127
          %vm4393 = vcmp.eq.f32.partialorder %v4392, 8.507059e+37
          %v4394 = vand.u32 %v4127, 2147483648
          %v4395 = vor.u32 1.1754944e-38, %v4394
          %v4396 = vsel %vm4393, %v4395, %v4391
          %v4397 = vrcp.pop %v4130
          %v4398 = vmul.f32 %v4130, %v4397
          %v4399 = vsub.f32 1.0, %v4398
          %v4400 = vmul.f32 %v4397, %v4399
          %v4401 = vadd.f32 %v4397, %v4400
          %vm4402 = vweird.f32 %v4130
          %vm4403 = vweird.f32 %v4397
          %vm4404 = vmor %vm4402, %vm4403
          %v4405 = vsel %vm4404, %v4397, %v4401
          %v4406 = vand.u32 2147483647, %v4130
          %vm4407 = vcmp.eq.f32.partialorder %v4406, 8.507059e+37
          %v4408 = vand.u32 %v4130, 2147483648
          %v4409 = vor.u32 1.1754944e-38, %v4408
          %v4410 = vsel %vm4407, %v4409, %v4405
          %v4411 = vrcp.pop %v4133
          %v4412 = vmul.f32 %v4133, %v4411
          %v4413 = vsub.f32 1.0, %v4412
          %v4414 = vmul.f32 %v4411, %v4413
          %v4415 = vadd.f32 %v4411, %v4414
          %vm4416 = vweird.f32 %v4133
          %vm4417 = vweird.f32 %v4411
          %vm4418 = vmor %vm4416, %vm4417
          %v4419 = vsel %vm4418, %v4411, %v4415
          %v4420 = vand.u32 2147483647, %v4133
          %vm4421 = vcmp.eq.f32.partialorder %v4420, 8.507059e+37
          %v4422 = vand.u32 %v4133, 2147483648
          %v4423 = vor.u32 1.1754944e-38, %v4422
          %v4424 = vsel %vm4421, %v4423, %v4419
          %v4425 = vrcp.pop %v4136
          %v4426 = vmul.f32 %v4136, %v4425
          %v4427 = vsub.f32 1.0, %v4426
          %v4428 = vmul.f32 %v4425, %v4427
          %v4429 = vadd.f32 %v4425, %v4428
          %vm4430 = vweird.f32 %v4136
          %vm4431 = vweird.f32 %v4425
          %vm4432 = vmor %vm4430, %vm4431
          %v4433 = vsel %vm4432, %v4425, %v4429
          %v4434 = vand.u32 2147483647, %v4136
          %vm4435 = vcmp.eq.f32.partialorder %v4434, 8.507059e+37
          %v4436 = vand.u32 %v4136, 2147483648
          %v4437 = vor.u32 1.1754944e-38, %v4436
          %v4438 = vsel %vm4435, %v4437, %v4433
          %v4439 = vrcp.pop %v4139
          %v4440 = vmul.f32 %v4139, %v4439
          %v4441 = vsub.f32 1.0, %v4440
          %v4442 = vmul.f32 %v4439, %v4441
          %v4443 = vadd.f32 %v4439, %v4442
          %vm4444 = vweird.f32 %v4139
          %vm4445 = vweird.f32 %v4439
          %vm4446 = vmor %vm4444, %vm4445
          %v4447 = vsel %vm4446, %v4439, %v4443
          %v4448 = vand.u32 2147483647, %v4139
          %vm4449 = vcmp.eq.f32.partialorder %v4448, 8.507059e+37
          %v4450 = vand.u32 %v4139, 2147483648
          %v4451 = vor.u32 1.1754944e-38, %v4450
          %v4452 = vsel %vm4449, %v4451, %v4447
          %v4453 = vrcp.pop %v4142
          %v4454 = vmul.f32 %v4142, %v4453
          %v4455 = vsub.f32 1.0, %v4454
          %v4456 = vmul.f32 %v4453, %v4455
          %v4457 = vadd.f32 %v4453, %v4456
          %vm4458 = vweird.f32 %v4142
          %vm4459 = vweird.f32 %v4453
          %vm4460 = vmor %vm4458, %vm4459
          %v4461 = vsel %vm4460, %v4453, %v4457
          %v4462 = vand.u32 2147483647, %v4142
          %vm4463 = vcmp.eq.f32.partialorder %v4462, 8.507059e+37
          %v4464 = vand.u32 %v4142, 2147483648
          %v4465 = vor.u32 1.1754944e-38, %v4464
          %v4466 = vsel %vm4463, %v4465, %v4461
          %v4467 = vrcp.pop %v4145
          %v4468 = vmul.f32 %v4145, %v4467
          %v4469 = vsub.f32 1.0, %v4468
          %v4470 = vmul.f32 %v4467, %v4469
          %v4471 = vadd.f32 %v4467, %v4470
          %vm4472 = vweird.f32 %v4145
          %vm4473 = vweird.f32 %v4467
          %vm4474 = vmor %vm4472, %vm4473
          %v4475 = vsel %vm4474, %v4467, %v4471
          %v4476 = vand.u32 2147483647, %v4145
          %vm4477 = vcmp.eq.f32.partialorder %v4476, 8.507059e+37
          %v4478 = vand.u32 %v4145, 2147483648
          %v4479 = vor.u32 1.1754944e-38, %v4478
          %v4480 = vsel %vm4477, %v4479, %v4475
          %v4481 = vrcp.pop %v4148
          %v4482 = vmul.f32 %v4148, %v4481
          %v4483 = vsub.f32 1.0, %v4482
          %v4484 = vmul.f32 %v4481, %v4483
          %v4485 = vadd.f32 %v4481, %v4484
          %vm4486 = vweird.f32 %v4148
          %vm4487 = vweird.f32 %v4481
          %vm4488 = vmor %vm4486, %vm4487
          %v4489 = vsel %vm4488, %v4481, %v4485
          %v4490 = vand.u32 2147483647, %v4148
          %vm4491 = vcmp.eq.f32.partialorder %v4490, 8.507059e+37
          %v4492 = vand.u32 %v4148, 2147483648
          %v4493 = vor.u32 1.1754944e-38, %v4492
          %v4494 = vsel %vm4491, %v4493, %v4489
          %v4495 = vrcp.pop %v4151
          %v4496 = vmul.f32 %v4151, %v4495
          %v4497 = vsub.f32 1.0, %v4496
          %v4498 = vmul.f32 %v4495, %v4497
          %v4499 = vadd.f32 %v4495, %v4498
          %vm4500 = vweird.f32 %v4151
          %vm4501 = vweird.f32 %v4495
          %vm4502 = vmor %vm4500, %vm4501
          %v4503 = vsel %vm4502, %v4495, %v4499
          %v4504 = vand.u32 2147483647, %v4151
          %vm4505 = vcmp.eq.f32.partialorder %v4504, 8.507059e+37
          %v4506 = vand.u32 %v4151, 2147483648
          %v4507 = vor.u32 1.1754944e-38, %v4506
          %v4508 = vsel %vm4505, %v4507, %v4503
          %v4509 = vrcp.pop %v4154
          %v4510 = vmul.f32 %v4154, %v4509
          %v4511 = vsub.f32 1.0, %v4510
          %v4512 = vmul.f32 %v4509, %v4511
          %v4513 = vadd.f32 %v4509, %v4512
          %vm4514 = vweird.f32 %v4154
          %vm4515 = vweird.f32 %v4509
          %vm4516 = vmor %vm4514, %vm4515
          %v4517 = vsel %vm4516, %v4509, %v4513
          %v4518 = vand.u32 2147483647, %v4154
          %vm4519 = vcmp.eq.f32.partialorder %v4518, 8.507059e+37
          %v4520 = vand.u32 %v4154, 2147483648
          %v4521 = vor.u32 1.1754944e-38, %v4520
          %v4522 = vsel %vm4519, %v4521, %v4517
          %v4523 = vrcp.pop %v4157
          %v4524 = vmul.f32 %v4157, %v4523
          %v4525 = vsub.f32 1.0, %v4524
          %v4526 = vmul.f32 %v4523, %v4525
          %v4527 = vadd.f32 %v4523, %v4526
          %vm4528 = vweird.f32 %v4157
          %vm4529 = vweird.f32 %v4523
          %vm4530 = vmor %vm4528, %vm4529
          %v4531 = vsel %vm4530, %v4523, %v4527
          %v4532 = vand.u32 2147483647, %v4157
          %vm4533 = vcmp.eq.f32.partialorder %v4532, 8.507059e+37
          %v4534 = vand.u32 %v4157, 2147483648
          %v4535 = vor.u32 1.1754944e-38, %v4534
          %v4536 = vsel %vm4533, %v4535, %v4531
          %v4537 = vrcp.pop %v4160
          %v4538 = vmul.f32 %v4160, %v4537
          %v4539 = vsub.f32 1.0, %v4538
          %v4540 = vmul.f32 %v4537, %v4539
          %v4541 = vadd.f32 %v4537, %v4540
          %vm4542 = vweird.f32 %v4160
          %vm4543 = vweird.f32 %v4537
          %vm4544 = vmor %vm4542, %vm4543
          %v4545 = vsel %vm4544, %v4537, %v4541
          %v4546 = vand.u32 2147483647, %v4160
          %vm4547 = vcmp.eq.f32.partialorder %v4546, 8.507059e+37
          %v4548 = vand.u32 %v4160, 2147483648
          %v4549 = vor.u32 1.1754944e-38, %v4548
          %v4550 = vsel %vm4547, %v4549, %v4545
          %v4551 = vrcp.pop %v4163
          %v4552 = vmul.f32 %v4163, %v4551
          %v4553 = vsub.f32 1.0, %v4552
          %v4554 = vmul.f32 %v4551, %v4553
          %v4555 = vadd.f32 %v4551, %v4554
          %vm4556 = vweird.f32 %v4163
          %vm4557 = vweird.f32 %v4551
          %vm4558 = vmor %vm4556, %vm4557
          %v4559 = vsel %vm4558, %v4551, %v4555
          %v4560 = vand.u32 2147483647, %v4163
          %vm4561 = vcmp.eq.f32.partialorder %v4560, 8.507059e+37
          %v4562 = vand.u32 %v4163, 2147483648
          %v4563 = vor.u32 1.1754944e-38, %v4562
          %v4564 = vsel %vm4561, %v4563, %v4559
          %v4565 = vrcp.pop %v4166
          %v4566 = vmul.f32 %v4166, %v4565
          %v4567 = vsub.f32 1.0, %v4566
          %v4568 = vmul.f32 %v4565, %v4567
          %v4569 = vadd.f32 %v4565, %v4568
          %vm4570 = vweird.f32 %v4166
          %vm4571 = vweird.f32 %v4565
          %vm4572 = vmor %vm4570, %vm4571
          %v4573 = vsel %vm4572, %v4565, %v4569
          %v4574 = vand.u32 2147483647, %v4166
          %vm4575 = vcmp.eq.f32.partialorder %v4574, 8.507059e+37
          %v4576 = vand.u32 %v4166, 2147483648
          %v4577 = vor.u32 1.1754944e-38, %v4576
          %v4578 = vsel %vm4575, %v4577, %v4573
          %v4579 = vrcp.pop %v4169
          %v4580 = vmul.f32 %v4169, %v4579
          %v4581 = vsub.f32 1.0, %v4580
          %v4582 = vmul.f32 %v4579, %v4581
          %v4583 = vadd.f32 %v4579, %v4582
          %vm4584 = vweird.f32 %v4169
          %vm4585 = vweird.f32 %v4579
          %vm4586 = vmor %vm4584, %vm4585
          %v4587 = vsel %vm4586, %v4579, %v4583
          %v4588 = vand.u32 2147483647, %v4169
          %vm4589 = vcmp.eq.f32.partialorder %v4588, 8.507059e+37
          %v4590 = vand.u32 %v4169, 2147483648
          %v4591 = vor.u32 1.1754944e-38, %v4590
          %v4592 = vsel %vm4589, %v4591, %v4587
          %v4593 = vrcp.pop %v4172
          %v4594 = vmul.f32 %v4172, %v4593
          %v4595 = vsub.f32 1.0, %v4594
          %v4596 = vmul.f32 %v4593, %v4595
          %v4597 = vadd.f32 %v4593, %v4596
          %vm4598 = vweird.f32 %v4172
          %vm4599 = vweird.f32 %v4593
          %vm4600 = vmor %vm4598, %vm4599
          %v4601 = vsel %vm4600, %v4593, %v4597
          %v4602 = vand.u32 2147483647, %v4172
          %vm4603 = vcmp.eq.f32.partialorder %v4602, 8.507059e+37
          %v4604 = vand.u32 %v4172, 2147483648
          %v4605 = vor.u32 1.1754944e-38, %v4604
          %v4606 = vsel %vm4603, %v4605, %v4601
          %v4607 = vrcp.pop %v4175
          %v4608 = vmul.f32 %v4175, %v4607
          %v4609 = vsub.f32 1.0, %v4608
          %v4610 = vmul.f32 %v4607, %v4609
          %v4611 = vadd.f32 %v4607, %v4610
          %vm4612 = vweird.f32 %v4175
          %vm4613 = vweird.f32 %v4607
          %vm4614 = vmor %vm4612, %vm4613
          %v4615 = vsel %vm4614, %v4607, %v4611
          %v4616 = vand.u32 2147483647, %v4175
          %vm4617 = vcmp.eq.f32.partialorder %v4616, 8.507059e+37
          %v4618 = vand.u32 %v4175, 2147483648
          %v4619 = vor.u32 1.1754944e-38, %v4618
          %v4620 = vsel %vm4617, %v4619, %v4615
          %v4621 = vrcp.pop %v4178
          %v4622 = vmul.f32 %v4178, %v4621
          %v4623 = vsub.f32 1.0, %v4622
          %v4624 = vmul.f32 %v4621, %v4623
          %v4625 = vadd.f32 %v4621, %v4624
          %vm4626 = vweird.f32 %v4178
          %vm4627 = vweird.f32 %v4621
          %vm4628 = vmor %vm4626, %vm4627
          %v4629 = vsel %vm4628, %v4621, %v4625
          %v4630 = vand.u32 2147483647, %v4178
          %vm4631 = vcmp.eq.f32.partialorder %v4630, 8.507059e+37
          %v4632 = vand.u32 %v4178, 2147483648
          %v4633 = vor.u32 1.1754944e-38, %v4632
          %v4634 = vsel %vm4631, %v4633, %v4629
          %v4635 = vrcp.pop %v4181
          %v4636 = vmul.f32 %v4181, %v4635
          %v4637 = vsub.f32 1.0, %v4636
          %v4638 = vmul.f32 %v4635, %v4637
          %v4639 = vadd.f32 %v4635, %v4638
          %vm4640 = vweird.f32 %v4181
          %vm4641 = vweird.f32 %v4635
          %vm4642 = vmor %vm4640, %vm4641
          %v4643 = vsel %vm4642, %v4635, %v4639
          %v4644 = vand.u32 2147483647, %v4181
          %vm4645 = vcmp.eq.f32.partialorder %v4644, 8.507059e+37
          %v4646 = vand.u32 %v4181, 2147483648
          %v4647 = vor.u32 1.1754944e-38, %v4646
          %v4648 = vsel %vm4645, %v4647, %v4643
          %v4649 = vrcp.pop %v4184
          %v4650 = vmul.f32 %v4184, %v4649
          %v4651 = vsub.f32 1.0, %v4650
          %v4652 = vmul.f32 %v4649, %v4651
          %v4653 = vadd.f32 %v4649, %v4652
          %vm4654 = vweird.f32 %v4184
          %vm4655 = vweird.f32 %v4649
          %vm4656 = vmor %vm4654, %vm4655
          %v4657 = vsel %vm4656, %v4649, %v4653
          %v4658 = vand.u32 2147483647, %v4184
          %vm4659 = vcmp.eq.f32.partialorder %v4658, 8.507059e+37
          %v4660 = vand.u32 %v4184, 2147483648
          %v4661 = vor.u32 1.1754944e-38, %v4660
          %v4662 = vsel %vm4659, %v4661, %v4657
          %v4663 = vrcp.pop %v4187
          %v4664 = vmul.f32 %v4187, %v4663
          %v4665 = vsub.f32 1.0, %v4664
          %v4666 = vmul.f32 %v4663, %v4665
          %v4667 = vadd.f32 %v4663, %v4666
          %vm4668 = vweird.f32 %v4187
          %vm4669 = vweird.f32 %v4663
          %vm4670 = vmor %vm4668, %vm4669
          %v4671 = vsel %vm4670, %v4663, %v4667
          %v4672 = vand.u32 2147483647, %v4187
          %vm4673 = vcmp.eq.f32.partialorder %v4672, 8.507059e+37
          %v4674 = vand.u32 %v4187, 2147483648
          %v4675 = vor.u32 1.1754944e-38, %v4674
          %v4676 = vsel %vm4673, %v4675, %v4671
          %v4677 = vrcp.pop %v4190
          %v4678 = vmul.f32 %v4190, %v4677
          %v4679 = vsub.f32 1.0, %v4678
          %v4680 = vmul.f32 %v4677, %v4679
          %v4681 = vadd.f32 %v4677, %v4680
          %vm4682 = vweird.f32 %v4190
          %vm4683 = vweird.f32 %v4677
          %vm4684 = vmor %vm4682, %vm4683
          %v4685 = vsel %vm4684, %v4677, %v4681
          %v4686 = vand.u32 2147483647, %v4190
          %vm4687 = vcmp.eq.f32.partialorder %v4686, 8.507059e+37
          %v4688 = vand.u32 %v4190, 2147483648
          %v4689 = vor.u32 1.1754944e-38, %v4688
          %v4690 = vsel %vm4687, %v4689, %v4685
          %v4691 = vrcp.pop %v4193
          %v4692 = vmul.f32 %v4193, %v4691
          %v4693 = vsub.f32 1.0, %v4692
          %v4694 = vmul.f32 %v4691, %v4693
          %v4695 = vadd.f32 %v4691, %v4694
          %vm4696 = vweird.f32 %v4193
          %vm4697 = vweird.f32 %v4691
          %vm4698 = vmor %vm4696, %vm4697
          %v4699 = vsel %vm4698, %v4691, %v4695
          %v4700 = vand.u32 2147483647, %v4193
          %vm4701 = vcmp.eq.f32.partialorder %v4700, 8.507059e+37
          %v4702 = vand.u32 %v4193, 2147483648
          %v4703 = vor.u32 1.1754944e-38, %v4702
          %v4704 = vsel %vm4701, %v4703, %v4699
          %v4705 = vrcp.pop %v4196
          %v4706 = vmul.f32 %v4196, %v4705
          %v4707 = vsub.f32 1.0, %v4706
          %v4708 = vmul.f32 %v4705, %v4707
          %v4709 = vadd.f32 %v4705, %v4708
          %vm4710 = vweird.f32 %v4196
          %vm4711 = vweird.f32 %v4705
          %vm4712 = vmor %vm4710, %vm4711
          %v4713 = vsel %vm4712, %v4705, %v4709
          %v4714 = vand.u32 2147483647, %v4196
          %vm4715 = vcmp.eq.f32.partialorder %v4714, 8.507059e+37
          %v4716 = vand.u32 %v4196, 2147483648
          %v4717 = vor.u32 1.1754944e-38, %v4716
          %v4718 = vsel %vm4715, %v4717, %v4713
          %v4719 = vrcp.pop %v4199
          %v4720 = vmul.f32 %v4199, %v4719
          %v4721 = vsub.f32 1.0, %v4720
          %v4722 = vmul.f32 %v4719, %v4721
          %v4723 = vadd.f32 %v4719, %v4722
          %vm4724 = vweird.f32 %v4199
          %vm4725 = vweird.f32 %v4719
          %vm4726 = vmor %vm4724, %vm4725
          %v4727 = vsel %vm4726, %v4719, %v4723
          %v4728 = vand.u32 2147483647, %v4199
          %vm4729 = vcmp.eq.f32.partialorder %v4728, 8.507059e+37
          %v4730 = vand.u32 %v4199, 2147483648
          %v4731 = vor.u32 1.1754944e-38, %v4730
          %v4732 = vsel %vm4729, %v4731, %v4727
          %v4733 = vrcp.pop %v4202
          %v4734 = vmul.f32 %v4202, %v4733
          %v4735 = vsub.f32 1.0, %v4734
          %v4736 = vmul.f32 %v4733, %v4735
          %v4737 = vadd.f32 %v4733, %v4736
          %vm4738 = vweird.f32 %v4202
          %vm4739 = vweird.f32 %v4733
          %vm4740 = vmor %vm4738, %vm4739
          %v4741 = vsel %vm4740, %v4733, %v4737
          %v4742 = vand.u32 2147483647, %v4202
          %vm4743 = vcmp.eq.f32.partialorder %v4742, 8.507059e+37
          %v4744 = vand.u32 %v4202, 2147483648
          %v4745 = vor.u32 1.1754944e-38, %v4744
          %v4746 = vsel %vm4743, %v4745, %v4741
          %v4747 = vrcp.pop %v4205
          %v4748 = vmul.f32 %v4205, %v4747
          %v4749 = vsub.f32 1.0, %v4748
          %v4750 = vmul.f32 %v4747, %v4749
          %v4751 = vadd.f32 %v4747, %v4750
          %vm4752 = vweird.f32 %v4205
          %vm4753 = vweird.f32 %v4747
          %vm4754 = vmor %vm4752, %vm4753
          %v4755 = vsel %vm4754, %v4747, %v4751
          %v4756 = vand.u32 2147483647, %v4205
          %vm4757 = vcmp.eq.f32.partialorder %v4756, 8.507059e+37
          %v4758 = vand.u32 %v4205, 2147483648
          %v4759 = vor.u32 1.1754944e-38, %v4758
          %v4760 = vsel %vm4757, %v4759, %v4755
          %v4761 = vrcp.pop %v4208
          %v4762 = vmul.f32 %v4208, %v4761
          %v4763 = vsub.f32 1.0, %v4762
          %v4764 = vmul.f32 %v4761, %v4763
          %v4765 = vadd.f32 %v4761, %v4764
          %vm4766 = vweird.f32 %v4208
          %vm4767 = vweird.f32 %v4761
          %vm4768 = vmor %vm4766, %vm4767
          %v4769 = vsel %vm4768, %v4761, %v4765
          %v4770 = vand.u32 2147483647, %v4208
          %vm4771 = vcmp.eq.f32.partialorder %v4770, 8.507059e+37
          %v4772 = vand.u32 %v4208, 2147483648
          %v4773 = vor.u32 1.1754944e-38, %v4772
          %v4774 = vsel %vm4771, %v4773, %v4769
          %v4775 = vrcp.pop %v4211
          %v4776 = vmul.f32 %v4211, %v4775
          %v4777 = vsub.f32 1.0, %v4776
          %v4778 = vmul.f32 %v4775, %v4777
          %v4779 = vadd.f32 %v4775, %v4778
          %vm4780 = vweird.f32 %v4211
          %vm4781 = vweird.f32 %v4775
          %vm4782 = vmor %vm4780, %vm4781
          %v4783 = vsel %vm4782, %v4775, %v4779
          %v4784 = vand.u32 2147483647, %v4211
          %vm4785 = vcmp.eq.f32.partialorder %v4784, 8.507059e+37
          %v4786 = vand.u32 %v4211, 2147483648
          %v4787 = vor.u32 1.1754944e-38, %v4786
          %v4788 = vsel %vm4785, %v4787, %v4783
          %v4789 = vrcp.pop %v4214
          %v4790 = vmul.f32 %v4214, %v4789
          %v4791 = vsub.f32 1.0, %v4790
          %v4792 = vmul.f32 %v4789, %v4791
          %v4793 = vadd.f32 %v4789, %v4792
          %vm4794 = vweird.f32 %v4214
          %vm4795 = vweird.f32 %v4789
          %vm4796 = vmor %vm4794, %vm4795
          %v4797 = vsel %vm4796, %v4789, %v4793
          %v4798 = vand.u32 2147483647, %v4214
          %vm4799 = vcmp.eq.f32.partialorder %v4798, 8.507059e+37
          %v4800 = vand.u32 %v4214, 2147483648
          %v4801 = vor.u32 1.1754944e-38, %v4800
          %v4802 = vsel %vm4799, %v4801, %v4797
          %v4803 = vrcp.pop %v4217
          %v4804 = vmul.f32 %v4217, %v4803
          %v4805 = vsub.f32 1.0, %v4804
          %v4806 = vmul.f32 %v4803, %v4805
          %v4807 = vadd.f32 %v4803, %v4806
          %vm4808 = vweird.f32 %v4217
          %vm4809 = vweird.f32 %v4803
          %vm4810 = vmor %vm4808, %vm4809
          %v4811 = vsel %vm4810, %v4803, %v4807
          %v4812 = vand.u32 2147483647, %v4217
          %vm4813 = vcmp.eq.f32.partialorder %v4812, 8.507059e+37
          %v4814 = vand.u32 %v4217, 2147483648
          %v4815 = vor.u32 1.1754944e-38, %v4814
          %v4816 = vsel %vm4813, %v4815, %v4811
          %v4817 = vrcp.pop %v4220
          %v4818 = vmul.f32 %v4220, %v4817
          %v4819 = vsub.f32 1.0, %v4818
          %v4820 = vmul.f32 %v4817, %v4819
          %v4821 = vadd.f32 %v4817, %v4820
          %vm4822 = vweird.f32 %v4220
          %vm4823 = vweird.f32 %v4817
          %vm4824 = vmor %vm4822, %vm4823
          %v4825 = vsel %vm4824, %v4817, %v4821
          %v4826 = vand.u32 2147483647, %v4220
          %vm4827 = vcmp.eq.f32.partialorder %v4826, 8.507059e+37
          %v4828 = vand.u32 %v4220, 2147483648
          %v4829 = vor.u32 1.1754944e-38, %v4828
          %v4830 = vsel %vm4827, %v4829, %v4825
          %v4831 = vrcp.pop %v4223
          %v4832 = vmul.f32 %v4223, %v4831
          %v4833 = vsub.f32 1.0, %v4832
          %v4834 = vmul.f32 %v4831, %v4833
          %v4835 = vadd.f32 %v4831, %v4834
          %vm4836 = vweird.f32 %v4223
          %vm4837 = vweird.f32 %v4831
          %vm4838 = vmor %vm4836, %vm4837
          %v4839 = vsel %vm4838, %v4831, %v4835
          %v4840 = vand.u32 2147483647, %v4223
          %vm4841 = vcmp.eq.f32.partialorder %v4840, 8.507059e+37
          %v4842 = vand.u32 %v4223, 2147483648
          %v4843 = vor.u32 1.1754944e-38, %v4842
          %v4844 = vsel %vm4841, %v4843, %v4839
          %v4845 = vrcp.pop %v4226
          %v4846 = vmul.f32 %v4226, %v4845
          %v4847 = vsub.f32 1.0, %v4846
          %v4848 = vmul.f32 %v4845, %v4847
          %v4849 = vadd.f32 %v4845, %v4848
          %vm4850 = vweird.f32 %v4226
          %vm4851 = vweird.f32 %v4845
          %vm4852 = vmor %vm4850, %vm4851
          %v4853 = vsel %vm4852, %v4845, %v4849
          %v4854 = vand.u32 2147483647, %v4226
          %vm4855 = vcmp.eq.f32.partialorder %v4854, 8.507059e+37
          %v4856 = vand.u32 %v4226, 2147483648
          %v4857 = vor.u32 1.1754944e-38, %v4856
          %v4858 = vsel %vm4855, %v4857, %v4853
          %v4859 = vrcp.pop %v4229
          %v4860 = vmul.f32 %v4229, %v4859
          %v4861 = vsub.f32 1.0, %v4860
          %v4862 = vmul.f32 %v4859, %v4861
          %v4863 = vadd.f32 %v4859, %v4862
          %vm4864 = vweird.f32 %v4229
          %vm4865 = vweird.f32 %v4859
          %vm4866 = vmor %vm4864, %vm4865
          %v4867 = vsel %vm4866, %v4859, %v4863
          %v4868 = vand.u32 2147483647, %v4229
          %vm4869 = vcmp.eq.f32.partialorder %v4868, 8.507059e+37
          %v4870 = vand.u32 %v4229, 2147483648
          %v4871 = vor.u32 1.1754944e-38, %v4870
          %v4872 = vsel %vm4869, %v4871, %v4867
          %v4873 = vrcp.pop %v4232
          %v4874 = vmul.f32 %v4232, %v4873
          %v4875 = vsub.f32 1.0, %v4874
          %v4876 = vmul.f32 %v4873, %v4875
          %v4877 = vadd.f32 %v4873, %v4876
          %vm4878 = vweird.f32 %v4232
          %vm4879 = vweird.f32 %v4873
          %vm4880 = vmor %vm4878, %vm4879
          %v4881 = vsel %vm4880, %v4873, %v4877
          %v4882 = vand.u32 2147483647, %v4232
          %vm4883 = vcmp.eq.f32.partialorder %v4882, 8.507059e+37
          %v4884 = vand.u32 %v4232, 2147483648
          %v4885 = vor.u32 1.1754944e-38, %v4884
          %v4886 = vsel %vm4883, %v4885, %v4881
          %v4887 = vrcp.pop %v4235
          %v4888 = vmul.f32 %v4235, %v4887
          %v4889 = vsub.f32 1.0, %v4888
          %v4890 = vmul.f32 %v4887, %v4889
          %v4891 = vadd.f32 %v4887, %v4890
          %vm4892 = vweird.f32 %v4235
          %vm4893 = vweird.f32 %v4887
          %vm4894 = vmor %vm4892, %vm4893
          %v4895 = vsel %vm4894, %v4887, %v4891
          %v4896 = vand.u32 2147483647, %v4235
          %vm4897 = vcmp.eq.f32.partialorder %v4896, 8.507059e+37
          %v4898 = vand.u32 %v4235, 2147483648
          %v4899 = vor.u32 1.1754944e-38, %v4898
          %v4900 = vsel %vm4897, %v4899, %v4895
          %v4901 = vrcp.pop %v4238
          %v4902 = vmul.f32 %v4238, %v4901
          %v4903 = vsub.f32 1.0, %v4902
          %v4904 = vmul.f32 %v4901, %v4903
          %v4905 = vadd.f32 %v4901, %v4904
          %vm4906 = vweird.f32 %v4238
          %vm4907 = vweird.f32 %v4901
          %vm4908 = vmor %vm4906, %vm4907
          %v4909 = vsel %vm4908, %v4901, %v4905
          %v4910 = vand.u32 2147483647, %v4238
          %vm4911 = vcmp.eq.f32.partialorder %v4910, 8.507059e+37
          %v4912 = vand.u32 %v4238, 2147483648
          %v4913 = vor.u32 1.1754944e-38, %v4912
          %v4914 = vsel %vm4911, %v4913, %v4909
          %v4915 = vrcp.pop %v4241
          %v4916 = vmul.f32 %v4241, %v4915
          %v4917 = vsub.f32 1.0, %v4916
          %v4918 = vmul.f32 %v4915, %v4917
          %v4919 = vadd.f32 %v4915, %v4918
          %vm4920 = vweird.f32 %v4241
          %vm4921 = vweird.f32 %v4915
          %vm4922 = vmor %vm4920, %vm4921
          %v4923 = vsel %vm4922, %v4915, %v4919
          %v4924 = vand.u32 2147483647, %v4241
          %vm4925 = vcmp.eq.f32.partialorder %v4924, 8.507059e+37
          %v4926 = vand.u32 %v4241, 2147483648
          %v4927 = vor.u32 1.1754944e-38, %v4926
          %v4928 = vsel %vm4925, %v4927, %v4923
          %v4929 = vrcp.pop %v4244
          %v4930 = vmul.f32 %v4244, %v4929
          %v4931 = vsub.f32 1.0, %v4930
          %v4932 = vmul.f32 %v4929, %v4931
          %v4933 = vadd.f32 %v4929, %v4932
          %vm4934 = vweird.f32 %v4244
          %vm4935 = vweird.f32 %v4929
          %vm4936 = vmor %vm4934, %vm4935
          %v4937 = vsel %vm4936, %v4929, %v4933
          %v4938 = vand.u32 2147483647, %v4244
          %vm4939 = vcmp.eq.f32.partialorder %v4938, 8.507059e+37
          %v4940 = vand.u32 %v4244, 2147483648
          %v4941 = vor.u32 1.1754944e-38, %v4940
          %v4942 = vsel %vm4939, %v4941, %v4937
          %v4943 = vrcp.pop %v4247
          %v4944 = vmul.f32 %v4247, %v4943
          %v4945 = vsub.f32 1.0, %v4944
          %v4946 = vmul.f32 %v4943, %v4945
          %v4947 = vadd.f32 %v4943, %v4946
          %vm4948 = vweird.f32 %v4247
          %vm4949 = vweird.f32 %v4943
          %vm4950 = vmor %vm4948, %vm4949
          %v4951 = vsel %vm4950, %v4943, %v4947
          %v4952 = vand.u32 2147483647, %v4247
          %vm4953 = vcmp.eq.f32.partialorder %v4952, 8.507059e+37
          %v4954 = vand.u32 %v4247, 2147483648
          %v4955 = vor.u32 1.1754944e-38, %v4954
          %v4956 = vsel %vm4953, %v4955, %v4951
          %v4957 = vrcp.pop %v4250
          %v4958 = vmul.f32 %v4250, %v4957
          %v4959 = vsub.f32 1.0, %v4958
          %v4960 = vmul.f32 %v4957, %v4959
          %v4961 = vadd.f32 %v4957, %v4960
          %vm4962 = vweird.f32 %v4250
          %vm4963 = vweird.f32 %v4957
          %vm4964 = vmor %vm4962, %vm4963
          %v4965 = vsel %vm4964, %v4957, %v4961
          %v4966 = vand.u32 2147483647, %v4250
          %vm4967 = vcmp.eq.f32.partialorder %v4966, 8.507059e+37
          %v4968 = vand.u32 %v4250, 2147483648
          %v4969 = vor.u32 1.1754944e-38, %v4968
          %v4970 = vsel %vm4967, %v4969, %v4965
          %v4971 = vrcp.pop %v4253
          %v4972 = vmul.f32 %v4253, %v4971
          %v4973 = vsub.f32 1.0, %v4972
          %v4974 = vmul.f32 %v4971, %v4973
          %v4975 = vadd.f32 %v4971, %v4974
          %vm4976 = vweird.f32 %v4253
          %vm4977 = vweird.f32 %v4971
          %vm4978 = vmor %vm4976, %vm4977
          %v4979 = vsel %vm4978, %v4971, %v4975
          %v4980 = vand.u32 2147483647, %v4253
          %vm4981 = vcmp.eq.f32.partialorder %v4980, 8.507059e+37
          %v4982 = vand.u32 %v4253, 2147483648
          %v4983 = vor.u32 1.1754944e-38, %v4982
          %v4984 = vsel %vm4981, %v4983, %v4979
          %v4985 = vrcp.pop %v4256
          %v4986 = vmul.f32 %v4256, %v4985
          %v4987 = vsub.f32 1.0, %v4986
          %v4988 = vmul.f32 %v4985, %v4987
          %v4989 = vadd.f32 %v4985, %v4988
          %vm4990 = vweird.f32 %v4256
          %vm4991 = vweird.f32 %v4985
          %vm4992 = vmor %vm4990, %vm4991
          %v4993 = vsel %vm4992, %v4985, %v4989
          %v4994 = vand.u32 2147483647, %v4256
          %vm4995 = vcmp.eq.f32.partialorder %v4994, 8.507059e+37
          %v4996 = vand.u32 %v4256, 2147483648
          %v4997 = vor.u32 1.1754944e-38, %v4996
          %v4998 = vsel %vm4995, %v4997, %v4993
          %v4999 = vrcp.pop %v4259
          %v5000 = vmul.f32 %v4259, %v4999
          %v5001 = vsub.f32 1.0, %v5000
          %v5002 = vmul.f32 %v4999, %v5001
          %v5003 = vadd.f32 %v4999, %v5002
          %vm5004 = vweird.f32 %v4259
          %vm5005 = vweird.f32 %v4999
          %vm5006 = vmor %vm5004, %vm5005
          %v5007 = vsel %vm5006, %v4999, %v5003
          %v5008 = vand.u32 2147483647, %v4259
          %vm5009 = vcmp.eq.f32.partialorder %v5008, 8.507059e+37
          %v5010 = vand.u32 %v4259, 2147483648
          %v5011 = vor.u32 1.1754944e-38, %v5010
          %v5012 = vsel %vm5009, %v5011, %v5007
          %v5013 = vrcp.pop %v4262
          %v5014 = vmul.f32 %v4262, %v5013
          %v5015 = vsub.f32 1.0, %v5014
          %v5016 = vmul.f32 %v5013, %v5015
          %v5017 = vadd.f32 %v5013, %v5016
          %vm5018 = vweird.f32 %v4262
          %vm5019 = vweird.f32 %v5013
          %vm5020 = vmor %vm5018, %vm5019
          %v5021 = vsel %vm5020, %v5013, %v5017
          %v5022 = vand.u32 2147483647, %v4262
          %vm5023 = vcmp.eq.f32.partialorder %v5022, 8.507059e+37
          %v5024 = vand.u32 %v4262, 2147483648
          %v5025 = vor.u32 1.1754944e-38, %v5024
          %v5026 = vsel %vm5023, %v5025, %v5021
          %v5027 = vrcp.pop %v4265
          %v5028 = vmul.f32 %v4265, %v5027
          %v5029 = vsub.f32 1.0, %v5028
          %v5030 = vmul.f32 %v5027, %v5029
          %v5031 = vadd.f32 %v5027, %v5030
          %vm5032 = vweird.f32 %v4265
          %vm5033 = vweird.f32 %v5027
          %vm5034 = vmor %vm5032, %vm5033
          %v5035 = vsel %vm5034, %v5027, %v5031
          %v5036 = vand.u32 2147483647, %v4265
          %vm5037 = vcmp.eq.f32.partialorder %v5036, 8.507059e+37
          %v5038 = vand.u32 %v4265, 2147483648
          %v5039 = vor.u32 1.1754944e-38, %v5038
          %v5040 = vsel %vm5037, %v5039, %v5035
          %v5041 = vrcp.pop %v4268
          %v5042 = vmul.f32 %v4268, %v5041
          %v5043 = vsub.f32 1.0, %v5042
          %v5044 = vmul.f32 %v5041, %v5043
          %v5045 = vadd.f32 %v5041, %v5044
          %vm5046 = vweird.f32 %v4268
          %vm5047 = vweird.f32 %v5041
          %vm5048 = vmor %vm5046, %vm5047
          %v5049 = vsel %vm5048, %v5041, %v5045
          %v5050 = vand.u32 2147483647, %v4268
          %vm5051 = vcmp.eq.f32.partialorder %v5050, 8.507059e+37
          %v5052 = vand.u32 %v4268, 2147483648
          %v5053 = vor.u32 1.1754944e-38, %v5052
          %v5054 = vsel %vm5051, %v5053, %v5049
          %v5055 = vrcp.pop %v4271
          %v5056 = vmul.f32 %v4271, %v5055
          %v5057 = vsub.f32 1.0, %v5056
          %v5058 = vmul.f32 %v5055, %v5057
          %v5059 = vadd.f32 %v5055, %v5058
          %vm5060 = vweird.f32 %v4271
          %vm5061 = vweird.f32 %v5055
          %vm5062 = vmor %vm5060, %vm5061
          %v5063 = vsel %vm5062, %v5055, %v5059
          %v5064 = vand.u32 2147483647, %v4271
          %vm5065 = vcmp.eq.f32.partialorder %v5064, 8.507059e+37
          %v5066 = vand.u32 %v4271, 2147483648
          %v5067 = vor.u32 1.1754944e-38, %v5066
          %v5068 = vsel %vm5065, %v5067, %v5063
          %v5069 = vrcp.pop %v4274
          %v5070 = vmul.f32 %v4274, %v5069
          %v5071 = vsub.f32 1.0, %v5070
          %v5072 = vmul.f32 %v5069, %v5071
          %v5073 = vadd.f32 %v5069, %v5072
          %vm5074 = vweird.f32 %v4274
          %vm5075 = vweird.f32 %v5069
          %vm5076 = vmor %vm5074, %vm5075
          %v5077 = vsel %vm5076, %v5069, %v5073
          %v5078 = vand.u32 2147483647, %v4274
          %vm5079 = vcmp.eq.f32.partialorder %v5078, 8.507059e+37
          %v5080 = vand.u32 %v4274, 2147483648
          %v5081 = vor.u32 1.1754944e-38, %v5080
          %v5082 = vsel %vm5079, %v5081, %v5077
          %v5083 = vrcp.pop %v4277
          %v5084 = vmul.f32 %v4277, %v5083
          %v5085 = vsub.f32 1.0, %v5084
          %v5086 = vmul.f32 %v5083, %v5085
          %v5087 = vadd.f32 %v5083, %v5086
          %vm5088 = vweird.f32 %v4277
          %vm5089 = vweird.f32 %v5083
          %vm5090 = vmor %vm5088, %vm5089
          %v5091 = vsel %vm5090, %v5083, %v5087
          %v5092 = vand.u32 2147483647, %v4277
          %vm5093 = vcmp.eq.f32.partialorder %v5092, 8.507059e+37
          %v5094 = vand.u32 %v4277, 2147483648
          %v5095 = vor.u32 1.1754944e-38, %v5094
          %v5096 = vsel %vm5093, %v5095, %v5091
          %v5097 = vrcp.pop %v4280
          %v5098 = vmul.f32 %v4280, %v5097
          %v5099 = vsub.f32 1.0, %v5098
          %v5100 = vmul.f32 %v5097, %v5099
          %v5101 = vadd.f32 %v5097, %v5100
          %vm5102 = vweird.f32 %v4280
          %vm5103 = vweird.f32 %v5097
          %vm5104 = vmor %vm5102, %vm5103
          %v5105 = vsel %vm5104, %v5097, %v5101
          %v5106 = vand.u32 2147483647, %v4280
          %vm5107 = vcmp.eq.f32.partialorder %v5106, 8.507059e+37
          %v5108 = vand.u32 %v4280, 2147483648
          %v5109 = vor.u32 1.1754944e-38, %v5108
          %v5110 = vsel %vm5107, %v5109, %v5105
          %v5111 = vrcp.pop %v4283
          %v5112 = vmul.f32 %v4283, %v5111
          %v5113 = vsub.f32 1.0, %v5112
          %v5114 = vmul.f32 %v5111, %v5113
          %v5115 = vadd.f32 %v5111, %v5114
          %vm5116 = vweird.f32 %v4283
          %vm5117 = vweird.f32 %v5111
          %vm5118 = vmor %vm5116, %vm5117
          %v5119 = vsel %vm5118, %v5111, %v5115
          %v5120 = vand.u32 2147483647, %v4283
          %vm5121 = vcmp.eq.f32.partialorder %v5120, 8.507059e+37
          %v5122 = vand.u32 %v4283, 2147483648
          %v5123 = vor.u32 1.1754944e-38, %v5122
          %v5124 = vsel %vm5121, %v5123, %v5119
          %v5125 = vrcp.pop %v4286
          %v5126 = vmul.f32 %v4286, %v5125
          %v5127 = vsub.f32 1.0, %v5126
          %v5128 = vmul.f32 %v5125, %v5127
          %v5129 = vadd.f32 %v5125, %v5128
          %vm5130 = vweird.f32 %v4286
          %vm5131 = vweird.f32 %v5125
          %vm5132 = vmor %vm5130, %vm5131
          %v5133 = vsel %vm5132, %v5125, %v5129
          %v5134 = vand.u32 2147483647, %v4286
          %vm5135 = vcmp.eq.f32.partialorder %v5134, 8.507059e+37
          %v5136 = vand.u32 %v4286, 2147483648
          %v5137 = vor.u32 1.1754944e-38, %v5136
          %v5138 = vsel %vm5135, %v5137, %v5133
          %v5139 = vrcp.pop %v4289
          %v5140 = vmul.f32 %v4289, %v5139
          %v5141 = vsub.f32 1.0, %v5140
          %v5142 = vmul.f32 %v5139, %v5141
          %v5143 = vadd.f32 %v5139, %v5142
          %vm5144 = vweird.f32 %v4289
          %vm5145 = vweird.f32 %v5139
          %vm5146 = vmor %vm5144, %vm5145
          %v5147 = vsel %vm5146, %v5139, %v5143
          %v5148 = vand.u32 2147483647, %v4289
          %vm5149 = vcmp.eq.f32.partialorder %v5148, 8.507059e+37
          %v5150 = vand.u32 %v4289, 2147483648
          %v5151 = vor.u32 1.1754944e-38, %v5150
          %v5152 = vsel %vm5149, %v5151, %v5147
          %v5153 = vrcp.pop %v4292
          %v5154 = vmul.f32 %v4292, %v5153
          %v5155 = vsub.f32 1.0, %v5154
          %v5156 = vmul.f32 %v5153, %v5155
          %v5157 = vadd.f32 %v5153, %v5156
          %vm5158 = vweird.f32 %v4292
          %vm5159 = vweird.f32 %v5153
          %vm5160 = vmor %vm5158, %vm5159
          %v5161 = vsel %vm5160, %v5153, %v5157
          %v5162 = vand.u32 2147483647, %v4292
          %vm5163 = vcmp.eq.f32.partialorder %v5162, 8.507059e+37
          %v5164 = vand.u32 %v4292, 2147483648
          %v5165 = vor.u32 1.1754944e-38, %v5164
          %v5166 = vsel %vm5163, %v5165, %v5161
          %v5167 = vrcp.pop %v4295
          %v5168 = vmul.f32 %v4295, %v5167
          %v5169 = vsub.f32 1.0, %v5168
          %v5170 = vmul.f32 %v5167, %v5169
          %v5171 = vadd.f32 %v5167, %v5170
          %vm5172 = vweird.f32 %v4295
          %vm5173 = vweird.f32 %v5167
          %vm5174 = vmor %vm5172, %vm5173
          %v5175 = vsel %vm5174, %v5167, %v5171
          %v5176 = vand.u32 2147483647, %v4295
          %vm5177 = vcmp.eq.f32.partialorder %v5176, 8.507059e+37
          %v5178 = vand.u32 %v4295, 2147483648
          %v5179 = vor.u32 1.1754944e-38, %v5178
          %v5180 = vsel %vm5177, %v5179, %v5175
          %v5181 = vrcp.pop %v4298
          %v5182 = vmul.f32 %v4298, %v5181
          %v5183 = vsub.f32 1.0, %v5182
          %v5184 = vmul.f32 %v5181, %v5183
          %v5185 = vadd.f32 %v5181, %v5184
          %vm5186 = vweird.f32 %v4298
          %vm5187 = vweird.f32 %v5181
          %vm5188 = vmor %vm5186, %vm5187
          %v5189 = vsel %vm5188, %v5181, %v5185
          %v5190 = vand.u32 2147483647, %v4298
          %vm5191 = vcmp.eq.f32.partialorder %v5190, 8.507059e+37
          %v5192 = vand.u32 %v4298, 2147483648
          %v5193 = vor.u32 1.1754944e-38, %v5192
          %v5194 = vsel %vm5191, %v5193, %v5189
          %v5195 = vmul.f32 %v3724, %v4312
          %v5196 = vmul.f32 %v3726, %v4326
          %v5197 = vmul.f32 %v3728, %v4340
          %v5198 = vmul.f32 %v3730, %v4354
          %v5199 = vmul.f32 %v3732, %v4368
          %v5200 = vmul.f32 %v3734, %v4382
          %v5201 = vmul.f32 %v3736, %v4396
          %v5202 = vmul.f32 %v3738, %v4410
          %v5203 = vmul.f32 %v3740, %v4424
          %v5204 = vmul.f32 %v3742, %v4438
          %v5205 = vmul.f32 %v3744, %v4452
          %v5206 = vmul.f32 %v3746, %v4466
          %v5207 = vmul.f32 %v3748, %v4480
          %v5208 = vmul.f32 %v3750, %v4494
          %v5209 = vmul.f32 %v3752, %v4508
          %v5210 = vmul.f32 %v3754, %v4522
          %v5211 = vmul.f32 %v3756, %v4536
          %v5212 = vmul.f32 %v3758, %v4550
          %v5213 = vmul.f32 %v3760, %v4564
          %v5214 = vmul.f32 %v3762, %v4578
          %v5215 = vmul.f32 %v3764, %v4592
          %v5216 = vmul.f32 %v3766, %v4606
          %v5217 = vmul.f32 %v3768, %v4620
          %v5218 = vmul.f32 %v3770, %v4634
          %v5219 = vmul.f32 %v3772, %v4648
          %v5220 = vmul.f32 %v3774, %v4662
          %v5221 = vmul.f32 %v3776, %v4676
          %v5222 = vmul.f32 %v3778, %v4690
          %v5223 = vmul.f32 %v3780, %v4704
          %v5224 = vmul.f32 %v3782, %v4718
          %v5225 = vmul.f32 %v3784, %v4732
          %v5226 = vmul.f32 %v3786, %v4746
          %v5227 = vmul.f32 %v3788, %v4760
          %v5228 = vmul.f32 %v3790, %v4774
          %v5229 = vmul.f32 %v3792, %v4788
          %v5230 = vmul.f32 %v3794, %v4802
          %v5231 = vmul.f32 %v3796, %v4816
          %v5232 = vmul.f32 %v3798, %v4830
          %v5233 = vmul.f32 %v3800, %v4844
          %v5234 = vmul.f32 %v3802, %v4858
          %v5235 = vmul.f32 %v3804, %v4872
          %v5236 = vmul.f32 %v3806, %v4886
          %v5237 = vmul.f32 %v3808, %v4900
          %v5238 = vmul.f32 %v3810, %v4914
          %v5239 = vmul.f32 %v3812, %v4928
          %v5240 = vmul.f32 %v3814, %v4942
          %v5241 = vmul.f32 %v3816, %v4956
          %v5242 = vmul.f32 %v3818, %v4970
          %v5243 = vmul.f32 %v3820, %v4984
          %v5244 = vmul.f32 %v3822, %v4998
          %v5245 = vmul.f32 %v3824, %v5012
          %v5246 = vmul.f32 %v3826, %v5026
          %v5247 = vmul.f32 %v3828, %v5040
          %v5248 = vmul.f32 %v3830, %v5054
          %v5249 = vmul.f32 %v3832, %v5068
          %v5250 = vmul.f32 %v3834, %v5082
          %v5251 = vmul.f32 %v3836, %v5096
          %v5252 = vmul.f32 %v3838, %v5110
          %v5253 = vmul.f32 %v3840, %v5124
          %v5254 = vmul.f32 %v3842, %v5138
          %v5255 = vmul.f32 %v3844, %v5152
          %v5256 = vmul.f32 %v3846, %v5166
          %v5257 = vmul.f32 %v3848, %v5180
          %v5258 = vmul.f32 %v3850, %v5194
          %v5259 = vsel %vm1824, %v3402, %v5195
          %v5260 = vsel %vm1824, %v3403, %v5196
          %v5261 = vsel %vm1824, %v3404, %v5197
          %v5262 = vsel %vm1824, %v3405, %v5198
          %v5263 = vsel %vm1824, %v3406, %v5199
          %v5264 = vsel %vm1824, %v3407, %v5200
          %v5265 = vsel %vm1824, %v3408, %v5201
          %v5266 = vsel %vm1824, %v3409, %v5202
          %v5267 = vsel %vm1824, %v3410, %v5203
          %v5268 = vsel %vm1824, %v3411, %v5204
          %v5269 = vsel %vm1824, %v3412, %v5205
          %v5270 = vsel %vm1824, %v3413, %v5206
          %v5271 = vsel %vm1824, %v3414, %v5207
          %v5272 = vsel %vm1824, %v3415, %v5208
          %v5273 = vsel %vm1824, %v3416, %v5209
          %v5274 = vsel %vm1824, %v3417, %v5210
          %v5275 = vsel %vm1824, %v3418, %v5211
          %v5276 = vsel %vm1824, %v3419, %v5212
          %v5277 = vsel %vm1824, %v3420, %v5213
          %v5278 = vsel %vm1824, %v3421, %v5214
          %v5279 = vsel %vm1824, %v3422, %v5215
          %v5280 = vsel %vm1824, %v3423, %v5216
          %v5281 = vsel %vm1824, %v3424, %v5217
          %v5282 = vsel %vm1824, %v3425, %v5218
          %v5283 = vsel %vm1824, %v3426, %v5219
          %v5284 = vsel %vm1824, %v3427, %v5220
          %v5285 = vsel %vm1824, %v3428, %v5221
          %v5286 = vsel %vm1824, %v3429, %v5222
          %v5287 = vsel %vm1824, %v3430, %v5223
          %v5288 = vsel %vm1824, %v3431, %v5224
          %v5289 = vsel %vm1824, %v3432, %v5225
          %v5290 = vsel %vm1824, %v3433, %v5226
          %v5291 = vsel %vm1824, %v3434, %v5227
          %v5292 = vsel %vm1824, %v3435, %v5228
          %v5293 = vsel %vm1824, %v3436, %v5229
          %v5294 = vsel %vm1824, %v3437, %v5230
          %v5295 = vsel %vm1824, %v3438, %v5231
          %v5296 = vsel %vm1824, %v3439, %v5232
          %v5297 = vsel %vm1824, %v3440, %v5233
          %v5298 = vsel %vm1824, %v3441, %v5234
          %v5299 = vsel %vm1824, %v3442, %v5235
          %v5300 = vsel %vm1824, %v3443, %v5236
          %v5301 = vsel %vm1824, %v3444, %v5237
          %v5302 = vsel %vm1824, %v3445, %v5238
          %v5303 = vsel %vm1824, %v3446, %v5239
          %v5304 = vsel %vm1824, %v3447, %v5240
          %v5305 = vsel %vm1824, %v3448, %v5241
          %v5306 = vsel %vm1824, %v3449, %v5242
          %v5307 = vsel %vm1824, %v3450, %v5243
          %v5308 = vsel %vm1824, %v3451, %v5244
          %v5309 = vsel %vm1824, %v3452, %v5245
          %v5310 = vsel %vm1824, %v3453, %v5246
          %v5311 = vsel %vm1824, %v3454, %v5247
          %v5312 = vsel %vm1824, %v3455, %v5248
          %v5313 = vsel %vm1824, %v3456, %v5249
          %v5314 = vsel %vm1824, %v3457, %v5250
          %v5315 = vsel %vm1824, %v3458, %v5251
          %v5316 = vsel %vm1824, %v3459, %v5252
          %v5317 = vsel %vm1824, %v3460, %v5253
          %v5318 = vsel %vm1824, %v3461, %v5254
          %v5319 = vsel %vm1824, %v3462, %v5255
          %v5320 = vsel %vm1824, %v3463, %v5256
          %v5321 = vsel %vm1824, %v3464, %v5257
          %v5322 = vsel %vm1824, %v3465, %v5258
          %v5323 = vpack.c.bf16 %v5259, %v5259
          %v5324 = vpack.c.bf16 %v5260, %v5260
          %v5325 = vpack.c.bf16 %v5261, %v5261
          %v5326 = vpack.c.bf16 %v5262, %v5262
          %v5327 = vpack.c.bf16 %v5263, %v5263
          %v5328 = vpack.c.bf16 %v5264, %v5264
          %v5329 = vpack.c.bf16 %v5265, %v5265
          %v5330 = vpack.c.bf16 %v5266, %v5266
          %v5331 = vpack.c.bf16 %v5267, %v5267
          %v5332 = vpack.c.bf16 %v5268, %v5268
          %v5333 = vpack.c.bf16 %v5269, %v5269
          %v5334 = vpack.c.bf16 %v5270, %v5270
          %v5335 = vpack.c.bf16 %v5271, %v5271
          %v5336 = vpack.c.bf16 %v5272, %v5272
          %v5337 = vpack.c.bf16 %v5273, %v5273
          %v5338 = vpack.c.bf16 %v5274, %v5274
          %v5339 = vpack.c.bf16 %v5275, %v5275
          %v5340 = vpack.c.bf16 %v5276, %v5276
          %v5341 = vpack.c.bf16 %v5277, %v5277
          %v5342 = vpack.c.bf16 %v5278, %v5278
          %v5343 = vpack.c.bf16 %v5279, %v5279
          %v5344 = vpack.c.bf16 %v5280, %v5280
          %v5345 = vpack.c.bf16 %v5281, %v5281
          %v5346 = vpack.c.bf16 %v5282, %v5282
          %v5347 = vpack.c.bf16 %v5283, %v5283
          %v5348 = vpack.c.bf16 %v5284, %v5284
          %v5349 = vpack.c.bf16 %v5285, %v5285
          %v5350 = vpack.c.bf16 %v5286, %v5286
          %v5351 = vpack.c.bf16 %v5287, %v5287
          %v5352 = vpack.c.bf16 %v5288, %v5288
          %v5353 = vpack.c.bf16 %v5289, %v5289
          %v5354 = vpack.c.bf16 %v5290, %v5290
          %v5355 = vpack.c.bf16 %v5291, %v5291
          %v5356 = vpack.c.bf16 %v5292, %v5292
          %v5357 = vpack.c.bf16 %v5293, %v5293
          %v5358 = vpack.c.bf16 %v5294, %v5294
          %v5359 = vpack.c.bf16 %v5295, %v5295
          %v5360 = vpack.c.bf16 %v5296, %v5296
          %v5361 = vpack.c.bf16 %v5297, %v5297
          %v5362 = vpack.c.bf16 %v5298, %v5298
          %v5363 = vpack.c.bf16 %v5299, %v5299
          %v5364 = vpack.c.bf16 %v5300, %v5300
          %v5365 = vpack.c.bf16 %v5301, %v5301
          %v5366 = vpack.c.bf16 %v5302, %v5302
          %v5367 = vpack.c.bf16 %v5303, %v5303
          %v5368 = vpack.c.bf16 %v5304, %v5304
          %v5369 = vpack.c.bf16 %v5305, %v5305
          %v5370 = vpack.c.bf16 %v5306, %v5306
          %v5371 = vpack.c.bf16 %v5307, %v5307
          %v5372 = vpack.c.bf16 %v5308, %v5308
          %v5373 = vpack.c.bf16 %v5309, %v5309
          %v5374 = vpack.c.bf16 %v5310, %v5310
          %v5375 = vpack.c.bf16 %v5311, %v5311
          %v5376 = vpack.c.bf16 %v5312, %v5312
          %v5377 = vpack.c.bf16 %v5313, %v5313
          %v5378 = vpack.c.bf16 %v5314, %v5314
          %v5379 = vpack.c.bf16 %v5315, %v5315
          %v5380 = vpack.c.bf16 %v5316, %v5316
          %v5381 = vpack.c.bf16 %v5317, %v5317
          %v5382 = vpack.c.bf16 %v5318, %v5318
          %v5383 = vpack.c.bf16 %v5319, %v5319
          %v5384 = vpack.c.bf16 %v5320, %v5320
          %v5385 = vpack.c.bf16 %v5321, %v5321
          %v5386 = vpack.c.bf16 %v5322, %v5322
          %s5387 = smul.u32 %s31, 512
          %s5388 = sshra.s32 %s5387, 3
          %s5389 = sand.u32 %s5387, 7
          %s5390 = smul.addr %s5388, 4
          %s5391 = scalar_lea.vmem [#allocation6], %s5390
          %5392 = vst [vmem:[%s5391] sm:$0xf] %v5323
          %5393 = vst [vmem:[%s5391 + $0x4] sm:$0xf] %v5324
          %5394 = vst [vmem:[%s5391 + $0x8] sm:$0xf] %v5325
          %5395 = vst [vmem:[%s5391 + $0xc] sm:$0xf] %v5326
          %5396 = vst [vmem:[%s5391 + $0x10] sm:$0xf] %v5327
          %5397 = vst [vmem:[%s5391 + $0x14] sm:$0xf] %v5328
          %5398 = vst [vmem:[%s5391 + $0x18] sm:$0xf] %v5329
          %5399 = vst [vmem:[%s5391 + $0x1c] sm:$0xf] %v5330
          %5400 = vst [vmem:[%s5391 + $0x20] sm:$0xf] %v5331
          %5401 = vst [vmem:[%s5391 + $0x24] sm:$0xf] %v5332
          %5402 = vst [vmem:[%s5391 + $0x28] sm:$0xf] %v5333
          %5403 = vst [vmem:[%s5391 + $0x2c] sm:$0xf] %v5334
          %5404 = vst [vmem:[%s5391 + $0x30] sm:$0xf] %v5335
          %5405 = vst [vmem:[%s5391 + $0x34] sm:$0xf] %v5336
          %5406 = vst [vmem:[%s5391 + $0x38] sm:$0xf] %v5337
          %5407 = vst [vmem:[%s5391 + $0x3c] sm:$0xf] %v5338
          %5408 = vst [vmem:[%s5391 + $0x40] sm:$0xf] %v5339
          %5409 = vst [vmem:[%s5391 + $0x44] sm:$0xf] %v5340
          %5410 = vst [vmem:[%s5391 + $0x48] sm:$0xf] %v5341
          %5411 = vst [vmem:[%s5391 + $0x4c] sm:$0xf] %v5342
          %5412 = vst [vmem:[%s5391 + $0x50] sm:$0xf] %v5343
          %5413 = vst [vmem:[%s5391 + $0x54] sm:$0xf] %v5344
          %5414 = vst [vmem:[%s5391 + $0x58] sm:$0xf] %v5345
          %5415 = vst [vmem:[%s5391 + $0x5c] sm:$0xf] %v5346
          %5416 = vst [vmem:[%s5391 + $0x60] sm:$0xf] %v5347
          %5417 = vst [vmem:[%s5391 + $0x64] sm:$0xf] %v5348
          %5418 = vst [vmem:[%s5391 + $0x68] sm:$0xf] %v5349
          %5419 = vst [vmem:[%s5391 + $0x6c] sm:$0xf] %v5350
          %5420 = vst [vmem:[%s5391 + $0x70] sm:$0xf] %v5351
          %5421 = vst [vmem:[%s5391 + $0x74] sm:$0xf] %v5352
          %5422 = vst [vmem:[%s5391 + $0x78] sm:$0xf] %v5353
          %5423 = vst [vmem:[%s5391 + $0x7c] sm:$0xf] %v5354
          %5424 = vst [vmem:[%s5391 + $0x80] sm:$0xf] %v5355
          %5425 = vst [vmem:[%s5391 + $0x84] sm:$0xf] %v5356
          %5426 = vst [vmem:[%s5391 + $0x88] sm:$0xf] %v5357
          %5427 = vst [vmem:[%s5391 + $0x8c] sm:$0xf] %v5358
          %5428 = vst [vmem:[%s5391 + $0x90] sm:$0xf] %v5359
          %5429 = vst [vmem:[%s5391 + $0x94] sm:$0xf] %v5360
          %5430 = vst [vmem:[%s5391 + $0x98] sm:$0xf] %v5361
          %5431 = vst [vmem:[%s5391 + $0x9c] sm:$0xf] %v5362
          %5432 = vst [vmem:[%s5391 + $0xa0] sm:$0xf] %v5363
          %5433 = vst [vmem:[%s5391 + $0xa4] sm:$0xf] %v5364
          %5434 = vst [vmem:[%s5391 + $0xa8] sm:$0xf] %v5365
          %5435 = vst [vmem:[%s5391 + $0xac] sm:$0xf] %v5366
          %5436 = vst [vmem:[%s5391 + $0xb0] sm:$0xf] %v5367
          %5437 = vst [vmem:[%s5391 + $0xb4] sm:$0xf] %v5368
          %5438 = vst [vmem:[%s5391 + $0xb8] sm:$0xf] %v5369
          %5439 = vst [vmem:[%s5391 + $0xbc] sm:$0xf] %v5370
          %5440 = vst [vmem:[%s5391 + $0xc0] sm:$0xf] %v5371
          %5441 = vst [vmem:[%s5391 + $0xc4] sm:$0xf] %v5372
          %5442 = vst [vmem:[%s5391 + $0xc8] sm:$0xf] %v5373
          %5443 = vst [vmem:[%s5391 + $0xcc] sm:$0xf] %v5374
          %5444 = vst [vmem:[%s5391 + $0xd0] sm:$0xf] %v5375
          %5445 = vst [vmem:[%s5391 + $0xd4] sm:$0xf] %v5376
          %5446 = vst [vmem:[%s5391 + $0xd8] sm:$0xf] %v5377
          %5447 = vst [vmem:[%s5391 + $0xdc] sm:$0xf] %v5378
          %5448 = vst [vmem:[%s5391 + $0xe0] sm:$0xf] %v5379
          %5449 = vst [vmem:[%s5391 + $0xe4] sm:$0xf] %v5380
          %5450 = vst [vmem:[%s5391 + $0xe8] sm:$0xf] %v5381
          %5451 = vst [vmem:[%s5391 + $0xec] sm:$0xf] %v5382
          %5452 = vst [vmem:[%s5391 + $0xf0] sm:$0xf] %v5383
          %5453 = vst [vmem:[%s5391 + $0xf4] sm:$0xf] %v5384
          %5454 = vst [vmem:[%s5391 + $0xf8] sm:$0xf] %v5385
          %5455 = vst [vmem:[%s5391 + $0xfc] sm:$0xf] %v5386
          // Predicated region
          $region65: #{tpu_custom_call.1} parent=59 // pred_check
            %p5456 = pneg %p1107
          $region66: #{tpu_custom_call.1} parent=59 // pred_check_branch
            %5458 = sbr.rel (%p5456) target = $region68
          $region67: #{tpu_custom_call.1} parent=59 // pred_region
            %v5459 = vld [vmem:[#allocation3] sm:$0x1]
            %v5460 = vrcp.pop %v5459
            %v5461 = vmul.f32 %v5459, %v5460
            %v5462 = vsub.f32 1.0, %v5461
            %v5463 = vmul.f32 %v5460, %v5462
            %v5464 = vadd.f32 %v5460, %v5463
            %vm5465 = vweird.f32 %v5459
            %vm5466 = vweird.f32 %v5460
            %vm5467 = vmor %vm5465, %vm5466
            %v5468 = vsel %vm5467, %v5460, %v5464
            %v5469 = vand.u32 2147483647, %v5459
            %vm5470 = vcmp.eq.f32.partialorder %v5469, 8.507059e+37
            %v5471 = vand.u32 %v5459, 2147483648
            %v5472 = vor.u32 1.1754944e-38, %v5471
            %v5473 = vsel %vm5470, %v5472, %v5468
            %v5474 = vld [vmem:[#allocation4] sm:$0xff]
            %v5475 = vld [vmem:[#allocation4 + $0x8] sm:$0xff]
            %v5476 = vld [vmem:[#allocation4 + $0x10] sm:$0xff]
            %v5477 = vld [vmem:[#allocation4 + $0x18] sm:$0xff]
            %v5478 = vld [vmem:[#allocation4 + $0x20] sm:$0xff]
            %v5479 = vld [vmem:[#allocation4 + $0x28] sm:$0xff]
            %v5480 = vld [vmem:[#allocation4 + $0x30] sm:$0xff]
            %v5481 = vld [vmem:[#allocation4 + $0x38] sm:$0xff]
            %v5483 = vperm.slane %v5473, 0
            %v5485 = vmul.f32 %v5474, %v5483
            %v5486 = vmul.f32 %v5475, %v5483
            %v5487 = vmul.f32 %v5476, %v5483
            %v5488 = vmul.f32 %v5477, %v5483
            %v5489 = vmul.f32 %v5478, %v5483
            %v5490 = vmul.f32 %v5479, %v5483
            %v5491 = vmul.f32 %v5480, %v5483
            %v5492 = vmul.f32 %v5481, %v5483
            %v5493 = vpack.c.bf16 %v5486, %v5485
            %v5494 = vpack.c.bf16 %v5488, %v5487
            %v5495 = vpack.c.bf16 %v5490, %v5489
            %v5496 = vpack.c.bf16 %v5492, %v5491
            %v5497 = vld [vmem:[#allocation12] sm:$0xf]
            %v5498 = vld [vmem:[#allocation12 + $0x4] sm:$0xf]
            %v5499 = vld [vmem:[#allocation12 + $0x8] sm:$0xf]
            %v5500 = vld [vmem:[#allocation12 + $0xc] sm:$0xf]
            %v5501 = vld [vmem:[#allocation12 + $0x10] sm:$0xf]
            %v5502 = vld [vmem:[#allocation12 + $0x14] sm:$0xf]
            %v5503 = vld [vmem:[#allocation12 + $0x18] sm:$0xf]
            %v5504 = vld [vmem:[#allocation12 + $0x1c] sm:$0xf]
            %5505 = vxpose.xlu0.c.b16.start [1/8] %v5493, 128
            %5506 = vxpose.xlu0.c.b16.cont [2/8] %v5494, 128
            %5507 = vxpose.xlu0.c.b16.cont [3/8] %v5495, 128
            %5508 = vxpose.xlu0.c.b16.cont [4/8] %v5496, 128
            %5509 = vxpose.xlu0.c.b16.cont [5/8] 0, 128
            %5510 = vxpose.xlu0.c.b16.cont [6/8] 0, 128
            %5511 = vxpose.xlu0.c.b16.cont [7/8] 0, 128
            %5512 = vxpose.xlu0.c.b16.end [8/8] 0, 128
            %v5513 = vpop.trf.xlu0
            %v5514 = vpop.trf.xlu0
            %v5515 = vpop.trf.xlu0
            %v5516 = vpop.trf.xlu0
            %v5517 = vpop.trf.xlu0
            %v5518 = vpop.trf.xlu0
            %v5519 = vpop.trf.xlu0
            %v5520 = vpop.trf.xlu0
            %v5529 = vunpack.c.l.b16 %v5497
            %v5530 = vunpack.c.l.b16 %v5498
            %v5531 = vunpack.c.l.b16 %v5499
            %v5532 = vunpack.c.l.b16 %v5500
            %v5533 = vunpack.c.l.b16 %v5501
            %v5534 = vunpack.c.l.b16 %v5502
            %v5535 = vunpack.c.l.b16 %v5503
            %v5536 = vunpack.c.l.b16 %v5504
            %v5537 = vpack.c.b16 %v5530, %v5529
            %v5538 = vpack.c.b16 %v5532, %v5531
            %v5539 = vpack.c.b16 %v5534, %v5533
            %v5540 = vpack.c.b16 %v5536, %v5535
            %v5546 = vsel %vm1824, %v5513, 0
            %v5549 = vsel %vm1824, %v5514, 0
            %v5552 = vsel %vm1824, %v5515, 0
            %v5555 = vsel %vm1824, %v5516, 0
            %5557 = vmatpush.bf16.msra.mxu0 0
            %5558 = vmatpush.bf16.msra.mxu0 0
            %5559 = vmatpush.bf16.msra.mxu0 0
            %5560 = vmatpush.bf16.msra.mxu0 0
            %5561 = vmatpush.bf16.msra.mxu0 %v5540
            %5562 = vmatpush.bf16.msra.mxu0 %v5539
            %5563 = vmatpush.bf16.msra.mxu0 %v5538
            %5564 = vmatpush.bf16.msra.mxu0 %v5537
            %5565 = vmatmul.bf16.gmra.mxu0 %v5546
            %v5566 = vpop.f32.mrf.mxu0
            %v5567 = vadd.f32 0.0, %v5566
            %v5568 = vpop.f32.mrf.mxu0
            %v5569 = vadd.f32 0.0, %v5568
            %5570 = vmatmul.bf16.gmra.mxu0 %v5549
            %v5571 = vpop.f32.mrf.mxu0
            %v5572 = vadd.f32 0.0, %v5571
            %v5573 = vpop.f32.mrf.mxu0
            %v5574 = vadd.f32 0.0, %v5573
            %5575 = vmatmul.bf16.gmra.mxu0 %v5552
            %v5576 = vpop.f32.mrf.mxu0
            %v5577 = vadd.f32 0.0, %v5576
            %v5578 = vpop.f32.mrf.mxu0
            %v5579 = vadd.f32 0.0, %v5578
            %5580 = vmatmul.bf16.gmra.mxu0 %v5555
            %v5581 = vpop.f32.mrf.mxu0
            %v5582 = vadd.f32 0.0, %v5581
            %v5583 = vpop.f32.mrf.mxu0
            %v5584 = vadd.f32 0.0, %v5583
            %5585 = vdwg.mxu0
            %v5586 = vpack.c.bf16 %v5567, %v5567
            %v5587 = vpack.c.bf16 %v5569, %v5569
            %v5588 = vpack.c.bf16 %v5572, %v5572
            %v5589 = vpack.c.bf16 %v5574, %v5574
            %v5590 = vpack.c.bf16 %v5577, %v5577
            %v5591 = vpack.c.bf16 %v5579, %v5579
            %v5592 = vpack.c.bf16 %v5582, %v5582
            %v5593 = vpack.c.bf16 %v5584, %v5584
            %5594 = vst [vmem:[#allocation5] sm:$0xf] %v5586
            %5595 = vst [vmem:[#allocation5 + $0x4] sm:$0xf] %v5587
            %5596 = vst [vmem:[#allocation5 + $0x8] sm:$0xf] %v5588
            %5597 = vst [vmem:[#allocation5 + $0xc] sm:$0xf] %v5589
            %5598 = vst [vmem:[#allocation5 + $0x10] sm:$0xf] %v5590
            %5599 = vst [vmem:[#allocation5 + $0x14] sm:$0xf] %v5591
            %5600 = vst [vmem:[#allocation5 + $0x18] sm:$0xf] %v5592
            %5601 = vst [vmem:[#allocation5 + $0x1c] sm:$0xf] %v5593
            %v5602 = vld [vmem:[%s1833] sm:$0xff]
            %v5603 = vld [vmem:[%s1833 + $0x8] sm:$0xff]
            %v5604 = vld [vmem:[%s1833 + $0x10] sm:$0xff]
            %v5605 = vld [vmem:[%s1833 + $0x18] sm:$0xff]
            %v5606 = vld [vmem:[%s1833 + $0x20] sm:$0xff]
            %v5607 = vld [vmem:[%s1833 + $0x28] sm:$0xff]
            %v5608 = vld [vmem:[%s1833 + $0x30] sm:$0xff]
            %v5609 = vld [vmem:[%s1833 + $0x38] sm:$0xff]
            %5610 = vrot.lane.b32.xlu0 %v5483, 64
            %v5611 = vpop.permute.xlu0 %5610
            %v5613 = vmul.f32 %v5602, %v5611
            %v5614 = vmul.f32 %v5603, %v5611
            %v5615 = vmul.f32 %v5604, %v5611
            %v5616 = vmul.f32 %v5605, %v5611
            %v5617 = vmul.f32 %v5606, %v5611
            %v5618 = vmul.f32 %v5607, %v5611
            %v5619 = vmul.f32 %v5608, %v5611
            %v5620 = vmul.f32 %v5609, %v5611
            %v5621 = vpack.c.bf16 %v5614, %v5613
            %v5622 = vpack.c.bf16 %v5616, %v5615
            %v5623 = vpack.c.bf16 %v5618, %v5617
            %v5624 = vpack.c.bf16 %v5620, %v5619
            %v5625 = vld [vmem:[#allocation12 + $0x20] sm:$0xf]
            %v5626 = vld [vmem:[#allocation12 + $0x24] sm:$0xf]
            %v5627 = vld [vmem:[#allocation12 + $0x28] sm:$0xf]
            %v5628 = vld [vmem:[#allocation12 + $0x2c] sm:$0xf]
            %v5629 = vld [vmem:[#allocation12 + $0x30] sm:$0xf]
            %v5630 = vld [vmem:[#allocation12 + $0x34] sm:$0xf]
            %v5631 = vld [vmem:[#allocation12 + $0x38] sm:$0xf]
            %v5632 = vld [vmem:[#allocation12 + $0x3c] sm:$0xf]
            %5633 = vxpose.xlu0.c.b16.start [1/8] %v5621, 128
            %5634 = vxpose.xlu0.c.b16.cont [2/8] %v5622, 128
            %5635 = vxpose.xlu0.c.b16.cont [3/8] %v5623, 128
            %5636 = vxpose.xlu0.c.b16.cont [4/8] %v5624, 128
            %5637 = vxpose.xlu0.c.b16.cont [5/8] 0, 128
            %5638 = vxpose.xlu0.c.b16.cont [6/8] 0, 128
            %5639 = vxpose.xlu0.c.b16.cont [7/8] 0, 128
            %5640 = vxpose.xlu0.c.b16.end [8/8] 0, 128
            %v5641 = vpop.trf.xlu0
            %v5642 = vpop.trf.xlu0
            %v5643 = vpop.trf.xlu0
            %v5644 = vpop.trf.xlu0
            %v5645 = vpop.trf.xlu0
            %v5646 = vpop.trf.xlu0
            %v5647 = vpop.trf.xlu0
            %v5648 = vpop.trf.xlu0
            %v5657 = vunpack.c.l.b16 %v5625
            %v5658 = vunpack.c.l.b16 %v5626
            %v5659 = vunpack.c.l.b16 %v5627
            %v5660 = vunpack.c.l.b16 %v5628
            %v5661 = vunpack.c.l.b16 %v5629
            %v5662 = vunpack.c.l.b16 %v5630
            %v5663 = vunpack.c.l.b16 %v5631
            %v5664 = vunpack.c.l.b16 %v5632
            %v5665 = vpack.c.b16 %v5658, %v5657
            %v5666 = vpack.c.b16 %v5660, %v5659
            %v5667 = vpack.c.b16 %v5662, %v5661
            %v5668 = vpack.c.b16 %v5664, %v5663
            %v5674 = vsel %vm1824, %v5641, 0
            %v5677 = vsel %vm1824, %v5642, 0
            %v5680 = vsel %vm1824, %v5643, 0
            %v5683 = vsel %vm1824, %v5644, 0
            %5685 = vmatpush.bf16.msra.mxu0 0
            %5686 = vmatpush.bf16.msra.mxu0 0
            %5687 = vmatpush.bf16.msra.mxu0 0
            %5688 = vmatpush.bf16.msra.mxu0 0
            %5689 = vmatpush.bf16.msra.mxu0 %v5668
            %5690 = vmatpush.bf16.msra.mxu0 %v5667
            %5691 = vmatpush.bf16.msra.mxu0 %v5666
            %5692 = vmatpush.bf16.msra.mxu0 %v5665
            %5693 = vmatmul.bf16.gmra.mxu0 %v5674
            %v5694 = vpop.f32.mrf.mxu0
            %v5695 = vadd.f32 0.0, %v5694
            %v5696 = vpop.f32.mrf.mxu0
            %v5697 = vadd.f32 0.0, %v5696
            %5698 = vmatmul.bf16.gmra.mxu0 %v5677
            %v5699 = vpop.f32.mrf.mxu0
            %v5700 = vadd.f32 0.0, %v5699
            %v5701 = vpop.f32.mrf.mxu0
            %v5702 = vadd.f32 0.0, %v5701
            %5703 = vmatmul.bf16.gmra.mxu0 %v5680
            %v5704 = vpop.f32.mrf.mxu0
            %v5705 = vadd.f32 0.0, %v5704
            %v5706 = vpop.f32.mrf.mxu0
            %v5707 = vadd.f32 0.0, %v5706
            %5708 = vmatmul.bf16.gmra.mxu0 %v5683
            %v5709 = vpop.f32.mrf.mxu0
            %v5710 = vadd.f32 0.0, %v5709
            %v5711 = vpop.f32.mrf.mxu0
            %v5712 = vadd.f32 0.0, %v5711
            %5713 = vdwg.mxu0
            %v5714 = vpack.c.bf16 %v5695, %v5695
            %v5715 = vpack.c.bf16 %v5697, %v5697
            %v5716 = vpack.c.bf16 %v5700, %v5700
            %v5717 = vpack.c.bf16 %v5702, %v5702
            %v5718 = vpack.c.bf16 %v5705, %v5705
            %v5719 = vpack.c.bf16 %v5707, %v5707
            %v5720 = vpack.c.bf16 %v5710, %v5710
            %v5721 = vpack.c.bf16 %v5712, %v5712
            %5722 = vst [vmem:[#allocation5 + $0x20] sm:$0xf] %v5714
            %5723 = vst [vmem:[#allocation5 + $0x24] sm:$0xf] %v5715
            %5724 = vst [vmem:[#allocation5 + $0x28] sm:$0xf] %v5716
            %5725 = vst [vmem:[#allocation5 + $0x2c] sm:$0xf] %v5717
            %5726 = vst [vmem:[#allocation5 + $0x30] sm:$0xf] %v5718
            %5727 = vst [vmem:[#allocation5 + $0x34] sm:$0xf] %v5719
            %5728 = vst [vmem:[#allocation5 + $0x38] sm:$0xf] %v5720
            %5729 = vst [vmem:[#allocation5 + $0x3c] sm:$0xf] %v5721
          $region68: #{tpu_custom_call.1} parent=59 // pred_fallthru
            _
        $region60: #{tpu_custom_call.1} parent=39 // pred_fallthru
          _
        %p5730 = scmp.eq.s32.totalorder %s30, 1
        // Predicated region
        $region69: #{tpu_custom_call.1} parent=39 // pred_check
          %p5731 = pneg %p5730
        $region70: #{tpu_custom_call.1} parent=39 // pred_check_branch
          %5733 = sbr.rel (%p5731) target = $region72
        $region71: #{tpu_custom_call.1} parent=39 // pred_region
          %s5734 = smul.u32 %s31, 512
          %s5735 = sshra.s32 %s5734, 3
          %s5736 = sand.u32 %s5734, 7
          %s5737 = smul.addr %s5735, 4
          %s5738 = scalar_lea.vmem [#allocation6], %s5737
          %v5739 = vld [vmem:[%s5738] sm:$0xf]
          %v5740 = vld [vmem:[%s5738 + $0x4] sm:$0xf]
          %v5741 = vld [vmem:[%s5738 + $0x8] sm:$0xf]
          %v5742 = vld [vmem:[%s5738 + $0xc] sm:$0xf]
          %v5743 = vld [vmem:[%s5738 + $0x10] sm:$0xf]
          %v5744 = vld [vmem:[%s5738 + $0x14] sm:$0xf]
          %v5745 = vld [vmem:[%s5738 + $0x18] sm:$0xf]
          %v5746 = vld [vmem:[%s5738 + $0x1c] sm:$0xf]
          %v5747 = vld [vmem:[%s5738 + $0x20] sm:$0xf]
          %v5748 = vld [vmem:[%s5738 + $0x24] sm:$0xf]
          %v5749 = vld [vmem:[%s5738 + $0x28] sm:$0xf]
          %v5750 = vld [vmem:[%s5738 + $0x2c] sm:$0xf]
          %v5751 = vld [vmem:[%s5738 + $0x30] sm:$0xf]
          %v5752 = vld [vmem:[%s5738 + $0x34] sm:$0xf]
          %v5753 = vld [vmem:[%s5738 + $0x38] sm:$0xf]
          %v5754 = vld [vmem:[%s5738 + $0x3c] sm:$0xf]
          %v5755 = vld [vmem:[%s5738 + $0x40] sm:$0xf]
          %v5756 = vld [vmem:[%s5738 + $0x44] sm:$0xf]
          %v5757 = vld [vmem:[%s5738 + $0x48] sm:$0xf]
          %v5758 = vld [vmem:[%s5738 + $0x4c] sm:$0xf]
          %v5759 = vld [vmem:[%s5738 + $0x50] sm:$0xf]
          %v5760 = vld [vmem:[%s5738 + $0x54] sm:$0xf]
          %v5761 = vld [vmem:[%s5738 + $0x58] sm:$0xf]
          %v5762 = vld [vmem:[%s5738 + $0x5c] sm:$0xf]
          %v5763 = vld [vmem:[%s5738 + $0x60] sm:$0xf]
          %v5764 = vld [vmem:[%s5738 + $0x64] sm:$0xf]
          %v5765 = vld [vmem:[%s5738 + $0x68] sm:$0xf]
          %v5766 = vld [vmem:[%s5738 + $0x6c] sm:$0xf]
          %v5767 = vld [vmem:[%s5738 + $0x70] sm:$0xf]
          %v5768 = vld [vmem:[%s5738 + $0x74] sm:$0xf]
          %v5769 = vld [vmem:[%s5738 + $0x78] sm:$0xf]
          %v5770 = vld [vmem:[%s5738 + $0x7c] sm:$0xf]
          %v5771 = vld [vmem:[%s5738 + $0x80] sm:$0xf]
          %v5772 = vld [vmem:[%s5738 + $0x84] sm:$0xf]
          %v5773 = vld [vmem:[%s5738 + $0x88] sm:$0xf]
          %v5774 = vld [vmem:[%s5738 + $0x8c] sm:$0xf]
          %v5775 = vld [vmem:[%s5738 + $0x90] sm:$0xf]
          %v5776 = vld [vmem:[%s5738 + $0x94] sm:$0xf]
          %v5777 = vld [vmem:[%s5738 + $0x98] sm:$0xf]
          %v5778 = vld [vmem:[%s5738 + $0x9c] sm:$0xf]
          %v5779 = vld [vmem:[%s5738 + $0xa0] sm:$0xf]
          %v5780 = vld [vmem:[%s5738 + $0xa4] sm:$0xf]
          %v5781 = vld [vmem:[%s5738 + $0xa8] sm:$0xf]
          %v5782 = vld [vmem:[%s5738 + $0xac] sm:$0xf]
          %v5783 = vld [vmem:[%s5738 + $0xb0] sm:$0xf]
          %v5784 = vld [vmem:[%s5738 + $0xb4] sm:$0xf]
          %v5785 = vld [vmem:[%s5738 + $0xb8] sm:$0xf]
          %v5786 = vld [vmem:[%s5738 + $0xbc] sm:$0xf]
          %v5787 = vld [vmem:[%s5738 + $0xc0] sm:$0xf]
          %v5788 = vld [vmem:[%s5738 + $0xc4] sm:$0xf]
          %v5789 = vld [vmem:[%s5738 + $0xc8] sm:$0xf]
          %v5790 = vld [vmem:[%s5738 + $0xcc] sm:$0xf]
          %v5791 = vld [vmem:[%s5738 + $0xd0] sm:$0xf]
          %v5792 = vld [vmem:[%s5738 + $0xd4] sm:$0xf]
          %v5793 = vld [vmem:[%s5738 + $0xd8] sm:$0xf]
          %v5794 = vld [vmem:[%s5738 + $0xdc] sm:$0xf]
          %v5795 = vld [vmem:[%s5738 + $0xe0] sm:$0xf]
          %v5796 = vld [vmem:[%s5738 + $0xe4] sm:$0xf]
          %v5797 = vld [vmem:[%s5738 + $0xe8] sm:$0xf]
          %v5798 = vld [vmem:[%s5738 + $0xec] sm:$0xf]
          %v5799 = vld [vmem:[%s5738 + $0xf0] sm:$0xf]
          %v5800 = vld [vmem:[%s5738 + $0xf4] sm:$0xf]
          %v5801 = vld [vmem:[%s5738 + $0xf8] sm:$0xf]
          %v5802 = vld [vmem:[%s5738 + $0xfc] sm:$0xf]
          %v5803 = vld [vmem:[#allocation5] sm:$0xf]
          %v5804 = vld [vmem:[#allocation5 + $0x4] sm:$0xf]
          %v5805 = vld [vmem:[#allocation5 + $0x8] sm:$0xf]
          %v5806 = vld [vmem:[#allocation5 + $0xc] sm:$0xf]
          %v5807 = vld [vmem:[#allocation5 + $0x10] sm:$0xf]
          %v5808 = vld [vmem:[#allocation5 + $0x14] sm:$0xf]
          %v5809 = vld [vmem:[#allocation5 + $0x18] sm:$0xf]
          %v5810 = vld [vmem:[#allocation5 + $0x1c] sm:$0xf]
          %v5811 = vld [vmem:[#allocation5 + $0x20] sm:$0xf]
          %v5812 = vld [vmem:[#allocation5 + $0x24] sm:$0xf]
          %v5813 = vld [vmem:[#allocation5 + $0x28] sm:$0xf]
          %v5814 = vld [vmem:[#allocation5 + $0x2c] sm:$0xf]
          %v5815 = vld [vmem:[#allocation5 + $0x30] sm:$0xf]
          %v5816 = vld [vmem:[#allocation5 + $0x34] sm:$0xf]
          %v5817 = vld [vmem:[#allocation5 + $0x38] sm:$0xf]
          %v5818 = vld [vmem:[#allocation5 + $0x3c] sm:$0xf]
          %v5819 = vld [vmem:[%s4] sm:$0x1]
          %v5821 = vperm.slane %v5819, 0
          %v5887 = vunpack.c.l.b16 %v5739
          %v5888 = vunpack.c.l.b16 %v5740
          %v5889 = vunpack.c.l.b16 %v5741
          %v5890 = vunpack.c.l.b16 %v5742
          %v5891 = vunpack.c.l.b16 %v5743
          %v5892 = vunpack.c.l.b16 %v5744
          %v5893 = vunpack.c.l.b16 %v5745
          %v5894 = vunpack.c.l.b16 %v5746
          %v5895 = vunpack.c.l.b16 %v5747
          %v5896 = vunpack.c.l.b16 %v5748
          %v5897 = vunpack.c.l.b16 %v5749
          %v5898 = vunpack.c.l.b16 %v5750
          %v5899 = vunpack.c.l.b16 %v5751
          %v5900 = vunpack.c.l.b16 %v5752
          %v5901 = vunpack.c.l.b16 %v5753
          %v5902 = vunpack.c.l.b16 %v5754
          %v5903 = vunpack.c.l.b16 %v5755
          %v5904 = vunpack.c.l.b16 %v5756
          %v5905 = vunpack.c.l.b16 %v5757
          %v5906 = vunpack.c.l.b16 %v5758
          %v5907 = vunpack.c.l.b16 %v5759
          %v5908 = vunpack.c.l.b16 %v5760
          %v5909 = vunpack.c.l.b16 %v5761
          %v5910 = vunpack.c.l.b16 %v5762
          %v5911 = vunpack.c.l.b16 %v5763
          %v5912 = vunpack.c.l.b16 %v5764
          %v5913 = vunpack.c.l.b16 %v5765
          %v5914 = vunpack.c.l.b16 %v5766
          %v5915 = vunpack.c.l.b16 %v5767
          %v5916 = vunpack.c.l.b16 %v5768
          %v5917 = vunpack.c.l.b16 %v5769
          %v5918 = vunpack.c.l.b16 %v5770
          %v5919 = vunpack.c.l.b16 %v5771
          %v5920 = vunpack.c.l.b16 %v5772
          %v5921 = vunpack.c.l.b16 %v5773
          %v5922 = vunpack.c.l.b16 %v5774
          %v5923 = vunpack.c.l.b16 %v5775
          %v5924 = vunpack.c.l.b16 %v5776
          %v5925 = vunpack.c.l.b16 %v5777
          %v5926 = vunpack.c.l.b16 %v5778
          %v5927 = vunpack.c.l.b16 %v5779
          %v5928 = vunpack.c.l.b16 %v5780
          %v5929 = vunpack.c.l.b16 %v5781
          %v5930 = vunpack.c.l.b16 %v5782
          %v5931 = vunpack.c.l.b16 %v5783
          %v5932 = vunpack.c.l.b16 %v5784
          %v5933 = vunpack.c.l.b16 %v5785
          %v5934 = vunpack.c.l.b16 %v5786
          %v5935 = vunpack.c.l.b16 %v5787
          %v5936 = vunpack.c.l.b16 %v5788
          %v5937 = vunpack.c.l.b16 %v5789
          %v5938 = vunpack.c.l.b16 %v5790
          %v5939 = vunpack.c.l.b16 %v5791
          %v5940 = vunpack.c.l.b16 %v5792
          %v5941 = vunpack.c.l.b16 %v5793
          %v5942 = vunpack.c.l.b16 %v5794
          %v5943 = vunpack.c.l.b16 %v5795
          %v5944 = vunpack.c.l.b16 %v5796
          %v5945 = vunpack.c.l.b16 %v5797
          %v5946 = vunpack.c.l.b16 %v5798
          %v5947 = vunpack.c.l.b16 %v5799
          %v5948 = vunpack.c.l.b16 %v5800
          %v5949 = vunpack.c.l.b16 %v5801
          %v5950 = vunpack.c.l.b16 %v5802
          %v5951 = vpack.c.b16 %v5888, %v5887
          %v5952 = vpack.c.b16 %v5890, %v5889
          %v5953 = vpack.c.b16 %v5892, %v5891
          %v5954 = vpack.c.b16 %v5894, %v5893
          %v5955 = vpack.c.b16 %v5896, %v5895
          %v5956 = vpack.c.b16 %v5898, %v5897
          %v5957 = vpack.c.b16 %v5900, %v5899
          %v5958 = vpack.c.b16 %v5902, %v5901
          %v5959 = vpack.c.b16 %v5904, %v5903
          %v5960 = vpack.c.b16 %v5906, %v5905
          %v5961 = vpack.c.b16 %v5908, %v5907
          %v5962 = vpack.c.b16 %v5910, %v5909
          %v5963 = vpack.c.b16 %v5912, %v5911
          %v5964 = vpack.c.b16 %v5914, %v5913
          %v5965 = vpack.c.b16 %v5916, %v5915
          %v5966 = vpack.c.b16 %v5918, %v5917
          %v5967 = vpack.c.b16 %v5920, %v5919
          %v5968 = vpack.c.b16 %v5922, %v5921
          %v5969 = vpack.c.b16 %v5924, %v5923
          %v5970 = vpack.c.b16 %v5926, %v5925
          %v5971 = vpack.c.b16 %v5928, %v5927
          %v5972 = vpack.c.b16 %v5930, %v5929
          %v5973 = vpack.c.b16 %v5932, %v5931
          %v5974 = vpack.c.b16 %v5934, %v5933
          %v5975 = vpack.c.b16 %v5936, %v5935
          %v5976 = vpack.c.b16 %v5938, %v5937
          %v5977 = vpack.c.b16 %v5940, %v5939
          %v5978 = vpack.c.b16 %v5942, %v5941
          %v5979 = vpack.c.b16 %v5944, %v5943
          %v5980 = vpack.c.b16 %v5946, %v5945
          %v5981 = vpack.c.b16 %v5948, %v5947
          %v5982 = vpack.c.b16 %v5950, %v5949
          %v6031 = vunpack.c.l.b16 %v5803
          %v6032 = vunpack.c.l.b16 %v5804
          %v6033 = vunpack.c.l.b16 %v5805
          %v6034 = vunpack.c.l.b16 %v5806
          %v6035 = vunpack.c.l.b16 %v5807
          %v6036 = vunpack.c.l.b16 %v5808
          %v6037 = vunpack.c.l.b16 %v5809
          %v6038 = vunpack.c.l.b16 %v5810
          %v6039 = vunpack.c.l.b16 %v5811
          %v6040 = vunpack.c.l.b16 %v5812
          %v6041 = vunpack.c.l.b16 %v5813
          %v6042 = vunpack.c.l.b16 %v5814
          %v6043 = vunpack.c.l.b16 %v5815
          %v6044 = vunpack.c.l.b16 %v5816
          %v6045 = vunpack.c.l.b16 %v5817
          %v6046 = vunpack.c.l.b16 %v5818
          %v6047 = vpack.c.b16 %v6032, %v6031
          %v6048 = vpack.c.b16 %v6034, %v6033
          %v6049 = vpack.c.b16 %v6036, %v6035
          %v6050 = vpack.c.b16 %v6038, %v6037
          %v6051 = vpack.c.b16 %v6040, %v6039
          %v6052 = vpack.c.b16 %v6042, %v6041
          %v6053 = vpack.c.b16 %v6044, %v6043
          %v6054 = vpack.c.b16 %v6046, %v6045
          %6063 = vmatpush.bf16.msra.mxu0 %v6054
          %6064 = vmatpush.bf16.msra.mxu0 %v6053
          %6065 = vmatpush.bf16.msra.mxu0 %v6052
          %6066 = vmatpush.bf16.msra.mxu0 %v6051
          %6067 = vmatpush.bf16.msra.mxu0 %v6050
          %6068 = vmatpush.bf16.msra.mxu0 %v6049
          %6069 = vmatpush.bf16.msra.mxu0 %v6048
          %6070 = vmatpush.bf16.msra.mxu0 %v6047
          %6071 = vmatmul.bf16.gmra.mxu0 %v5951
          %v6072 = vpop.f32.mrf.mxu0
          %v6073 = vadd.f32 %v5821, %v6072
          %v6074 = vpop.f32.mrf.mxu0
          %v6075 = vadd.f32 %v5821, %v6074
          %6076 = vmatmul.bf16.gmra.mxu0 %v5952
          %v6077 = vpop.f32.mrf.mxu0
          %v6078 = vadd.f32 %v5821, %v6077
          %v6079 = vpop.f32.mrf.mxu0
          %v6080 = vadd.f32 %v5821, %v6079
          %6081 = vmatmul.bf16.gmra.mxu0 %v5953
          %v6082 = vpop.f32.mrf.mxu0
          %v6083 = vadd.f32 %v5821, %v6082
          %v6084 = vpop.f32.mrf.mxu0
          %v6085 = vadd.f32 %v5821, %v6084
          %6086 = vmatmul.bf16.gmra.mxu0 %v5954
          %v6087 = vpop.f32.mrf.mxu0
          %v6088 = vadd.f32 %v5821, %v6087
          %v6089 = vpop.f32.mrf.mxu0
          %v6090 = vadd.f32 %v5821, %v6089
          %6091 = vmatmul.bf16.gmra.mxu0 %v5955
          %v6092 = vpop.f32.mrf.mxu0
          %v6093 = vadd.f32 %v5821, %v6092
          %v6094 = vpop.f32.mrf.mxu0
          %v6095 = vadd.f32 %v5821, %v6094
          %6096 = vmatmul.bf16.gmra.mxu0 %v5956
          %v6097 = vpop.f32.mrf.mxu0
          %v6098 = vadd.f32 %v5821, %v6097
          %v6099 = vpop.f32.mrf.mxu0
          %v6100 = vadd.f32 %v5821, %v6099
          %6101 = vmatmul.bf16.gmra.mxu0 %v5957
          %v6102 = vpop.f32.mrf.mxu0
          %v6103 = vadd.f32 %v5821, %v6102
          %v6104 = vpop.f32.mrf.mxu0
          %v6105 = vadd.f32 %v5821, %v6104
          %6106 = vmatmul.bf16.gmra.mxu0 %v5958
          %v6107 = vpop.f32.mrf.mxu0
          %v6108 = vadd.f32 %v5821, %v6107
          %v6109 = vpop.f32.mrf.mxu0
          %v6110 = vadd.f32 %v5821, %v6109
          %6111 = vmatmul.bf16.gmra.mxu0 %v5959
          %v6112 = vpop.f32.mrf.mxu0
          %v6113 = vadd.f32 %v5821, %v6112
          %v6114 = vpop.f32.mrf.mxu0
          %v6115 = vadd.f32 %v5821, %v6114
          %6116 = vmatmul.bf16.gmra.mxu0 %v5960
          %v6117 = vpop.f32.mrf.mxu0
          %v6118 = vadd.f32 %v5821, %v6117
          %v6119 = vpop.f32.mrf.mxu0
          %v6120 = vadd.f32 %v5821, %v6119
          %6121 = vmatmul.bf16.gmra.mxu0 %v5961
          %v6122 = vpop.f32.mrf.mxu0
          %v6123 = vadd.f32 %v5821, %v6122
          %v6124 = vpop.f32.mrf.mxu0
          %v6125 = vadd.f32 %v5821, %v6124
          %6126 = vmatmul.bf16.gmra.mxu0 %v5962
          %v6127 = vpop.f32.mrf.mxu0
          %v6128 = vadd.f32 %v5821, %v6127
          %v6129 = vpop.f32.mrf.mxu0
          %v6130 = vadd.f32 %v5821, %v6129
          %6131 = vmatmul.bf16.gmra.mxu0 %v5963
          %v6132 = vpop.f32.mrf.mxu0
          %v6133 = vadd.f32 %v5821, %v6132
          %v6134 = vpop.f32.mrf.mxu0
          %v6135 = vadd.f32 %v5821, %v6134
          %6136 = vmatmul.bf16.gmra.mxu0 %v5964
          %v6137 = vpop.f32.mrf.mxu0
          %v6138 = vadd.f32 %v5821, %v6137
          %v6139 = vpop.f32.mrf.mxu0
          %v6140 = vadd.f32 %v5821, %v6139
          %6141 = vmatmul.bf16.gmra.mxu0 %v5965
          %v6142 = vpop.f32.mrf.mxu0
          %v6143 = vadd.f32 %v5821, %v6142
          %v6144 = vpop.f32.mrf.mxu0
          %v6145 = vadd.f32 %v5821, %v6144
          %6146 = vmatmul.bf16.gmra.mxu0 %v5966
          %v6147 = vpop.f32.mrf.mxu0
          %v6148 = vadd.f32 %v5821, %v6147
          %v6149 = vpop.f32.mrf.mxu0
          %v6150 = vadd.f32 %v5821, %v6149
          %6151 = vmatmul.bf16.gmra.mxu0 %v5967
          %v6152 = vpop.f32.mrf.mxu0
          %v6153 = vadd.f32 %v5821, %v6152
          %v6154 = vpop.f32.mrf.mxu0
          %v6155 = vadd.f32 %v5821, %v6154
          %6156 = vmatmul.bf16.gmra.mxu0 %v5968
          %v6157 = vpop.f32.mrf.mxu0
          %v6158 = vadd.f32 %v5821, %v6157
          %v6159 = vpop.f32.mrf.mxu0
          %v6160 = vadd.f32 %v5821, %v6159
          %6161 = vmatmul.bf16.gmra.mxu0 %v5969
          %v6162 = vpop.f32.mrf.mxu0
          %v6163 = vadd.f32 %v5821, %v6162
          %v6164 = vpop.f32.mrf.mxu0
          %v6165 = vadd.f32 %v5821, %v6164
          %6166 = vmatmul.bf16.gmra.mxu0 %v5970
          %v6167 = vpop.f32.mrf.mxu0
          %v6168 = vadd.f32 %v5821, %v6167
          %v6169 = vpop.f32.mrf.mxu0
          %v6170 = vadd.f32 %v5821, %v6169
          %6171 = vmatmul.bf16.gmra.mxu0 %v5971
          %v6172 = vpop.f32.mrf.mxu0
          %v6173 = vadd.f32 %v5821, %v6172
          %v6174 = vpop.f32.mrf.mxu0
          %v6175 = vadd.f32 %v5821, %v6174
          %6176 = vmatmul.bf16.gmra.mxu0 %v5972
          %v6177 = vpop.f32.mrf.mxu0
          %v6178 = vadd.f32 %v5821, %v6177
          %v6179 = vpop.f32.mrf.mxu0
          %v6180 = vadd.f32 %v5821, %v6179
          %6181 = vmatmul.bf16.gmra.mxu0 %v5973
          %v6182 = vpop.f32.mrf.mxu0
          %v6183 = vadd.f32 %v5821, %v6182
          %v6184 = vpop.f32.mrf.mxu0
          %v6185 = vadd.f32 %v5821, %v6184
          %6186 = vmatmul.bf16.gmra.mxu0 %v5974
          %v6187 = vpop.f32.mrf.mxu0
          %v6188 = vadd.f32 %v5821, %v6187
          %v6189 = vpop.f32.mrf.mxu0
          %v6190 = vadd.f32 %v5821, %v6189
          %6191 = vmatmul.bf16.gmra.mxu0 %v5975
          %v6192 = vpop.f32.mrf.mxu0
          %v6193 = vadd.f32 %v5821, %v6192
          %v6194 = vpop.f32.mrf.mxu0
          %v6195 = vadd.f32 %v5821, %v6194
          %6196 = vmatmul.bf16.gmra.mxu0 %v5976
          %v6197 = vpop.f32.mrf.mxu0
          %v6198 = vadd.f32 %v5821, %v6197
          %v6199 = vpop.f32.mrf.mxu0
          %v6200 = vadd.f32 %v5821, %v6199
          %6201 = vmatmul.bf16.gmra.mxu0 %v5977
          %v6202 = vpop.f32.mrf.mxu0
          %v6203 = vadd.f32 %v5821, %v6202
          %v6204 = vpop.f32.mrf.mxu0
          %v6205 = vadd.f32 %v5821, %v6204
          %6206 = vmatmul.bf16.gmra.mxu0 %v5978
          %v6207 = vpop.f32.mrf.mxu0
          %v6208 = vadd.f32 %v5821, %v6207
          %v6209 = vpop.f32.mrf.mxu0
          %v6210 = vadd.f32 %v5821, %v6209
          %6211 = vmatmul.bf16.gmra.mxu0 %v5979
          %v6212 = vpop.f32.mrf.mxu0
          %v6213 = vadd.f32 %v5821, %v6212
          %v6214 = vpop.f32.mrf.mxu0
          %v6215 = vadd.f32 %v5821, %v6214
          %6216 = vmatmul.bf16.gmra.mxu0 %v5980
          %v6217 = vpop.f32.mrf.mxu0
          %v6218 = vadd.f32 %v5821, %v6217
          %v6219 = vpop.f32.mrf.mxu0
          %v6220 = vadd.f32 %v5821, %v6219
          %6221 = vmatmul.bf16.gmra.mxu0 %v5981
          %v6222 = vpop.f32.mrf.mxu0
          %v6223 = vadd.f32 %v5821, %v6222
          %v6224 = vpop.f32.mrf.mxu0
          %v6225 = vadd.f32 %v5821, %v6224
          %6226 = vmatmul.bf16.gmra.mxu0 %v5982
          %v6227 = vpop.f32.mrf.mxu0
          %v6228 = vadd.f32 %v5821, %v6227
          %v6229 = vpop.f32.mrf.mxu0
          %v6230 = vadd.f32 %v5821, %v6229
          %6231 = vdwg.mxu0
          %6232 = vst [vmem:[%s325] sm:$0xff] %v6073
          %6233 = vst [vmem:[%s325 + $0x8] sm:$0xff] %v6075
          %6234 = vst [vmem:[%s325 + $0x10] sm:$0xff] %v6078
          %6235 = vst [vmem:[%s325 + $0x18] sm:$0xff] %v6080
          %6236 = vst [vmem:[%s325 + $0x20] sm:$0xff] %v6083
          %6237 = vst [vmem:[%s325 + $0x28] sm:$0xff] %v6085
          %6238 = vst [vmem:[%s325 + $0x30] sm:$0xff] %v6088
          %6239 = vst [vmem:[%s325 + $0x38] sm:$0xff] %v6090
          %6240 = vst [vmem:[%s325 + $0x40] sm:$0xff] %v6093
          %6241 = vst [vmem:[%s325 + $0x48] sm:$0xff] %v6095
          %6242 = vst [vmem:[%s325 + $0x50] sm:$0xff] %v6098
          %6243 = vst [vmem:[%s325 + $0x58] sm:$0xff] %v6100
          %6244 = vst [vmem:[%s325 + $0x60] sm:$0xff] %v6103
          %6245 = vst [vmem:[%s325 + $0x68] sm:$0xff] %v6105
          %6246 = vst [vmem:[%s325 + $0x70] sm:$0xff] %v6108
          %6247 = vst [vmem:[%s325 + $0x78] sm:$0xff] %v6110
          %6248 = vst [vmem:[%s325 + $0x80] sm:$0xff] %v6113
          %6249 = vst [vmem:[%s325 + $0x88] sm:$0xff] %v6115
          %6250 = vst [vmem:[%s325 + $0x90] sm:$0xff] %v6118
          %6251 = vst [vmem:[%s325 + $0x98] sm:$0xff] %v6120
          %6252 = vst [vmem:[%s325 + $0xa0] sm:$0xff] %v6123
          %6253 = vst [vmem:[%s325 + $0xa8] sm:$0xff] %v6125
          %6254 = vst [vmem:[%s325 + $0xb0] sm:$0xff] %v6128
          %6255 = vst [vmem:[%s325 + $0xb8] sm:$0xff] %v6130
          %6256 = vst [vmem:[%s325 + $0xc0] sm:$0xff] %v6133
          %6257 = vst [vmem:[%s325 + $0xc8] sm:$0xff] %v6135
          %6258 = vst [vmem:[%s325 + $0xd0] sm:$0xff] %v6138
          %6259 = vst [vmem:[%s325 + $0xd8] sm:$0xff] %v6140
          %6260 = vst [vmem:[%s325 + $0xe0] sm:$0xff] %v6143
          %6261 = vst [vmem:[%s325 + $0xe8] sm:$0xff] %v6145
          %6262 = vst [vmem:[%s325 + $0xf0] sm:$0xff] %v6148
          %6263 = vst [vmem:[%s325 + $0xf8] sm:$0xff] %v6150
          %6264 = vst [vmem:[%s325 + $0x100] sm:$0xff] %v6153
          %6265 = vst [vmem:[%s325 + $0x108] sm:$0xff] %v6155
          %6266 = vst [vmem:[%s325 + $0x110] sm:$0xff] %v6158
          %6267 = vst [vmem:[%s325 + $0x118] sm:$0xff] %v6160
          %6268 = vst [vmem:[%s325 + $0x120] sm:$0xff] %v6163
          %6269 = vst [vmem:[%s325 + $0x128] sm:$0xff] %v6165
          %6270 = vst [vmem:[%s325 + $0x130] sm:$0xff] %v6168
          %6271 = vst [vmem:[%s325 + $0x138] sm:$0xff] %v6170
          %6272 = vst [vmem:[%s325 + $0x140] sm:$0xff] %v6173
          %6273 = vst [vmem:[%s325 + $0x148] sm:$0xff] %v6175
          %6274 = vst [vmem:[%s325 + $0x150] sm:$0xff] %v6178
          %6275 = vst [vmem:[%s325 + $0x158] sm:$0xff] %v6180
          %6276 = vst [vmem:[%s325 + $0x160] sm:$0xff] %v6183
          %6277 = vst [vmem:[%s325 + $0x168] sm:$0xff] %v6185
          %6278 = vst [vmem:[%s325 + $0x170] sm:$0xff] %v6188
          %6279 = vst [vmem:[%s325 + $0x178] sm:$0xff] %v6190
          %6280 = vst [vmem:[%s325 + $0x180] sm:$0xff] %v6193
          %6281 = vst [vmem:[%s325 + $0x188] sm:$0xff] %v6195
          %6282 = vst [vmem:[%s325 + $0x190] sm:$0xff] %v6198
          %6283 = vst [vmem:[%s325 + $0x198] sm:$0xff] %v6200
          %6284 = vst [vmem:[%s325 + $0x1a0] sm:$0xff] %v6203
          %6285 = vst [vmem:[%s325 + $0x1a8] sm:$0xff] %v6205
          %6286 = vst [vmem:[%s325 + $0x1b0] sm:$0xff] %v6208
          %6287 = vst [vmem:[%s325 + $0x1b8] sm:$0xff] %v6210
          %6288 = vst [vmem:[%s325 + $0x1c0] sm:$0xff] %v6213
          %6289 = vst [vmem:[%s325 + $0x1c8] sm:$0xff] %v6215
          %6290 = vst [vmem:[%s325 + $0x1d0] sm:$0xff] %v6218
          %6291 = vst [vmem:[%s325 + $0x1d8] sm:$0xff] %v6220
          %6292 = vst [vmem:[%s325 + $0x1e0] sm:$0xff] %v6223
          %6293 = vst [vmem:[%s325 + $0x1e8] sm:$0xff] %v6225
          %6294 = vst [vmem:[%s325 + $0x1f0] sm:$0xff] %v6228
          %6295 = vst [vmem:[%s325 + $0x1f8] sm:$0xff] %v6230
        $region72: #{tpu_custom_call.1} parent=39 // pred_fallthru
          _
        %s6296 = sand.u32 %s171, 1
        %s6297 = scalar_lea.sflag [#allocation9], %s6296
        %s6298 = sand.u32 %s171, 1
        %s6299 = smul.addr %s6298, 512
        %s6300 = scalar_lea.vmem [#allocation15], %s6299
        // Predicated region
        $region73: #{tpu_custom_call.1} parent=39 // pred_check
          %p6301 = pneg %p181
        $region74: #{tpu_custom_call.1} parent=39 // pred_check_branch
          %6303 = sbr.rel (%p6301) target = $region76
        $region75: #{tpu_custom_call.1} parent=39 // pred_region
          %s6304 = smul.u32 %s30, %s31
          %s6305 = smul.u32 64, %s6304
          %6307 = vsyncadd %s6297, 0
          %s6308 = smul.addr %s29, 64
          %s6309 = sadd.s32 %s6305, %s6308
          %s6310 = smul.addr %s6309, 8
          %s6311 = scalar_lea.hbm %s5, %s6310
          %s6312 = sshll.u32 %s6300, 4
          %s6313 = int_to_ptr.vmem [resolvable:$true] %s6312
          %s6314 = sshll.u32 %s6311, 4
          %s6315 = int_to_ptr.hbm [resolvable:$true] %s6314
          %6320 = dma.vmem_to_hbm [thread:$0]  %s6313, 8192, %s6315, %s6297, 128, 128, 8
        $region76: #{tpu_custom_call.1} parent=39 // pred_fallthru
          _
      $region40: #{tpu_custom_call.1} parent=5 // pred_fallthru
        _
      %p6321 = scmp.le.s32.totalorder 2, %s19
      // Predicated region
      $region77: #{tpu_custom_call.1} parent=5 // pred_check
        %p6322 = pneg %p6321
      $region78: #{tpu_custom_call.1} parent=5 // pred_check_branch
        %6324 = sbr.rel (%p6322) target = $region80
      $region79: #{tpu_custom_call.1} parent=5 // pred_region
        %s6325 = ssub.s32 %s19, 2
        // Predicated region
        $region81: #{tpu_custom_call.1} parent=79 // pred_check
          %p6326 = pneg %p187
        $region82: #{tpu_custom_call.1} parent=79 // pred_check_branch
          %6328 = sbr.rel (%p6326) target = $region84
        $region83: #{tpu_custom_call.1} parent=79 // pred_region
          %s6329 = sand.u32 %s172, 1
          %s6330 = scalar_lea.sflag [#allocation9], %s6329
          %s6331 = sand.u32 %s172, 1
          %s6332 = smul.addr %s6331, 512
          %s6333 = scalar_lea.vmem [#allocation15], %s6332
          %6335 = dma.done %s6330, 8192
        $region84: #{tpu_custom_call.1} parent=79 // pred_fallthru
          _
      $region80: #{tpu_custom_call.1} parent=5 // pred_fallthru
        _
    $region6: #{tpu_custom_call.1} parent=1 // loop_footer
      %s23 = sadd.s32 1, %s19
    $region7: #{tpu_custom_call.1} parent=1 // loop_footer_branch
      %18 = sbr.rel target = $region3
    $region8: #{tpu_custom_call.1} parent=1 // loop_exit
      _
    %6336 = vsyncpa [#allocation8], 1
    %s6337 = scalar_lea.sflag [#allocation8], 1
    %6338 = vsyncpa %s6337, 1
    %6339 = vsyncpa [#allocation11], 1
    %6340 = vsyncpa [#allocation14], 1
    %6341 = vsyncpa [#allocation9], 1
    %s6342 = scalar_lea.sflag [#allocation9], 1
    %6343 = vsyncpa %s6342, 1

</llo_original>
